<compile_context>
chip_gen: v7x
topology: tpu7x:2x2x1
jax: 0.10.0
libtpu: 0.0.40
codegen_flags: <defaults>
</compile_context>

<pallas_src>
import math
import functools

import jax
import jax.numpy as jnp
from jax.experimental import pallas as pl
from jax.experimental.pallas import tpu as pltpu

ROW_TILE = 256  # target row tile (multiple of 128 sublgroups; >=2 grid blocks kept)


# ------------------------------ tiling helpers ------------------------------

def _round_up(x, m):
    return pl.cdiv(x, m) * m


def _tiling(M, target=ROW_TILE):
    """Return (padded_M, row_tile, grid) with row_tile a multiple of 8."""
    Mp = _round_up(M, 8)
    tm = min(target, Mp)
    Mp = _round_up(Mp, tm)
    g = Mp // tm
    if g == 1 and Mp >= 16 and Mp % 16 == 0:
        # keep at least two parallel grid steps (both v7x TensorCores busy)
        tm = Mp // 2
        g = 2
    return Mp, tm, g


def _pad_rows(a, Mp):
    M = a.shape[0]
    if Mp == M:
        return a
    return jnp.pad(a, [(0, Mp - M)] + [(0, 0)] * (a.ndim - 1))


# ----------------------------- Pallas kernels ------------------------------

def _mlp2_kernel(x_ref, w1_ref, b1_ref, w2_ref, b2_ref, o_ref, *, relu_out):
    h = jnp.dot(x_ref[...], w1_ref[...], preferred_element_type=jnp.float32) + b1_ref[...]
    h = jnp.maximum(h, 0.0)
    y = jnp.dot(h, w2_ref[...], preferred_element_type=jnp.float32) + b2_ref[...]
    if relu_out:
        y = jnp.maximum(y, 0.0)
    o_ref[...] = y


def pallas_mlp2(x, w1, b1, w2, b2, relu_out=False):
    """x: [M, Cin] -> Linear+ReLU+Linear (optional final ReLU), fused in VMEM."""
    M, Cin = x.shape
    C1, C2 = w1.shape[1], w2.shape[1]
    Mp, tm, g = _tiling(M)
    xp = _pad_rows(x, Mp)
    out = pl.pallas_call(
        functools.partial(_mlp2_kernel, relu_out=relu_out),
        out_shape=jax.ShapeDtypeStruct((Mp, C2), jnp.float32),
        grid_spec=pltpu.PrefetchScalarGridSpec(
            num_scalar_prefetch=0,
            grid=(g,),
            in_specs=[
                pl.BlockSpec((tm, Cin), lambda i: (i, 0)),
                pl.BlockSpec((Cin, C1), lambda i: (0, 0)),
                pl.BlockSpec((1, C1), lambda i: (0, 0)),
                pl.BlockSpec((C1, C2), lambda i: (0, 0)),
                pl.BlockSpec((1, C2), lambda i: (0, 0)),
            ],
            out_specs=pl.BlockSpec((tm, C2), lambda i: (i, 0)),
        ),
        compiler_params=pltpu.CompilerParams(dimension_semantics=("parallel",)),
    )(xp, w1, b1.reshape(1, C1), w2, b2.reshape(1, C2))
    return out[:M]


def _fc1_qkv_kernel(x_ref, w1_ref, b1_ref, wqkv_ref, o_ref):
    h = jnp.dot(x_ref[...], w1_ref[...], preferred_element_type=jnp.float32) + b1_ref[...]
    o_ref[...] = jnp.dot(h, wqkv_ref[...], preferred_element_type=jnp.float32)


def pallas_fc1_qkv(x, w1, b1, wqkv):
    """Fused fc1 (Linear) + concatenated q/k/v projection. Output [M, 3*D]."""
    M, Cin = x.shape
    D = w1.shape[1]
    Mp, tm, g = _tiling(M)
    xp = _pad_rows(x, Mp)
    out = pl.pallas_call(
        _fc1_qkv_kernel,
        out_shape=jax.ShapeDtypeStruct((Mp, 3 * D), jnp.float32),
        grid_spec=pltpu.PrefetchScalarGridSpec(
            num_scalar_prefetch=0,
            grid=(g,),
            in_specs=[
                pl.BlockSpec((tm, Cin), lambda i: (i, 0)),
                pl.BlockSpec((Cin, D), lambda i: (0, 0)),
                pl.BlockSpec((1, D), lambda i: (0, 0)),
                pl.BlockSpec((D, 3 * D), lambda i: (0, 0)),
            ],
            out_specs=pl.BlockSpec((tm, 3 * D), lambda i: (i, 0)),
        ),
        compiler_params=pltpu.CompilerParams(dimension_semantics=("parallel",)),
    )(xp, w1, b1.reshape(1, D), wqkv)
    return out[:M]


def _attn_block_kernel(q_ref, kg_ref, pe_ref, vg_ref, pre_ref,
                       wg1_ref, bg1_ref, wg2_ref, bg2_ref, wf_ref, bf_ref,
                       o_ref, *, scale, k_valid, flatten):
    pe = pe_ref[...]                               # (tm, K, D)
    kg = kg_ref[...]
    tm, K, D = kg.shape
    gin = q_ref[...] - kg + pe                     # q broadcast over K (sublanes)

    if flatten:
        g2 = gin.reshape(tm * K, D)                # one big 2-D MXU matmul per layer
        h = jnp.dot(g2, wg1_ref[...], preferred_element_type=jnp.float32) + bg1_ref[...]
        h = jnp.maximum(h, 0.0)
        h = jnp.dot(h, wg2_ref[...], preferred_element_type=jnp.float32) + bg2_ref[...]
        logits = h.reshape(tm, K, D)
    else:
        h = jnp.einsum('mkc,cd->mkd', gin, wg1_ref[...],
                       preferred_element_type=jnp.float32) + bg1_ref[...]
        h = jnp.maximum(h, 0.0)
        logits = jnp.einsum('mkc,cd->mkd', h, wg2_ref[...],
                            preferred_element_type=jnp.float32) + bg2_ref[...]

    a = logits * scale
    if k_valid < K:                                # mask padded neighbours
        nbr = jax.lax.broadcasted_iota(jnp.int32, (tm, K, D), 1)
        a = jnp.where(nbr < k_valid, a, -1e30)
    m = jnp.max(a, axis=1, keepdims=True)
    e = jnp.exp(a - m)
    attn = e / jnp.sum(e, axis=1, keepdims=True)   # softmax over K (dim=-2)
    res = jnp.sum(attn * (vg_ref[...] + pe), axis=1)            # (tm, D)
    out = jnp.dot(res, wf_ref[...], preferred_element_type=jnp.float32) + bf_ref[...]
    o_ref[...] = out + pre_ref[...]                # fc2 + residual, lane-dense output


def pallas_attn_block(q, kg, pe, vg, pre, wg1, bg1, wg2, bg2, wf, bf, *, scale, k_valid):
    """Fused fc_gamma + vector-attention softmax + weighted sum + fc2 + residual."""
    M, K, D = kg.shape
    d_out = wf.shape[1]
    Mp, tm, g = _tiling(M)
    q, kg, pe, vg, pre = (_pad_rows(a, Mp) for a in (q, kg, pe, vg, pre))
    flatten = (K % 8 == 0)
    out = pl.pallas_call(
        functools.partial(_attn_block_kernel, scale=scale, k_valid=k_valid,
                          flatten=flatten),
        out_shape=jax.ShapeDtypeStruct((Mp, d_out), jnp.float32),
        grid_spec=pltpu.PrefetchScalarGridSpec(
            num_scalar_prefetch=0,
            grid=(g,),
            in_specs=[
                pl.BlockSpec((tm, 1, D), lambda i: (i, 0, 0)),
                pl.BlockSpec((tm, K, D), lambda i: (i, 0, 0)),
                pl.BlockSpec((tm, K, D), lambda i: (i, 0, 0)),
                pl.BlockSpec((tm, K, D), lambda i: (i, 0, 0)),
                pl.BlockSpec((tm, d_out), lambda i: (i, 0)),
                pl.BlockSpec((D, D), lambda i: (0, 0)),
                pl.BlockSpec((1, D), lambda i: (0, 0)),
                pl.BlockSpec((D, D), lambda i: (0, 0)),
                pl.BlockSpec((1, D), lambda i: (0, 0)),
                pl.BlockSpec((D, d_out), lambda i: (0, 0)),
                pl.BlockSpec((1, d_out), lambda i: (0, 0)),
            ],
            out_specs=pl.BlockSpec((tm, d_out), lambda i: (i, 0)),
        ),
        compiler_params=pltpu.CompilerParams(dimension_semantics=("parallel",)),
    )(q, kg, pe, vg, pre, wg1, bg1.reshape(1, D), wg2, bg2.reshape(1, D),
      wf, bf.reshape(1, d_out))
    return out[:M]


def _samlp_kernel(x_ref, w1_ref, b1_ref, w2_ref, b2_ref, o_ref, *, flatten):
    x = x_ref[...]                                 # (tm, K, Cin)
    tm, K, Cin = x.shape
    if flatten:                                    # flat 2-D matmuls (K multiple of 8)
        x2 = x.reshape(tm * K, Cin)
        h = jnp.maximum(jnp.dot(x2, w1_ref[...],
                                preferred_element_type=jnp.float32) + b1_ref[...], 0.0)
        h = jnp.maximum(jnp.dot(h, w2_ref[...],
                                preferred_element_type=jnp.float32) + b2_ref[...], 0.0)
        h = h.reshape(tm, K, h.shape[-1])
    else:
        h = jnp.maximum(jnp.einsum('mkc,cd->mkd', x, w1_ref[...],
                                   preferred_element_type=jnp.float32) + b1_ref[...], 0.0)
        h = jnp.maximum(jnp.einsum('mkc,cd->mkd', h, w2_ref[...],
                                   preferred_element_type=jnp.float32) + b2_ref[...], 0.0)
    o_ref[...] = jnp.max(h, axis=1)                # max over neighbours


def pallas_group_mlp_max(x, w1, b1, w2, b2):
    """x: [M, K, Cin] -> two (conv1x1+BN+ReLU) then max over K -> [M, C2]."""
    M, K, Cin = x.shape
    C1, C2 = w1.shape[1], w2.shape[1]
    Mp, tm, g = _tiling(M)
    xp = _pad_rows(x, Mp)
    flatten = (K % 8 == 0)
    out = pl.pallas_call(
        functools.partial(_samlp_kernel, flatten=flatten),
        out_shape=jax.ShapeDtypeStruct((Mp, C2), jnp.float32),
        grid_spec=pltpu.PrefetchScalarGridSpec(
            num_scalar_prefetch=0,
            grid=(g,),
            in_specs=[
                pl.BlockSpec((tm, K, Cin), lambda i: (i, 0, 0)),
                pl.BlockSpec((Cin, C1), lambda i: (0, 0)),
                pl.BlockSpec((1, C1), lambda i: (0, 0)),
                pl.BlockSpec((C1, C2), lambda i: (0, 0)),
                pl.BlockSpec((1, C2), lambda i: (0, 0)),
            ],
            out_specs=pl.BlockSpec((tm, C2), lambda i: (i, 0)),
        ),
        compiler_params=pltpu.CompilerParams(dimension_semantics=("parallel",)),
    )(xp, w1, b1.reshape(1, C1), w2, b2.reshape(1, C2))
    return out[:M]


def _head_kernel(x_ref, w1_ref, b1_ref, w2_ref, b2_ref, w3_ref, b3_ref, o_ref):
    pooled = jnp.mean(x_ref[...], axis=1)                         # mean over points
    h = jnp.maximum(jnp.dot(pooled, w1_ref[...],
                            preferred_element_type=jnp.float32) + b1_ref[...], 0.0)
    h = jnp.maximum(jnp.dot(h, w2_ref[...],
                            preferred_element_type=jnp.float32) + b2_ref[...], 0.0)
    o_ref[...] = jnp.dot(h, w3_ref[...],
                         preferred_element_type=jnp.float32) + b3_ref[...]


def pallas_head(points, p1, p2, p3):
    """Fused mean-pool + 3-layer classification head. points: [B, N, C]."""
    B = points.shape[0]
    (w1, b1), (w2, b2), (w3, b3) = p1, p2, p3
    nc = w3.shape[1]
    return pl.pallas_call(
        _head_kernel,
        out_shape=jax.ShapeDtypeStruct((B, nc), jnp.float32),
    )(points, w1, b1.reshape(1, -1), w2, b2.reshape(1, -1), w3, b3.reshape(1, -1))


# ------------------------------- JAX glue ----------------------------------
# TODO(synk): farthest-point sampling and kNN argsort/gather are sequential /
# data-dependent sort+gather ops with no clean Pallas TPU equivalent; kept in
# plain JAX (FPS uses a deterministic start index instead of torch.randint).
# The kNN gather of k/v could be moved in-kernel via scalar-prefetch index maps
# later.

def square_distance(src, dst):
    return jnp.sum((src[:, :, None, :] - dst[:, None, :, :]) ** 2, axis=-1)


def index_points(points, idx):
    B = points.shape[0]
    batch = jnp.arange(B).reshape((B,) + (1,) * (idx.ndim - 1))
    return points[batch, idx]


def farthest_point_sample(xyz, npoint):
    B, N, _ = xyz.shape

    def body(i, carry):
        centroids, distance, farthest = carry
        centroids = centroids.at[:, i].set(farthest)
        centroid = xyz[jnp.arange(B), farthest][:, None, :]           # [B,1,3]
        dist = jnp.sum((xyz - centroid) ** 2, axis=-1)
        distance = jnp.minimum(distance, dist)
        farthest = jnp.argmax(distance, axis=-1).astype(jnp.int32)
        return centroids, distance, farthest

    centroids = jnp.zeros((B, npoint), dtype=jnp.int32)
    distance = jnp.full((B, N), 1e10, dtype=jnp.float32)
    farthest = jnp.zeros((B,), dtype=jnp.int32)
    centroids, _, _ = jax.lax.fori_loop(0, npoint, body,
                                        (centroids, distance, farthest))
    return centroids


# ----------------------------- module forward ------------------------------

def transformer_block(p, xyz, features, nneighbor):
    B, N, d_points = features.shape
    D = p['fc1'][0].shape[1]
    k = min(nneighbor, N)
    M = B * N

    dists = square_distance(xyz, xyz)
    knn_idx = jnp.argsort(dists, axis=-1)[:, :, :k]                   # [B,N,k]
    knn_xyz = index_points(xyz, knn_idx)                              # [B,N,k,3]

    pre = features

    # fused fc1 + w_q|w_k|w_v (single kernel, Cout = 3*D)
    qkv = pallas_fc1_qkv(features.reshape(M, d_points), p['fc1'][0], p['fc1'][1],
                         p['wqkv'])
    q = qkv[:, :D]
    kproj = qkv[:, D:2 * D].reshape(B, N, D)
    vproj = qkv[:, 2 * D:].reshape(B, N, D)

    k_g = index_points(kproj, knn_idx)                                # [B,N,k,D]
    v_g = index_points(vproj, knn_idx)

    # fused fc_delta (Linear+ReLU+Linear) positional encoding
    rel = (xyz[:, :, None, :] - knn_xyz).reshape(M * k, 3)
    pe = pallas_mlp2(rel, p['delta1'][0], p['delta1'][1],
                     p['delta2'][0], p['delta2'][1]).reshape(B, N, k, D)

    # pad K to a multiple of 8 so in-kernel layouts stay tile friendly
    Kp = _round_up(k, 8)
    if Kp != k:
        padK = ((0, 0), (0, 0), (0, Kp - k), (0, 0))
        k_g = jnp.pad(k_g, padK)
        v_g = jnp.pad(v_g, padK)
        pe = jnp.pad(pe, padK)

    scale = 1.0 / math.sqrt(D)
    res = pallas_attn_block(
        q.reshape(M, 1, D),
        k_g.reshape(M, Kp, D), pe.reshape(M, Kp, D), v_g.reshape(M, Kp, D),
        pre.reshape(M, d_points),
        p['gamma1'][0], p['gamma1'][1], p['gamma2'][0], p['gamma2'][1],
        p['fc2'][0], p['fc2'][1],
        scale=scale, k_valid=k)
    return res.reshape(B, N, d_points)


def transition_down(p, xyz, points, npoint, nsample):
    B, N, _ = xyz.shape
    nsample = min(nsample, N)
    fps_idx = farthest_point_sample(xyz, npoint)                      # [B,S]
    new_xyz = index_points(xyz, fps_idx)                              # [B,S,3]
    dists = square_distance(new_xyz, xyz)
    idx = jnp.argsort(dists, axis=-1)[:, :, :nsample]                 # [B,S,K]
    grouped_xyz = index_points(xyz, idx)                              # [B,S,K,3]
    grouped_xyz_norm = grouped_xyz - new_xyz[:, :, None, :]
    grouped_points = index_points(points, idx)                        # [B,S,K,D]
    new_points = jnp.concatenate([grouped_xyz_norm, grouped_points], axis=-1)
    S, K, Cin = npoint, nsample, new_points.shape[-1]
    feats = pallas_group_mlp_max(new_points.reshape(B * S, K, Cin),
                                 p['w1'], p['b1'], p['w2'], p['b2']).reshape(B, S, -1)
    return new_xyz, feats


def point_transformer_cls(params, x, cfg):
    B, N, _ = x.shape
    xyz = x[..., :3]
    # backbone fc1: Linear + ReLU + Linear fused into one kernel
    h = pallas_mlp2(x.reshape(B * N, cfg['input_dim']),
                    params['fc1a'][0], params['fc1a'][1],
                    params['fc1b'][0], params['fc1b'][1])
    points = h.reshape(B, N, 32)
    points = transformer_block(params['transformer1'], xyz, points, cfg['nneighbor'])
    for i in range(cfg['nblocks']):
        npoint = cfg['num_points'] // (4 ** (i + 1))
        xyz, points = transition_down(params['td'][i], xyz, points, npoint,
                                      cfg['nneighbor'])
        points = transformer_block(params['tf'][i], xyz, points, cfg['nneighbor'])
    # fused mean-pool + classification head
    return pallas_head(points, params['fc2a'], params['fc2b'], params['fc2c'])


# ---------------------------- parameter init --------------------------------

def _init_linear(key, cin, cout, bias=True):
    k1, k2 = jax.random.split(key)
    bound = 1.0 / math.sqrt(cin)
    w = jax.random.uniform(k1, (cin, cout), jnp.float32, -bound, bound)
    if bias:
        b = jax.random.uniform(k2, (cout,), jnp.float32, -bound, bound)
    else:
        b = jnp.zeros((cout,), jnp.float32)
    return w, b


def init_transformer(key, d_points, d_model):
    ks = jax.random.split(key, 9)
    wq, _ = _init_linear(ks[6], d_model, d_model, bias=False)
    wk, _ = _init_linear(ks[7], d_model, d_model, bias=False)
    wv, _ = _init_linear(ks[8], d_model, d_model, bias=False)
    return {
        'fc1': _init_linear(ks[0], d_points, d_model),
        'fc2': _init_linear(ks[1], d_model, d_points),
        'delta1': _init_linear(ks[2], 3, d_model),
        'delta2': _init_linear(ks[3], d_model, d_model),
        'gamma1': _init_linear(ks[4], d_model, d_model),
        'gamma2': _init_linear(ks[5], d_model, d_model),
        'wqkv': jnp.concatenate([wq, wk, wv], axis=1),   # fused q|k|v projection
    }


def init_transition_down(key, cin, c):
    k1, k2 = jax.random.split(key)
    w1, b1 = _init_linear(k1, cin, c)
    w2, b2 = _init_linear(k2, c, c)
    s = 1.0 / math.sqrt(1.0 + 1e-5)   # eval-mode BatchNorm2d folded (default stats)
    return {'w1': w1 * s, 'b1': b1 * s, 'w2': w2 * s, 'b2': b2 * s}


def init_params(key, cfg):
    nblocks = cfg['nblocks']
    keys = jax.random.split(key, 6 + 2 * nblocks)
    p = {
        'fc1a': _init_linear(keys[0], cfg['input_dim'], 32),
        'fc1b': _init_linear(keys[1], 32, 32),
        'transformer1': init_transformer(keys[2], 32, cfg['transformer_dim']),
        'td': [], 'tf': [],
    }
    for i in range(nblocks):
        channel = 32 * 2 ** (i + 1)
        p['td'].append(init_transition_down(keys[3 + 2 * i], channel // 2 + 3, channel))
        p['tf'].append(init_transformer(keys[4 + 2 * i], channel, cfg['transformer_dim']))
    base = 3 + 2 * nblocks
    p['fc2a'] = _init_linear(keys[base], 32 * 2 ** nblocks, 256)
    p['fc2b'] = _init_linear(keys[base + 1], 256, 64)
    p['fc2c'] = _init_linear(keys[base + 2], 64, cfg['num_class'])
    return p


# --------------------------------- main -------------------------------------

if __name__ == "__main__":
    cfg = dict(num_points=32, nblocks=2, nneighbor=8, num_class=5,
               input_dim=6, transformer_dim=32)
    key = jax.random.PRNGKey(0)
    pkey, xkey = jax.random.split(key)
    params = init_params(pkey, cfg)
    x = jax.random.normal(xkey, (2, cfg['num_points'], cfg['input_dim']), jnp.float32)

    forward = jax.jit(functools.partial(point_transformer_cls, cfg=cfg))
    out = jax.block_until_ready(forward(params, x))
    assert out.shape == (2, cfg['num_class'])
    assert bool(jnp.all(jnp.isfinite(out)))
    print("KERNEL_OK")
</pallas_src>

<mosaic_0001>
module attributes {stable_mosaic.version = 11 : i64} {
  func.func @_mlp2_kernel(%arg0: i32, %arg1: memref<256x3xf32, #tpu.memory_space<vmem>>, %arg2: memref<3x32xf32, #tpu.memory_space<vmem>>, %arg3: memref<1x32xf32, #tpu.memory_space<vmem>>, %arg4: memref<32x32xf32, #tpu.memory_space<vmem>>, %arg5: memref<1x32xf32, #tpu.memory_space<vmem>>, %arg6: memref<256x32xf32, #tpu.memory_space<vmem>>) attributes {dimension_semantics = [#tpu.dimension_semantics<parallel>], iteration_bounds = array<i64: 2>, scalar_prefetch = 0 : i64, scratch_operands = 0 : i64, tpu.core_type = #tpu.core_type<tc>, window_params = [{transform_indices = @transform_0, window_bounds = array<i64: 256, 3>}, {pipeline_mode = #tpu.pipeline_mode<synchronous>, transform_indices = @transform_1, window_bounds = array<i64: 3, 32>}, {pipeline_mode = #tpu.pipeline_mode<synchronous>, transform_indices = @transform_2, window_bounds = array<i64: 1, 32>}, {pipeline_mode = #tpu.pipeline_mode<synchronous>, transform_indices = @transform_3, window_bounds = array<i64: 32, 32>}, {pipeline_mode = #tpu.pipeline_mode<synchronous>, transform_indices = @transform_4, window_bounds = array<i64: 1, 32>}, {transform_indices = @transform_5, window_bounds = array<i64: 256, 32>}]} {
    %c0 = arith.constant 0 : index
    %c0_0 = arith.constant 0 : index
    %0 = vector.load %arg1[%c0, %c0_0] : memref<256x3xf32, #tpu.memory_space<vmem>>, vector<256x3xf32>
    %c0_1 = arith.constant 0 : index
    %c0_2 = arith.constant 0 : index
    %1 = vector.load %arg2[%c0_1, %c0_2] : memref<3x32xf32, #tpu.memory_space<vmem>>, vector<3x32xf32>
    %cst = arith.constant dense<0.000000e+00> : vector<256x32xf32>
    %2 = tpu.matmul %0, %1, %cst {dimension_numbers = #tpu.dot_dimension_numbers<[1], [0], [0], [1], [0, 0, 1, 1], [], []>} : vector<256x3xf32>, vector<3x32xf32>, vector<256x32xf32> -> vector<256x32xf32>
    %c0_3 = arith.constant 0 : index
    %c0_4 = arith.constant 0 : index
    %3 = vector.load %arg3[%c0_3, %c0_4] : memref<1x32xf32, #tpu.memory_space<vmem>>, vector<1x32xf32>
    %4 = vector.broadcast %3 : vector<1x32xf32> to vector<256x32xf32>
    %5 = arith.addf %2, %4 : vector<256x32xf32>
    %cst_5 = arith.constant 0.000000e+00 : f32
    %6 = vector.broadcast %cst_5 : f32 to vector<256x32xf32>
    %7 = arith.maximumf %5, %6 : vector<256x32xf32>
    %c0_6 = arith.constant 0 : index
    %c0_7 = arith.constant 0 : index
    %8 = vector.load %arg4[%c0_6, %c0_7] : memref<32x32xf32, #tpu.memory_space<vmem>>, vector<32x32xf32>
    %cst_8 = arith.constant dense<0.000000e+00> : vector<256x32xf32>
    %9 = tpu.matmul %7, %8, %cst_8 {dimension_numbers = #tpu.dot_dimension_numbers<[1], [0], [0], [1], [0, 0, 1, 1], [], []>} : vector<256x32xf32>, vector<32x32xf32>, vector<256x32xf32> -> vector<256x32xf32>
    %c0_9 = arith.constant 0 : index
    %c0_10 = arith.constant 0 : index
    %10 = vector.load %arg5[%c0_9, %c0_10] : memref<1x32xf32, #tpu.memory_space<vmem>>, vector<1x32xf32>
    %11 = vector.broadcast %10 : vector<1x32xf32> to vector<256x32xf32>
    %12 = arith.addf %9, %11 : vector<256x32xf32>
    %c0_11 = arith.constant 0 : index
    %c0_12 = arith.constant 0 : index
    %13 = vector.load %arg6[%c0_11, %c0_12] : memref<256x32xf32, #tpu.memory_space<vmem>>, vector<256x32xf32>
    tpu.vector_store %arg6[%c0_11, %c0_12], %12 {strides = array<i32>} : memref<256x32xf32, #tpu.memory_space<vmem>>, vector<256x32xf32>,
    return
  }
  func.func @transform_0(%arg0: i32) -> (i32, i32) {
    %c0_i32 = arith.constant 0 : i32
    %c0_i32_0 = arith.constant 0 : i32
    return %arg0, %c0_i32 : i32, i32
  }
  func.func @transform_1(%arg0: i32) -> (i32, i32) {
    %c0_i32 = arith.constant 0 : i32
    %c0_i32_0 = arith.constant 0 : i32
    %c0_i32_1 = arith.constant 0 : i32
    return %c0_i32, %c0_i32_0 : i32, i32
  }
  func.func @transform_2(%arg0: i32) -> (i32, i32) {
    %c0_i32 = arith.constant 0 : i32
    %c0_i32_0 = arith.constant 0 : i32
    %c0_i32_1 = arith.constant 0 : i32
    return %c0_i32, %c0_i32_0 : i32, i32
  }
  func.func @transform_3(%arg0: i32) -> (i32, i32) {
    %c0_i32 = arith.constant 0 : i32
    %c0_i32_0 = arith.constant 0 : i32
    %c0_i32_1 = arith.constant 0 : i32
    return %c0_i32, %c0_i32_0 : i32, i32
  }
  func.func @transform_4(%arg0: i32) -> (i32, i32) {
    %c0_i32 = arith.constant 0 : i32
    %c0_i32_0 = arith.constant 0 : i32
    %c0_i32_1 = arith.constant 0 : i32
    return %c0_i32, %c0_i32_0 : i32, i32
  }
  func.func @transform_5(%arg0: i32) -> (i32, i32) {
    %c0_i32 = arith.constant 0 : i32
    %c0_i32_0 = arith.constant 0 : i32
    return %arg0, %c0_i32 : i32, i32
  }
}

module attributes {stable_mosaic.version = 11 : i64} {
  func.func @_mlp2_kernel(%arg0: i32, %arg1: memref<32x6xf32, #tpu.memory_space<vmem>>, %arg2: memref<6x32xf32, #tpu.memory_space<vmem>>, %arg3: memref<1x32xf32, #tpu.memory_space<vmem>>, %arg4: memref<32x32xf32, #tpu.memory_space<vmem>>, %arg5: memref<1x32xf32, #tpu.memory_space<vmem>>, %arg6: memref<32x32xf32, #tpu.memory_space<vmem>>) attributes {dimension_semantics = [#tpu.dimension_semantics<parallel>], iteration_bounds = array<i64: 2>, scalar_prefetch = 0 : i64, scratch_operands = 0 : i64, tpu.core_type = #tpu.core_type<tc>, window_params = [{transform_indices = @transform_0, window_bounds = array<i64: 32, 6>}, {pipeline_mode = #tpu.pipeline_mode<synchronous>, transform_indices = @transform_1, window_bounds = array<i64: 6, 32>}, {pipeline_mode = #tpu.pipeline_mode<synchronous>, transform_indices = @transform_2, window_bounds = array<i64: 1, 32>}, {pipeline_mode = #tpu.pipeline_mode<synchronous>, transform_indices = @transform_3, window_bounds = array<i64: 32, 32>}, {pipeline_mode = #tpu.pipeline_mode<synchronous>, transform_indices = @transform_4, window_bounds = array<i64: 1, 32>}, {transform_indices = @transform_5, window_bounds = array<i64: 32, 32>}]} {
    %c0 = arith.constant 0 : index
    %c0_0 = arith.constant 0 : index
    %0 = vector.load %arg1[%c0, %c0_0] : memref<32x6xf32, #tpu.memory_space<vmem>>, vector<32x6xf32>
    %c0_1 = arith.constant 0 : index
    %c0_2 = arith.constant 0 : index
    %1 = vector.load %arg2[%c0_1, %c0_2] : memref<6x32xf32, #tpu.memory_space<vmem>>, vector<6x32xf32>
    %cst = arith.constant dense<0.000000e+00> : vector<32x32xf32>
    %2 = tpu.matmul %0, %1, %cst {dimension_numbers = #tpu.dot_dimension_numbers<[1], [0], [0], [1], [0, 0, 1, 1], [], []>} : vector<32x6xf32>, vector<6x32xf32>, vector<32x32xf32> -> vector<32x32xf32>
    %c0_3 = arith.constant 0 : index
    %c0_4 = arith.constant 0 : index
    %3 = vector.load %arg3[%c0_3, %c0_4] : memref<1x32xf32, #tpu.memory_space<vmem>>, vector<1x32xf32>
    %4 = vector.broadcast %3 : vector<1x32xf32> to vector<32x32xf32>
    %5 = arith.addf %2, %4 : vector<32x32xf32>
    %cst_5 = arith.constant 0.000000e+00 : f32
    %6 = vector.broadcast %cst_5 : f32 to vector<32x32xf32>
    %7 = arith.maximumf %5, %6 : vector<32x32xf32>
    %c0_6 = arith.constant 0 : index
    %c0_7 = arith.constant 0 : index
    %8 = vector.load %arg4[%c0_6, %c0_7] : memref<32x32xf32, #tpu.memory_space<vmem>>, vector<32x32xf32>
    %cst_8 = arith.constant dense<0.000000e+00> : vector<32x32xf32>
    %9 = tpu.matmul %7, %8, %cst_8 {dimension_numbers = #tpu.dot_dimension_numbers<[1], [0], [0], [1], [0, 0, 1, 1], [], []>} : vector<32x32xf32>, vector<32x32xf32>, vector<32x32xf32> -> vector<32x32xf32>
    %c0_9 = arith.constant 0 : index
    %c0_10 = arith.constant 0 : index
    %10 = vector.load %arg5[%c0_9, %c0_10] : memref<1x32xf32, #tpu.memory_space<vmem>>, vector<1x32xf32>
    %11 = vector.broadcast %10 : vector<1x32xf32> to vector<32x32xf32>
    %12 = arith.addf %9, %11 : vector<32x32xf32>
    %c0_11 = arith.constant 0 : index
    %c0_12 = arith.constant 0 : index
    %13 = vector.load %arg6[%c0_11, %c0_12] : memref<32x32xf32, #tpu.memory_space<vmem>>, vector<32x32xf32>
    tpu.vector_store %arg6[%c0_11, %c0_12], %12 {strides = array<i32>} : memref<32x32xf32, #tpu.memory_space<vmem>>, vector<32x32xf32>,
    return
  }
  func.func @transform_0(%arg0: i32) -> (i32, i32) {
    %c0_i32 = arith.constant 0 : i32
    %c0_i32_0 = arith.constant 0 : i32
    return %arg0, %c0_i32 : i32, i32
  }
  func.func @transform_1(%arg0: i32) -> (i32, i32) {
    %c0_i32 = arith.constant 0 : i32
    %c0_i32_0 = arith.constant 0 : i32
    %c0_i32_1 = arith.constant 0 : i32
    return %c0_i32, %c0_i32_0 : i32, i32
  }
  func.func @transform_2(%arg0: i32) -> (i32, i32) {
    %c0_i32 = arith.constant 0 : i32
    %c0_i32_0 = arith.constant 0 : i32
    %c0_i32_1 = arith.constant 0 : i32
    return %c0_i32, %c0_i32_0 : i32, i32
  }
  func.func @transform_3(%arg0: i32) -> (i32, i32) {
    %c0_i32 = arith.constant 0 : i32
    %c0_i32_0 = arith.constant 0 : i32
    %c0_i32_1 = arith.constant 0 : i32
    return %c0_i32, %c0_i32_0 : i32, i32
  }
  func.func @transform_4(%arg0: i32) -> (i32, i32) {
    %c0_i32 = arith.constant 0 : i32
    %c0_i32_0 = arith.constant 0 : i32
    %c0_i32_1 = arith.constant 0 : i32
    return %c0_i32, %c0_i32_0 : i32, i32
  }
  func.func @transform_5(%arg0: i32) -> (i32, i32) {
    %c0_i32 = arith.constant 0 : i32
    %c0_i32_0 = arith.constant 0 : i32
    return %arg0, %c0_i32 : i32, i32
  }
}

module attributes {stable_mosaic.version = 11 : i64} {
  func.func @_fc1_qkv_kernel(%arg0: i32, %arg1: memref<32x32xf32, #tpu.memory_space<vmem>>, %arg2: memref<32x32xf32, #tpu.memory_space<vmem>>, %arg3: memref<1x32xf32, #tpu.memory_space<vmem>>, %arg4: memref<32x96xf32, #tpu.memory_space<vmem>>, %arg5: memref<32x96xf32, #tpu.memory_space<vmem>>) attributes {dimension_semantics = [#tpu.dimension_semantics<parallel>], iteration_bounds = array<i64: 2>, scalar_prefetch = 0 : i64, scratch_operands = 0 : i64, tpu.core_type = #tpu.core_type<tc>, window_params = [{transform_indices = @transform_0, window_bounds = array<i64: 32, 32>}, {pipeline_mode = #tpu.pipeline_mode<synchronous>, transform_indices = @transform_1, window_bounds = array<i64: 32, 32>}, {pipeline_mode = #tpu.pipeline_mode<synchronous>, transform_indices = @transform_2, window_bounds = array<i64: 1, 32>}, {pipeline_mode = #tpu.pipeline_mode<synchronous>, transform_indices = @transform_3, window_bounds = array<i64: 32, 96>}, {transform_indices = @transform_4, window_bounds = array<i64: 32, 96>}]} {
    %c0 = arith.constant 0 : index
    %c0_0 = arith.constant 0 : index
    %0 = vector.load %arg1[%c0, %c0_0] : memref<32x32xf32, #tpu.memory_space<vmem>>, vector<32x32xf32>
    %c0_1 = arith.constant 0 : index
    %c0_2 = arith.constant 0 : index
    %1 = vector.load %arg2[%c0_1, %c0_2] : memref<32x32xf32, #tpu.memory_space<vmem>>, vector<32x32xf32>
    %cst = arith.constant dense<0.000000e+00> : vector<32x32xf32>
    %2 = tpu.matmul %0, %1, %cst {dimension_numbers = #tpu.dot_dimension_numbers<[1], [0], [0], [1], [0, 0, 1, 1], [], []>} : vector<32x32xf32>, vector<32x32xf32>, vector<32x32xf32> -> vector<32x32xf32>
    %c0_3 = arith.constant 0 : index
    %c0_4 = arith.constant 0 : index
    %3 = vector.load %arg3[%c0_3, %c0_4] : memref<1x32xf32, #tpu.memory_space<vmem>>, vector<1x32xf32>
    %4 = vector.broadcast %3 : vector<1x32xf32> to vector<32x32xf32>
    %5 = arith.addf %2, %4 : vector<32x32xf32>
    %c0_5 = arith.constant 0 : index
    %c0_6 = arith.constant 0 : index
    %6 = vector.load %arg4[%c0_5, %c0_6] : memref<32x96xf32, #tpu.memory_space<vmem>>, vector<32x96xf32>
    %cst_7 = arith.constant dense<0.000000e+00> : vector<32x96xf32>
    %7 = tpu.matmul %5, %6, %cst_7 {dimension_numbers = #tpu.dot_dimension_numbers<[1], [0], [0], [1], [0, 0, 1, 1], [], []>} : vector<32x32xf32>, vector<32x96xf32>, vector<32x96xf32> -> vector<32x96xf32>
    %c0_8 = arith.constant 0 : index
    %c0_9 = arith.constant 0 : index
    %8 = vector.load %arg5[%c0_8, %c0_9] : memref<32x96xf32, #tpu.memory_space<vmem>>, vector<32x96xf32>
    tpu.vector_store %arg5[%c0_8, %c0_9], %7 {strides = array<i32>} : memref<32x96xf32, #tpu.memory_space<vmem>>, vector<32x96xf32>,
    return
  }
  func.func @transform_0(%arg0: i32) -> (i32, i32) {
    %c0_i32 = arith.constant 0 : i32
    %c0_i32_0 = arith.constant 0 : i32
    return %arg0, %c0_i32 : i32, i32
  }
  func.func @transform_1(%arg0: i32) -> (i32, i32) {
    %c0_i32 = arith.constant 0 : i32
    %c0_i32_0 = arith.constant 0 : i32
    %c0_i32_1 = arith.constant 0 : i32
    return %c0_i32, %c0_i32_0 : i32, i32
  }
  func.func @transform_2(%arg0: i32) -> (i32, i32) {
    %c0_i32 = arith.constant 0 : i32
    %c0_i32_0 = arith.constant 0 : i32
    %c0_i32_1 = arith.constant 0 : i32
    return %c0_i32, %c0_i32_0 : i32, i32
  }
  func.func @transform_3(%arg0: i32) -> (i32, i32) {
    %c0_i32 = arith.constant 0 : i32
    %c0_i32_0 = arith.constant 0 : i32
    %c0_i32_1 = arith.constant 0 : i32
    return %c0_i32, %c0_i32_0 : i32, i32
  }
  func.func @transform_4(%arg0: i32) -> (i32, i32) {
    %c0_i32 = arith.constant 0 : i32
    %c0_i32_0 = arith.constant 0 : i32
    return %arg0, %c0_i32 : i32, i32
  }
}

module attributes {stable_mosaic.version = 11 : i64} {
  func.func @_attn_block_kernel(%arg0: i32, %arg1: memref<32x1x32xf32, #tpu.memory_space<vmem>>, %arg2: memref<32x8x32xf32, #tpu.memory_space<vmem>>, %arg3: memref<32x8x32xf32, #tpu.memory_space<vmem>>, %arg4: memref<32x8x32xf32, #tpu.memory_space<vmem>>, %arg5: memref<32x32xf32, #tpu.memory_space<vmem>>, %arg6: memref<32x32xf32, #tpu.memory_space<vmem>>, %arg7: memref<1x32xf32, #tpu.memory_space<vmem>>, %arg8: memref<32x32xf32, #tpu.memory_space<vmem>>, %arg9: memref<1x32xf32, #tpu.memory_space<vmem>>, %arg10: memref<32x32xf32, #tpu.memory_space<vmem>>, %arg11: memref<1x32xf32, #tpu.memory_space<vmem>>, %arg12: memref<32x32xf32, #tpu.memory_space<vmem>>) attributes {dimension_semantics = [#tpu.dimension_semantics<parallel>], iteration_bounds = array<i64: 2>, scalar_prefetch = 0 : i64, scratch_operands = 0 : i64, tpu.core_type = #tpu.core_type<tc>, window_params = [{transform_indices = @transform_0, window_bounds = array<i64: 32, 1, 32>}, {transform_indices = @transform_1, window_bounds = array<i64: 32, 8, 32>}, {transform_indices = @transform_2, window_bounds = array<i64: 32, 8, 32>}, {transform_indices = @transform_3, window_bounds = array<i64: 32, 8, 32>}, {transform_indices = @transform_4, window_bounds = array<i64: 32, 32>}, {pipeline_mode = #tpu.pipeline_mode<synchronous>, transform_indices = @transform_5, window_bounds = array<i64: 32, 32>}, {pipeline_mode = #tpu.pipeline_mode<synchronous>, transform_indices = @transform_6, window_bounds = array<i64: 1, 32>}, {pipeline_mode = #tpu.pipeline_mode<synchronous>, transform_indices = @transform_7, window_bounds = array<i64: 32, 32>}, {pipeline_mode = #tpu.pipeline_mode<synchronous>, transform_indices = @transform_8, window_bounds = array<i64: 1, 32>}, {pipeline_mode = #tpu.pipeline_mode<synchronous>, transform_indices = @transform_9, window_bounds = array<i64: 32, 32>}, {pipeline_mode = #tpu.pipeline_mode<synchronous>, transform_indices = @transform_10, window_bounds = array<i64: 1, 32>}, {transform_indices = @transform_11, window_bounds = array<i64: 32, 32>}]} {
    %c0 = arith.constant 0 : index
    %c0_0 = arith.constant 0 : index
    %c0_1 = arith.constant 0 : index
    %0 = vector.load %arg3[%c0, %c0_0, %c0_1] : memref<32x8x32xf32, #tpu.memory_space<vmem>>, vector<32x8x32xf32>
    %c0_2 = arith.constant 0 : index
    %c0_3 = arith.constant 0 : index
    %c0_4 = arith.constant 0 : index
    %1 = vector.load %arg2[%c0_2, %c0_3, %c0_4] : memref<32x8x32xf32, #tpu.memory_space<vmem>>, vector<32x8x32xf32>
    %c0_5 = arith.constant 0 : index
    %c0_6 = arith.constant 0 : index
    %c0_7 = arith.constant 0 : index
    %2 = vector.load %arg1[%c0_5, %c0_6, %c0_7] : memref<32x1x32xf32, #tpu.memory_space<vmem>>, vector<32x1x32xf32>
    %3 = vector.broadcast %2 : vector<32x1x32xf32> to vector<32x8x32xf32>
    %4 = arith.subf %3, %1 : vector<32x8x32xf32>
    %5 = arith.addf %4, %0 : vector<32x8x32xf32>
    %6 = vector.shape_cast %5 : vector<32x8x32xf32> to vector<256x32xf32>
    %c0_8 = arith.constant 0 : index
    %c0_9 = arith.constant 0 : index
    %7 = vector.load %arg6[%c0_8, %c0_9] : memref<32x32xf32, #tpu.memory_space<vmem>>, vector<32x32xf32>
    %cst = arith.constant dense<0.000000e+00> : vector<256x32xf32>
    %8 = tpu.matmul %6, %7, %cst {dimension_numbers = #tpu.dot_dimension_numbers<[1], [0], [0], [1], [0, 0, 1, 1], [], []>} : vector<256x32xf32>, vector<32x32xf32>, vector<256x32xf32> -> vector<256x32xf32>
    %c0_10 = arith.constant 0 : index
    %c0_11 = arith.constant 0 : index
    %9 = vector.load %arg7[%c0_10, %c0_11] : memref<1x32xf32, #tpu.memory_space<vmem>>, vector<1x32xf32>
    %10 = vector.broadcast %9 : vector<1x32xf32> to vector<256x32xf32>
    %11 = arith.addf %8, %10 : vector<256x32xf32>
    %cst_12 = arith.constant 0.000000e+00 : f32
    %12 = vector.broadcast %cst_12 : f32 to vector<256x32xf32>
    %13 = arith.maximumf %11, %12 : vector<256x32xf32>
    %c0_13 = arith.constant 0 : index
    %c0_14 = arith.constant 0 : index
    %14 = vector.load %arg8[%c0_13, %c0_14] : memref<32x32xf32, #tpu.memory_space<vmem>>, vector<32x32xf32>
    %cst_15 = arith.constant dense<0.000000e+00> : vector<256x32xf32>
    %15 = tpu.matmul %13, %14, %cst_15 {dimension_numbers = #tpu.dot_dimension_numbers<[1], [0], [0], [1], [0, 0, 1, 1], [], []>} : vector<256x32xf32>, vector<32x32xf32>, vector<256x32xf32> -> vector<256x32xf32>
    %c0_16 = arith.constant 0 : index
    %c0_17 = arith.constant 0 : index
    %16 = vector.load %arg9[%c0_16, %c0_17] : memref<1x32xf32, #tpu.memory_space<vmem>>, vector<1x32xf32>
    %17 = vector.broadcast %16 : vector<1x32xf32> to vector<256x32xf32>
    %18 = arith.addf %15, %17 : vector<256x32xf32>
    %19 = vector.shape_cast %18 : vector<256x32xf32> to vector<32x8x32xf32>
    %cst_18 = arith.constant 0.176776692 : f32
    %20 = vector.broadcast %cst_18 : f32 to vector<32x8x32xf32>
    %21 = arith.mulf %19, %20 : vector<32x8x32xf32>
    %cst_19 = arith.constant dense<0xFF800000> : vector<32x32xf32>
    %22 = vector.multi_reduction <maximumf>, %21, %cst_19 [1] : vector<32x8x32xf32> to vector<32x32xf32>
    %23 = vector.shape_cast %22 : vector<32x32xf32> to vector<32x1x32xf32>
    %24 = vector.broadcast %23 : vector<32x1x32xf32> to vector<32x8x32xf32>
    %25 = arith.subf %21, %24 : vector<32x8x32xf32>
    %26 = math.exp %25 : vector<32x8x32xf32>
    %cst_20 = arith.constant dense<0.000000e+00> : vector<32x32xf32>
    %27 = vector.multi_reduction <add>, %26, %cst_20 [1] : vector<32x8x32xf32> to vector<32x32xf32>
    %28 = vector.shape_cast %27 : vector<32x32xf32> to vector<32x1x32xf32>
    %29 = vector.broadcast %28 : vector<32x1x32xf32> to vector<32x8x32xf32>
    %30 = arith.divf %26, %29 : vector<32x8x32xf32>
    %c0_21 = arith.constant 0 : index
    %c0_22 = arith.constant 0 : index
    %c0_23 = arith.constant 0 : index
    %31 = vector.load %arg4[%c0_21, %c0_22, %c0_23] : memref<32x8x32xf32, #tpu.memory_space<vmem>>, vector<32x8x32xf32>
    %32 = arith.addf %31, %0 : vector<32x8x32xf32>
    %33 = arith.mulf %30, %32 : vector<32x8x32xf32>
    %cst_24 = arith.constant dense<0.000000e+00> : vector<32x32xf32>
    %34 = vector.multi_reduction <add>, %33, %cst_24 [1] : vector<32x8x32xf32> to vector<32x32xf32>
    %c0_25 = arith.constant 0 : index
    %c0_26 = arith.constant 0 : index
    %35 = vector.load %arg10[%c0_25, %c0_26] : memref<32x32xf32, #tpu.memory_space<vmem>>, vector<32x32xf32>
    %cst_27 = arith.constant dense<0.000000e+00> : vector<32x32xf32>
    %36 = tpu.matmul %34, %35, %cst_27 {dimension_numbers = #tpu.dot_dimension_numbers<[1], [0], [0], [1], [0, 0, 1, 1], [], []>} : vector<32x32xf32>, vector<32x32xf32>, vector<32x32xf32> -> vector<32x32xf32>
    %c0_28 = arith.constant 0 : index
    %c0_29 = arith.constant 0 : index
    %37 = vector.load %arg11[%c0_28, %c0_29] : memref<1x32xf32, #tpu.memory_space<vmem>>, vector<1x32xf32>
    %38 = vector.broadcast %37 : vector<1x32xf32> to vector<32x32xf32>
    %39 = arith.addf %36, %38 : vector<32x32xf32>
    %c0_30 = arith.constant 0 : index
    %c0_31 = arith.constant 0 : index
    %40 = vector.load %arg5[%c0_30, %c0_31] : memref<32x32xf32, #tpu.memory_space<vmem>>, vector<32x32xf32>
    %41 = arith.addf %39, %40 : vector<32x32xf32>
    %c0_32 = arith.constant 0 : index
    %c0_33 = arith.constant 0 : index
    %42 = vector.load %arg12[%c0_32, %c0_33] : memref<32x32xf32, #tpu.memory_space<vmem>>, vector<32x32xf32>
    tpu.vector_store %arg12[%c0_32, %c0_33], %41 {strides = array<i32>} : memref<32x32xf32, #tpu.memory_space<vmem>>, vector<32x32xf32>,
    return
  }
  func.func @transform_0(%arg0: i32) -> (i32, i32, i32) {
    %c0_i32 = arith.constant 0 : i32
    %c0_i32_0 = arith.constant 0 : i32
    %c0_i32_1 = arith.constant 0 : i32
    return %arg0, %c0_i32, %c0_i32_0 : i32, i32, i32
  }
  func.func @transform_1(%arg0: i32) -> (i32, i32, i32) {
    %c0_i32 = arith.constant 0 : i32
    %c0_i32_0 = arith.constant 0 : i32
    %c0_i32_1 = arith.constant 0 : i32
    return %arg0, %c0_i32, %c0_i32_0 : i32, i32, i32
  }
  func.func @transform_2(%arg0: i32) -> (i32, i32, i32) {
    %c0_i32 = arith.constant 0 : i32
    %c0_i32_0 = arith.constant 0 : i32
    %c0_i32_1 = arith.constant 0 : i32
    return %arg0, %c0_i32, %c0_i32_0 : i32, i32, i32
  }
  func.func @transform_3(%arg0: i32) -> (i32, i32, i32) {
    %c0_i32 = arith.constant 0 : i32
    %c0_i32_0 = arith.constant 0 : i32
    %c0_i32_1 = arith.constant 0 : i32
    return %arg0, %c0_i32, %c0_i32_0 : i32, i32, i32
  }
  func.func @transform_4(%arg0: i32) -> (i32, i32) {
    %c0_i32 = arith.constant 0 : i32
    %c0_i32_0 = arith.constant 0 : i32
    return %arg0, %c0_i32 : i32, i32
  }
  func.func @transform_5(%arg0: i32) -> (i32, i32) {
    %c0_i32 = arith.constant 0 : i32
    %c0_i32_0 = arith.constant 0 : i32
    %c0_i32_1 = arith.constant 0 : i32
    return %c0_i32, %c0_i32_0 : i32, i32
  }
  func.func @transform_6(%arg0: i32) -> (i32, i32) {
    %c0_i32 = arith.constant 0 : i32
    %c0_i32_0 = arith.constant 0 : i32
    %c0_i32_1 = arith.constant 0 : i32
    return %c0_i32, %c0_i32_0 : i32, i32
  }
  func.func @transform_7(%arg0: i32) -> (i32, i32) {
    %c0_i32 = arith.constant 0 : i32
    %c0_i32_0 = arith.constant 0 : i32
    %c0_i32_1 = arith.constant 0 : i32
    return %c0_i32, %c0_i32_0 : i32, i32
  }
  func.func @transform_8(%arg0: i32) -> (i32, i32) {
    %c0_i32 = arith.constant 0 : i32
    %c0_i32_0 = arith.constant 0 : i32
    %c0_i32_1 = arith.constant 0 : i32
    return %c0_i32, %c0_i32_0 : i32, i32
  }
  func.func @transform_9(%arg0: i32) -> (i32, i32) {
    %c0_i32 = arith.constant 0 : i32
    %c0_i32_0 = arith.constant 0 : i32
    %c0_i32_1 = arith.constant 0 : i32
    return %c0_i32, %c0_i32_0 : i32, i32
  }
  func.func @transform_10(%arg0: i32) -> (i32, i32) {
    %c0_i32 = arith.constant 0 : i32
    %c0_i32_0 = arith.constant 0 : i32
    %c0_i32_1 = arith.constant 0 : i32
    return %c0_i32, %c0_i32_0 : i32, i32
  }
  func.func @transform_11(%arg0: i32) -> (i32, i32) {
    %c0_i32 = arith.constant 0 : i32
    %c0_i32_0 = arith.constant 0 : i32
    return %arg0, %c0_i32 : i32, i32
  }
}

module attributes {stable_mosaic.version = 11 : i64} {
  func.func @_samlp_kernel(%arg0: i32, %arg1: memref<8x8x35xf32, #tpu.memory_space<vmem>>, %arg2: memref<35x64xf32, #tpu.memory_space<vmem>>, %arg3: memref<1x64xf32, #tpu.memory_space<vmem>>, %arg4: memref<64x64xf32, #tpu.memory_space<vmem>>, %arg5: memref<1x64xf32, #tpu.memory_space<vmem>>, %arg6: memref<8x64xf32, #tpu.memory_space<vmem>>) attributes {dimension_semantics = [#tpu.dimension_semantics<parallel>], iteration_bounds = array<i64: 2>, scalar_prefetch = 0 : i64, scratch_operands = 0 : i64, tpu.core_type = #tpu.core_type<tc>, window_params = [{transform_indices = @transform_0, window_bounds = array<i64: 8, 8, 35>}, {pipeline_mode = #tpu.pipeline_mode<synchronous>, transform_indices = @transform_1, window_bounds = array<i64: 35, 64>}, {pipeline_mode = #tpu.pipeline_mode<synchronous>, transform_indices = @transform_2, window_bounds = array<i64: 1, 64>}, {pipeline_mode = #tpu.pipeline_mode<synchronous>, transform_indices = @transform_3, window_bounds = array<i64: 64, 64>}, {pipeline_mode = #tpu.pipeline_mode<synchronous>, transform_indices = @transform_4, window_bounds = array<i64: 1, 64>}, {transform_indices = @transform_5, window_bounds = array<i64: 8, 64>}]} {
    %c0 = arith.constant 0 : index
    %c0_0 = arith.constant 0 : index
    %c0_1 = arith.constant 0 : index
    %0 = vector.load %arg1[%c0, %c0_0, %c0_1] : memref<8x8x35xf32, #tpu.memory_space<vmem>>, vector<8x8x35xf32>
    %1 = vector.shape_cast %0 : vector<8x8x35xf32> to vector<64x35xf32>
    %c0_2 = arith.constant 0 : index
    %c0_3 = arith.constant 0 : index
    %2 = vector.load %arg2[%c0_2, %c0_3] : memref<35x64xf32, #tpu.memory_space<vmem>>, vector<35x64xf32>
    %cst = arith.constant dense<0.000000e+00> : vector<64x64xf32>
    %3 = tpu.matmul %1, %2, %cst {dimension_numbers = #tpu.dot_dimension_numbers<[1], [0], [0], [1], [0, 0, 1, 1], [], []>} : vector<64x35xf32>, vector<35x64xf32>, vector<64x64xf32> -> vector<64x64xf32>
    %c0_4 = arith.constant 0 : index
    %c0_5 = arith.constant 0 : index
    %4 = vector.load %arg3[%c0_4, %c0_5] : memref<1x64xf32, #tpu.memory_space<vmem>>, vector<1x64xf32>
    %5 = vector.broadcast %4 : vector<1x64xf32> to vector<64x64xf32>
    %6 = arith.addf %3, %5 : vector<64x64xf32>
    %cst_6 = arith.constant 0.000000e+00 : f32
    %7 = vector.broadcast %cst_6 : f32 to vector<64x64xf32>
    %8 = arith.maximumf %6, %7 : vector<64x64xf32>
    %c0_7 = arith.constant 0 : index
    %c0_8 = arith.constant 0 : index
    %9 = vector.load %arg4[%c0_7, %c0_8] : memref<64x64xf32, #tpu.memory_space<vmem>>, vector<64x64xf32>
    %cst_9 = arith.constant dense<0.000000e+00> : vector<64x64xf32>
    %10 = tpu.matmul %8, %9, %cst_9 {dimension_numbers = #tpu.dot_dimension_numbers<[1], [0], [0], [1], [0, 0, 1, 1], [], []>} : vector<64x64xf32>, vector<64x64xf32>, vector<64x64xf32> -> vector<64x64xf32>
    %c0_10 = arith.constant 0 : index
    %c0_11 = arith.constant 0 : index
    %11 = vector.load %arg5[%c0_10, %c0_11] : memref<1x64xf32, #tpu.memory_space<vmem>>, vector<1x64xf32>
    %12 = vector.broadcast %11 : vector<1x64xf32> to vector<64x64xf32>
    %13 = arith.addf %10, %12 : vector<64x64xf32>
    %cst_12 = arith.constant 0.000000e+00 : f32
    %14 = vector.broadcast %cst_12 : f32 to vector<64x64xf32>
    %15 = arith.maximumf %13, %14 : vector<64x64xf32>
    %16 = vector.shape_cast %15 : vector<64x64xf32> to vector<8x8x64xf32>
    %cst_13 = arith.constant dense<0xFF800000> : vector<8x64xf32>
    %17 = vector.multi_reduction <maximumf>, %16, %cst_13 [1] : vector<8x8x64xf32> to vector<8x64xf32>
    %c0_14 = arith.constant 0 : index
    %c0_15 = arith.constant 0 : index
    %18 = vector.load %arg6[%c0_14, %c0_15] : memref<8x64xf32, #tpu.memory_space<vmem>>, vector<8x64xf32>
    tpu.vector_store %arg6[%c0_14, %c0_15], %17 {strides = array<i32>} : memref<8x64xf32, #tpu.memory_space<vmem>>, vector<8x64xf32>,
    return
  }
  func.func @transform_0(%arg0: i32) -> (i32, i32, i32) {
    %c0_i32 = arith.constant 0 : i32
    %c0_i32_0 = arith.constant 0 : i32
    %c0_i32_1 = arith.constant 0 : i32
    return %arg0, %c0_i32, %c0_i32_0 : i32, i32, i32
  }
  func.func @transform_1(%arg0: i32) -> (i32, i32) {
    %c0_i32 = arith.constant 0 : i32
    %c0_i32_0 = arith.constant 0 : i32
    %c0_i32_1 = arith.constant 0 : i32
    return %c0_i32, %c0_i32_0 : i32, i32
  }
  func.func @transform_2(%arg0: i32) -> (i32, i32) {
    %c0_i32 = arith.constant 0 : i32
    %c0_i32_0 = arith.constant 0 : i32
    %c0_i32_1 = arith.constant 0 : i32
    return %c0_i32, %c0_i32_0 : i32, i32
  }
  func.func @transform_3(%arg0: i32) -> (i32, i32) {
    %c0_i32 = arith.constant 0 : i32
    %c0_i32_0 = arith.constant 0 : i32
    %c0_i32_1 = arith.constant 0 : i32
    return %c0_i32, %c0_i32_0 : i32, i32
  }
  func.func @transform_4(%arg0: i32) -> (i32, i32) {
    %c0_i32 = arith.constant 0 : i32
    %c0_i32_0 = arith.constant 0 : i32
    %c0_i32_1 = arith.constant 0 : i32
    return %c0_i32, %c0_i32_0 : i32, i32
  }
  func.func @transform_5(%arg0: i32) -> (i32, i32) {
    %c0_i32 = arith.constant 0 : i32
    %c0_i32_0 = arith.constant 0 : i32
    return %arg0, %c0_i32 : i32, i32
  }
}

module attributes {stable_mosaic.version = 11 : i64} {
  func.func @_fc1_qkv_kernel(%arg0: i32, %arg1: memref<8x64xf32, #tpu.memory_space<vmem>>, %arg2: memref<64x32xf32, #tpu.memory_space<vmem>>, %arg3: memref<1x32xf32, #tpu.memory_space<vmem>>, %arg4: memref<32x96xf32, #tpu.memory_space<vmem>>, %arg5: memref<8x96xf32, #tpu.memory_space<vmem>>) attributes {dimension_semantics = [#tpu.dimension_semantics<parallel>], iteration_bounds = array<i64: 2>, scalar_prefetch = 0 : i64, scratch_operands = 0 : i64, tpu.core_type = #tpu.core_type<tc>, window_params = [{transform_indices = @transform_0, window_bounds = array<i64: 8, 64>}, {pipeline_mode = #tpu.pipeline_mode<synchronous>, transform_indices = @transform_1, window_bounds = array<i64: 64, 32>}, {pipeline_mode = #tpu.pipeline_mode<synchronous>, transform_indices = @transform_2, window_bounds = array<i64: 1, 32>}, {pipeline_mode = #tpu.pipeline_mode<synchronous>, transform_indices = @transform_3, window_bounds = array<i64: 32, 96>}, {transform_indices = @transform_4, window_bounds = array<i64: 8, 96>}]} {
    %c0 = arith.constant 0 : index
    %c0_0 = arith.constant 0 : index
    %0 = vector.load %arg1[%c0, %c0_0] : memref<8x64xf32, #tpu.memory_space<vmem>>, vector<8x64xf32>
    %c0_1 = arith.constant 0 : index
    %c0_2 = arith.constant 0 : index
    %1 = vector.load %arg2[%c0_1, %c0_2] : memref<64x32xf32, #tpu.memory_space<vmem>>, vector<64x32xf32>
    %cst = arith.constant dense<0.000000e+00> : vector<8x32xf32>
    %2 = tpu.matmul %0, %1, %cst {dimension_numbers = #tpu.dot_dimension_numbers<[1], [0], [0], [1], [0, 0, 1, 1], [], []>} : vector<8x64xf32>, vector<64x32xf32>, vector<8x32xf32> -> vector<8x32xf32>
    %c0_3 = arith.constant 0 : index
    %c0_4 = arith.constant 0 : index
    %3 = vector.load %arg3[%c0_3, %c0_4] : memref<1x32xf32, #tpu.memory_space<vmem>>, vector<1x32xf32>
    %4 = vector.broadcast %3 : vector<1x32xf32> to vector<8x32xf32>
    %5 = arith.addf %2, %4 : vector<8x32xf32>
    %c0_5 = arith.constant 0 : index
    %c0_6 = arith.constant 0 : index
    %6 = vector.load %arg4[%c0_5, %c0_6] : memref<32x96xf32, #tpu.memory_space<vmem>>, vector<32x96xf32>
    %cst_7 = arith.constant dense<0.000000e+00> : vector<8x96xf32>
    %7 = tpu.matmul %5, %6, %cst_7 {dimension_numbers = #tpu.dot_dimension_numbers<[1], [0], [0], [1], [0, 0, 1, 1], [], []>} : vector<8x32xf32>, vector<32x96xf32>, vector<8x96xf32> -> vector<8x96xf32>
    %c0_8 = arith.constant 0 : index
    %c0_9 = arith.constant 0 : index
    %8 = vector.load %arg5[%c0_8, %c0_9] : memref<8x96xf32, #tpu.memory_space<vmem>>, vector<8x96xf32>
    tpu.vector_store %arg5[%c0_8, %c0_9], %7 {strides = array<i32>} : memref<8x96xf32, #tpu.memory_space<vmem>>, vector<8x96xf32>,
    return
  }
  func.func @transform_0(%arg0: i32) -> (i32, i32) {
    %c0_i32 = arith.constant 0 : i32
    %c0_i32_0 = arith.constant 0 : i32
    return %arg0, %c0_i32 : i32, i32
  }
  func.func @transform_1(%arg0: i32) -> (i32, i32) {
    %c0_i32 = arith.constant 0 : i32
    %c0_i32_0 = arith.constant 0 : i32
    %c0_i32_1 = arith.constant 0 : i32
    return %c0_i32, %c0_i32_0 : i32, i32
  }
  func.func @transform_2(%arg0: i32) -> (i32, i32) {
    %c0_i32 = arith.constant 0 : i32
    %c0_i32_0 = arith.constant 0 : i32
    %c0_i32_1 = arith.constant 0 : i32
    return %c0_i32, %c0_i32_0 : i32, i32
  }
  func.func @transform_3(%arg0: i32) -> (i32, i32) {
    %c0_i32 = arith.constant 0 : i32
    %c0_i32_0 = arith.constant 0 : i32
    %c0_i32_1 = arith.constant 0 : i32
    return %c0_i32, %c0_i32_0 : i32, i32
  }
  func.func @transform_4(%arg0: i32) -> (i32, i32) {
    %c0_i32 = arith.constant 0 : i32
    %c0_i32_0 = arith.constant 0 : i32
    return %arg0, %c0_i32 : i32, i32
  }
}

module attributes {stable_mosaic.version = 11 : i64} {
  func.func @_mlp2_kernel(%arg0: i32, %arg1: memref<64x3xf32, #tpu.memory_space<vmem>>, %arg2: memref<3x32xf32, #tpu.memory_space<vmem>>, %arg3: memref<1x32xf32, #tpu.memory_space<vmem>>, %arg4: memref<32x32xf32, #tpu.memory_space<vmem>>, %arg5: memref<1x32xf32, #tpu.memory_space<vmem>>, %arg6: memref<64x32xf32, #tpu.memory_space<vmem>>) attributes {dimension_semantics = [#tpu.dimension_semantics<parallel>], iteration_bounds = array<i64: 2>, scalar_prefetch = 0 : i64, scratch_operands = 0 : i64, tpu.core_type = #tpu.core_type<tc>, window_params = [{transform_indices = @transform_0, window_bounds = array<i64: 64, 3>}, {pipeline_mode = #tpu.pipeline_mode<synchronous>, transform_indices = @transform_1, window_bounds = array<i64: 3, 32>}, {pipeline_mode = #tpu.pipeline_mode<synchronous>, transform_indices = @transform_2, window_bounds = array<i64: 1, 32>}, {pipeline_mode = #tpu.pipeline_mode<synchronous>, transform_indices = @transform_3, window_bounds = array<i64: 32, 32>}, {pipeline_mode = #tpu.pipeline_mode<synchronous>, transform_indices = @transform_4, window_bounds = array<i64: 1, 32>}, {transform_indices = @transform_5, window_bounds = array<i64: 64, 32>}]} {
    %c0 = arith.constant 0 : index
    %c0_0 = arith.constant 0 : index
    %0 = vector.load %arg1[%c0, %c0_0] : memref<64x3xf32, #tpu.memory_space<vmem>>, vector<64x3xf32>
    %c0_1 = arith.constant 0 : index
    %c0_2 = arith.constant 0 : index
    %1 = vector.load %arg2[%c0_1, %c0_2] : memref<3x32xf32, #tpu.memory_space<vmem>>, vector<3x32xf32>
    %cst = arith.constant dense<0.000000e+00> : vector<64x32xf32>
    %2 = tpu.matmul %0, %1, %cst {dimension_numbers = #tpu.dot_dimension_numbers<[1], [0], [0], [1], [0, 0, 1, 1], [], []>} : vector<64x3xf32>, vector<3x32xf32>, vector<64x32xf32> -> vector<64x32xf32>
    %c0_3 = arith.constant 0 : index
    %c0_4 = arith.constant 0 : index
    %3 = vector.load %arg3[%c0_3, %c0_4] : memref<1x32xf32, #tpu.memory_space<vmem>>, vector<1x32xf32>
    %4 = vector.broadcast %3 : vector<1x32xf32> to vector<64x32xf32>
    %5 = arith.addf %2, %4 : vector<64x32xf32>
    %cst_5 = arith.constant 0.000000e+00 : f32
    %6 = vector.broadcast %cst_5 : f32 to vector<64x32xf32>
    %7 = arith.maximumf %5, %6 : vector<64x32xf32>
    %c0_6 = arith.constant 0 : index
    %c0_7 = arith.constant 0 : index
    %8 = vector.load %arg4[%c0_6, %c0_7] : memref<32x32xf32, #tpu.memory_space<vmem>>, vector<32x32xf32>
    %cst_8 = arith.constant dense<0.000000e+00> : vector<64x32xf32>
    %9 = tpu.matmul %7, %8, %cst_8 {dimension_numbers = #tpu.dot_dimension_numbers<[1], [0], [0], [1], [0, 0, 1, 1], [], []>} : vector<64x32xf32>, vector<32x32xf32>, vector<64x32xf32> -> vector<64x32xf32>
    %c0_9 = arith.constant 0 : index
    %c0_10 = arith.constant 0 : index
    %10 = vector.load %arg5[%c0_9, %c0_10] : memref<1x32xf32, #tpu.memory_space<vmem>>, vector<1x32xf32>
    %11 = vector.broadcast %10 : vector<1x32xf32> to vector<64x32xf32>
    %12 = arith.addf %9, %11 : vector<64x32xf32>
    %c0_11 = arith.constant 0 : index
    %c0_12 = arith.constant 0 : index
    %13 = vector.load %arg6[%c0_11, %c0_12] : memref<64x32xf32, #tpu.memory_space<vmem>>, vector<64x32xf32>
    tpu.vector_store %arg6[%c0_11, %c0_12], %12 {strides = array<i32>} : memref<64x32xf32, #tpu.memory_space<vmem>>, vector<64x32xf32>,
    return
  }
  func.func @transform_0(%arg0: i32) -> (i32, i32) {
    %c0_i32 = arith.constant 0 : i32
    %c0_i32_0 = arith.constant 0 : i32
    return %arg0, %c0_i32 : i32, i32
  }
  func.func @transform_1(%arg0: i32) -> (i32, i32) {
    %c0_i32 = arith.constant 0 : i32
    %c0_i32_0 = arith.constant 0 : i32
    %c0_i32_1 = arith.constant 0 : i32
    return %c0_i32, %c0_i32_0 : i32, i32
  }
  func.func @transform_2(%arg0: i32) -> (i32, i32) {
    %c0_i32 = arith.constant 0 : i32
    %c0_i32_0 = arith.constant 0 : i32
    %c0_i32_1 = arith.constant 0 : i32
    return %c0_i32, %c0_i32_0 : i32, i32
  }
  func.func @transform_3(%arg0: i32) -> (i32, i32) {
    %c0_i32 = arith.constant 0 : i32
    %c0_i32_0 = arith.constant 0 : i32
    %c0_i32_1 = arith.constant 0 : i32
    return %c0_i32, %c0_i32_0 : i32, i32
  }
  func.func @transform_4(%arg0: i32) -> (i32, i32) {
    %c0_i32 = arith.constant 0 : i32
    %c0_i32_0 = arith.constant 0 : i32
    %c0_i32_1 = arith.constant 0 : i32
    return %c0_i32, %c0_i32_0 : i32, i32
  }
  func.func @transform_5(%arg0: i32) -> (i32, i32) {
    %c0_i32 = arith.constant 0 : i32
    %c0_i32_0 = arith.constant 0 : i32
    return %arg0, %c0_i32 : i32, i32
  }
}

module attributes {stable_mosaic.version = 11 : i64} {
  func.func @_attn_block_kernel(%arg0: i32, %arg1: memref<8x1x32xf32, #tpu.memory_space<vmem>>, %arg2: memref<8x8x32xf32, #tpu.memory_space<vmem>>, %arg3: memref<8x8x32xf32, #tpu.memory_space<vmem>>, %arg4: memref<8x8x32xf32, #tpu.memory_space<vmem>>, %arg5: memref<8x64xf32, #tpu.memory_space<vmem>>, %arg6: memref<32x32xf32, #tpu.memory_space<vmem>>, %arg7: memref<1x32xf32, #tpu.memory_space<vmem>>, %arg8: memref<32x32xf32, #tpu.memory_space<vmem>>, %arg9: memref<1x32xf32, #tpu.memory_space<vmem>>, %arg10: memref<32x64xf32, #tpu.memory_space<vmem>>, %arg11: memref<1x64xf32, #tpu.memory_space<vmem>>, %arg12: memref<8x64xf32, #tpu.memory_space<vmem>>) attributes {dimension_semantics = [#tpu.dimension_semantics<parallel>], iteration_bounds = array<i64: 2>, scalar_prefetch = 0 : i64, scratch_operands = 0 : i64, tpu.core_type = #tpu.core_type<tc>, window_params = [{transform_indices = @transform_0, window_bounds = array<i64: 8, 1, 32>}, {transform_indices = @transform_1, window_bounds = array<i64: 8, 8, 32>}, {transform_indices = @transform_2, window_bounds = array<i64: 8, 8, 32>}, {transform_indices = @transform_3, window_bounds = array<i64: 8, 8, 32>}, {transform_indices = @transform_4, window_bounds = array<i64: 8, 64>}, {pipeline_mode = #tpu.pipeline_mode<synchronous>, transform_indices = @transform_5, window_bounds = array<i64: 32, 32>}, {pipeline_mode = #tpu.pipeline_mode<synchronous>, transform_indices = @transform_6, window_bounds = array<i64: 1, 32>}, {pipeline_mode = #tpu.pipeline_mode<synchronous>, transform_indices = @transform_7, window_bounds = array<i64: 32, 32>}, {pipeline_mode = #tpu.pipeline_mode<synchronous>, transform_indices = @transform_8, window_bounds = array<i64: 1, 32>}, {pipeline_mode = #tpu.pipeline_mode<synchronous>, transform_indices = @transform_9, window_bounds = array<i64: 32, 64>}, {pipeline_mode = #tpu.pipeline_mode<synchronous>, transform_indices = @transform_10, window_bounds = array<i64: 1, 64>}, {transform_indices = @transform_11, window_bounds = array<i64: 8, 64>}]} {
    %c0 = arith.constant 0 : index
    %c0_0 = arith.constant 0 : index
    %c0_1 = arith.constant 0 : index
    %0 = vector.load %arg3[%c0, %c0_0, %c0_1] : memref<8x8x32xf32, #tpu.memory_space<vmem>>, vector<8x8x32xf32>
    %c0_2 = arith.constant 0 : index
    %c0_3 = arith.constant 0 : index
    %c0_4 = arith.constant 0 : index
    %1 = vector.load %arg2[%c0_2, %c0_3, %c0_4] : memref<8x8x32xf32, #tpu.memory_space<vmem>>, vector<8x8x32xf32>
    %c0_5 = arith.constant 0 : index
    %c0_6 = arith.constant 0 : index
    %c0_7 = arith.constant 0 : index
    %2 = vector.load %arg1[%c0_5, %c0_6, %c0_7] : memref<8x1x32xf32, #tpu.memory_space<vmem>>, vector<8x1x32xf32>
    %3 = vector.broadcast %2 : vector<8x1x32xf32> to vector<8x8x32xf32>
    %4 = arith.subf %3, %1 : vector<8x8x32xf32>
    %5 = arith.addf %4, %0 : vector<8x8x32xf32>
    %6 = vector.shape_cast %5 : vector<8x8x32xf32> to vector<64x32xf32>
    %c0_8 = arith.constant 0 : index
    %c0_9 = arith.constant 0 : index
    %7 = vector.load %arg6[%c0_8, %c0_9] : memref<32x32xf32, #tpu.memory_space<vmem>>, vector<32x32xf32>
    %cst = arith.constant dense<0.000000e+00> : vector<64x32xf32>
    %8 = tpu.matmul %6, %7, %cst {dimension_numbers = #tpu.dot_dimension_numbers<[1], [0], [0], [1], [0, 0, 1, 1], [], []>} : vector<64x32xf32>, vector<32x32xf32>, vector<64x32xf32> -> vector<64x32xf32>
    %c0_10 = arith.constant 0 : index
    %c0_11 = arith.constant 0 : index
    %9 = vector.load %arg7[%c0_10, %c0_11] : memref<1x32xf32, #tpu.memory_space<vmem>>, vector<1x32xf32>
    %10 = vector.broadcast %9 : vector<1x32xf32> to vector<64x32xf32>
    %11 = arith.addf %8, %10 : vector<64x32xf32>
    %cst_12 = arith.constant 0.000000e+00 : f32
    %12 = vector.broadcast %cst_12 : f32 to vector<64x32xf32>
    %13 = arith.maximumf %11, %12 : vector<64x32xf32>
    %c0_13 = arith.constant 0 : index
    %c0_14 = arith.constant 0 : index
    %14 = vector.load %arg8[%c0_13, %c0_14] : memref<32x32xf32, #tpu.memory_space<vmem>>, vector<32x32xf32>
    %cst_15 = arith.constant dense<0.000000e+00> : vector<64x32xf32>
    %15 = tpu.matmul %13, %14, %cst_15 {dimension_numbers = #tpu.dot_dimension_numbers<[1], [0], [0], [1], [0, 0, 1, 1], [], []>} : vector<64x32xf32>, vector<32x32xf32>, vector<64x32xf32> -> vector<64x32xf32>
    %c0_16 = arith.constant 0 : index
    %c0_17 = arith.constant 0 : index
    %16 = vector.load %arg9[%c0_16, %c0_17] : memref<1x32xf32, #tpu.memory_space<vmem>>, vector<1x32xf32>
    %17 = vector.broadcast %16 : vector<1x32xf32> to vector<64x32xf32>
    %18 = arith.addf %15, %17 : vector<64x32xf32>
    %19 = vector.shape_cast %18 : vector<64x32xf32> to vector<8x8x32xf32>
    %cst_18 = arith.constant 0.176776692 : f32
    %20 = vector.broadcast %cst_18 : f32 to vector<8x8x32xf32>
    %21 = arith.mulf %19, %20 : vector<8x8x32xf32>
    %cst_19 = arith.constant dense<0xFF800000> : vector<8x32xf32>
    %22 = vector.multi_reduction <maximumf>, %21, %cst_19 [1] : vector<8x8x32xf32> to vector<8x32xf32>
    %23 = vector.shape_cast %22 : vector<8x32xf32> to vector<8x1x32xf32>
    %24 = vector.broadcast %23 : vector<8x1x32xf32> to vector<8x8x32xf32>
    %25 = arith.subf %21, %24 : vector<8x8x32xf32>
    %26 = math.exp %25 : vector<8x8x32xf32>
    %cst_20 = arith.constant dense<0.000000e+00> : vector<8x32xf32>
    %27 = vector.multi_reduction <add>, %26, %cst_20 [1] : vector<8x8x32xf32> to vector<8x32xf32>
    %28 = vector.shape_cast %27 : vector<8x32xf32> to vector<8x1x32xf32>
    %29 = vector.broadcast %28 : vector<8x1x32xf32> to vector<8x8x32xf32>
    %30 = arith.divf %26, %29 : vector<8x8x32xf32>
    %c0_21 = arith.constant 0 : index
    %c0_22 = arith.constant 0 : index
    %c0_23 = arith.constant 0 : index
    %31 = vector.load %arg4[%c0_21, %c0_22, %c0_23] : memref<8x8x32xf32, #tpu.memory_space<vmem>>, vector<8x8x32xf32>
    %32 = arith.addf %31, %0 : vector<8x8x32xf32>
    %33 = arith.mulf %30, %32 : vector<8x8x32xf32>
    %cst_24 = arith.constant dense<0.000000e+00> : vector<8x32xf32>
    %34 = vector.multi_reduction <add>, %33, %cst_24 [1] : vector<8x8x32xf32> to vector<8x32xf32>
    %c0_25 = arith.constant 0 : index
    %c0_26 = arith.constant 0 : index
    %35 = vector.load %arg10[%c0_25, %c0_26] : memref<32x64xf32, #tpu.memory_space<vmem>>, vector<32x64xf32>
    %cst_27 = arith.constant dense<0.000000e+00> : vector<8x64xf32>
    %36 = tpu.matmul %34, %35, %cst_27 {dimension_numbers = #tpu.dot_dimension_numbers<[1], [0], [0], [1], [0, 0, 1, 1], [], []>} : vector<8x32xf32>, vector<32x64xf32>, vector<8x64xf32> -> vector<8x64xf32>
    %c0_28 = arith.constant 0 : index
    %c0_29 = arith.constant 0 : index
    %37 = vector.load %arg11[%c0_28, %c0_29] : memref<1x64xf32, #tpu.memory_space<vmem>>, vector<1x64xf32>
    %38 = vector.broadcast %37 : vector<1x64xf32> to vector<8x64xf32>
    %39 = arith.addf %36, %38 : vector<8x64xf32>
    %c0_30 = arith.constant 0 : index
    %c0_31 = arith.constant 0 : index
    %40 = vector.load %arg5[%c0_30, %c0_31] : memref<8x64xf32, #tpu.memory_space<vmem>>, vector<8x64xf32>
    %41 = arith.addf %39, %40 : vector<8x64xf32>
    %c0_32 = arith.constant 0 : index
    %c0_33 = arith.constant 0 : index
    %42 = vector.load %arg12[%c0_32, %c0_33] : memref<8x64xf32, #tpu.memory_space<vmem>>, vector<8x64xf32>
    tpu.vector_store %arg12[%c0_32, %c0_33], %41 {strides = array<i32>} : memref<8x64xf32, #tpu.memory_space<vmem>>, vector<8x64xf32>,
    return
  }
  func.func @transform_0(%arg0: i32) -> (i32, i32, i32) {
    %c0_i32 = arith.constant 0 : i32
    %c0_i32_0 = arith.constant 0 : i32
    %c0_i32_1 = arith.constant 0 : i32
    return %arg0, %c0_i32, %c0_i32_0 : i32, i32, i32
  }
  func.func @transform_1(%arg0: i32) -> (i32, i32, i32) {
    %c0_i32 = arith.constant 0 : i32
    %c0_i32_0 = arith.constant 0 : i32
    %c0_i32_1 = arith.constant 0 : i32
    return %arg0, %c0_i32, %c0_i32_0 : i32, i32, i32
  }
  func.func @transform_2(%arg0: i32) -> (i32, i32, i32) {
    %c0_i32 = arith.constant 0 : i32
    %c0_i32_0 = arith.constant 0 : i32
    %c0_i32_1 = arith.constant 0 : i32
    return %arg0, %c0_i32, %c0_i32_0 : i32, i32, i32
  }
  func.func @transform_3(%arg0: i32) -> (i32, i32, i32) {
    %c0_i32 = arith.constant 0 : i32
    %c0_i32_0 = arith.constant 0 : i32
    %c0_i32_1 = arith.constant 0 : i32
    return %arg0, %c0_i32, %c0_i32_0 : i32, i32, i32
  }
  func.func @transform_4(%arg0: i32) -> (i32, i32) {
    %c0_i32 = arith.constant 0 : i32
    %c0_i32_0 = arith.constant 0 : i32
    return %arg0, %c0_i32 : i32, i32
  }
  func.func @transform_5(%arg0: i32) -> (i32, i32) {
    %c0_i32 = arith.constant 0 : i32
    %c0_i32_0 = arith.constant 0 : i32
    %c0_i32_1 = arith.constant 0 : i32
    return %c0_i32, %c0_i32_0 : i32, i32
  }
  func.func @transform_6(%arg0: i32) -> (i32, i32) {
    %c0_i32 = arith.constant 0 : i32
    %c0_i32_0 = arith.constant 0 : i32
    %c0_i32_1 = arith.constant 0 : i32
    return %c0_i32, %c0_i32_0 : i32, i32
  }
  func.func @transform_7(%arg0: i32) -> (i32, i32) {
    %c0_i32 = arith.constant 0 : i32
    %c0_i32_0 = arith.constant 0 : i32
    %c0_i32_1 = arith.constant 0 : i32
    return %c0_i32, %c0_i32_0 : i32, i32
  }
  func.func @transform_8(%arg0: i32) -> (i32, i32) {
    %c0_i32 = arith.constant 0 : i32
    %c0_i32_0 = arith.constant 0 : i32
    %c0_i32_1 = arith.constant 0 : i32
    return %c0_i32, %c0_i32_0 : i32, i32
  }
  func.func @transform_9(%arg0: i32) -> (i32, i32) {
    %c0_i32 = arith.constant 0 : i32
    %c0_i32_0 = arith.constant 0 : i32
    %c0_i32_1 = arith.constant 0 : i32
    return %c0_i32, %c0_i32_0 : i32, i32
  }
  func.func @transform_10(%arg0: i32) -> (i32, i32) {
    %c0_i32 = arith.constant 0 : i32
    %c0_i32_0 = arith.constant 0 : i32
    %c0_i32_1 = arith.constant 0 : i32
    return %c0_i32, %c0_i32_0 : i32, i32
  }
  func.func @transform_11(%arg0: i32) -> (i32, i32) {
    %c0_i32 = arith.constant 0 : i32
    %c0_i32_0 = arith.constant 0 : i32
    return %arg0, %c0_i32 : i32, i32
  }
}

module attributes {stable_mosaic.version = 11 : i64} {
  func.func @_fc1_qkv_kernel(%arg0: i32, %arg1: memref<8x128xf32, #tpu.memory_space<vmem>>, %arg2: memref<128x32xf32, #tpu.memory_space<vmem>>, %arg3: memref<1x32xf32, #tpu.memory_space<vmem>>, %arg4: memref<32x96xf32, #tpu.memory_space<vmem>>, %arg5: memref<8x96xf32, #tpu.memory_space<vmem>>) attributes {dimension_semantics = [#tpu.dimension_semantics<parallel>], iteration_bounds = array<i64: 1>, scalar_prefetch = 0 : i64, scratch_operands = 0 : i64, tpu.core_type = #tpu.core_type<tc>, window_params = [{transform_indices = @transform_0, window_bounds = array<i64: 8, 128>}, {pipeline_mode = #tpu.pipeline_mode<synchronous>, transform_indices = @transform_1, window_bounds = array<i64: 128, 32>}, {pipeline_mode = #tpu.pipeline_mode<synchronous>, transform_indices = @transform_2, window_bounds = array<i64: 1, 32>}, {pipeline_mode = #tpu.pipeline_mode<synchronous>, transform_indices = @transform_3, window_bounds = array<i64: 32, 96>}, {transform_indices = @transform_4, window_bounds = array<i64: 8, 96>}]} {
    %c0 = arith.constant 0 : index
    %c0_0 = arith.constant 0 : index
    %0 = vector.load %arg1[%c0, %c0_0] : memref<8x128xf32, #tpu.memory_space<vmem>>, vector<8x128xf32>
    %c0_1 = arith.constant 0 : index
    %c0_2 = arith.constant 0 : index
    %1 = vector.load %arg2[%c0_1, %c0_2] : memref<128x32xf32, #tpu.memory_space<vmem>>, vector<128x32xf32>
    %cst = arith.constant dense<0.000000e+00> : vector<8x32xf32>
    %2 = tpu.matmul %0, %1, %cst {dimension_numbers = #tpu.dot_dimension_numbers<[1], [0], [0], [1], [0, 0, 1, 1], [], []>} : vector<8x128xf32>, vector<128x32xf32>, vector<8x32xf32> -> vector<8x32xf32>
    %c0_3 = arith.constant 0 : index
    %c0_4 = arith.constant 0 : index
    %3 = vector.load %arg3[%c0_3, %c0_4] : memref<1x32xf32, #tpu.memory_space<vmem>>, vector<1x32xf32>
    %4 = vector.broadcast %3 : vector<1x32xf32> to vector<8x32xf32>
    %5 = arith.addf %2, %4 : vector<8x32xf32>
    %c0_5 = arith.constant 0 : index
    %c0_6 = arith.constant 0 : index
    %6 = vector.load %arg4[%c0_5, %c0_6] : memref<32x96xf32, #tpu.memory_space<vmem>>, vector<32x96xf32>
    %cst_7 = arith.constant dense<0.000000e+00> : vector<8x96xf32>
    %7 = tpu.matmul %5, %6, %cst_7 {dimension_numbers = #tpu.dot_dimension_numbers<[1], [0], [0], [1], [0, 0, 1, 1], [], []>} : vector<8x32xf32>, vector<32x96xf32>, vector<8x96xf32> -> vector<8x96xf32>
    %c0_8 = arith.constant 0 : index
    %c0_9 = arith.constant 0 : index
    %8 = vector.load %arg5[%c0_8, %c0_9] : memref<8x96xf32, #tpu.memory_space<vmem>>, vector<8x96xf32>
    tpu.vector_store %arg5[%c0_8, %c0_9], %7 {strides = array<i32>} : memref<8x96xf32, #tpu.memory_space<vmem>>, vector<8x96xf32>,
    return
  }
  func.func @transform_0(%arg0: i32) -> (i32, i32) {
    %c0_i32 = arith.constant 0 : i32
    %c0_i32_0 = arith.constant 0 : i32
    return %arg0, %c0_i32 : i32, i32
  }
  func.func @transform_1(%arg0: i32) -> (i32, i32) {
    %c0_i32 = arith.constant 0 : i32
    %c0_i32_0 = arith.constant 0 : i32
    %c0_i32_1 = arith.constant 0 : i32
    return %c0_i32, %c0_i32_0 : i32, i32
  }
  func.func @transform_2(%arg0: i32) -> (i32, i32) {
    %c0_i32 = arith.constant 0 : i32
    %c0_i32_0 = arith.constant 0 : i32
    %c0_i32_1 = arith.constant 0 : i32
    return %c0_i32, %c0_i32_0 : i32, i32
  }
  func.func @transform_3(%arg0: i32) -> (i32, i32) {
    %c0_i32 = arith.constant 0 : i32
    %c0_i32_0 = arith.constant 0 : i32
    %c0_i32_1 = arith.constant 0 : i32
    return %c0_i32, %c0_i32_0 : i32, i32
  }
  func.func @transform_4(%arg0: i32) -> (i32, i32) {
    %c0_i32 = arith.constant 0 : i32
    %c0_i32_0 = arith.constant 0 : i32
    return %arg0, %c0_i32 : i32, i32
  }
}

module attributes {stable_mosaic.version = 11 : i64} {
  func.func @_samlp_kernel(%arg0: i32, %arg1: memref<8x8x67xf32, #tpu.memory_space<vmem>>, %arg2: memref<67x128xf32, #tpu.memory_space<vmem>>, %arg3: memref<1x128xf32, #tpu.memory_space<vmem>>, %arg4: memref<128x128xf32, #tpu.memory_space<vmem>>, %arg5: memref<1x128xf32, #tpu.memory_space<vmem>>, %arg6: memref<8x128xf32, #tpu.memory_space<vmem>>) attributes {dimension_semantics = [#tpu.dimension_semantics<parallel>], iteration_bounds = array<i64: 1>, scalar_prefetch = 0 : i64, scratch_operands = 0 : i64, tpu.core_type = #tpu.core_type<tc>, window_params = [{transform_indices = @transform_0, window_bounds = array<i64: 8, 8, 67>}, {pipeline_mode = #tpu.pipeline_mode<synchronous>, transform_indices = @transform_1, window_bounds = array<i64: 67, 128>}, {pipeline_mode = #tpu.pipeline_mode<synchronous>, transform_indices = @transform_2, window_bounds = array<i64: 1, 128>}, {pipeline_mode = #tpu.pipeline_mode<synchronous>, transform_indices = @transform_3, window_bounds = array<i64: 128, 128>}, {pipeline_mode = #tpu.pipeline_mode<synchronous>, transform_indices = @transform_4, window_bounds = array<i64: 1, 128>}, {transform_indices = @transform_5, window_bounds = array<i64: 8, 128>}]} {
    %c0 = arith.constant 0 : index
    %c0_0 = arith.constant 0 : index
    %c0_1 = arith.constant 0 : index
    %0 = vector.load %arg1[%c0, %c0_0, %c0_1] : memref<8x8x67xf32, #tpu.memory_space<vmem>>, vector<8x8x67xf32>
    %1 = vector.shape_cast %0 : vector<8x8x67xf32> to vector<64x67xf32>
    %c0_2 = arith.constant 0 : index
    %c0_3 = arith.constant 0 : index
    %2 = vector.load %arg2[%c0_2, %c0_3] : memref<67x128xf32, #tpu.memory_space<vmem>>, vector<67x128xf32>
    %cst = arith.constant dense<0.000000e+00> : vector<64x128xf32>
    %3 = tpu.matmul %1, %2, %cst {dimension_numbers = #tpu.dot_dimension_numbers<[1], [0], [0], [1], [0, 0, 1, 1], [], []>} : vector<64x67xf32>, vector<67x128xf32>, vector<64x128xf32> -> vector<64x128xf32>
    %c0_4 = arith.constant 0 : index
    %c0_5 = arith.constant 0 : index
    %4 = vector.load %arg3[%c0_4, %c0_5] : memref<1x128xf32, #tpu.memory_space<vmem>>, vector<1x128xf32>
    %5 = vector.broadcast %4 : vector<1x128xf32> to vector<64x128xf32>
    %6 = arith.addf %3, %5 : vector<64x128xf32>
    %cst_6 = arith.constant 0.000000e+00 : f32
    %7 = vector.broadcast %cst_6 : f32 to vector<64x128xf32>
    %8 = arith.maximumf %6, %7 : vector<64x128xf32>
    %c0_7 = arith.constant 0 : index
    %c0_8 = arith.constant 0 : index
    %9 = vector.load %arg4[%c0_7, %c0_8] : memref<128x128xf32, #tpu.memory_space<vmem>>, vector<128x128xf32>
    %cst_9 = arith.constant dense<0.000000e+00> : vector<64x128xf32>
    %10 = tpu.matmul %8, %9, %cst_9 {dimension_numbers = #tpu.dot_dimension_numbers<[1], [0], [0], [1], [0, 0, 1, 1], [], []>} : vector<64x128xf32>, vector<128x128xf32>, vector<64x128xf32> -> vector<64x128xf32>
    %c0_10 = arith.constant 0 : index
    %c0_11 = arith.constant 0 : index
    %11 = vector.load %arg5[%c0_10, %c0_11] : memref<1x128xf32, #tpu.memory_space<vmem>>, vector<1x128xf32>
    %12 = vector.broadcast %11 : vector<1x128xf32> to vector<64x128xf32>
    %13 = arith.addf %10, %12 : vector<64x128xf32>
    %cst_12 = arith.constant 0.000000e+00 : f32
    %14 = vector.broadcast %cst_12 : f32 to vector<64x128xf32>
    %15 = arith.maximumf %13, %14 : vector<64x128xf32>
    %16 = vector.shape_cast %15 : vector<64x128xf32> to vector<8x8x128xf32>
    %cst_13 = arith.constant dense<0xFF800000> : vector<8x128xf32>
    %17 = vector.multi_reduction <maximumf>, %16, %cst_13 [1] : vector<8x8x128xf32> to vector<8x128xf32>
    %c0_14 = arith.constant 0 : index
    %c0_15 = arith.constant 0 : index
    %18 = vector.load %arg6[%c0_14, %c0_15] : memref<8x128xf32, #tpu.memory_space<vmem>>, vector<8x128xf32>
    tpu.vector_store %arg6[%c0_14, %c0_15], %17 {strides = array<i32>} : memref<8x128xf32, #tpu.memory_space<vmem>>, vector<8x128xf32>,
    return
  }
  func.func @transform_0(%arg0: i32) -> (i32, i32, i32) {
    %c0_i32 = arith.constant 0 : i32
    %c0_i32_0 = arith.constant 0 : i32
    %c0_i32_1 = arith.constant 0 : i32
    return %arg0, %c0_i32, %c0_i32_0 : i32, i32, i32
  }
  func.func @transform_1(%arg0: i32) -> (i32, i32) {
    %c0_i32 = arith.constant 0 : i32
    %c0_i32_0 = arith.constant 0 : i32
    %c0_i32_1 = arith.constant 0 : i32
    return %c0_i32, %c0_i32_0 : i32, i32
  }
  func.func @transform_2(%arg0: i32) -> (i32, i32) {
    %c0_i32 = arith.constant 0 : i32
    %c0_i32_0 = arith.constant 0 : i32
    %c0_i32_1 = arith.constant 0 : i32
    return %c0_i32, %c0_i32_0 : i32, i32
  }
  func.func @transform_3(%arg0: i32) -> (i32, i32) {
    %c0_i32 = arith.constant 0 : i32
    %c0_i32_0 = arith.constant 0 : i32
    %c0_i32_1 = arith.constant 0 : i32
    return %c0_i32, %c0_i32_0 : i32, i32
  }
  func.func @transform_4(%arg0: i32) -> (i32, i32) {
    %c0_i32 = arith.constant 0 : i32
    %c0_i32_0 = arith.constant 0 : i32
    %c0_i32_1 = arith.constant 0 : i32
    return %c0_i32, %c0_i32_0 : i32, i32
  }
  func.func @transform_5(%arg0: i32) -> (i32, i32) {
    %c0_i32 = arith.constant 0 : i32
    %c0_i32_0 = arith.constant 0 : i32
    return %arg0, %c0_i32 : i32, i32
  }
}

module attributes {stable_mosaic.version = 11 : i64} {
  func.func @_mlp2_kernel(%arg0: i32, %arg1: memref<8x3xf32, #tpu.memory_space<vmem>>, %arg2: memref<3x32xf32, #tpu.memory_space<vmem>>, %arg3: memref<1x32xf32, #tpu.memory_space<vmem>>, %arg4: memref<32x32xf32, #tpu.memory_space<vmem>>, %arg5: memref<1x32xf32, #tpu.memory_space<vmem>>, %arg6: memref<8x32xf32, #tpu.memory_space<vmem>>) attributes {dimension_semantics = [#tpu.dimension_semantics<parallel>], iteration_bounds = array<i64: 1>, scalar_prefetch = 0 : i64, scratch_operands = 0 : i64, tpu.core_type = #tpu.core_type<tc>, window_params = [{transform_indices = @transform_0, window_bounds = array<i64: 8, 3>}, {pipeline_mode = #tpu.pipeline_mode<synchronous>, transform_indices = @transform_1, window_bounds = array<i64: 3, 32>}, {pipeline_mode = #tpu.pipeline_mode<synchronous>, transform_indices = @transform_2, window_bounds = array<i64: 1, 32>}, {pipeline_mode = #tpu.pipeline_mode<synchronous>, transform_indices = @transform_3, window_bounds = array<i64: 32, 32>}, {pipeline_mode = #tpu.pipeline_mode<synchronous>, transform_indices = @transform_4, window_bounds = array<i64: 1, 32>}, {transform_indices = @transform_5, window_bounds = array<i64: 8, 32>}]} {
    %c0 = arith.constant 0 : index
    %c0_0 = arith.constant 0 : index
    %0 = vector.load %arg1[%c0, %c0_0] : memref<8x3xf32, #tpu.memory_space<vmem>>, vector<8x3xf32>
    %c0_1 = arith.constant 0 : index
    %c0_2 = arith.constant 0 : index
    %1 = vector.load %arg2[%c0_1, %c0_2] : memref<3x32xf32, #tpu.memory_space<vmem>>, vector<3x32xf32>
    %cst = arith.constant dense<0.000000e+00> : vector<8x32xf32>
    %2 = tpu.matmul %0, %1, %cst {dimension_numbers = #tpu.dot_dimension_numbers<[1], [0], [0], [1], [0, 0, 1, 1], [], []>} : vector<8x3xf32>, vector<3x32xf32>, vector<8x32xf32> -> vector<8x32xf32>
    %c0_3 = arith.constant 0 : index
    %c0_4 = arith.constant 0 : index
    %3 = vector.load %arg3[%c0_3, %c0_4] : memref<1x32xf32, #tpu.memory_space<vmem>>, vector<1x32xf32>
    %4 = vector.broadcast %3 : vector<1x32xf32> to vector<8x32xf32>
    %5 = arith.addf %2, %4 : vector<8x32xf32>
    %cst_5 = arith.constant 0.000000e+00 : f32
    %6 = vector.broadcast %cst_5 : f32 to vector<8x32xf32>
    %7 = arith.maximumf %5, %6 : vector<8x32xf32>
    %c0_6 = arith.constant 0 : index
    %c0_7 = arith.constant 0 : index
    %8 = vector.load %arg4[%c0_6, %c0_7] : memref<32x32xf32, #tpu.memory_space<vmem>>, vector<32x32xf32>
    %cst_8 = arith.constant dense<0.000000e+00> : vector<8x32xf32>
    %9 = tpu.matmul %7, %8, %cst_8 {dimension_numbers = #tpu.dot_dimension_numbers<[1], [0], [0], [1], [0, 0, 1, 1], [], []>} : vector<8x32xf32>, vector<32x32xf32>, vector<8x32xf32> -> vector<8x32xf32>
    %c0_9 = arith.constant 0 : index
    %c0_10 = arith.constant 0 : index
    %10 = vector.load %arg5[%c0_9, %c0_10] : memref<1x32xf32, #tpu.memory_space<vmem>>, vector<1x32xf32>
    %11 = vector.broadcast %10 : vector<1x32xf32> to vector<8x32xf32>
    %12 = arith.addf %9, %11 : vector<8x32xf32>
    %c0_11 = arith.constant 0 : index
    %c0_12 = arith.constant 0 : index
    %13 = vector.load %arg6[%c0_11, %c0_12] : memref<8x32xf32, #tpu.memory_space<vmem>>, vector<8x32xf32>
    tpu.vector_store %arg6[%c0_11, %c0_12], %12 {strides = array<i32>} : memref<8x32xf32, #tpu.memory_space<vmem>>, vector<8x32xf32>,
    return
  }
  func.func @transform_0(%arg0: i32) -> (i32, i32) {
    %c0_i32 = arith.constant 0 : i32
    %c0_i32_0 = arith.constant 0 : i32
    return %arg0, %c0_i32 : i32, i32
  }
  func.func @transform_1(%arg0: i32) -> (i32, i32) {
    %c0_i32 = arith.constant 0 : i32
    %c0_i32_0 = arith.constant 0 : i32
    %c0_i32_1 = arith.constant 0 : i32
    return %c0_i32, %c0_i32_0 : i32, i32
  }
  func.func @transform_2(%arg0: i32) -> (i32, i32) {
    %c0_i32 = arith.constant 0 : i32
    %c0_i32_0 = arith.constant 0 : i32
    %c0_i32_1 = arith.constant 0 : i32
    return %c0_i32, %c0_i32_0 : i32, i32
  }
  func.func @transform_3(%arg0: i32) -> (i32, i32) {
    %c0_i32 = arith.constant 0 : i32
    %c0_i32_0 = arith.constant 0 : i32
    %c0_i32_1 = arith.constant 0 : i32
    return %c0_i32, %c0_i32_0 : i32, i32
  }
  func.func @transform_4(%arg0: i32) -> (i32, i32) {
    %c0_i32 = arith.constant 0 : i32
    %c0_i32_0 = arith.constant 0 : i32
    %c0_i32_1 = arith.constant 0 : i32
    return %c0_i32, %c0_i32_0 : i32, i32
  }
  func.func @transform_5(%arg0: i32) -> (i32, i32) {
    %c0_i32 = arith.constant 0 : i32
    %c0_i32_0 = arith.constant 0 : i32
    return %arg0, %c0_i32 : i32, i32
  }
}

module attributes {stable_mosaic.version = 11 : i64} {
  func.func @_attn_block_kernel(%arg0: i32, %arg1: memref<8x1x32xf32, #tpu.memory_space<vmem>>, %arg2: memref<8x8x32xf32, #tpu.memory_space<vmem>>, %arg3: memref<8x8x32xf32, #tpu.memory_space<vmem>>, %arg4: memref<8x8x32xf32, #tpu.memory_space<vmem>>, %arg5: memref<8x128xf32, #tpu.memory_space<vmem>>, %arg6: memref<32x32xf32, #tpu.memory_space<vmem>>, %arg7: memref<1x32xf32, #tpu.memory_space<vmem>>, %arg8: memref<32x32xf32, #tpu.memory_space<vmem>>, %arg9: memref<1x32xf32, #tpu.memory_space<vmem>>, %arg10: memref<32x128xf32, #tpu.memory_space<vmem>>, %arg11: memref<1x128xf32, #tpu.memory_space<vmem>>, %arg12: memref<8x128xf32, #tpu.memory_space<vmem>>) attributes {dimension_semantics = [#tpu.dimension_semantics<parallel>], iteration_bounds = array<i64: 1>, scalar_prefetch = 0 : i64, scratch_operands = 0 : i64, tpu.core_type = #tpu.core_type<tc>, window_params = [{transform_indices = @transform_0, window_bounds = array<i64: 8, 1, 32>}, {transform_indices = @transform_1, window_bounds = array<i64: 8, 8, 32>}, {transform_indices = @transform_2, window_bounds = array<i64: 8, 8, 32>}, {transform_indices = @transform_3, window_bounds = array<i64: 8, 8, 32>}, {transform_indices = @transform_4, window_bounds = array<i64: 8, 128>}, {pipeline_mode = #tpu.pipeline_mode<synchronous>, transform_indices = @transform_5, window_bounds = array<i64: 32, 32>}, {pipeline_mode = #tpu.pipeline_mode<synchronous>, transform_indices = @transform_6, window_bounds = array<i64: 1, 32>}, {pipeline_mode = #tpu.pipeline_mode<synchronous>, transform_indices = @transform_7, window_bounds = array<i64: 32, 32>}, {pipeline_mode = #tpu.pipeline_mode<synchronous>, transform_indices = @transform_8, window_bounds = array<i64: 1, 32>}, {pipeline_mode = #tpu.pipeline_mode<synchronous>, transform_indices = @transform_9, window_bounds = array<i64: 32, 128>}, {pipeline_mode = #tpu.pipeline_mode<synchronous>, transform_indices = @transform_10, window_bounds = array<i64: 1, 128>}, {transform_indices = @transform_11, window_bounds = array<i64: 8, 128>}]} {
    %c0 = arith.constant 0 : index
    %c0_0 = arith.constant 0 : index
    %c0_1 = arith.constant 0 : index
    %0 = vector.load %arg3[%c0, %c0_0, %c0_1] : memref<8x8x32xf32, #tpu.memory_space<vmem>>, vector<8x8x32xf32>
    %c0_2 = arith.constant 0 : index
    %c0_3 = arith.constant 0 : index
    %c0_4 = arith.constant 0 : index
    %1 = vector.load %arg2[%c0_2, %c0_3, %c0_4] : memref<8x8x32xf32, #tpu.memory_space<vmem>>, vector<8x8x32xf32>
    %c0_5 = arith.constant 0 : index
    %c0_6 = arith.constant 0 : index
    %c0_7 = arith.constant 0 : index
    %2 = vector.load %arg1[%c0_5, %c0_6, %c0_7] : memref<8x1x32xf32, #tpu.memory_space<vmem>>, vector<8x1x32xf32>
    %3 = vector.broadcast %2 : vector<8x1x32xf32> to vector<8x8x32xf32>
    %4 = arith.subf %3, %1 : vector<8x8x32xf32>
    %5 = arith.addf %4, %0 : vector<8x8x32xf32>
    %6 = vector.shape_cast %5 : vector<8x8x32xf32> to vector<64x32xf32>
    %c0_8 = arith.constant 0 : index
    %c0_9 = arith.constant 0 : index
    %7 = vector.load %arg6[%c0_8, %c0_9] : memref<32x32xf32, #tpu.memory_space<vmem>>, vector<32x32xf32>
    %cst = arith.constant dense<0.000000e+00> : vector<64x32xf32>
    %8 = tpu.matmul %6, %7, %cst {dimension_numbers = #tpu.dot_dimension_numbers<[1], [0], [0], [1], [0, 0, 1, 1], [], []>} : vector<64x32xf32>, vector<32x32xf32>, vector<64x32xf32> -> vector<64x32xf32>
    %c0_10 = arith.constant 0 : index
    %c0_11 = arith.constant 0 : index
    %9 = vector.load %arg7[%c0_10, %c0_11] : memref<1x32xf32, #tpu.memory_space<vmem>>, vector<1x32xf32>
    %10 = vector.broadcast %9 : vector<1x32xf32> to vector<64x32xf32>
    %11 = arith.addf %8, %10 : vector<64x32xf32>
    %cst_12 = arith.constant 0.000000e+00 : f32
    %12 = vector.broadcast %cst_12 : f32 to vector<64x32xf32>
    %13 = arith.maximumf %11, %12 : vector<64x32xf32>
    %c0_13 = arith.constant 0 : index
    %c0_14 = arith.constant 0 : index
    %14 = vector.load %arg8[%c0_13, %c0_14] : memref<32x32xf32, #tpu.memory_space<vmem>>, vector<32x32xf32>
    %cst_15 = arith.constant dense<0.000000e+00> : vector<64x32xf32>
    %15 = tpu.matmul %13, %14, %cst_15 {dimension_numbers = #tpu.dot_dimension_numbers<[1], [0], [0], [1], [0, 0, 1, 1], [], []>} : vector<64x32xf32>, vector<32x32xf32>, vector<64x32xf32> -> vector<64x32xf32>
    %c0_16 = arith.constant 0 : index
    %c0_17 = arith.constant 0 : index
    %16 = vector.load %arg9[%c0_16, %c0_17] : memref<1x32xf32, #tpu.memory_space<vmem>>, vector<1x32xf32>
    %17 = vector.broadcast %16 : vector<1x32xf32> to vector<64x32xf32>
    %18 = arith.addf %15, %17 : vector<64x32xf32>
    %19 = vector.shape_cast %18 : vector<64x32xf32> to vector<8x8x32xf32>
    %cst_18 = arith.constant 0.176776692 : f32
    %20 = vector.broadcast %cst_18 : f32 to vector<8x8x32xf32>
    %21 = arith.mulf %19, %20 : vector<8x8x32xf32>
    %22 = tpu.iota {dimensions = array<i32: 1>} : vector<8x8x32xi32>
    %c2_i32 = arith.constant 2 : i32
    %23 = vector.broadcast %c2_i32 : i32 to vector<8x8x32xi32>
    %24 = arith.cmpi slt, %22, %23 : vector<8x8x32xi32>
    %cst_19 = arith.constant -1.000000e+30 : f32
    %25 = vector.broadcast %cst_19 : f32 to vector<8x8x32xf32>
    %26 = arith.select %24, %21, %25 : vector<8x8x32xi1>, vector<8x8x32xf32>
    %cst_20 = arith.constant dense<0xFF800000> : vector<8x32xf32>
    %27 = vector.multi_reduction <maximumf>, %26, %cst_20 [1] : vector<8x8x32xf32> to vector<8x32xf32>
    %28 = vector.shape_cast %27 : vector<8x32xf32> to vector<8x1x32xf32>
    %29 = vector.broadcast %28 : vector<8x1x32xf32> to vector<8x8x32xf32>
    %30 = arith.subf %26, %29 : vector<8x8x32xf32>
    %31 = math.exp %30 : vector<8x8x32xf32>
    %cst_21 = arith.constant dense<0.000000e+00> : vector<8x32xf32>
    %32 = vector.multi_reduction <add>, %31, %cst_21 [1] : vector<8x8x32xf32> to vector<8x32xf32>
    %33 = vector.shape_cast %32 : vector<8x32xf32> to vector<8x1x32xf32>
    %34 = vector.broadcast %33 : vector<8x1x32xf32> to vector<8x8x32xf32>
    %35 = arith.divf %31, %34 : vector<8x8x32xf32>
    %c0_22 = arith.constant 0 : index
    %c0_23 = arith.constant 0 : index
    %c0_24 = arith.constant 0 : index
    %36 = vector.load %arg4[%c0_22, %c0_23, %c0_24] : memref<8x8x32xf32, #tpu.memory_space<vmem>>, vector<8x8x32xf32>
    %37 = arith.addf %36, %0 : vector<8x8x32xf32>
    %38 = arith.mulf %35, %37 : vector<8x8x32xf32>
    %cst_25 = arith.constant dense<0.000000e+00> : vector<8x32xf32>
    %39 = vector.multi_reduction <add>, %38, %cst_25 [1] : vector<8x8x32xf32> to vector<8x32xf32>
    %c0_26 = arith.constant 0 : index
    %c0_27 = arith.constant 0 : index
    %40 = vector.load %arg10[%c0_26, %c0_27] : memref<32x128xf32, #tpu.memory_space<vmem>>, vector<32x128xf32>
    %cst_28 = arith.constant dense<0.000000e+00> : vector<8x128xf32>
    %41 = tpu.matmul %39, %40, %cst_28 {dimension_numbers = #tpu.dot_dimension_numbers<[1], [0], [0], [1], [0, 0, 1, 1], [], []>} : vector<8x32xf32>, vector<32x128xf32>, vector<8x128xf32> -> vector<8x128xf32>
    %c0_29 = arith.constant 0 : index
    %c0_30 = arith.constant 0 : index
    %42 = vector.load %arg11[%c0_29, %c0_30] : memref<1x128xf32, #tpu.memory_space<vmem>>, vector<1x128xf32>
    %43 = vector.broadcast %42 : vector<1x128xf32> to vector<8x128xf32>
    %44 = arith.addf %41, %43 : vector<8x128xf32>
    %c0_31 = arith.constant 0 : index
    %c0_32 = arith.constant 0 : index
    %45 = vector.load %arg5[%c0_31, %c0_32] : memref<8x128xf32, #tpu.memory_space<vmem>>, vector<8x128xf32>
    %46 = arith.addf %44, %45 : vector<8x128xf32>
    %c0_33 = arith.constant 0 : index
    %c0_34 = arith.constant 0 : index
    %47 = vector.load %arg12[%c0_33, %c0_34] : memref<8x128xf32, #tpu.memory_space<vmem>>, vector<8x128xf32>
    tpu.vector_store %arg12[%c0_33, %c0_34], %46 {strides = array<i32>} : memref<8x128xf32, #tpu.memory_space<vmem>>, vector<8x128xf32>,
    return
  }
  func.func @transform_0(%arg0: i32) -> (i32, i32, i32) {
    %c0_i32 = arith.constant 0 : i32
    %c0_i32_0 = arith.constant 0 : i32
    %c0_i32_1 = arith.constant 0 : i32
    return %arg0, %c0_i32, %c0_i32_0 : i32, i32, i32
  }
  func.func @transform_1(%arg0: i32) -> (i32, i32, i32) {
    %c0_i32 = arith.constant 0 : i32
    %c0_i32_0 = arith.constant 0 : i32
    %c0_i32_1 = arith.constant 0 : i32
    return %arg0, %c0_i32, %c0_i32_0 : i32, i32, i32
  }
  func.func @transform_2(%arg0: i32) -> (i32, i32, i32) {
    %c0_i32 = arith.constant 0 : i32
    %c0_i32_0 = arith.constant 0 : i32
    %c0_i32_1 = arith.constant 0 : i32
    return %arg0, %c0_i32, %c0_i32_0 : i32, i32, i32
  }
  func.func @transform_3(%arg0: i32) -> (i32, i32, i32) {
    %c0_i32 = arith.constant 0 : i32
    %c0_i32_0 = arith.constant 0 : i32
    %c0_i32_1 = arith.constant 0 : i32
    return %arg0, %c0_i32, %c0_i32_0 : i32, i32, i32
  }
  func.func @transform_4(%arg0: i32) -> (i32, i32) {
    %c0_i32 = arith.constant 0 : i32
    %c0_i32_0 = arith.constant 0 : i32
    return %arg0, %c0_i32 : i32, i32
  }
  func.func @transform_5(%arg0: i32) -> (i32, i32) {
    %c0_i32 = arith.constant 0 : i32
    %c0_i32_0 = arith.constant 0 : i32
    %c0_i32_1 = arith.constant 0 : i32
    return %c0_i32, %c0_i32_0 : i32, i32
  }
  func.func @transform_6(%arg0: i32) -> (i32, i32) {
    %c0_i32 = arith.constant 0 : i32
    %c0_i32_0 = arith.constant 0 : i32
    %c0_i32_1 = arith.constant 0 : i32
    return %c0_i32, %c0_i32_0 : i32, i32
  }
  func.func @transform_7(%arg0: i32) -> (i32, i32) {
    %c0_i32 = arith.constant 0 : i32
    %c0_i32_0 = arith.constant 0 : i32
    %c0_i32_1 = arith.constant 0 : i32
    return %c0_i32, %c0_i32_0 : i32, i32
  }
  func.func @transform_8(%arg0: i32) -> (i32, i32) {
    %c0_i32 = arith.constant 0 : i32
    %c0_i32_0 = arith.constant 0 : i32
    %c0_i32_1 = arith.constant 0 : i32
    return %c0_i32, %c0_i32_0 : i32, i32
  }
  func.func @transform_9(%arg0: i32) -> (i32, i32) {
    %c0_i32 = arith.constant 0 : i32
    %c0_i32_0 = arith.constant 0 : i32
    %c0_i32_1 = arith.constant 0 : i32
    return %c0_i32, %c0_i32_0 : i32, i32
  }
  func.func @transform_10(%arg0: i32) -> (i32, i32) {
    %c0_i32 = arith.constant 0 : i32
    %c0_i32_0 = arith.constant 0 : i32
    %c0_i32_1 = arith.constant 0 : i32
    return %c0_i32, %c0_i32_0 : i32, i32
  }
  func.func @transform_11(%arg0: i32) -> (i32, i32) {
    %c0_i32 = arith.constant 0 : i32
    %c0_i32_0 = arith.constant 0 : i32
    return %arg0, %c0_i32 : i32, i32
  }
}

module attributes {stable_mosaic.version = 11 : i64} {
  func.func @_head_kernel(%arg0: memref<2x2x128xf32, #tpu.memory_space<vmem>>, %arg1: memref<128x256xf32, #tpu.memory_space<vmem>>, %arg2: memref<1x256xf32, #tpu.memory_space<vmem>>, %arg3: memref<256x64xf32, #tpu.memory_space<vmem>>, %arg4: memref<1x64xf32, #tpu.memory_space<vmem>>, %arg5: memref<64x5xf32, #tpu.memory_space<vmem>>, %arg6: memref<1x5xf32, #tpu.memory_space<vmem>>, %arg7: memref<2x5xf32, #tpu.memory_space<vmem>>) attributes {dimension_semantics = [], scalar_prefetch = 0 : i64, scratch_operands = 0 : i64, tpu.core_type = #tpu.core_type<tc>} {
    %c0 = arith.constant 0 : index
    %c0_0 = arith.constant 0 : index
    %c0_1 = arith.constant 0 : index
    %0 = vector.load %arg0[%c0, %c0_0, %c0_1] : memref<2x2x128xf32, #tpu.memory_space<vmem>>, vector<2x2x128xf32>
    %cst = arith.constant dense<0.000000e+00> : vector<2x128xf32>
    %1 = vector.multi_reduction <add>, %0, %cst [1] : vector<2x2x128xf32> to vector<2x128xf32>
    %cst_2 = arith.constant 2.000000e+00 : f32
    %2 = vector.broadcast %cst_2 : f32 to vector<2x128xf32>
    %3 = arith.divf %1, %2 : vector<2x128xf32>
    %c0_3 = arith.constant 0 : index
    %c0_4 = arith.constant 0 : index
    %4 = vector.load %arg1[%c0_3, %c0_4] : memref<128x256xf32, #tpu.memory_space<vmem>>, vector<128x256xf32>
    %cst_5 = arith.constant dense<0.000000e+00> : vector<2x256xf32>
    %5 = tpu.matmul %3, %4, %cst_5 {dimension_numbers = #tpu.dot_dimension_numbers<[1], [0], [0], [1], [0, 0, 1, 1], [], []>} : vector<2x128xf32>, vector<128x256xf32>, vector<2x256xf32> -> vector<2x256xf32>
    %c0_6 = arith.constant 0 : index
    %c0_7 = arith.constant 0 : index
    %6 = vector.load %arg2[%c0_6, %c0_7] : memref<1x256xf32, #tpu.memory_space<vmem>>, vector<1x256xf32>
    %7 = vector.broadcast %6 : vector<1x256xf32> to vector<2x256xf32>
    %8 = arith.addf %5, %7 : vector<2x256xf32>
    %cst_8 = arith.constant 0.000000e+00 : f32
    %9 = vector.broadcast %cst_8 : f32 to vector<2x256xf32>
    %10 = arith.maximumf %8, %9 : vector<2x256xf32>
    %c0_9 = arith.constant 0 : index
    %c0_10 = arith.constant 0 : index
    %11 = vector.load %arg3[%c0_9, %c0_10] : memref<256x64xf32, #tpu.memory_space<vmem>>, vector<256x64xf32>
    %cst_11 = arith.constant dense<0.000000e+00> : vector<2x64xf32>
    %12 = tpu.matmul %10, %11, %cst_11 {dimension_numbers = #tpu.dot_dimension_numbers<[1], [0], [0], [1], [0, 0, 1, 1], [], []>} : vector<2x256xf32>, vector<256x64xf32>, vector<2x64xf32> -> vector<2x64xf32>
    %c0_12 = arith.constant 0 : index
    %c0_13 = arith.constant 0 : index
    %13 = vector.load %arg4[%c0_12, %c0_13] : memref<1x64xf32, #tpu.memory_space<vmem>>, vector<1x64xf32>
    %14 = vector.broadcast %13 : vector<1x64xf32> to vector<2x64xf32>
    %15 = arith.addf %12, %14 : vector<2x64xf32>
    %cst_14 = arith.constant 0.000000e+00 : f32
    %16 = vector.broadcast %cst_14 : f32 to vector<2x64xf32>
    %17 = arith.maximumf %15, %16 : vector<2x64xf32>
    %c0_15 = arith.constant 0 : index
    %c0_16 = arith.constant 0 : index
    %18 = vector.load %arg5[%c0_15, %c0_16] : memref<64x5xf32, #tpu.memory_space<vmem>>, vector<64x5xf32>
    %cst_17 = arith.constant dense<0.000000e+00> : vector<2x5xf32>
    %19 = tpu.matmul %17, %18, %cst_17 {dimension_numbers = #tpu.dot_dimension_numbers<[1], [0], [0], [1], [0, 0, 1, 1], [], []>} : vector<2x64xf32>, vector<64x5xf32>, vector<2x5xf32> -> vector<2x5xf32>
    %c0_18 = arith.constant 0 : index
    %c0_19 = arith.constant 0 : index
    %20 = vector.load %arg6[%c0_18, %c0_19] : memref<1x5xf32, #tpu.memory_space<vmem>>, vector<1x5xf32>
    %21 = vector.broadcast %20 : vector<1x5xf32> to vector<2x5xf32>
    %22 = arith.addf %19, %21 : vector<2x5xf32>
    %c0_20 = arith.constant 0 : index
    %c0_21 = arith.constant 0 : index
    %23 = vector.load %arg7[%c0_20, %c0_21] : memref<2x5xf32, #tpu.memory_space<vmem>>, vector<2x5xf32>
    tpu.vector_store %arg7[%c0_20, %c0_21], %22 {strides = array<i32>} : memref<2x5xf32, #tpu.memory_space<vmem>>, vector<2x5xf32>,
    return
  }
}

</mosaic_0001>

<llo_original>
// kernel: point_transformer_cls.13
$region0: #{point_transformer_cls.13}
  #allocation0 [shape = 'u32[]', space=smem, size = 0x4, offset = 0x4, fixed_abs, tag = 'smem constant byte address 0x4 - core index']
  #allocation1 [shape = 'u32[144,128]{1,0:T(1,128)}', space=vmem, size = 0x12000, scoped, tag = 'internal scratch']
  %s0 = inlined_call_operand.vmem [shape: f32[64,6], index: 0, kind: input, shape index: {}]
  %s1 = inlined_call_operand.vmem [shape: f32[6,32], index: 1, kind: input, shape index: {}]
  %s2 = inlined_call_operand.vmem [shape: f32[1,32], index: 2, kind: input, shape index: {}]
  %s3 = inlined_call_operand.vmem [shape: f32[32,32], index: 3, kind: input, shape index: {}]
  %s4 = inlined_call_operand.vmem [shape: f32[1,32], index: 4, kind: input, shape index: {}]
  %s5 = inlined_call_operand.vmem [shape: f32[64,32], index: 5, kind: output, shape index: {}]
  %s6 = sld [smem:[#allocation0]]
  $region53: #{point_transformer_cls.13} parent=0
    _
  %s8 = ssub.s32 1, %s6
  %s9 = scalar_select 0, %s8, %s6
  loop: start=0, step=1, limit=4
  $region2: #{point_transformer_cls.13} parent=0 // loop_pre_header
    _
  $region3: #{point_transformer_cls.13} parent=0 // loop_header
    %s11 = sphi 0, %s15
    %p12 = scmp.ge.s32.totalorder %s11, 4
    %s21 = sphi 0, %s23
    %s24 = sphi 0, %s21
    %s25 = sphi 0, %s24
    %s41 = sphi 0, %s25
    %s45 = sphi 0, %s45
    %s47 = sphi 0, %s45
    %s48 = sphi 0, %s47
    %s62 = sphi 0, %s48
    %s66 = sphi 0, %s66
    %s68 = sphi 0, %s66
    %s69 = sphi 0, %s68
    %s83 = sphi 0, %s69
    %s87 = sphi 0, %s87
    %s89 = sphi 0, %s87
    %s90 = sphi 0, %s89
    %s104 = sphi 0, %s90
    %s108 = sphi 0, %s108
    %s110 = sphi 0, %s108
    %s111 = sphi 0, %s110
    %s125 = sphi 0, %s111
    %s131 = sphi 0, %s133
    %s134 = sphi 0, %s131
    %s135 = sphi 0, %s134
    %s151 = sphi 0, %s135
  $region4: #{point_transformer_cls.13} parent=0 // loop_header_branch
    %14 = sbr.rel (%p12) target = $region8
  $region5: #{point_transformer_cls.13} parent=0 // loop_body
    %s16 = ssub.s32 %s11, 1
    %s17 = ssub.s32 %s11, 2
    %s18 = sadd.s32 %s11, 1
    %s19 = ssub.s32 %s11, %s18
    %p20 = scmp.eq.s32.totalorder %s19, 0
    %s22 = sadd.s32 %s21, 1
    %s23 = scalar_select %p20, %s21, %s22
    %p26 = pneg %p20
    %p27 = scmp.eq.s32.totalorder %s11, 1
    %p28 = por %p26, %p27
    %p29 = scmp.ne.s32.totalorder %s21, %s24
    %p30 = scmp.eq.s32.totalorder %s11, 0
    %p31 = por %p29, %p30
    %p32 = scmp.ne.s32.totalorder %s21, %s24
    %p33 = scmp.eq.s32.totalorder %s16, 1
    %p34 = por %p32, %p33
    %p35 = scmp.ne.s32.totalorder %s24, %s25
    %p36 = scmp.eq.s32.totalorder %s16, 0
    %p37 = por %p35, %p36
    %p38 = scmp.ne.s32.totalorder %s24, %s25
    %p39 = scmp.eq.s32.totalorder %s17, 1
    %p40 = por %p38, %p39
    %p42 = scmp.ne.s32.totalorder %s25, %s41
    %p43 = scmp.eq.s32.totalorder %s17, 0
    %p44 = por %p42, %p43
    %s46 = sadd.s32 %s45, 1
    %p49 = scmp.eq.s32.totalorder %s11, 1
    %p50 = scmp.ne.s32.totalorder %s45, %s47
    %p51 = scmp.eq.s32.totalorder %s11, 0
    %p52 = por %p50, %p51
    %p53 = scmp.ne.s32.totalorder %s45, %s47
    %p54 = scmp.eq.s32.totalorder %s16, 1
    %p55 = por %p53, %p54
    %p56 = scmp.ne.s32.totalorder %s47, %s48
    %p57 = scmp.eq.s32.totalorder %s16, 0
    %p58 = por %p56, %p57
    %p59 = scmp.ne.s32.totalorder %s47, %s48
    %p60 = scmp.eq.s32.totalorder %s17, 1
    %p61 = por %p59, %p60
    %p63 = scmp.ne.s32.totalorder %s48, %s62
    %p64 = scmp.eq.s32.totalorder %s17, 0
    %p65 = por %p63, %p64
    %s67 = sadd.s32 %s66, 1
    %p70 = scmp.eq.s32.totalorder %s11, 1
    %p71 = scmp.ne.s32.totalorder %s66, %s68
    %p72 = scmp.eq.s32.totalorder %s11, 0
    %p73 = por %p71, %p72
    %p74 = scmp.ne.s32.totalorder %s66, %s68
    %p75 = scmp.eq.s32.totalorder %s16, 1
    %p76 = por %p74, %p75
    %p77 = scmp.ne.s32.totalorder %s68, %s69
    %p78 = scmp.eq.s32.totalorder %s16, 0
    %p79 = por %p77, %p78
    %p80 = scmp.ne.s32.totalorder %s68, %s69
    %p81 = scmp.eq.s32.totalorder %s17, 1
    %p82 = por %p80, %p81
    %p84 = scmp.ne.s32.totalorder %s69, %s83
    %p85 = scmp.eq.s32.totalorder %s17, 0
    %p86 = por %p84, %p85
    %s88 = sadd.s32 %s87, 1
    %p91 = scmp.eq.s32.totalorder %s11, 1
    %p92 = scmp.ne.s32.totalorder %s87, %s89
    %p93 = scmp.eq.s32.totalorder %s11, 0
    %p94 = por %p92, %p93
    %p95 = scmp.ne.s32.totalorder %s87, %s89
    %p96 = scmp.eq.s32.totalorder %s16, 1
    %p97 = por %p95, %p96
    %p98 = scmp.ne.s32.totalorder %s89, %s90
    %p99 = scmp.eq.s32.totalorder %s16, 0
    %p100 = por %p98, %p99
    %p101 = scmp.ne.s32.totalorder %s89, %s90
    %p102 = scmp.eq.s32.totalorder %s17, 1
    %p103 = por %p101, %p102
    %p105 = scmp.ne.s32.totalorder %s90, %s104
    %p106 = scmp.eq.s32.totalorder %s17, 0
    %p107 = por %p105, %p106
    %s109 = sadd.s32 %s108, 1
    %p112 = scmp.eq.s32.totalorder %s11, 1
    %p113 = scmp.ne.s32.totalorder %s108, %s110
    %p114 = scmp.eq.s32.totalorder %s11, 0
    %p115 = por %p113, %p114
    %p116 = scmp.ne.s32.totalorder %s108, %s110
    %p117 = scmp.eq.s32.totalorder %s16, 1
    %p118 = por %p116, %p117
    %p119 = scmp.ne.s32.totalorder %s110, %s111
    %p120 = scmp.eq.s32.totalorder %s16, 0
    %p121 = por %p119, %p120
    %p122 = scmp.ne.s32.totalorder %s110, %s111
    %p123 = scmp.eq.s32.totalorder %s17, 1
    %p124 = por %p122, %p123
    %p126 = scmp.ne.s32.totalorder %s111, %s125
    %p127 = scmp.eq.s32.totalorder %s17, 0
    %p128 = por %p126, %p127
    %s129 = ssub.s32 %s11, %s18
    %p130 = scmp.eq.s32.totalorder %s129, 0
    %s132 = sadd.s32 %s131, 1
    %s133 = scalar_select %p130, %s131, %s132
    %p136 = pneg %p130
    %p137 = scmp.eq.s32.totalorder %s11, 1
    %p138 = por %p136, %p137
    %p139 = scmp.ne.s32.totalorder %s131, %s134
    %p140 = scmp.eq.s32.totalorder %s11, 0
    %p141 = por %p139, %p140
    %p142 = scmp.ne.s32.totalorder %s131, %s134
    %p143 = scmp.eq.s32.totalorder %s16, 1
    %p144 = por %p142, %p143
    %p145 = scmp.ne.s32.totalorder %s134, %s135
    %p146 = scmp.eq.s32.totalorder %s16, 0
    %p147 = por %p145, %p146
    %p148 = scmp.ne.s32.totalorder %s134, %s135
    %p149 = scmp.eq.s32.totalorder %s17, 1
    %p150 = por %p148, %p149
    %p152 = scmp.ne.s32.totalorder %s135, %s151
    %p153 = scmp.eq.s32.totalorder %s17, 0
    %p154 = por %p152, %p153
    %p155 = scmp.le.s32.totalorder 1, %s11
    %p156 = scmp.lt.s32.totalorder %s11, 3
    %p157 = pnand %p155, %p156
    %p158 = pneg %p157
    // Predicated region
    $region9: #{point_transformer_cls.13} parent=5 // pred_check
      _
    $region10: #{point_transformer_cls.13} parent=5 // pred_check_branch
      %160 = sbr.rel (%p157) target = $region12
    $region11: #{point_transformer_cls.13} parent=5 // pred_region
      %s161 = ssub.s32 %s11, 1
      // Predicated region
      $region13: #{point_transformer_cls.13} parent=11 // pred_check
        %p162 = pneg %p58
      $region14: #{point_transformer_cls.13} parent=11 // pred_check_branch
        %164 = sbr.rel (%p162) target = $region16
      $region15: #{point_transformer_cls.13} parent=11 // pred_region
        _
      $region16: #{point_transformer_cls.13} parent=11 // pred_fallthru
        _
      // Predicated region
      $region17: #{point_transformer_cls.13} parent=11 // pred_check
        %p165 = pneg %p79
      $region18: #{point_transformer_cls.13} parent=11 // pred_check_branch
        %167 = sbr.rel (%p165) target = $region20
      $region19: #{point_transformer_cls.13} parent=11 // pred_region
        _
      $region20: #{point_transformer_cls.13} parent=11 // pred_fallthru
        _
      // Predicated region
      $region21: #{point_transformer_cls.13} parent=11 // pred_check
        %p168 = pneg %p100
      $region22: #{point_transformer_cls.13} parent=11 // pred_check_branch
        %170 = sbr.rel (%p168) target = $region24
      $region23: #{point_transformer_cls.13} parent=11 // pred_region
        _
      $region24: #{point_transformer_cls.13} parent=11 // pred_fallthru
        _
      // Predicated region
      $region25: #{point_transformer_cls.13} parent=11 // pred_check
        %p171 = pneg %p121
      $region26: #{point_transformer_cls.13} parent=11 // pred_check_branch
        %173 = sbr.rel (%p171) target = $region28
      $region27: #{point_transformer_cls.13} parent=11 // pred_region
        _
      $region28: #{point_transformer_cls.13} parent=11 // pred_fallthru
        _
    $region12: #{point_transformer_cls.13} parent=5 // pred_fallthru
      _
    %p174 = scmp.lt.s32.totalorder %s11, 2
    // Predicated region
    $region29: #{point_transformer_cls.13} parent=5 // pred_check
      %p175 = pneg %p174
    $region30: #{point_transformer_cls.13} parent=5 // pred_check_branch
      %177 = sbr.rel (%p175) target = $region32
    $region31: #{point_transformer_cls.13} parent=5 // pred_region
      // Predicated region
      $region33: #{point_transformer_cls.13} parent=31 // pred_check
        %p178 = pneg %p31
      $region34: #{point_transformer_cls.13} parent=31 // pred_check_branch
        %180 = sbr.rel (%p178) target = $region36
      $region35: #{point_transformer_cls.13} parent=31 // pred_region
        %s181 = smul.u32 4, %s11
        %p182 = scmp.lt.s32.totalorder %s181, 7
        %s183 = scalar_select %p182, %s181, 7
        %s184 = smul.addr %s183, 8
        %s185 = scalar_lea.vmem %s0, %s184
        %s186 = smul.u32 4, %s11
      $region36: #{point_transformer_cls.13} parent=31 // pred_fallthru
        _
    $region32: #{point_transformer_cls.13} parent=5 // pred_fallthru
      _
    %p187 = scmp.le.s32.totalorder 1, %s11
    %p188 = scmp.lt.s32.totalorder %s11, 3
    %p189 = pnand %p187, %p188
    %p190 = pneg %p189
    // Predicated region
    $region37: #{point_transformer_cls.13} parent=5 // pred_check
      _
    $region38: #{point_transformer_cls.13} parent=5 // pred_check_branch
      %192 = sbr.rel (%p189) target = $region40
    $region39: #{point_transformer_cls.13} parent=5 // pred_region
      %s193 = ssub.s32 %s11, 1
      %s194 = smul.u32 4, %s16
      %p195 = scmp.lt.s32.totalorder %s194, 7
      %s196 = scalar_select %p195, %s194, 7
      %s197 = smul.addr %s196, 8
      %s198 = scalar_lea.vmem %s0, %s197
      %p199 = pneg %p37
      %p200 = pneg %p34
      %p201 = pneg %p58
      %p202 = pneg %p55
      %p203 = pneg %p79
      %p204 = pneg %p76
      %p205 = pneg %p100
      %p206 = pneg %p97
      %p207 = pneg %p121
      %p208 = pneg %p118
      %p209 = pneg %p147
      %p210 = pneg %p144
      %s211 = smul.u32 4, %s16
      %p212 = scmp.lt.s32.totalorder %s211, 7
      %s213 = scalar_select %p212, %s211, 7
      %s214 = smul.addr %s213, 8
      %s215 = scalar_lea.vmem %s5, %s214
      %s216 = smul.u32 4, %s16
      %p217 = scmp.lt.s32.totalorder %s216, 7
      %s218 = scalar_select %p217, %s216, 7
      %s219 = smul.addr %s218, 8
      %s220 = scalar_lea.vmem %s0, %s219
      %s221 = smul.u32 4, %s16
      %s222 = smul.u32 4, %s16
      %p223 = scmp.lt.s32.totalorder %s222, 7
      %s224 = scalar_select %p223, %s222, 7
      %s225 = smul.addr %s224, 8
      %s226 = scalar_lea.vmem %s5, %s225
      %s227 = smul.u32 4, %s16
      %v228 = vld [vmem:[%s220] sm:$0xff]
      %v229 = vld [vmem:[%s220 + $0x8] sm:$0xff]
      %v230 = vld [vmem:[%s220 + $0x10] sm:$0xff]
      %v231 = vld [vmem:[%s220 + $0x18] sm:$0xff]
      %v232 = vld [vmem:[%s1] sm:$0x3f]
      %v233 = vld [vmem:[%s2] sm:$0x1]
      %v235 = vlaneseq
      %v236 = vshrl.u32 %v235, 7
      %v237 = vsub.s32 0, %v236
      %v238 = vrot.slane %v233, %v237
      %vm240 = vcmask 48128
      %v242 = vsel %vm240, %v228, 0
      %v245 = vsel %vm240, %v229, 0
      %v248 = vsel %vm240, %v230, 0
      %v251 = vsel %vm240, %v231, 0
      %vm253 = vcmask 1045504
      %v255 = vsel %vm253, %v232, 0
      %257 = vmatprep.subr.mxu0 0.0
      %258 = vmatpush1.msra.mxu0 %v255
      %259 = vmatprep.subr.mxu0 0.0
      %260 = vmatpush1.msra.mxu0 0.0
      %261 = vmatprep.subr.mxu0 0.0
      %262 = vmatpush1.msra.mxu0 0.0
      %263 = vmatprep.subr.mxu0 0.0
      %264 = vmatpush1.msra.mxu0 0.0
      %265 = vmatprep.subr.mxu0 0.0
      %266 = vmatpush1.msra.mxu0 0.0
      %267 = vmatprep.subr.mxu0 0.0
      %268 = vmatpush1.msra.mxu0 0.0
      %269 = vmatprep.subr.mxu0 0.0
      %270 = vmatpush1.msra.mxu0 0.0
      %271 = vmatprep.subr.mxu0 0.0
      %272 = vmatpush1.msra.mxu0 0.0
      %273 = vmatprep.subr.mxu0 0.0
      %274 = vmatpush1.msra.mxu0 0.0
      %275 = vmatprep.subr.mxu0 0.0
      %276 = vmatpush1.msra.mxu0 0.0
      %277 = vmatprep.subr.mxu0 0.0
      %278 = vmatpush1.msra.mxu0 0.0
      %279 = vmatprep.subr.mxu0 0.0
      %280 = vmatpush1.msra.mxu0 0.0
      %281 = vmatprep.subr.mxu0 0.0
      %282 = vmatpush1.msra.mxu0 0.0
      %283 = vmatprep.subr.mxu0 0.0
      %284 = vmatpush1.msra.mxu0 0.0
      %285 = vmatprep.subr.mxu0 0.0
      %286 = vmatpush1.msra.mxu0 0.0
      %287 = vmatprep.subr.mxu0 0.0
      %288 = vmatpush1.msra.mxu0 0.0
      %289 = vmatprep.subr.mxu0 0.0
      %290 = vmatpush1.msra.mxu0 0.0
      %291 = vmatprep.subr.mxu0 0.0
      %292 = vmatpush1.msra.mxu0 0.0
      %293 = vmatprep.subr.mxu0 0.0
      %294 = vmatpush1.msra.mxu0 0.0
      %295 = vmatprep.subr.mxu0 0.0
      %296 = vmatpush1.msra.mxu0 0.0
      %297 = vmatprep.subr.mxu0 0.0
      %298 = vmatpush1.msra.mxu0 0.0
      %299 = vmatprep.subr.mxu0 0.0
      %300 = vmatpush1.msra.mxu0 0.0
      %301 = vmatprep.subr.mxu0 0.0
      %302 = vmatpush1.msra.mxu0 0.0
      %303 = vmatprep.subr.mxu0 0.0
      %304 = vmatpush1.msra.mxu0 0.0
      %305 = vmatprep.subr.mxu0 0.0
      %306 = vmatpush1.msra.mxu0 0.0
      %307 = vmatprep.subr.mxu0 0.0
      %308 = vmatpush1.msra.mxu0 0.0
      %309 = vmatprep.subr.mxu0 0.0
      %310 = vmatpush1.msra.mxu0 0.0
      %311 = vmatprep.subr.mxu0 0.0
      %312 = vmatpush1.msra.mxu0 0.0
      %313 = vmatprep.subr.mxu0 0.0
      %314 = vmatpush1.msra.mxu0 0.0
      %315 = vmatprep.subr.mxu0 0.0
      %316 = vmatpush1.msra.mxu0 0.0
      %317 = vmatprep.subr.mxu0 0.0
      %318 = vmatpush1.msra.mxu0 0.0
      %319 = vmatprep.subr.mxu0 0.0
      %320 = vmatpush1.msra.mxu0 0.0
      %321 = vmatprep.mubr.f32.mxu0 0.0
      %322 = vmatmul.mubr.f32.gmra.mrb[0].mxu0 %v242
      %v323 = vpop.f32.mrb[0].mxu0
      %v324 = vadd.f32 %v238, %v323
      %v325 = vpop.f32.mrb[0].mxu0
      %326 = vmatprep.mubr.f32.mxu0 0.0
      %327 = vmatmul.mubr.f32.gmra.mrb[0].mxu0 %v245
      %v328 = vpop.f32.mrb[0].mxu0
      %v329 = vadd.f32 %v238, %v328
      %v330 = vpop.f32.mrb[0].mxu0
      %331 = vmatprep.mubr.f32.mxu0 0.0
      %332 = vmatmul.mubr.f32.gmra.mrb[0].mxu0 %v248
      %v333 = vpop.f32.mrb[0].mxu0
      %v334 = vadd.f32 %v238, %v333
      %v335 = vpop.f32.mrb[0].mxu0
      %336 = vmatprep.mubr.f32.mxu0 0.0
      %337 = vmatmul.mubr.f32.gmra.mrb[0].mxu0 %v251
      %v338 = vpop.f32.mrb[0].mxu0
      %v339 = vadd.f32 %v238, %v338
      %v340 = vpop.f32.mrb[0].mxu0
      %341 = vdwg.mxu0
      %v342 = vmax.f32 %v324, 0.0
      %v343 = vmax.f32 %v329, 0.0
      %v344 = vmax.f32 %v334, 0.0
      %v345 = vmax.f32 %v339, 0.0
      %v346 = vld [vmem:[%s3] sm:$0xff]
      %v347 = vld [vmem:[%s3 + $0x8] sm:$0xff]
      %v348 = vld [vmem:[%s3 + $0x10] sm:$0xff]
      %v349 = vld [vmem:[%s3 + $0x18] sm:$0xff]
      %v350 = vld [vmem:[%s4] sm:$0x1]
      %v352 = vlaneseq
      %v353 = vshrl.u32 %v352, 7
      %v354 = vsub.s32 0, %v353
      %v355 = vrot.slane %v350, %v354
      %vm357 = vcmask 261120
      %v359 = vsel %vm357, %v342, 0
      %v362 = vsel %vm357, %v343, 0
      %v365 = vsel %vm357, %v344, 0
      %v368 = vsel %vm357, %v345, 0
      %370 = vmatprep.subr.mxu0 0.0
      %371 = vmatpush1.msra.mxu0 %v346
      %372 = vmatprep.subr.mxu0 0.0
      %373 = vmatpush1.msra.mxu0 %v347
      %374 = vmatprep.subr.mxu0 0.0
      %375 = vmatpush1.msra.mxu0 %v348
      %376 = vmatprep.subr.mxu0 0.0
      %377 = vmatpush1.msra.mxu0 %v349
      %378 = vmatprep.subr.mxu0 0.0
      %379 = vmatpush1.msra.mxu0 0.0
      %380 = vmatprep.subr.mxu0 0.0
      %381 = vmatpush1.msra.mxu0 0.0
      %382 = vmatprep.subr.mxu0 0.0
      %383 = vmatpush1.msra.mxu0 0.0
      %384 = vmatprep.subr.mxu0 0.0
      %385 = vmatpush1.msra.mxu0 0.0
      %386 = vmatprep.subr.mxu0 0.0
      %387 = vmatpush1.msra.mxu0 0.0
      %388 = vmatprep.subr.mxu0 0.0
      %389 = vmatpush1.msra.mxu0 0.0
      %390 = vmatprep.subr.mxu0 0.0
      %391 = vmatpush1.msra.mxu0 0.0
      %392 = vmatprep.subr.mxu0 0.0
      %393 = vmatpush1.msra.mxu0 0.0
      %394 = vmatprep.subr.mxu0 0.0
      %395 = vmatpush1.msra.mxu0 0.0
      %396 = vmatprep.subr.mxu0 0.0
      %397 = vmatpush1.msra.mxu0 0.0
      %398 = vmatprep.subr.mxu0 0.0
      %399 = vmatpush1.msra.mxu0 0.0
      %400 = vmatprep.subr.mxu0 0.0
      %401 = vmatpush1.msra.mxu0 0.0
      %402 = vmatprep.subr.mxu0 0.0
      %403 = vmatpush1.msra.mxu0 0.0
      %404 = vmatprep.subr.mxu0 0.0
      %405 = vmatpush1.msra.mxu0 0.0
      %406 = vmatprep.subr.mxu0 0.0
      %407 = vmatpush1.msra.mxu0 0.0
      %408 = vmatprep.subr.mxu0 0.0
      %409 = vmatpush1.msra.mxu0 0.0
      %410 = vmatprep.subr.mxu0 0.0
      %411 = vmatpush1.msra.mxu0 0.0
      %412 = vmatprep.subr.mxu0 0.0
      %413 = vmatpush1.msra.mxu0 0.0
      %414 = vmatprep.subr.mxu0 0.0
      %415 = vmatpush1.msra.mxu0 0.0
      %416 = vmatprep.subr.mxu0 0.0
      %417 = vmatpush1.msra.mxu0 0.0
      %418 = vmatprep.subr.mxu0 0.0
      %419 = vmatpush1.msra.mxu0 0.0
      %420 = vmatprep.subr.mxu0 0.0
      %421 = vmatpush1.msra.mxu0 0.0
      %422 = vmatprep.subr.mxu0 0.0
      %423 = vmatpush1.msra.mxu0 0.0
      %424 = vmatprep.subr.mxu0 0.0
      %425 = vmatpush1.msra.mxu0 0.0
      %426 = vmatprep.subr.mxu0 0.0
      %427 = vmatpush1.msra.mxu0 0.0
      %428 = vmatprep.subr.mxu0 0.0
      %429 = vmatpush1.msra.mxu0 0.0
      %430 = vmatprep.subr.mxu0 0.0
      %431 = vmatpush1.msra.mxu0 0.0
      %432 = vmatprep.subr.mxu0 0.0
      %433 = vmatpush1.msra.mxu0 0.0
      %434 = vmatprep.mubr.f32.mxu0 0.0
      %435 = vmatmul.mubr.f32.gmra.mrb[0].mxu0 %v359
      %v436 = vpop.f32.mrb[0].mxu0
      %v437 = vadd.f32 %v355, %v436
      %v438 = vpop.f32.mrb[0].mxu0
      %439 = vmatprep.mubr.f32.mxu0 0.0
      %440 = vmatmul.mubr.f32.gmra.mrb[0].mxu0 %v362
      %v441 = vpop.f32.mrb[0].mxu0
      %v442 = vadd.f32 %v355, %v441
      %v443 = vpop.f32.mrb[0].mxu0
      %444 = vmatprep.mubr.f32.mxu0 0.0
      %445 = vmatmul.mubr.f32.gmra.mrb[0].mxu0 %v365
      %v446 = vpop.f32.mrb[0].mxu0
      %v447 = vadd.f32 %v355, %v446
      %v448 = vpop.f32.mrb[0].mxu0
      %449 = vmatprep.mubr.f32.mxu0 0.0
      %450 = vmatmul.mubr.f32.gmra.mrb[0].mxu0 %v368
      %v451 = vpop.f32.mrb[0].mxu0
      %v452 = vadd.f32 %v355, %v451
      %v453 = vpop.f32.mrb[0].mxu0
      %454 = vdwg.mxu0
      %455 = vst.msk [vmem:[%s226] sm:$0xff] %vm357, %v437
      %456 = vst.msk [vmem:[%s226 + $0x8] sm:$0xff] %vm357, %v442
      %457 = vst.msk [vmem:[%s226 + $0x10] sm:$0xff] %vm357, %v447
      %458 = vst.msk [vmem:[%s226 + $0x18] sm:$0xff] %vm357, %v452
      %s459 = smul.u32 4, %s16
      %p460 = scmp.lt.s32.totalorder %s459, 7
      %s461 = scalar_select %p460, %s459, 7
      %s462 = smul.addr %s461, 8
      %s463 = scalar_lea.vmem %s5, %s462
      // Predicated region
      $region41: #{point_transformer_cls.13} parent=39 // pred_check
        %p464 = pneg %p144
      $region42: #{point_transformer_cls.13} parent=39 // pred_check_branch
        %466 = sbr.rel (%p464) target = $region44
      $region43: #{point_transformer_cls.13} parent=39 // pred_region
        %s467 = smul.u32 4, %s16
      $region44: #{point_transformer_cls.13} parent=39 // pred_fallthru
        _
    $region40: #{point_transformer_cls.13} parent=5 // pred_fallthru
      _
    %p468 = scmp.le.s32.totalorder 2, %s11
    // Predicated region
    $region45: #{point_transformer_cls.13} parent=5 // pred_check
      %p469 = pneg %p468
    $region46: #{point_transformer_cls.13} parent=5 // pred_check_branch
      %471 = sbr.rel (%p469) target = $region48
    $region47: #{point_transformer_cls.13} parent=5 // pred_region
      %s472 = ssub.s32 %s11, 2
      // Predicated region
      $region49: #{point_transformer_cls.13} parent=47 // pred_check
        %p473 = pneg %p150
      $region50: #{point_transformer_cls.13} parent=47 // pred_check_branch
        %475 = sbr.rel (%p473) target = $region52
      $region51: #{point_transformer_cls.13} parent=47 // pred_region
        %s476 = smul.u32 4, %s17
        %p477 = scmp.lt.s32.totalorder %s476, 7
        %s478 = scalar_select %p477, %s476, 7
        %s479 = smul.addr %s478, 8
        %s480 = scalar_lea.vmem %s5, %s479
      $region52: #{point_transformer_cls.13} parent=47 // pred_fallthru
        _
    $region48: #{point_transformer_cls.13} parent=5 // pred_fallthru
      _
  $region6: #{point_transformer_cls.13} parent=0 // loop_footer
    %s15 = sadd.s32 1, %s11
  $region7: #{point_transformer_cls.13} parent=0 // loop_footer_branch
    %10 = sbr.rel target = $region3
  $region8: #{point_transformer_cls.13} parent=0 // loop_exit
    _

// kernel: point_transformer_cls.15
$region0: #{point_transformer_cls.15}
  #allocation0 [shape = 'u32[]', space=smem, size = 0x4, offset = 0x4, fixed_abs, tag = 'smem constant byte address 0x4 - core index']
  #allocation1 [shape = 'u32[144,128]{1,0:T(1,128)}', space=vmem, size = 0x12000, scoped, tag = 'internal scratch']
  %s0 = inlined_call_operand.vmem [shape: f32[512,3], index: 0, kind: input, shape index: {}]
  %s1 = inlined_call_operand.vmem [shape: f32[3,32], index: 1, kind: input, shape index: {}]
  %s2 = inlined_call_operand.vmem [shape: f32[1,32], index: 2, kind: input, shape index: {}]
  %s3 = inlined_call_operand.vmem [shape: f32[32,32], index: 3, kind: input, shape index: {}]
  %s4 = inlined_call_operand.vmem [shape: f32[1,32], index: 4, kind: input, shape index: {}]
  %s5 = inlined_call_operand.vmem [shape: f32[512,32], index: 5, kind: output, shape index: {}]
  %s6 = sld [smem:[#allocation0]]
  $region53: #{point_transformer_cls.15} parent=0
    _
  %s8 = ssub.s32 1, %s6
  %s9 = scalar_select 0, %s8, %s6
  loop: start=0, step=1, limit=4
  $region2: #{point_transformer_cls.15} parent=0 // loop_pre_header
    _
  $region3: #{point_transformer_cls.15} parent=0 // loop_header
    %s11 = sphi 0, %s15
    %p12 = scmp.ge.s32.totalorder %s11, 4
    %s21 = sphi 0, %s23
    %s24 = sphi 0, %s21
    %s25 = sphi 0, %s24
    %s41 = sphi 0, %s25
    %s45 = sphi 0, %s45
    %s47 = sphi 0, %s45
    %s48 = sphi 0, %s47
    %s62 = sphi 0, %s48
    %s66 = sphi 0, %s66
    %s68 = sphi 0, %s66
    %s69 = sphi 0, %s68
    %s83 = sphi 0, %s69
    %s87 = sphi 0, %s87
    %s89 = sphi 0, %s87
    %s90 = sphi 0, %s89
    %s104 = sphi 0, %s90
    %s108 = sphi 0, %s108
    %s110 = sphi 0, %s108
    %s111 = sphi 0, %s110
    %s125 = sphi 0, %s111
    %s131 = sphi 0, %s133
    %s134 = sphi 0, %s131
    %s135 = sphi 0, %s134
    %s151 = sphi 0, %s135
  $region4: #{point_transformer_cls.15} parent=0 // loop_header_branch
    %14 = sbr.rel (%p12) target = $region8
  $region5: #{point_transformer_cls.15} parent=0 // loop_body
    %s16 = ssub.s32 %s11, 1
    %s17 = ssub.s32 %s11, 2
    %s18 = sadd.s32 %s11, 1
    %s19 = ssub.s32 %s11, %s18
    %p20 = scmp.eq.s32.totalorder %s19, 0
    %s22 = sadd.s32 %s21, 1
    %s23 = scalar_select %p20, %s21, %s22
    %p26 = pneg %p20
    %p27 = scmp.eq.s32.totalorder %s11, 1
    %p28 = por %p26, %p27
    %p29 = scmp.ne.s32.totalorder %s21, %s24
    %p30 = scmp.eq.s32.totalorder %s11, 0
    %p31 = por %p29, %p30
    %p32 = scmp.ne.s32.totalorder %s21, %s24
    %p33 = scmp.eq.s32.totalorder %s16, 1
    %p34 = por %p32, %p33
    %p35 = scmp.ne.s32.totalorder %s24, %s25
    %p36 = scmp.eq.s32.totalorder %s16, 0
    %p37 = por %p35, %p36
    %p38 = scmp.ne.s32.totalorder %s24, %s25
    %p39 = scmp.eq.s32.totalorder %s17, 1
    %p40 = por %p38, %p39
    %p42 = scmp.ne.s32.totalorder %s25, %s41
    %p43 = scmp.eq.s32.totalorder %s17, 0
    %p44 = por %p42, %p43
    %s46 = sadd.s32 %s45, 1
    %p49 = scmp.eq.s32.totalorder %s11, 1
    %p50 = scmp.ne.s32.totalorder %s45, %s47
    %p51 = scmp.eq.s32.totalorder %s11, 0
    %p52 = por %p50, %p51
    %p53 = scmp.ne.s32.totalorder %s45, %s47
    %p54 = scmp.eq.s32.totalorder %s16, 1
    %p55 = por %p53, %p54
    %p56 = scmp.ne.s32.totalorder %s47, %s48
    %p57 = scmp.eq.s32.totalorder %s16, 0
    %p58 = por %p56, %p57
    %p59 = scmp.ne.s32.totalorder %s47, %s48
    %p60 = scmp.eq.s32.totalorder %s17, 1
    %p61 = por %p59, %p60
    %p63 = scmp.ne.s32.totalorder %s48, %s62
    %p64 = scmp.eq.s32.totalorder %s17, 0
    %p65 = por %p63, %p64
    %s67 = sadd.s32 %s66, 1
    %p70 = scmp.eq.s32.totalorder %s11, 1
    %p71 = scmp.ne.s32.totalorder %s66, %s68
    %p72 = scmp.eq.s32.totalorder %s11, 0
    %p73 = por %p71, %p72
    %p74 = scmp.ne.s32.totalorder %s66, %s68
    %p75 = scmp.eq.s32.totalorder %s16, 1
    %p76 = por %p74, %p75
    %p77 = scmp.ne.s32.totalorder %s68, %s69
    %p78 = scmp.eq.s32.totalorder %s16, 0
    %p79 = por %p77, %p78
    %p80 = scmp.ne.s32.totalorder %s68, %s69
    %p81 = scmp.eq.s32.totalorder %s17, 1
    %p82 = por %p80, %p81
    %p84 = scmp.ne.s32.totalorder %s69, %s83
    %p85 = scmp.eq.s32.totalorder %s17, 0
    %p86 = por %p84, %p85
    %s88 = sadd.s32 %s87, 1
    %p91 = scmp.eq.s32.totalorder %s11, 1
    %p92 = scmp.ne.s32.totalorder %s87, %s89
    %p93 = scmp.eq.s32.totalorder %s11, 0
    %p94 = por %p92, %p93
    %p95 = scmp.ne.s32.totalorder %s87, %s89
    %p96 = scmp.eq.s32.totalorder %s16, 1
    %p97 = por %p95, %p96
    %p98 = scmp.ne.s32.totalorder %s89, %s90
    %p99 = scmp.eq.s32.totalorder %s16, 0
    %p100 = por %p98, %p99
    %p101 = scmp.ne.s32.totalorder %s89, %s90
    %p102 = scmp.eq.s32.totalorder %s17, 1
    %p103 = por %p101, %p102
    %p105 = scmp.ne.s32.totalorder %s90, %s104
    %p106 = scmp.eq.s32.totalorder %s17, 0
    %p107 = por %p105, %p106
    %s109 = sadd.s32 %s108, 1
    %p112 = scmp.eq.s32.totalorder %s11, 1
    %p113 = scmp.ne.s32.totalorder %s108, %s110
    %p114 = scmp.eq.s32.totalorder %s11, 0
    %p115 = por %p113, %p114
    %p116 = scmp.ne.s32.totalorder %s108, %s110
    %p117 = scmp.eq.s32.totalorder %s16, 1
    %p118 = por %p116, %p117
    %p119 = scmp.ne.s32.totalorder %s110, %s111
    %p120 = scmp.eq.s32.totalorder %s16, 0
    %p121 = por %p119, %p120
    %p122 = scmp.ne.s32.totalorder %s110, %s111
    %p123 = scmp.eq.s32.totalorder %s17, 1
    %p124 = por %p122, %p123
    %p126 = scmp.ne.s32.totalorder %s111, %s125
    %p127 = scmp.eq.s32.totalorder %s17, 0
    %p128 = por %p126, %p127
    %s129 = ssub.s32 %s11, %s18
    %p130 = scmp.eq.s32.totalorder %s129, 0
    %s132 = sadd.s32 %s131, 1
    %s133 = scalar_select %p130, %s131, %s132
    %p136 = pneg %p130
    %p137 = scmp.eq.s32.totalorder %s11, 1
    %p138 = por %p136, %p137
    %p139 = scmp.ne.s32.totalorder %s131, %s134
    %p140 = scmp.eq.s32.totalorder %s11, 0
    %p141 = por %p139, %p140
    %p142 = scmp.ne.s32.totalorder %s131, %s134
    %p143 = scmp.eq.s32.totalorder %s16, 1
    %p144 = por %p142, %p143
    %p145 = scmp.ne.s32.totalorder %s134, %s135
    %p146 = scmp.eq.s32.totalorder %s16, 0
    %p147 = por %p145, %p146
    %p148 = scmp.ne.s32.totalorder %s134, %s135
    %p149 = scmp.eq.s32.totalorder %s17, 1
    %p150 = por %p148, %p149
    %p152 = scmp.ne.s32.totalorder %s135, %s151
    %p153 = scmp.eq.s32.totalorder %s17, 0
    %p154 = por %p152, %p153
    %p155 = scmp.le.s32.totalorder 1, %s11
    %p156 = scmp.lt.s32.totalorder %s11, 3
    %p157 = pnand %p155, %p156
    %p158 = pneg %p157
    // Predicated region
    $region9: #{point_transformer_cls.15} parent=5 // pred_check
      _
    $region10: #{point_transformer_cls.15} parent=5 // pred_check_branch
      %160 = sbr.rel (%p157) target = $region12
    $region11: #{point_transformer_cls.15} parent=5 // pred_region
      %s161 = ssub.s32 %s11, 1
      // Predicated region
      $region13: #{point_transformer_cls.15} parent=11 // pred_check
        %p162 = pneg %p58
      $region14: #{point_transformer_cls.15} parent=11 // pred_check_branch
        %164 = sbr.rel (%p162) target = $region16
      $region15: #{point_transformer_cls.15} parent=11 // pred_region
        _
      $region16: #{point_transformer_cls.15} parent=11 // pred_fallthru
        _
      // Predicated region
      $region17: #{point_transformer_cls.15} parent=11 // pred_check
        %p165 = pneg %p79
      $region18: #{point_transformer_cls.15} parent=11 // pred_check_branch
        %167 = sbr.rel (%p165) target = $region20
      $region19: #{point_transformer_cls.15} parent=11 // pred_region
        _
      $region20: #{point_transformer_cls.15} parent=11 // pred_fallthru
        _
      // Predicated region
      $region21: #{point_transformer_cls.15} parent=11 // pred_check
        %p168 = pneg %p100
      $region22: #{point_transformer_cls.15} parent=11 // pred_check_branch
        %170 = sbr.rel (%p168) target = $region24
      $region23: #{point_transformer_cls.15} parent=11 // pred_region
        _
      $region24: #{point_transformer_cls.15} parent=11 // pred_fallthru
        _
      // Predicated region
      $region25: #{point_transformer_cls.15} parent=11 // pred_check
        %p171 = pneg %p121
      $region26: #{point_transformer_cls.15} parent=11 // pred_check_branch
        %173 = sbr.rel (%p171) target = $region28
      $region27: #{point_transformer_cls.15} parent=11 // pred_region
        _
      $region28: #{point_transformer_cls.15} parent=11 // pred_fallthru
        _
    $region12: #{point_transformer_cls.15} parent=5 // pred_fallthru
      _
    %p174 = scmp.lt.s32.totalorder %s11, 2
    // Predicated region
    $region29: #{point_transformer_cls.15} parent=5 // pred_check
      %p175 = pneg %p174
    $region30: #{point_transformer_cls.15} parent=5 // pred_check_branch
      %177 = sbr.rel (%p175) target = $region32
    $region31: #{point_transformer_cls.15} parent=5 // pred_region
      // Predicated region
      $region33: #{point_transformer_cls.15} parent=31 // pred_check
        %p178 = pneg %p31
      $region34: #{point_transformer_cls.15} parent=31 // pred_check_branch
        %180 = sbr.rel (%p178) target = $region36
      $region35: #{point_transformer_cls.15} parent=31 // pred_region
        %s181 = smul.u32 32, %s11
        %p182 = scmp.lt.s32.totalorder %s181, 63
        %s183 = scalar_select %p182, %s181, 63
        %s184 = smul.addr %s183, 8
        %s185 = scalar_lea.vmem %s0, %s184
        %s186 = smul.u32 32, %s11
      $region36: #{point_transformer_cls.15} parent=31 // pred_fallthru
        _
    $region32: #{point_transformer_cls.15} parent=5 // pred_fallthru
      _
    %p187 = scmp.le.s32.totalorder 1, %s11
    %p188 = scmp.lt.s32.totalorder %s11, 3
    %p189 = pnand %p187, %p188
    %p190 = pneg %p189
    // Predicated region
    $region37: #{point_transformer_cls.15} parent=5 // pred_check
      _
    $region38: #{point_transformer_cls.15} parent=5 // pred_check_branch
      %192 = sbr.rel (%p189) target = $region40
    $region39: #{point_transformer_cls.15} parent=5 // pred_region
      %s193 = ssub.s32 %s11, 1
      %s194 = smul.u32 32, %s16
      %p195 = scmp.lt.s32.totalorder %s194, 63
      %s196 = scalar_select %p195, %s194, 63
      %s197 = smul.addr %s196, 8
      %s198 = scalar_lea.vmem %s0, %s197
      %p199 = pneg %p37
      %p200 = pneg %p34
      %p201 = pneg %p58
      %p202 = pneg %p55
      %p203 = pneg %p79
      %p204 = pneg %p76
      %p205 = pneg %p100
      %p206 = pneg %p97
      %p207 = pneg %p121
      %p208 = pneg %p118
      %p209 = pneg %p147
      %p210 = pneg %p144
      %s211 = smul.u32 32, %s16
      %p212 = scmp.lt.s32.totalorder %s211, 63
      %s213 = scalar_select %p212, %s211, 63
      %s214 = smul.addr %s213, 8
      %s215 = scalar_lea.vmem %s5, %s214
      %s216 = smul.u32 32, %s16
      %p217 = scmp.lt.s32.totalorder %s216, 63
      %s218 = scalar_select %p217, %s216, 63
      %s219 = smul.addr %s218, 8
      %s220 = scalar_lea.vmem %s0, %s219
      %s221 = smul.u32 32, %s16
      %s222 = smul.u32 32, %s16
      %p223 = scmp.lt.s32.totalorder %s222, 63
      %s224 = scalar_select %p223, %s222, 63
      %s225 = smul.addr %s224, 8
      %s226 = scalar_lea.vmem %s5, %s225
      %s227 = smul.u32 32, %s16
      %v228 = vld [vmem:[%s220] sm:$0xff]
      %v229 = vld [vmem:[%s220 + $0x8] sm:$0xff]
      %v230 = vld [vmem:[%s220 + $0x10] sm:$0xff]
      %v231 = vld [vmem:[%s220 + $0x18] sm:$0xff]
      %v232 = vld [vmem:[%s220 + $0x20] sm:$0xff]
      %v233 = vld [vmem:[%s220 + $0x28] sm:$0xff]
      %v234 = vld [vmem:[%s220 + $0x30] sm:$0xff]
      %v235 = vld [vmem:[%s220 + $0x38] sm:$0xff]
      %v236 = vld [vmem:[%s220 + $0x40] sm:$0xff]
      %v237 = vld [vmem:[%s220 + $0x48] sm:$0xff]
      %v238 = vld [vmem:[%s220 + $0x50] sm:$0xff]
      %v239 = vld [vmem:[%s220 + $0x58] sm:$0xff]
      %v240 = vld [vmem:[%s220 + $0x60] sm:$0xff]
      %v241 = vld [vmem:[%s220 + $0x68] sm:$0xff]
      %v242 = vld [vmem:[%s220 + $0x70] sm:$0xff]
      %v243 = vld [vmem:[%s220 + $0x78] sm:$0xff]
      %v244 = vld [vmem:[%s220 + $0x80] sm:$0xff]
      %v245 = vld [vmem:[%s220 + $0x88] sm:$0xff]
      %v246 = vld [vmem:[%s220 + $0x90] sm:$0xff]
      %v247 = vld [vmem:[%s220 + $0x98] sm:$0xff]
      %v248 = vld [vmem:[%s220 + $0xa0] sm:$0xff]
      %v249 = vld [vmem:[%s220 + $0xa8] sm:$0xff]
      %v250 = vld [vmem:[%s220 + $0xb0] sm:$0xff]
      %v251 = vld [vmem:[%s220 + $0xb8] sm:$0xff]
      %v252 = vld [vmem:[%s220 + $0xc0] sm:$0xff]
      %v253 = vld [vmem:[%s220 + $0xc8] sm:$0xff]
      %v254 = vld [vmem:[%s220 + $0xd0] sm:$0xff]
      %v255 = vld [vmem:[%s220 + $0xd8] sm:$0xff]
      %v256 = vld [vmem:[%s220 + $0xe0] sm:$0xff]
      %v257 = vld [vmem:[%s220 + $0xe8] sm:$0xff]
      %v258 = vld [vmem:[%s220 + $0xf0] sm:$0xff]
      %v259 = vld [vmem:[%s220 + $0xf8] sm:$0xff]
      %v260 = vld [vmem:[%s1] sm:$0x7]
      %v261 = vld [vmem:[%s2] sm:$0x1]
      %v263 = vlaneseq
      %v264 = vshrl.u32 %v263, 7
      %v265 = vsub.s32 0, %v264
      %v266 = vrot.slane %v261, %v265
      %vm268 = vcmask 23552
      %v270 = vsel %vm268, %v228, 0
      %v273 = vsel %vm268, %v229, 0
      %v276 = vsel %vm268, %v230, 0
      %v279 = vsel %vm268, %v231, 0
      %v282 = vsel %vm268, %v232, 0
      %v285 = vsel %vm268, %v233, 0
      %v288 = vsel %vm268, %v234, 0
      %v291 = vsel %vm268, %v235, 0
      %v294 = vsel %vm268, %v236, 0
      %v297 = vsel %vm268, %v237, 0
      %v300 = vsel %vm268, %v238, 0
      %v303 = vsel %vm268, %v239, 0
      %v306 = vsel %vm268, %v240, 0
      %v309 = vsel %vm268, %v241, 0
      %v312 = vsel %vm268, %v242, 0
      %v315 = vsel %vm268, %v243, 0
      %v318 = vsel %vm268, %v244, 0
      %v321 = vsel %vm268, %v245, 0
      %v324 = vsel %vm268, %v246, 0
      %v327 = vsel %vm268, %v247, 0
      %v330 = vsel %vm268, %v248, 0
      %v333 = vsel %vm268, %v249, 0
      %v336 = vsel %vm268, %v250, 0
      %v339 = vsel %vm268, %v251, 0
      %v342 = vsel %vm268, %v252, 0
      %v345 = vsel %vm268, %v253, 0
      %v348 = vsel %vm268, %v254, 0
      %v351 = vsel %vm268, %v255, 0
      %v354 = vsel %vm268, %v256, 0
      %v357 = vsel %vm268, %v257, 0
      %v360 = vsel %vm268, %v258, 0
      %v363 = vsel %vm268, %v259, 0
      %vm365 = vcmask 1042432
      %v367 = vsel %vm365, %v260, 0
      %369 = vmatprep.subr.mxu0 0.0
      %370 = vmatpush1.msra.mxu0 %v367
      %371 = vmatprep.subr.mxu0 0.0
      %372 = vmatpush1.msra.mxu0 0.0
      %373 = vmatprep.subr.mxu0 0.0
      %374 = vmatpush1.msra.mxu0 0.0
      %375 = vmatprep.subr.mxu0 0.0
      %376 = vmatpush1.msra.mxu0 0.0
      %377 = vmatprep.subr.mxu0 0.0
      %378 = vmatpush1.msra.mxu0 0.0
      %379 = vmatprep.subr.mxu0 0.0
      %380 = vmatpush1.msra.mxu0 0.0
      %381 = vmatprep.subr.mxu0 0.0
      %382 = vmatpush1.msra.mxu0 0.0
      %383 = vmatprep.subr.mxu0 0.0
      %384 = vmatpush1.msra.mxu0 0.0
      %385 = vmatprep.subr.mxu0 0.0
      %386 = vmatpush1.msra.mxu0 0.0
      %387 = vmatprep.subr.mxu0 0.0
      %388 = vmatpush1.msra.mxu0 0.0
      %389 = vmatprep.subr.mxu0 0.0
      %390 = vmatpush1.msra.mxu0 0.0
      %391 = vmatprep.subr.mxu0 0.0
      %392 = vmatpush1.msra.mxu0 0.0
      %393 = vmatprep.subr.mxu0 0.0
      %394 = vmatpush1.msra.mxu0 0.0
      %395 = vmatprep.subr.mxu0 0.0
      %396 = vmatpush1.msra.mxu0 0.0
      %397 = vmatprep.subr.mxu0 0.0
      %398 = vmatpush1.msra.mxu0 0.0
      %399 = vmatprep.subr.mxu0 0.0
      %400 = vmatpush1.msra.mxu0 0.0
      %401 = vmatprep.subr.mxu0 0.0
      %402 = vmatpush1.msra.mxu0 0.0
      %403 = vmatprep.subr.mxu0 0.0
      %404 = vmatpush1.msra.mxu0 0.0
      %405 = vmatprep.subr.mxu0 0.0
      %406 = vmatpush1.msra.mxu0 0.0
      %407 = vmatprep.subr.mxu0 0.0
      %408 = vmatpush1.msra.mxu0 0.0
      %409 = vmatprep.subr.mxu0 0.0
      %410 = vmatpush1.msra.mxu0 0.0
      %411 = vmatprep.subr.mxu0 0.0
      %412 = vmatpush1.msra.mxu0 0.0
      %413 = vmatprep.subr.mxu0 0.0
      %414 = vmatpush1.msra.mxu0 0.0
      %415 = vmatprep.subr.mxu0 0.0
      %416 = vmatpush1.msra.mxu0 0.0
      %417 = vmatprep.subr.mxu0 0.0
      %418 = vmatpush1.msra.mxu0 0.0
      %419 = vmatprep.subr.mxu0 0.0
      %420 = vmatpush1.msra.mxu0 0.0
      %421 = vmatprep.subr.mxu0 0.0
      %422 = vmatpush1.msra.mxu0 0.0
      %423 = vmatprep.subr.mxu0 0.0
      %424 = vmatpush1.msra.mxu0 0.0
      %425 = vmatprep.subr.mxu0 0.0
      %426 = vmatpush1.msra.mxu0 0.0
      %427 = vmatprep.subr.mxu0 0.0
      %428 = vmatpush1.msra.mxu0 0.0
      %429 = vmatprep.subr.mxu0 0.0
      %430 = vmatpush1.msra.mxu0 0.0
      %431 = vmatprep.subr.mxu0 0.0
      %432 = vmatpush1.msra.mxu0 0.0
      %433 = vmatprep.mubr.f32.mxu0 0.0
      %434 = vmatmul.mubr.f32.gmra.mrb[0].mxu0 %v270
      %v435 = vpop.f32.mrb[0].mxu0
      %v436 = vadd.f32 %v266, %v435
      %v437 = vpop.f32.mrb[0].mxu0
      %438 = vmatprep.mubr.f32.mxu0 0.0
      %439 = vmatmul.mubr.f32.gmra.mrb[0].mxu0 %v273
      %v440 = vpop.f32.mrb[0].mxu0
      %v441 = vadd.f32 %v266, %v440
      %v442 = vpop.f32.mrb[0].mxu0
      %443 = vmatprep.mubr.f32.mxu0 0.0
      %444 = vmatmul.mubr.f32.gmra.mrb[0].mxu0 %v276
      %v445 = vpop.f32.mrb[0].mxu0
      %v446 = vadd.f32 %v266, %v445
      %v447 = vpop.f32.mrb[0].mxu0
      %448 = vmatprep.mubr.f32.mxu0 0.0
      %449 = vmatmul.mubr.f32.gmra.mrb[0].mxu0 %v279
      %v450 = vpop.f32.mrb[0].mxu0
      %v451 = vadd.f32 %v266, %v450
      %v452 = vpop.f32.mrb[0].mxu0
      %453 = vmatprep.mubr.f32.mxu0 0.0
      %454 = vmatmul.mubr.f32.gmra.mrb[0].mxu0 %v282
      %v455 = vpop.f32.mrb[0].mxu0
      %v456 = vadd.f32 %v266, %v455
      %v457 = vpop.f32.mrb[0].mxu0
      %458 = vmatprep.mubr.f32.mxu0 0.0
      %459 = vmatmul.mubr.f32.gmra.mrb[0].mxu0 %v285
      %v460 = vpop.f32.mrb[0].mxu0
      %v461 = vadd.f32 %v266, %v460
      %v462 = vpop.f32.mrb[0].mxu0
      %463 = vmatprep.mubr.f32.mxu0 0.0
      %464 = vmatmul.mubr.f32.gmra.mrb[0].mxu0 %v288
      %v465 = vpop.f32.mrb[0].mxu0
      %v466 = vadd.f32 %v266, %v465
      %v467 = vpop.f32.mrb[0].mxu0
      %468 = vmatprep.mubr.f32.mxu0 0.0
      %469 = vmatmul.mubr.f32.gmra.mrb[0].mxu0 %v291
      %v470 = vpop.f32.mrb[0].mxu0
      %v471 = vadd.f32 %v266, %v470
      %v472 = vpop.f32.mrb[0].mxu0
      %473 = vmatprep.mubr.f32.mxu0 0.0
      %474 = vmatmul.mubr.f32.gmra.mrb[0].mxu0 %v294
      %v475 = vpop.f32.mrb[0].mxu0
      %v476 = vadd.f32 %v266, %v475
      %v477 = vpop.f32.mrb[0].mxu0
      %478 = vmatprep.mubr.f32.mxu0 0.0
      %479 = vmatmul.mubr.f32.gmra.mrb[0].mxu0 %v297
      %v480 = vpop.f32.mrb[0].mxu0
      %v481 = vadd.f32 %v266, %v480
      %v482 = vpop.f32.mrb[0].mxu0
      %483 = vmatprep.mubr.f32.mxu0 0.0
      %484 = vmatmul.mubr.f32.gmra.mrb[0].mxu0 %v300
      %v485 = vpop.f32.mrb[0].mxu0
      %v486 = vadd.f32 %v266, %v485
      %v487 = vpop.f32.mrb[0].mxu0
      %488 = vmatprep.mubr.f32.mxu0 0.0
      %489 = vmatmul.mubr.f32.gmra.mrb[0].mxu0 %v303
      %v490 = vpop.f32.mrb[0].mxu0
      %v491 = vadd.f32 %v266, %v490
      %v492 = vpop.f32.mrb[0].mxu0
      %493 = vmatprep.mubr.f32.mxu0 0.0
      %494 = vmatmul.mubr.f32.gmra.mrb[0].mxu0 %v306
      %v495 = vpop.f32.mrb[0].mxu0
      %v496 = vadd.f32 %v266, %v495
      %v497 = vpop.f32.mrb[0].mxu0
      %498 = vmatprep.mubr.f32.mxu0 0.0
      %499 = vmatmul.mubr.f32.gmra.mrb[0].mxu0 %v309
      %v500 = vpop.f32.mrb[0].mxu0
      %v501 = vadd.f32 %v266, %v500
      %v502 = vpop.f32.mrb[0].mxu0
      %503 = vmatprep.mubr.f32.mxu0 0.0
      %504 = vmatmul.mubr.f32.gmra.mrb[0].mxu0 %v312
      %v505 = vpop.f32.mrb[0].mxu0
      %v506 = vadd.f32 %v266, %v505
      %v507 = vpop.f32.mrb[0].mxu0
      %508 = vmatprep.mubr.f32.mxu0 0.0
      %509 = vmatmul.mubr.f32.gmra.mrb[0].mxu0 %v315
      %v510 = vpop.f32.mrb[0].mxu0
      %v511 = vadd.f32 %v266, %v510
      %v512 = vpop.f32.mrb[0].mxu0
      %513 = vmatprep.mubr.f32.mxu0 0.0
      %514 = vmatmul.mubr.f32.gmra.mrb[0].mxu0 %v318
      %v515 = vpop.f32.mrb[0].mxu0
      %v516 = vadd.f32 %v266, %v515
      %v517 = vpop.f32.mrb[0].mxu0
      %518 = vmatprep.mubr.f32.mxu0 0.0
      %519 = vmatmul.mubr.f32.gmra.mrb[0].mxu0 %v321
      %v520 = vpop.f32.mrb[0].mxu0
      %v521 = vadd.f32 %v266, %v520
      %v522 = vpop.f32.mrb[0].mxu0
      %523 = vmatprep.mubr.f32.mxu0 0.0
      %524 = vmatmul.mubr.f32.gmra.mrb[0].mxu0 %v324
      %v525 = vpop.f32.mrb[0].mxu0
      %v526 = vadd.f32 %v266, %v525
      %v527 = vpop.f32.mrb[0].mxu0
      %528 = vmatprep.mubr.f32.mxu0 0.0
      %529 = vmatmul.mubr.f32.gmra.mrb[0].mxu0 %v327
      %v530 = vpop.f32.mrb[0].mxu0
      %v531 = vadd.f32 %v266, %v530
      %v532 = vpop.f32.mrb[0].mxu0
      %533 = vmatprep.mubr.f32.mxu0 0.0
      %534 = vmatmul.mubr.f32.gmra.mrb[0].mxu0 %v330
      %v535 = vpop.f32.mrb[0].mxu0
      %v536 = vadd.f32 %v266, %v535
      %v537 = vpop.f32.mrb[0].mxu0
      %538 = vmatprep.mubr.f32.mxu0 0.0
      %539 = vmatmul.mubr.f32.gmra.mrb[0].mxu0 %v333
      %v540 = vpop.f32.mrb[0].mxu0
      %v541 = vadd.f32 %v266, %v540
      %v542 = vpop.f32.mrb[0].mxu0
      %543 = vmatprep.mubr.f32.mxu0 0.0
      %544 = vmatmul.mubr.f32.gmra.mrb[0].mxu0 %v336
      %v545 = vpop.f32.mrb[0].mxu0
      %v546 = vadd.f32 %v266, %v545
      %v547 = vpop.f32.mrb[0].mxu0
      %548 = vmatprep.mubr.f32.mxu0 0.0
      %549 = vmatmul.mubr.f32.gmra.mrb[0].mxu0 %v339
      %v550 = vpop.f32.mrb[0].mxu0
      %v551 = vadd.f32 %v266, %v550
      %v552 = vpop.f32.mrb[0].mxu0
      %553 = vmatprep.mubr.f32.mxu0 0.0
      %554 = vmatmul.mubr.f32.gmra.mrb[0].mxu0 %v342
      %v555 = vpop.f32.mrb[0].mxu0
      %v556 = vadd.f32 %v266, %v555
      %v557 = vpop.f32.mrb[0].mxu0
      %558 = vmatprep.mubr.f32.mxu0 0.0
      %559 = vmatmul.mubr.f32.gmra.mrb[0].mxu0 %v345
      %v560 = vpop.f32.mrb[0].mxu0
      %v561 = vadd.f32 %v266, %v560
      %v562 = vpop.f32.mrb[0].mxu0
      %563 = vmatprep.mubr.f32.mxu0 0.0
      %564 = vmatmul.mubr.f32.gmra.mrb[0].mxu0 %v348
      %v565 = vpop.f32.mrb[0].mxu0
      %v566 = vadd.f32 %v266, %v565
      %v567 = vpop.f32.mrb[0].mxu0
      %568 = vmatprep.mubr.f32.mxu0 0.0
      %569 = vmatmul.mubr.f32.gmra.mrb[0].mxu0 %v351
      %v570 = vpop.f32.mrb[0].mxu0
      %v571 = vadd.f32 %v266, %v570
      %v572 = vpop.f32.mrb[0].mxu0
      %573 = vmatprep.mubr.f32.mxu0 0.0
      %574 = vmatmul.mubr.f32.gmra.mrb[0].mxu0 %v354
      %v575 = vpop.f32.mrb[0].mxu0
      %v576 = vadd.f32 %v266, %v575
      %v577 = vpop.f32.mrb[0].mxu0
      %578 = vmatprep.mubr.f32.mxu0 0.0
      %579 = vmatmul.mubr.f32.gmra.mrb[0].mxu0 %v357
      %v580 = vpop.f32.mrb[0].mxu0
      %v581 = vadd.f32 %v266, %v580
      %v582 = vpop.f32.mrb[0].mxu0
      %583 = vmatprep.mubr.f32.mxu0 0.0
      %584 = vmatmul.mubr.f32.gmra.mrb[0].mxu0 %v360
      %v585 = vpop.f32.mrb[0].mxu0
      %v586 = vadd.f32 %v266, %v585
      %v587 = vpop.f32.mrb[0].mxu0
      %588 = vmatprep.mubr.f32.mxu0 0.0
      %589 = vmatmul.mubr.f32.gmra.mrb[0].mxu0 %v363
      %v590 = vpop.f32.mrb[0].mxu0
      %v591 = vadd.f32 %v266, %v590
      %v592 = vpop.f32.mrb[0].mxu0
      %593 = vdwg.mxu0
      %v594 = vmax.f32 %v436, 0.0
      %v595 = vmax.f32 %v441, 0.0
      %v596 = vmax.f32 %v446, 0.0
      %v597 = vmax.f32 %v451, 0.0
      %v598 = vmax.f32 %v456, 0.0
      %v599 = vmax.f32 %v461, 0.0
      %v600 = vmax.f32 %v466, 0.0
      %v601 = vmax.f32 %v471, 0.0
      %v602 = vmax.f32 %v476, 0.0
      %v603 = vmax.f32 %v481, 0.0
      %v604 = vmax.f32 %v486, 0.0
      %v605 = vmax.f32 %v491, 0.0
      %v606 = vmax.f32 %v496, 0.0
      %v607 = vmax.f32 %v501, 0.0
      %v608 = vmax.f32 %v506, 0.0
      %v609 = vmax.f32 %v511, 0.0
      %v610 = vmax.f32 %v516, 0.0
      %v611 = vmax.f32 %v521, 0.0
      %v612 = vmax.f32 %v526, 0.0
      %v613 = vmax.f32 %v531, 0.0
      %v614 = vmax.f32 %v536, 0.0
      %v615 = vmax.f32 %v541, 0.0
      %v616 = vmax.f32 %v546, 0.0
      %v617 = vmax.f32 %v551, 0.0
      %v618 = vmax.f32 %v556, 0.0
      %v619 = vmax.f32 %v561, 0.0
      %v620 = vmax.f32 %v566, 0.0
      %v621 = vmax.f32 %v571, 0.0
      %v622 = vmax.f32 %v576, 0.0
      %v623 = vmax.f32 %v581, 0.0
      %v624 = vmax.f32 %v586, 0.0
      %v625 = vmax.f32 %v591, 0.0
      %v626 = vld [vmem:[%s3] sm:$0xff]
      %v627 = vld [vmem:[%s3 + $0x8] sm:$0xff]
      %v628 = vld [vmem:[%s3 + $0x10] sm:$0xff]
      %v629 = vld [vmem:[%s3 + $0x18] sm:$0xff]
      %v630 = vld [vmem:[%s4] sm:$0x1]
      %v632 = vlaneseq
      %v633 = vshrl.u32 %v632, 7
      %v634 = vsub.s32 0, %v633
      %v635 = vrot.slane %v630, %v634
      %vm637 = vcmask 261120
      %v639 = vsel %vm637, %v594, 0
      %v642 = vsel %vm637, %v595, 0
      %v645 = vsel %vm637, %v596, 0
      %v648 = vsel %vm637, %v597, 0
      %v651 = vsel %vm637, %v598, 0
      %v654 = vsel %vm637, %v599, 0
      %v657 = vsel %vm637, %v600, 0
      %v660 = vsel %vm637, %v601, 0
      %v663 = vsel %vm637, %v602, 0
      %v666 = vsel %vm637, %v603, 0
      %v669 = vsel %vm637, %v604, 0
      %v672 = vsel %vm637, %v605, 0
      %v675 = vsel %vm637, %v606, 0
      %v678 = vsel %vm637, %v607, 0
      %v681 = vsel %vm637, %v608, 0
      %v684 = vsel %vm637, %v609, 0
      %v687 = vsel %vm637, %v610, 0
      %v690 = vsel %vm637, %v611, 0
      %v693 = vsel %vm637, %v612, 0
      %v696 = vsel %vm637, %v613, 0
      %v699 = vsel %vm637, %v614, 0
      %v702 = vsel %vm637, %v615, 0
      %v705 = vsel %vm637, %v616, 0
      %v708 = vsel %vm637, %v617, 0
      %v711 = vsel %vm637, %v618, 0
      %v714 = vsel %vm637, %v619, 0
      %v717 = vsel %vm637, %v620, 0
      %v720 = vsel %vm637, %v621, 0
      %v723 = vsel %vm637, %v622, 0
      %v726 = vsel %vm637, %v623, 0
      %v729 = vsel %vm637, %v624, 0
      %v732 = vsel %vm637, %v625, 0
      %734 = vmatprep.subr.mxu0 0.0
      %735 = vmatpush1.msra.mxu0 %v626
      %736 = vmatprep.subr.mxu0 0.0
      %737 = vmatpush1.msra.mxu0 %v627
      %738 = vmatprep.subr.mxu0 0.0
      %739 = vmatpush1.msra.mxu0 %v628
      %740 = vmatprep.subr.mxu0 0.0
      %741 = vmatpush1.msra.mxu0 %v629
      %742 = vmatprep.subr.mxu0 0.0
      %743 = vmatpush1.msra.mxu0 0.0
      %744 = vmatprep.subr.mxu0 0.0
      %745 = vmatpush1.msra.mxu0 0.0
      %746 = vmatprep.subr.mxu0 0.0
      %747 = vmatpush1.msra.mxu0 0.0
      %748 = vmatprep.subr.mxu0 0.0
      %749 = vmatpush1.msra.mxu0 0.0
      %750 = vmatprep.subr.mxu0 0.0
      %751 = vmatpush1.msra.mxu0 0.0
      %752 = vmatprep.subr.mxu0 0.0
      %753 = vmatpush1.msra.mxu0 0.0
      %754 = vmatprep.subr.mxu0 0.0
      %755 = vmatpush1.msra.mxu0 0.0
      %756 = vmatprep.subr.mxu0 0.0
      %757 = vmatpush1.msra.mxu0 0.0
      %758 = vmatprep.subr.mxu0 0.0
      %759 = vmatpush1.msra.mxu0 0.0
      %760 = vmatprep.subr.mxu0 0.0
      %761 = vmatpush1.msra.mxu0 0.0
      %762 = vmatprep.subr.mxu0 0.0
      %763 = vmatpush1.msra.mxu0 0.0
      %764 = vmatprep.subr.mxu0 0.0
      %765 = vmatpush1.msra.mxu0 0.0
      %766 = vmatprep.subr.mxu0 0.0
      %767 = vmatpush1.msra.mxu0 0.0
      %768 = vmatprep.subr.mxu0 0.0
      %769 = vmatpush1.msra.mxu0 0.0
      %770 = vmatprep.subr.mxu0 0.0
      %771 = vmatpush1.msra.mxu0 0.0
      %772 = vmatprep.subr.mxu0 0.0
      %773 = vmatpush1.msra.mxu0 0.0
      %774 = vmatprep.subr.mxu0 0.0
      %775 = vmatpush1.msra.mxu0 0.0
      %776 = vmatprep.subr.mxu0 0.0
      %777 = vmatpush1.msra.mxu0 0.0
      %778 = vmatprep.subr.mxu0 0.0
      %779 = vmatpush1.msra.mxu0 0.0
      %780 = vmatprep.subr.mxu0 0.0
      %781 = vmatpush1.msra.mxu0 0.0
      %782 = vmatprep.subr.mxu0 0.0
      %783 = vmatpush1.msra.mxu0 0.0
      %784 = vmatprep.subr.mxu0 0.0
      %785 = vmatpush1.msra.mxu0 0.0
      %786 = vmatprep.subr.mxu0 0.0
      %787 = vmatpush1.msra.mxu0 0.0
      %788 = vmatprep.subr.mxu0 0.0
      %789 = vmatpush1.msra.mxu0 0.0
      %790 = vmatprep.subr.mxu0 0.0
      %791 = vmatpush1.msra.mxu0 0.0
      %792 = vmatprep.subr.mxu0 0.0
      %793 = vmatpush1.msra.mxu0 0.0
      %794 = vmatprep.subr.mxu0 0.0
      %795 = vmatpush1.msra.mxu0 0.0
      %796 = vmatprep.subr.mxu0 0.0
      %797 = vmatpush1.msra.mxu0 0.0
      %798 = vmatprep.mubr.f32.mxu0 0.0
      %799 = vmatmul.mubr.f32.gmra.mrb[0].mxu0 %v639
      %v800 = vpop.f32.mrb[0].mxu0
      %v801 = vadd.f32 %v635, %v800
      %v802 = vpop.f32.mrb[0].mxu0
      %803 = vmatprep.mubr.f32.mxu0 0.0
      %804 = vmatmul.mubr.f32.gmra.mrb[0].mxu0 %v642
      %v805 = vpop.f32.mrb[0].mxu0
      %v806 = vadd.f32 %v635, %v805
      %v807 = vpop.f32.mrb[0].mxu0
      %808 = vmatprep.mubr.f32.mxu0 0.0
      %809 = vmatmul.mubr.f32.gmra.mrb[0].mxu0 %v645
      %v810 = vpop.f32.mrb[0].mxu0
      %v811 = vadd.f32 %v635, %v810
      %v812 = vpop.f32.mrb[0].mxu0
      %813 = vmatprep.mubr.f32.mxu0 0.0
      %814 = vmatmul.mubr.f32.gmra.mrb[0].mxu0 %v648
      %v815 = vpop.f32.mrb[0].mxu0
      %v816 = vadd.f32 %v635, %v815
      %v817 = vpop.f32.mrb[0].mxu0
      %818 = vmatprep.mubr.f32.mxu0 0.0
      %819 = vmatmul.mubr.f32.gmra.mrb[0].mxu0 %v651
      %v820 = vpop.f32.mrb[0].mxu0
      %v821 = vadd.f32 %v635, %v820
      %v822 = vpop.f32.mrb[0].mxu0
      %823 = vmatprep.mubr.f32.mxu0 0.0
      %824 = vmatmul.mubr.f32.gmra.mrb[0].mxu0 %v654
      %v825 = vpop.f32.mrb[0].mxu0
      %v826 = vadd.f32 %v635, %v825
      %v827 = vpop.f32.mrb[0].mxu0
      %828 = vmatprep.mubr.f32.mxu0 0.0
      %829 = vmatmul.mubr.f32.gmra.mrb[0].mxu0 %v657
      %v830 = vpop.f32.mrb[0].mxu0
      %v831 = vadd.f32 %v635, %v830
      %v832 = vpop.f32.mrb[0].mxu0
      %833 = vmatprep.mubr.f32.mxu0 0.0
      %834 = vmatmul.mubr.f32.gmra.mrb[0].mxu0 %v660
      %v835 = vpop.f32.mrb[0].mxu0
      %v836 = vadd.f32 %v635, %v835
      %v837 = vpop.f32.mrb[0].mxu0
      %838 = vmatprep.mubr.f32.mxu0 0.0
      %839 = vmatmul.mubr.f32.gmra.mrb[0].mxu0 %v663
      %v840 = vpop.f32.mrb[0].mxu0
      %v841 = vadd.f32 %v635, %v840
      %v842 = vpop.f32.mrb[0].mxu0
      %843 = vmatprep.mubr.f32.mxu0 0.0
      %844 = vmatmul.mubr.f32.gmra.mrb[0].mxu0 %v666
      %v845 = vpop.f32.mrb[0].mxu0
      %v846 = vadd.f32 %v635, %v845
      %v847 = vpop.f32.mrb[0].mxu0
      %848 = vmatprep.mubr.f32.mxu0 0.0
      %849 = vmatmul.mubr.f32.gmra.mrb[0].mxu0 %v669
      %v850 = vpop.f32.mrb[0].mxu0
      %v851 = vadd.f32 %v635, %v850
      %v852 = vpop.f32.mrb[0].mxu0
      %853 = vmatprep.mubr.f32.mxu0 0.0
      %854 = vmatmul.mubr.f32.gmra.mrb[0].mxu0 %v672
      %v855 = vpop.f32.mrb[0].mxu0
      %v856 = vadd.f32 %v635, %v855
      %v857 = vpop.f32.mrb[0].mxu0
      %858 = vmatprep.mubr.f32.mxu0 0.0
      %859 = vmatmul.mubr.f32.gmra.mrb[0].mxu0 %v675
      %v860 = vpop.f32.mrb[0].mxu0
      %v861 = vadd.f32 %v635, %v860
      %v862 = vpop.f32.mrb[0].mxu0
      %863 = vmatprep.mubr.f32.mxu0 0.0
      %864 = vmatmul.mubr.f32.gmra.mrb[0].mxu0 %v678
      %v865 = vpop.f32.mrb[0].mxu0
      %v866 = vadd.f32 %v635, %v865
      %v867 = vpop.f32.mrb[0].mxu0
      %868 = vmatprep.mubr.f32.mxu0 0.0
      %869 = vmatmul.mubr.f32.gmra.mrb[0].mxu0 %v681
      %v870 = vpop.f32.mrb[0].mxu0
      %v871 = vadd.f32 %v635, %v870
      %v872 = vpop.f32.mrb[0].mxu0
      %873 = vmatprep.mubr.f32.mxu0 0.0
      %874 = vmatmul.mubr.f32.gmra.mrb[0].mxu0 %v684
      %v875 = vpop.f32.mrb[0].mxu0
      %v876 = vadd.f32 %v635, %v875
      %v877 = vpop.f32.mrb[0].mxu0
      %878 = vmatprep.mubr.f32.mxu0 0.0
      %879 = vmatmul.mubr.f32.gmra.mrb[0].mxu0 %v687
      %v880 = vpop.f32.mrb[0].mxu0
      %v881 = vadd.f32 %v635, %v880
      %v882 = vpop.f32.mrb[0].mxu0
      %883 = vmatprep.mubr.f32.mxu0 0.0
      %884 = vmatmul.mubr.f32.gmra.mrb[0].mxu0 %v690
      %v885 = vpop.f32.mrb[0].mxu0
      %v886 = vadd.f32 %v635, %v885
      %v887 = vpop.f32.mrb[0].mxu0
      %888 = vmatprep.mubr.f32.mxu0 0.0
      %889 = vmatmul.mubr.f32.gmra.mrb[0].mxu0 %v693
      %v890 = vpop.f32.mrb[0].mxu0
      %v891 = vadd.f32 %v635, %v890
      %v892 = vpop.f32.mrb[0].mxu0
      %893 = vmatprep.mubr.f32.mxu0 0.0
      %894 = vmatmul.mubr.f32.gmra.mrb[0].mxu0 %v696
      %v895 = vpop.f32.mrb[0].mxu0
      %v896 = vadd.f32 %v635, %v895
      %v897 = vpop.f32.mrb[0].mxu0
      %898 = vmatprep.mubr.f32.mxu0 0.0
      %899 = vmatmul.mubr.f32.gmra.mrb[0].mxu0 %v699
      %v900 = vpop.f32.mrb[0].mxu0
      %v901 = vadd.f32 %v635, %v900
      %v902 = vpop.f32.mrb[0].mxu0
      %903 = vmatprep.mubr.f32.mxu0 0.0
      %904 = vmatmul.mubr.f32.gmra.mrb[0].mxu0 %v702
      %v905 = vpop.f32.mrb[0].mxu0
      %v906 = vadd.f32 %v635, %v905
      %v907 = vpop.f32.mrb[0].mxu0
      %908 = vmatprep.mubr.f32.mxu0 0.0
      %909 = vmatmul.mubr.f32.gmra.mrb[0].mxu0 %v705
      %v910 = vpop.f32.mrb[0].mxu0
      %v911 = vadd.f32 %v635, %v910
      %v912 = vpop.f32.mrb[0].mxu0
      %913 = vmatprep.mubr.f32.mxu0 0.0
      %914 = vmatmul.mubr.f32.gmra.mrb[0].mxu0 %v708
      %v915 = vpop.f32.mrb[0].mxu0
      %v916 = vadd.f32 %v635, %v915
      %v917 = vpop.f32.mrb[0].mxu0
      %918 = vmatprep.mubr.f32.mxu0 0.0
      %919 = vmatmul.mubr.f32.gmra.mrb[0].mxu0 %v711
      %v920 = vpop.f32.mrb[0].mxu0
      %v921 = vadd.f32 %v635, %v920
      %v922 = vpop.f32.mrb[0].mxu0
      %923 = vmatprep.mubr.f32.mxu0 0.0
      %924 = vmatmul.mubr.f32.gmra.mrb[0].mxu0 %v714
      %v925 = vpop.f32.mrb[0].mxu0
      %v926 = vadd.f32 %v635, %v925
      %v927 = vpop.f32.mrb[0].mxu0
      %928 = vmatprep.mubr.f32.mxu0 0.0
      %929 = vmatmul.mubr.f32.gmra.mrb[0].mxu0 %v717
      %v930 = vpop.f32.mrb[0].mxu0
      %v931 = vadd.f32 %v635, %v930
      %v932 = vpop.f32.mrb[0].mxu0
      %933 = vmatprep.mubr.f32.mxu0 0.0
      %934 = vmatmul.mubr.f32.gmra.mrb[0].mxu0 %v720
      %v935 = vpop.f32.mrb[0].mxu0
      %v936 = vadd.f32 %v635, %v935
      %v937 = vpop.f32.mrb[0].mxu0
      %938 = vmatprep.mubr.f32.mxu0 0.0
      %939 = vmatmul.mubr.f32.gmra.mrb[0].mxu0 %v723
      %v940 = vpop.f32.mrb[0].mxu0
      %v941 = vadd.f32 %v635, %v940
      %v942 = vpop.f32.mrb[0].mxu0
      %943 = vmatprep.mubr.f32.mxu0 0.0
      %944 = vmatmul.mubr.f32.gmra.mrb[0].mxu0 %v726
      %v945 = vpop.f32.mrb[0].mxu0
      %v946 = vadd.f32 %v635, %v945
      %v947 = vpop.f32.mrb[0].mxu0
      %948 = vmatprep.mubr.f32.mxu0 0.0
      %949 = vmatmul.mubr.f32.gmra.mrb[0].mxu0 %v729
      %v950 = vpop.f32.mrb[0].mxu0
      %v951 = vadd.f32 %v635, %v950
      %v952 = vpop.f32.mrb[0].mxu0
      %953 = vmatprep.mubr.f32.mxu0 0.0
      %954 = vmatmul.mubr.f32.gmra.mrb[0].mxu0 %v732
      %v955 = vpop.f32.mrb[0].mxu0
      %v956 = vadd.f32 %v635, %v955
      %v957 = vpop.f32.mrb[0].mxu0
      %958 = vdwg.mxu0
      %959 = vst.msk [vmem:[%s226] sm:$0xff] %vm637, %v801
      %960 = vst.msk [vmem:[%s226 + $0x8] sm:$0xff] %vm637, %v806
      %961 = vst.msk [vmem:[%s226 + $0x10] sm:$0xff] %vm637, %v811
      %962 = vst.msk [vmem:[%s226 + $0x18] sm:$0xff] %vm637, %v816
      %963 = vst.msk [vmem:[%s226 + $0x20] sm:$0xff] %vm637, %v821
      %964 = vst.msk [vmem:[%s226 + $0x28] sm:$0xff] %vm637, %v826
      %965 = vst.msk [vmem:[%s226 + $0x30] sm:$0xff] %vm637, %v831
      %966 = vst.msk [vmem:[%s226 + $0x38] sm:$0xff] %vm637, %v836
      %967 = vst.msk [vmem:[%s226 + $0x40] sm:$0xff] %vm637, %v841
      %968 = vst.msk [vmem:[%s226 + $0x48] sm:$0xff] %vm637, %v846
      %969 = vst.msk [vmem:[%s226 + $0x50] sm:$0xff] %vm637, %v851
      %970 = vst.msk [vmem:[%s226 + $0x58] sm:$0xff] %vm637, %v856
      %971 = vst.msk [vmem:[%s226 + $0x60] sm:$0xff] %vm637, %v861
      %972 = vst.msk [vmem:[%s226 + $0x68] sm:$0xff] %vm637, %v866
      %973 = vst.msk [vmem:[%s226 + $0x70] sm:$0xff] %vm637, %v871
      %974 = vst.msk [vmem:[%s226 + $0x78] sm:$0xff] %vm637, %v876
      %975 = vst.msk [vmem:[%s226 + $0x80] sm:$0xff] %vm637, %v881
      %976 = vst.msk [vmem:[%s226 + $0x88] sm:$0xff] %vm637, %v886
      %977 = vst.msk [vmem:[%s226 + $0x90] sm:$0xff] %vm637, %v891
      %978 = vst.msk [vmem:[%s226 + $0x98] sm:$0xff] %vm637, %v896
      %979 = vst.msk [vmem:[%s226 + $0xa0] sm:$0xff] %vm637, %v901
      %980 = vst.msk [vmem:[%s226 + $0xa8] sm:$0xff] %vm637, %v906
      %981 = vst.msk [vmem:[%s226 + $0xb0] sm:$0xff] %vm637, %v911
      %982 = vst.msk [vmem:[%s226 + $0xb8] sm:$0xff] %vm637, %v916
      %983 = vst.msk [vmem:[%s226 + $0xc0] sm:$0xff] %vm637, %v921
      %984 = vst.msk [vmem:[%s226 + $0xc8] sm:$0xff] %vm637, %v926
      %985 = vst.msk [vmem:[%s226 + $0xd0] sm:$0xff] %vm637, %v931
      %986 = vst.msk [vmem:[%s226 + $0xd8] sm:$0xff] %vm637, %v936
      %987 = vst.msk [vmem:[%s226 + $0xe0] sm:$0xff] %vm637, %v941
      %988 = vst.msk [vmem:[%s226 + $0xe8] sm:$0xff] %vm637, %v946
      %989 = vst.msk [vmem:[%s226 + $0xf0] sm:$0xff] %vm637, %v951
      %990 = vst.msk [vmem:[%s226 + $0xf8] sm:$0xff] %vm637, %v956
      %s991 = smul.u32 32, %s16
      %p992 = scmp.lt.s32.totalorder %s991, 63
      %s993 = scalar_select %p992, %s991, 63
      %s994 = smul.addr %s993, 8
      %s995 = scalar_lea.vmem %s5, %s994
      // Predicated region
      $region41: #{point_transformer_cls.15} parent=39 // pred_check
        %p996 = pneg %p144
      $region42: #{point_transformer_cls.15} parent=39 // pred_check_branch
        %998 = sbr.rel (%p996) target = $region44
      $region43: #{point_transformer_cls.15} parent=39 // pred_region
        %s999 = smul.u32 32, %s16
      $region44: #{point_transformer_cls.15} parent=39 // pred_fallthru
        _
    $region40: #{point_transformer_cls.15} parent=5 // pred_fallthru
      _
    %p1000 = scmp.le.s32.totalorder 2, %s11
    // Predicated region
    $region45: #{point_transformer_cls.15} parent=5 // pred_check
      %p1001 = pneg %p1000
    $region46: #{point_transformer_cls.15} parent=5 // pred_check_branch
      %1003 = sbr.rel (%p1001) target = $region48
    $region47: #{point_transformer_cls.15} parent=5 // pred_region
      %s1004 = ssub.s32 %s11, 2
      // Predicated region
      $region49: #{point_transformer_cls.15} parent=47 // pred_check
        %p1005 = pneg %p150
      $region50: #{point_transformer_cls.15} parent=47 // pred_check_branch
        %1007 = sbr.rel (%p1005) target = $region52
      $region51: #{point_transformer_cls.15} parent=47 // pred_region
        %s1008 = smul.u32 32, %s17
        %p1009 = scmp.lt.s32.totalorder %s1008, 63
        %s1010 = scalar_select %p1009, %s1008, 63
        %s1011 = smul.addr %s1010, 8
        %s1012 = scalar_lea.vmem %s5, %s1011
      $region52: #{point_transformer_cls.15} parent=47 // pred_fallthru
        _
    $region48: #{point_transformer_cls.15} parent=5 // pred_fallthru
      _
  $region6: #{point_transformer_cls.15} parent=0 // loop_footer
    %s15 = sadd.s32 1, %s11
  $region7: #{point_transformer_cls.15} parent=0 // loop_footer_branch
    %10 = sbr.rel target = $region3
  $region8: #{point_transformer_cls.15} parent=0 // loop_exit
    _

// kernel: point_transformer_cls.14
$region0: #{point_transformer_cls.14}
  #allocation0 [shape = 'u32[]', space=smem, size = 0x4, offset = 0x4, fixed_abs, tag = 'smem constant byte address 0x4 - core index']
  #allocation1 [shape = 'u32[144,128]{1,0:T(1,128)}', space=vmem, size = 0x12000, scoped, tag = 'internal scratch']
  %s0 = inlined_call_operand.vmem [shape: f32[64,32], index: 0, kind: input, shape index: {}]
  %s1 = inlined_call_operand.vmem [shape: f32[32,32], index: 1, kind: input, shape index: {}]
  %s2 = inlined_call_operand.vmem [shape: f32[1,32], index: 2, kind: input, shape index: {}]
  %s3 = inlined_call_operand.vmem [shape: f32[32,96], index: 3, kind: input, shape index: {}]
  %s4 = inlined_call_operand.vmem [shape: f32[64,96], index: 4, kind: output, shape index: {}]
  %s5 = sld [smem:[#allocation0]]
  $region49: #{point_transformer_cls.14} parent=0
    _
  %s7 = ssub.s32 1, %s5
  %s8 = scalar_select 0, %s7, %s5
  loop: start=0, step=1, limit=4
  $region2: #{point_transformer_cls.14} parent=0 // loop_pre_header
    _
  $region3: #{point_transformer_cls.14} parent=0 // loop_header
    %s10 = sphi 0, %s14
    %p11 = scmp.ge.s32.totalorder %s10, 4
    %s20 = sphi 0, %s22
    %s23 = sphi 0, %s20
    %s24 = sphi 0, %s23
    %s40 = sphi 0, %s24
    %s44 = sphi 0, %s44
    %s46 = sphi 0, %s44
    %s47 = sphi 0, %s46
    %s61 = sphi 0, %s47
    %s65 = sphi 0, %s65
    %s67 = sphi 0, %s65
    %s68 = sphi 0, %s67
    %s82 = sphi 0, %s68
    %s86 = sphi 0, %s86
    %s88 = sphi 0, %s86
    %s89 = sphi 0, %s88
    %s103 = sphi 0, %s89
    %s109 = sphi 0, %s111
    %s112 = sphi 0, %s109
    %s113 = sphi 0, %s112
    %s129 = sphi 0, %s113
  $region4: #{point_transformer_cls.14} parent=0 // loop_header_branch
    %13 = sbr.rel (%p11) target = $region8
  $region5: #{point_transformer_cls.14} parent=0 // loop_body
    %s15 = ssub.s32 %s10, 1
    %s16 = ssub.s32 %s10, 2
    %s17 = sadd.s32 %s10, 1
    %s18 = ssub.s32 %s10, %s17
    %p19 = scmp.eq.s32.totalorder %s18, 0
    %s21 = sadd.s32 %s20, 1
    %s22 = scalar_select %p19, %s20, %s21
    %p25 = pneg %p19
    %p26 = scmp.eq.s32.totalorder %s10, 1
    %p27 = por %p25, %p26
    %p28 = scmp.ne.s32.totalorder %s20, %s23
    %p29 = scmp.eq.s32.totalorder %s10, 0
    %p30 = por %p28, %p29
    %p31 = scmp.ne.s32.totalorder %s20, %s23
    %p32 = scmp.eq.s32.totalorder %s15, 1
    %p33 = por %p31, %p32
    %p34 = scmp.ne.s32.totalorder %s23, %s24
    %p35 = scmp.eq.s32.totalorder %s15, 0
    %p36 = por %p34, %p35
    %p37 = scmp.ne.s32.totalorder %s23, %s24
    %p38 = scmp.eq.s32.totalorder %s16, 1
    %p39 = por %p37, %p38
    %p41 = scmp.ne.s32.totalorder %s24, %s40
    %p42 = scmp.eq.s32.totalorder %s16, 0
    %p43 = por %p41, %p42
    %s45 = sadd.s32 %s44, 1
    %p48 = scmp.eq.s32.totalorder %s10, 1
    %p49 = scmp.ne.s32.totalorder %s44, %s46
    %p50 = scmp.eq.s32.totalorder %s10, 0
    %p51 = por %p49, %p50
    %p52 = scmp.ne.s32.totalorder %s44, %s46
    %p53 = scmp.eq.s32.totalorder %s15, 1
    %p54 = por %p52, %p53
    %p55 = scmp.ne.s32.totalorder %s46, %s47
    %p56 = scmp.eq.s32.totalorder %s15, 0
    %p57 = por %p55, %p56
    %p58 = scmp.ne.s32.totalorder %s46, %s47
    %p59 = scmp.eq.s32.totalorder %s16, 1
    %p60 = por %p58, %p59
    %p62 = scmp.ne.s32.totalorder %s47, %s61
    %p63 = scmp.eq.s32.totalorder %s16, 0
    %p64 = por %p62, %p63
    %s66 = sadd.s32 %s65, 1
    %p69 = scmp.eq.s32.totalorder %s10, 1
    %p70 = scmp.ne.s32.totalorder %s65, %s67
    %p71 = scmp.eq.s32.totalorder %s10, 0
    %p72 = por %p70, %p71
    %p73 = scmp.ne.s32.totalorder %s65, %s67
    %p74 = scmp.eq.s32.totalorder %s15, 1
    %p75 = por %p73, %p74
    %p76 = scmp.ne.s32.totalorder %s67, %s68
    %p77 = scmp.eq.s32.totalorder %s15, 0
    %p78 = por %p76, %p77
    %p79 = scmp.ne.s32.totalorder %s67, %s68
    %p80 = scmp.eq.s32.totalorder %s16, 1
    %p81 = por %p79, %p80
    %p83 = scmp.ne.s32.totalorder %s68, %s82
    %p84 = scmp.eq.s32.totalorder %s16, 0
    %p85 = por %p83, %p84
    %s87 = sadd.s32 %s86, 1
    %p90 = scmp.eq.s32.totalorder %s10, 1
    %p91 = scmp.ne.s32.totalorder %s86, %s88
    %p92 = scmp.eq.s32.totalorder %s10, 0
    %p93 = por %p91, %p92
    %p94 = scmp.ne.s32.totalorder %s86, %s88
    %p95 = scmp.eq.s32.totalorder %s15, 1
    %p96 = por %p94, %p95
    %p97 = scmp.ne.s32.totalorder %s88, %s89
    %p98 = scmp.eq.s32.totalorder %s15, 0
    %p99 = por %p97, %p98
    %p100 = scmp.ne.s32.totalorder %s88, %s89
    %p101 = scmp.eq.s32.totalorder %s16, 1
    %p102 = por %p100, %p101
    %p104 = scmp.ne.s32.totalorder %s89, %s103
    %p105 = scmp.eq.s32.totalorder %s16, 0
    %p106 = por %p104, %p105
    %s107 = ssub.s32 %s10, %s17
    %p108 = scmp.eq.s32.totalorder %s107, 0
    %s110 = sadd.s32 %s109, 1
    %s111 = scalar_select %p108, %s109, %s110
    %p114 = pneg %p108
    %p115 = scmp.eq.s32.totalorder %s10, 1
    %p116 = por %p114, %p115
    %p117 = scmp.ne.s32.totalorder %s109, %s112
    %p118 = scmp.eq.s32.totalorder %s10, 0
    %p119 = por %p117, %p118
    %p120 = scmp.ne.s32.totalorder %s109, %s112
    %p121 = scmp.eq.s32.totalorder %s15, 1
    %p122 = por %p120, %p121
    %p123 = scmp.ne.s32.totalorder %s112, %s113
    %p124 = scmp.eq.s32.totalorder %s15, 0
    %p125 = por %p123, %p124
    %p126 = scmp.ne.s32.totalorder %s112, %s113
    %p127 = scmp.eq.s32.totalorder %s16, 1
    %p128 = por %p126, %p127
    %p130 = scmp.ne.s32.totalorder %s113, %s129
    %p131 = scmp.eq.s32.totalorder %s16, 0
    %p132 = por %p130, %p131
    %p133 = scmp.le.s32.totalorder 1, %s10
    %p134 = scmp.lt.s32.totalorder %s10, 3
    %p135 = pnand %p133, %p134
    %p136 = pneg %p135
    // Predicated region
    $region9: #{point_transformer_cls.14} parent=5 // pred_check
      _
    $region10: #{point_transformer_cls.14} parent=5 // pred_check_branch
      %138 = sbr.rel (%p135) target = $region12
    $region11: #{point_transformer_cls.14} parent=5 // pred_region
      %s139 = ssub.s32 %s10, 1
      // Predicated region
      $region13: #{point_transformer_cls.14} parent=11 // pred_check
        %p140 = pneg %p57
      $region14: #{point_transformer_cls.14} parent=11 // pred_check_branch
        %142 = sbr.rel (%p140) target = $region16
      $region15: #{point_transformer_cls.14} parent=11 // pred_region
        _
      $region16: #{point_transformer_cls.14} parent=11 // pred_fallthru
        _
      // Predicated region
      $region17: #{point_transformer_cls.14} parent=11 // pred_check
        %p143 = pneg %p78
      $region18: #{point_transformer_cls.14} parent=11 // pred_check_branch
        %145 = sbr.rel (%p143) target = $region20
      $region19: #{point_transformer_cls.14} parent=11 // pred_region
        _
      $region20: #{point_transformer_cls.14} parent=11 // pred_fallthru
        _
      // Predicated region
      $region21: #{point_transformer_cls.14} parent=11 // pred_check
        %p146 = pneg %p99
      $region22: #{point_transformer_cls.14} parent=11 // pred_check_branch
        %148 = sbr.rel (%p146) target = $region24
      $region23: #{point_transformer_cls.14} parent=11 // pred_region
        _
      $region24: #{point_transformer_cls.14} parent=11 // pred_fallthru
        _
    $region12: #{point_transformer_cls.14} parent=5 // pred_fallthru
      _
    %p149 = scmp.lt.s32.totalorder %s10, 2
    // Predicated region
    $region25: #{point_transformer_cls.14} parent=5 // pred_check
      %p150 = pneg %p149
    $region26: #{point_transformer_cls.14} parent=5 // pred_check_branch
      %152 = sbr.rel (%p150) target = $region28
    $region27: #{point_transformer_cls.14} parent=5 // pred_region
      // Predicated region
      $region29: #{point_transformer_cls.14} parent=27 // pred_check
        %p153 = pneg %p30
      $region30: #{point_transformer_cls.14} parent=27 // pred_check_branch
        %155 = sbr.rel (%p153) target = $region32
      $region31: #{point_transformer_cls.14} parent=27 // pred_region
        %s156 = smul.u32 4, %s10
        %p157 = scmp.lt.s32.totalorder %s156, 7
        %s158 = scalar_select %p157, %s156, 7
        %s159 = smul.addr %s158, 8
        %s160 = scalar_lea.vmem %s0, %s159
        %s161 = smul.u32 4, %s10
      $region32: #{point_transformer_cls.14} parent=27 // pred_fallthru
        _
    $region28: #{point_transformer_cls.14} parent=5 // pred_fallthru
      _
    %p162 = scmp.le.s32.totalorder 1, %s10
    %p163 = scmp.lt.s32.totalorder %s10, 3
    %p164 = pnand %p162, %p163
    %p165 = pneg %p164
    // Predicated region
    $region33: #{point_transformer_cls.14} parent=5 // pred_check
      _
    $region34: #{point_transformer_cls.14} parent=5 // pred_check_branch
      %167 = sbr.rel (%p164) target = $region36
    $region35: #{point_transformer_cls.14} parent=5 // pred_region
      %s168 = ssub.s32 %s10, 1
      %s169 = smul.u32 4, %s15
      %p170 = scmp.lt.s32.totalorder %s169, 7
      %s171 = scalar_select %p170, %s169, 7
      %s172 = smul.addr %s171, 8
      %s173 = scalar_lea.vmem %s0, %s172
      %p174 = pneg %p36
      %p175 = pneg %p33
      %p176 = pneg %p57
      %p177 = pneg %p54
      %p178 = pneg %p78
      %p179 = pneg %p75
      %p180 = pneg %p99
      %p181 = pneg %p96
      %p182 = pneg %p125
      %p183 = pneg %p122
      %s184 = smul.u32 4, %s15
      %p185 = scmp.lt.s32.totalorder %s184, 7
      %s186 = scalar_select %p185, %s184, 7
      %s187 = smul.addr %s186, 8
      %s188 = scalar_lea.vmem %s4, %s187
      %s189 = smul.u32 4, %s15
      %p190 = scmp.lt.s32.totalorder %s189, 7
      %s191 = scalar_select %p190, %s189, 7
      %s192 = smul.addr %s191, 8
      %s193 = scalar_lea.vmem %s0, %s192
      %s194 = smul.u32 4, %s15
      %s195 = smul.u32 4, %s15
      %p196 = scmp.lt.s32.totalorder %s195, 7
      %s197 = scalar_select %p196, %s195, 7
      %s198 = smul.addr %s197, 8
      %s199 = scalar_lea.vmem %s4, %s198
      %s200 = smul.u32 4, %s15
      %v201 = vld [vmem:[%s193] sm:$0xff]
      %v202 = vld [vmem:[%s193 + $0x8] sm:$0xff]
      %v203 = vld [vmem:[%s193 + $0x10] sm:$0xff]
      %v204 = vld [vmem:[%s193 + $0x18] sm:$0xff]
      %v205 = vld [vmem:[%s1] sm:$0xff]
      %v206 = vld [vmem:[%s1 + $0x8] sm:$0xff]
      %v207 = vld [vmem:[%s1 + $0x10] sm:$0xff]
      %v208 = vld [vmem:[%s1 + $0x18] sm:$0xff]
      %v209 = vld [vmem:[%s2] sm:$0x1]
      %v211 = vlaneseq
      %v212 = vshrl.u32 %v211, 7
      %v213 = vsub.s32 0, %v212
      %v214 = vrot.slane %v209, %v213
      %vm216 = vcmask 261120
      %v218 = vsel %vm216, %v201, 0
      %v221 = vsel %vm216, %v202, 0
      %v224 = vsel %vm216, %v203, 0
      %v227 = vsel %vm216, %v204, 0
      %229 = vmatprep.subr.mxu0 0.0
      %230 = vmatpush1.msra.mxu0 %v205
      %231 = vmatprep.subr.mxu0 0.0
      %232 = vmatpush1.msra.mxu0 %v206
      %233 = vmatprep.subr.mxu0 0.0
      %234 = vmatpush1.msra.mxu0 %v207
      %235 = vmatprep.subr.mxu0 0.0
      %236 = vmatpush1.msra.mxu0 %v208
      %237 = vmatprep.subr.mxu0 0.0
      %238 = vmatpush1.msra.mxu0 0.0
      %239 = vmatprep.subr.mxu0 0.0
      %240 = vmatpush1.msra.mxu0 0.0
      %241 = vmatprep.subr.mxu0 0.0
      %242 = vmatpush1.msra.mxu0 0.0
      %243 = vmatprep.subr.mxu0 0.0
      %244 = vmatpush1.msra.mxu0 0.0
      %245 = vmatprep.subr.mxu0 0.0
      %246 = vmatpush1.msra.mxu0 0.0
      %247 = vmatprep.subr.mxu0 0.0
      %248 = vmatpush1.msra.mxu0 0.0
      %249 = vmatprep.subr.mxu0 0.0
      %250 = vmatpush1.msra.mxu0 0.0
      %251 = vmatprep.subr.mxu0 0.0
      %252 = vmatpush1.msra.mxu0 0.0
      %253 = vmatprep.subr.mxu0 0.0
      %254 = vmatpush1.msra.mxu0 0.0
      %255 = vmatprep.subr.mxu0 0.0
      %256 = vmatpush1.msra.mxu0 0.0
      %257 = vmatprep.subr.mxu0 0.0
      %258 = vmatpush1.msra.mxu0 0.0
      %259 = vmatprep.subr.mxu0 0.0
      %260 = vmatpush1.msra.mxu0 0.0
      %261 = vmatprep.subr.mxu0 0.0
      %262 = vmatpush1.msra.mxu0 0.0
      %263 = vmatprep.subr.mxu0 0.0
      %264 = vmatpush1.msra.mxu0 0.0
      %265 = vmatprep.subr.mxu0 0.0
      %266 = vmatpush1.msra.mxu0 0.0
      %267 = vmatprep.subr.mxu0 0.0
      %268 = vmatpush1.msra.mxu0 0.0
      %269 = vmatprep.subr.mxu0 0.0
      %270 = vmatpush1.msra.mxu0 0.0
      %271 = vmatprep.subr.mxu0 0.0
      %272 = vmatpush1.msra.mxu0 0.0
      %273 = vmatprep.subr.mxu0 0.0
      %274 = vmatpush1.msra.mxu0 0.0
      %275 = vmatprep.subr.mxu0 0.0
      %276 = vmatpush1.msra.mxu0 0.0
      %277 = vmatprep.subr.mxu0 0.0
      %278 = vmatpush1.msra.mxu0 0.0
      %279 = vmatprep.subr.mxu0 0.0
      %280 = vmatpush1.msra.mxu0 0.0
      %281 = vmatprep.subr.mxu0 0.0
      %282 = vmatpush1.msra.mxu0 0.0
      %283 = vmatprep.subr.mxu0 0.0
      %284 = vmatpush1.msra.mxu0 0.0
      %285 = vmatprep.subr.mxu0 0.0
      %286 = vmatpush1.msra.mxu0 0.0
      %287 = vmatprep.subr.mxu0 0.0
      %288 = vmatpush1.msra.mxu0 0.0
      %289 = vmatprep.subr.mxu0 0.0
      %290 = vmatpush1.msra.mxu0 0.0
      %291 = vmatprep.subr.mxu0 0.0
      %292 = vmatpush1.msra.mxu0 0.0
      %293 = vmatprep.mubr.f32.mxu0 0.0
      %294 = vmatmul.mubr.f32.gmra.mrb[0].mxu0 %v218
      %v295 = vpop.f32.mrb[0].mxu0
      %v296 = vadd.f32 %v214, %v295
      %v297 = vpop.f32.mrb[0].mxu0
      %298 = vmatprep.mubr.f32.mxu0 0.0
      %299 = vmatmul.mubr.f32.gmra.mrb[0].mxu0 %v221
      %v300 = vpop.f32.mrb[0].mxu0
      %v301 = vadd.f32 %v214, %v300
      %v302 = vpop.f32.mrb[0].mxu0
      %303 = vmatprep.mubr.f32.mxu0 0.0
      %304 = vmatmul.mubr.f32.gmra.mrb[0].mxu0 %v224
      %v305 = vpop.f32.mrb[0].mxu0
      %v306 = vadd.f32 %v214, %v305
      %v307 = vpop.f32.mrb[0].mxu0
      %308 = vmatprep.mubr.f32.mxu0 0.0
      %309 = vmatmul.mubr.f32.gmra.mrb[0].mxu0 %v227
      %v310 = vpop.f32.mrb[0].mxu0
      %v311 = vadd.f32 %v214, %v310
      %v312 = vpop.f32.mrb[0].mxu0
      %313 = vdwg.mxu0
      %v314 = vld [vmem:[%s3] sm:$0xff]
      %v315 = vld [vmem:[%s3 + $0x8] sm:$0xff]
      %v316 = vld [vmem:[%s3 + $0x10] sm:$0xff]
      %v317 = vld [vmem:[%s3 + $0x18] sm:$0xff]
      %v319 = vsel %vm216, %v296, 0
      %v322 = vsel %vm216, %v301, 0
      %v325 = vsel %vm216, %v306, 0
      %v328 = vsel %vm216, %v311, 0
      %330 = vmatprep.subr.mxu0 0.0
      %331 = vmatpush1.msra.mxu0 %v314
      %332 = vmatprep.subr.mxu0 0.0
      %333 = vmatpush1.msra.mxu0 %v315
      %334 = vmatprep.subr.mxu0 0.0
      %335 = vmatpush1.msra.mxu0 %v316
      %336 = vmatprep.subr.mxu0 0.0
      %337 = vmatpush1.msra.mxu0 %v317
      %338 = vmatprep.subr.mxu0 0.0
      %339 = vmatpush1.msra.mxu0 0.0
      %340 = vmatprep.subr.mxu0 0.0
      %341 = vmatpush1.msra.mxu0 0.0
      %342 = vmatprep.subr.mxu0 0.0
      %343 = vmatpush1.msra.mxu0 0.0
      %344 = vmatprep.subr.mxu0 0.0
      %345 = vmatpush1.msra.mxu0 0.0
      %346 = vmatprep.subr.mxu0 0.0
      %347 = vmatpush1.msra.mxu0 0.0
      %348 = vmatprep.subr.mxu0 0.0
      %349 = vmatpush1.msra.mxu0 0.0
      %350 = vmatprep.subr.mxu0 0.0
      %351 = vmatpush1.msra.mxu0 0.0
      %352 = vmatprep.subr.mxu0 0.0
      %353 = vmatpush1.msra.mxu0 0.0
      %354 = vmatprep.subr.mxu0 0.0
      %355 = vmatpush1.msra.mxu0 0.0
      %356 = vmatprep.subr.mxu0 0.0
      %357 = vmatpush1.msra.mxu0 0.0
      %358 = vmatprep.subr.mxu0 0.0
      %359 = vmatpush1.msra.mxu0 0.0
      %360 = vmatprep.subr.mxu0 0.0
      %361 = vmatpush1.msra.mxu0 0.0
      %362 = vmatprep.subr.mxu0 0.0
      %363 = vmatpush1.msra.mxu0 0.0
      %364 = vmatprep.subr.mxu0 0.0
      %365 = vmatpush1.msra.mxu0 0.0
      %366 = vmatprep.subr.mxu0 0.0
      %367 = vmatpush1.msra.mxu0 0.0
      %368 = vmatprep.subr.mxu0 0.0
      %369 = vmatpush1.msra.mxu0 0.0
      %370 = vmatprep.subr.mxu0 0.0
      %371 = vmatpush1.msra.mxu0 0.0
      %372 = vmatprep.subr.mxu0 0.0
      %373 = vmatpush1.msra.mxu0 0.0
      %374 = vmatprep.subr.mxu0 0.0
      %375 = vmatpush1.msra.mxu0 0.0
      %376 = vmatprep.subr.mxu0 0.0
      %377 = vmatpush1.msra.mxu0 0.0
      %378 = vmatprep.subr.mxu0 0.0
      %379 = vmatpush1.msra.mxu0 0.0
      %380 = vmatprep.subr.mxu0 0.0
      %381 = vmatpush1.msra.mxu0 0.0
      %382 = vmatprep.subr.mxu0 0.0
      %383 = vmatpush1.msra.mxu0 0.0
      %384 = vmatprep.subr.mxu0 0.0
      %385 = vmatpush1.msra.mxu0 0.0
      %386 = vmatprep.subr.mxu0 0.0
      %387 = vmatpush1.msra.mxu0 0.0
      %388 = vmatprep.subr.mxu0 0.0
      %389 = vmatpush1.msra.mxu0 0.0
      %390 = vmatprep.subr.mxu0 0.0
      %391 = vmatpush1.msra.mxu0 0.0
      %392 = vmatprep.subr.mxu0 0.0
      %393 = vmatpush1.msra.mxu0 0.0
      %394 = vmatprep.mubr.f32.mxu0 0.0
      %395 = vmatmul.mubr.f32.gmra.mrb[0].mxu0 %v319
      %v396 = vpop.f32.mrb[0].mxu0
      %v397 = vadd.f32 0.0, %v396
      %v398 = vpop.f32.mrb[0].mxu0
      %399 = vmatprep.mubr.f32.mxu0 0.0
      %400 = vmatmul.mubr.f32.gmra.mrb[0].mxu0 %v322
      %v401 = vpop.f32.mrb[0].mxu0
      %v402 = vadd.f32 0.0, %v401
      %v403 = vpop.f32.mrb[0].mxu0
      %404 = vmatprep.mubr.f32.mxu0 0.0
      %405 = vmatmul.mubr.f32.gmra.mrb[0].mxu0 %v325
      %v406 = vpop.f32.mrb[0].mxu0
      %v407 = vadd.f32 0.0, %v406
      %v408 = vpop.f32.mrb[0].mxu0
      %409 = vmatprep.mubr.f32.mxu0 0.0
      %410 = vmatmul.mubr.f32.gmra.mrb[0].mxu0 %v328
      %v411 = vpop.f32.mrb[0].mxu0
      %v412 = vadd.f32 0.0, %v411
      %v413 = vpop.f32.mrb[0].mxu0
      %414 = vdwg.mxu0
      %vm415 = vcmask 785408
      %416 = vst.msk [vmem:[%s199] sm:$0xff] %vm415, %v397
      %417 = vst.msk [vmem:[%s199 + $0x8] sm:$0xff] %vm415, %v402
      %418 = vst.msk [vmem:[%s199 + $0x10] sm:$0xff] %vm415, %v407
      %419 = vst.msk [vmem:[%s199 + $0x18] sm:$0xff] %vm415, %v412
      %s420 = smul.u32 4, %s15
      %p421 = scmp.lt.s32.totalorder %s420, 7
      %s422 = scalar_select %p421, %s420, 7
      %s423 = smul.addr %s422, 8
      %s424 = scalar_lea.vmem %s4, %s423
      // Predicated region
      $region37: #{point_transformer_cls.14} parent=35 // pred_check
        %p425 = pneg %p122
      $region38: #{point_transformer_cls.14} parent=35 // pred_check_branch
        %427 = sbr.rel (%p425) target = $region40
      $region39: #{point_transformer_cls.14} parent=35 // pred_region
        %s428 = smul.u32 4, %s15
      $region40: #{point_transformer_cls.14} parent=35 // pred_fallthru
        _
    $region36: #{point_transformer_cls.14} parent=5 // pred_fallthru
      _
    %p429 = scmp.le.s32.totalorder 2, %s10
    // Predicated region
    $region41: #{point_transformer_cls.14} parent=5 // pred_check
      %p430 = pneg %p429
    $region42: #{point_transformer_cls.14} parent=5 // pred_check_branch
      %432 = sbr.rel (%p430) target = $region44
    $region43: #{point_transformer_cls.14} parent=5 // pred_region
      %s433 = ssub.s32 %s10, 2
      // Predicated region
      $region45: #{point_transformer_cls.14} parent=43 // pred_check
        %p434 = pneg %p128
      $region46: #{point_transformer_cls.14} parent=43 // pred_check_branch
        %436 = sbr.rel (%p434) target = $region48
      $region47: #{point_transformer_cls.14} parent=43 // pred_region
        %s437 = smul.u32 4, %s16
        %p438 = scmp.lt.s32.totalorder %s437, 7
        %s439 = scalar_select %p438, %s437, 7
        %s440 = smul.addr %s439, 8
        %s441 = scalar_lea.vmem %s4, %s440
      $region48: #{point_transformer_cls.14} parent=43 // pred_fallthru
        _
    $region44: #{point_transformer_cls.14} parent=5 // pred_fallthru
      _
  $region6: #{point_transformer_cls.14} parent=0 // loop_footer
    %s14 = sadd.s32 1, %s10
  $region7: #{point_transformer_cls.14} parent=0 // loop_footer_branch
    %9 = sbr.rel target = $region3
  $region8: #{point_transformer_cls.14} parent=0 // loop_exit
    _

// kernel: custom-call.34
$region0: #{custom-call.34}
  %s0 = inlined_call_operand.vmem [shape: f32[2,32], index: 0, kind: output, shape index: {}]

// kernel: point_transformer_cls.16
$region0: #{point_transformer_cls.16}
  #allocation0 [shape = 'u32[]', space=smem, size = 0x4, offset = 0x4, fixed_abs, tag = 'smem constant byte address 0x4 - core index']
  #allocation1 [shape = 'u32[144,128]{1,0:T(1,128)}', space=vmem, size = 0x12000, scoped, tag = 'internal scratch']
  %s0 = inlined_call_operand.vmem [shape: f32[64,1,32], index: 0, kind: input, shape index: {}]
  %s1 = inlined_call_operand.vmem [shape: f32[64,8,32], index: 1, kind: input, shape index: {}]
  %s2 = inlined_call_operand.vmem [shape: f32[64,8,32], index: 2, kind: input, shape index: {}]
  %s3 = inlined_call_operand.vmem [shape: f32[64,8,32], index: 3, kind: input, shape index: {}]
  %s4 = inlined_call_operand.vmem [shape: f32[64,32], index: 4, kind: input, shape index: {}]
  %s5 = inlined_call_operand.vmem [shape: f32[32,32], index: 5, kind: input, shape index: {}]
  %s6 = inlined_call_operand.vmem [shape: f32[1,32], index: 6, kind: input, shape index: {}]
  %s7 = inlined_call_operand.vmem [shape: f32[32,32], index: 7, kind: input, shape index: {}]
  %s8 = inlined_call_operand.vmem [shape: f32[1,32], index: 8, kind: input, shape index: {}]
  %s9 = inlined_call_operand.vmem [shape: f32[32,32], index: 9, kind: input, shape index: {}]
  %s10 = inlined_call_operand.vmem [shape: f32[1,32], index: 10, kind: input, shape index: {}]
  %s11 = inlined_call_operand.vmem [shape: f32[64,32], index: 11, kind: output, shape index: {}]
  %s12 = sld [smem:[#allocation0]]
  $region77: #{point_transformer_cls.16} parent=0
    _
  %s14 = ssub.s32 1, %s12
  %s15 = scalar_select 0, %s14, %s12
  loop: start=0, step=1, limit=4
  $region2: #{point_transformer_cls.16} parent=0 // loop_pre_header
    _
  $region3: #{point_transformer_cls.16} parent=0 // loop_header
    %s17 = sphi 0, %s21
    %p18 = scmp.ge.s32.totalorder %s17, 4
    %s27 = sphi 0, %s29
    %s30 = sphi 0, %s27
    %s31 = sphi 0, %s30
    %s47 = sphi 0, %s31
    %s53 = sphi 0, %s55
    %s56 = sphi 0, %s53
    %s57 = sphi 0, %s56
    %s73 = sphi 0, %s57
    %s79 = sphi 0, %s81
    %s82 = sphi 0, %s79
    %s83 = sphi 0, %s82
    %s99 = sphi 0, %s83
    %s105 = sphi 0, %s107
    %s108 = sphi 0, %s105
    %s109 = sphi 0, %s108
    %s125 = sphi 0, %s109
    %s131 = sphi 0, %s133
    %s134 = sphi 0, %s131
    %s135 = sphi 0, %s134
    %s151 = sphi 0, %s135
    %s155 = sphi 0, %s155
    %s157 = sphi 0, %s155
    %s158 = sphi 0, %s157
    %s172 = sphi 0, %s158
    %s176 = sphi 0, %s176
    %s178 = sphi 0, %s176
    %s179 = sphi 0, %s178
    %s193 = sphi 0, %s179
    %s197 = sphi 0, %s197
    %s199 = sphi 0, %s197
    %s200 = sphi 0, %s199
    %s214 = sphi 0, %s200
    %s218 = sphi 0, %s218
    %s220 = sphi 0, %s218
    %s221 = sphi 0, %s220
    %s235 = sphi 0, %s221
    %s239 = sphi 0, %s239
    %s241 = sphi 0, %s239
    %s242 = sphi 0, %s241
    %s256 = sphi 0, %s242
    %s260 = sphi 0, %s260
    %s262 = sphi 0, %s260
    %s263 = sphi 0, %s262
    %s277 = sphi 0, %s263
    %s283 = sphi 0, %s285
    %s286 = sphi 0, %s283
    %s287 = sphi 0, %s286
    %s303 = sphi 0, %s287
  $region4: #{point_transformer_cls.16} parent=0 // loop_header_branch
    %20 = sbr.rel (%p18) target = $region8
  $region5: #{point_transformer_cls.16} parent=0 // loop_body
    %s22 = ssub.s32 %s17, 1
    %s23 = ssub.s32 %s17, 2
    %s24 = sadd.s32 %s17, 1
    %s25 = ssub.s32 %s17, %s24
    %p26 = scmp.eq.s32.totalorder %s25, 0
    %s28 = sadd.s32 %s27, 1
    %s29 = scalar_select %p26, %s27, %s28
    %p32 = pneg %p26
    %p33 = scmp.eq.s32.totalorder %s17, 1
    %p34 = por %p32, %p33
    %p35 = scmp.ne.s32.totalorder %s27, %s30
    %p36 = scmp.eq.s32.totalorder %s17, 0
    %p37 = por %p35, %p36
    %p38 = scmp.ne.s32.totalorder %s27, %s30
    %p39 = scmp.eq.s32.totalorder %s22, 1
    %p40 = por %p38, %p39
    %p41 = scmp.ne.s32.totalorder %s30, %s31
    %p42 = scmp.eq.s32.totalorder %s22, 0
    %p43 = por %p41, %p42
    %p44 = scmp.ne.s32.totalorder %s30, %s31
    %p45 = scmp.eq.s32.totalorder %s23, 1
    %p46 = por %p44, %p45
    %p48 = scmp.ne.s32.totalorder %s31, %s47
    %p49 = scmp.eq.s32.totalorder %s23, 0
    %p50 = por %p48, %p49
    %s51 = ssub.s32 %s17, %s24
    %p52 = scmp.eq.s32.totalorder %s51, 0
    %s54 = sadd.s32 %s53, 1
    %s55 = scalar_select %p52, %s53, %s54
    %p58 = pneg %p52
    %p59 = scmp.eq.s32.totalorder %s17, 1
    %p60 = por %p58, %p59
    %p61 = scmp.ne.s32.totalorder %s53, %s56
    %p62 = scmp.eq.s32.totalorder %s17, 0
    %p63 = por %p61, %p62
    %p64 = scmp.ne.s32.totalorder %s53, %s56
    %p65 = scmp.eq.s32.totalorder %s22, 1
    %p66 = por %p64, %p65
    %p67 = scmp.ne.s32.totalorder %s56, %s57
    %p68 = scmp.eq.s32.totalorder %s22, 0
    %p69 = por %p67, %p68
    %p70 = scmp.ne.s32.totalorder %s56, %s57
    %p71 = scmp.eq.s32.totalorder %s23, 1
    %p72 = por %p70, %p71
    %p74 = scmp.ne.s32.totalorder %s57, %s73
    %p75 = scmp.eq.s32.totalorder %s23, 0
    %p76 = por %p74, %p75
    %s77 = ssub.s32 %s17, %s24
    %p78 = scmp.eq.s32.totalorder %s77, 0
    %s80 = sadd.s32 %s79, 1
    %s81 = scalar_select %p78, %s79, %s80
    %p84 = pneg %p78
    %p85 = scmp.eq.s32.totalorder %s17, 1
    %p86 = por %p84, %p85
    %p87 = scmp.ne.s32.totalorder %s79, %s82
    %p88 = scmp.eq.s32.totalorder %s17, 0
    %p89 = por %p87, %p88
    %p90 = scmp.ne.s32.totalorder %s79, %s82
    %p91 = scmp.eq.s32.totalorder %s22, 1
    %p92 = por %p90, %p91
    %p93 = scmp.ne.s32.totalorder %s82, %s83
    %p94 = scmp.eq.s32.totalorder %s22, 0
    %p95 = por %p93, %p94
    %p96 = scmp.ne.s32.totalorder %s82, %s83
    %p97 = scmp.eq.s32.totalorder %s23, 1
    %p98 = por %p96, %p97
    %p100 = scmp.ne.s32.totalorder %s83, %s99
    %p101 = scmp.eq.s32.totalorder %s23, 0
    %p102 = por %p100, %p101
    %s103 = ssub.s32 %s17, %s24
    %p104 = scmp.eq.s32.totalorder %s103, 0
    %s106 = sadd.s32 %s105, 1
    %s107 = scalar_select %p104, %s105, %s106
    %p110 = pneg %p104
    %p111 = scmp.eq.s32.totalorder %s17, 1
    %p112 = por %p110, %p111
    %p113 = scmp.ne.s32.totalorder %s105, %s108
    %p114 = scmp.eq.s32.totalorder %s17, 0
    %p115 = por %p113, %p114
    %p116 = scmp.ne.s32.totalorder %s105, %s108
    %p117 = scmp.eq.s32.totalorder %s22, 1
    %p118 = por %p116, %p117
    %p119 = scmp.ne.s32.totalorder %s108, %s109
    %p120 = scmp.eq.s32.totalorder %s22, 0
    %p121 = por %p119, %p120
    %p122 = scmp.ne.s32.totalorder %s108, %s109
    %p123 = scmp.eq.s32.totalorder %s23, 1
    %p124 = por %p122, %p123
    %p126 = scmp.ne.s32.totalorder %s109, %s125
    %p127 = scmp.eq.s32.totalorder %s23, 0
    %p128 = por %p126, %p127
    %s129 = ssub.s32 %s17, %s24
    %p130 = scmp.eq.s32.totalorder %s129, 0
    %s132 = sadd.s32 %s131, 1
    %s133 = scalar_select %p130, %s131, %s132
    %p136 = pneg %p130
    %p137 = scmp.eq.s32.totalorder %s17, 1
    %p138 = por %p136, %p137
    %p139 = scmp.ne.s32.totalorder %s131, %s134
    %p140 = scmp.eq.s32.totalorder %s17, 0
    %p141 = por %p139, %p140
    %p142 = scmp.ne.s32.totalorder %s131, %s134
    %p143 = scmp.eq.s32.totalorder %s22, 1
    %p144 = por %p142, %p143
    %p145 = scmp.ne.s32.totalorder %s134, %s135
    %p146 = scmp.eq.s32.totalorder %s22, 0
    %p147 = por %p145, %p146
    %p148 = scmp.ne.s32.totalorder %s134, %s135
    %p149 = scmp.eq.s32.totalorder %s23, 1
    %p150 = por %p148, %p149
    %p152 = scmp.ne.s32.totalorder %s135, %s151
    %p153 = scmp.eq.s32.totalorder %s23, 0
    %p154 = por %p152, %p153
    %s156 = sadd.s32 %s155, 1
    %p159 = scmp.eq.s32.totalorder %s17, 1
    %p160 = scmp.ne.s32.totalorder %s155, %s157
    %p161 = scmp.eq.s32.totalorder %s17, 0
    %p162 = por %p160, %p161
    %p163 = scmp.ne.s32.totalorder %s155, %s157
    %p164 = scmp.eq.s32.totalorder %s22, 1
    %p165 = por %p163, %p164
    %p166 = scmp.ne.s32.totalorder %s157, %s158
    %p167 = scmp.eq.s32.totalorder %s22, 0
    %p168 = por %p166, %p167
    %p169 = scmp.ne.s32.totalorder %s157, %s158
    %p170 = scmp.eq.s32.totalorder %s23, 1
    %p171 = por %p169, %p170
    %p173 = scmp.ne.s32.totalorder %s158, %s172
    %p174 = scmp.eq.s32.totalorder %s23, 0
    %p175 = por %p173, %p174
    %s177 = sadd.s32 %s176, 1
    %p180 = scmp.eq.s32.totalorder %s17, 1
    %p181 = scmp.ne.s32.totalorder %s176, %s178
    %p182 = scmp.eq.s32.totalorder %s17, 0
    %p183 = por %p181, %p182
    %p184 = scmp.ne.s32.totalorder %s176, %s178
    %p185 = scmp.eq.s32.totalorder %s22, 1
    %p186 = por %p184, %p185
    %p187 = scmp.ne.s32.totalorder %s178, %s179
    %p188 = scmp.eq.s32.totalorder %s22, 0
    %p189 = por %p187, %p188
    %p190 = scmp.ne.s32.totalorder %s178, %s179
    %p191 = scmp.eq.s32.totalorder %s23, 1
    %p192 = por %p190, %p191
    %p194 = scmp.ne.s32.totalorder %s179, %s193
    %p195 = scmp.eq.s32.totalorder %s23, 0
    %p196 = por %p194, %p195
    %s198 = sadd.s32 %s197, 1
    %p201 = scmp.eq.s32.totalorder %s17, 1
    %p202 = scmp.ne.s32.totalorder %s197, %s199
    %p203 = scmp.eq.s32.totalorder %s17, 0
    %p204 = por %p202, %p203
    %p205 = scmp.ne.s32.totalorder %s197, %s199
    %p206 = scmp.eq.s32.totalorder %s22, 1
    %p207 = por %p205, %p206
    %p208 = scmp.ne.s32.totalorder %s199, %s200
    %p209 = scmp.eq.s32.totalorder %s22, 0
    %p210 = por %p208, %p209
    %p211 = scmp.ne.s32.totalorder %s199, %s200
    %p212 = scmp.eq.s32.totalorder %s23, 1
    %p213 = por %p211, %p212
    %p215 = scmp.ne.s32.totalorder %s200, %s214
    %p216 = scmp.eq.s32.totalorder %s23, 0
    %p217 = por %p215, %p216
    %s219 = sadd.s32 %s218, 1
    %p222 = scmp.eq.s32.totalorder %s17, 1
    %p223 = scmp.ne.s32.totalorder %s218, %s220
    %p224 = scmp.eq.s32.totalorder %s17, 0
    %p225 = por %p223, %p224
    %p226 = scmp.ne.s32.totalorder %s218, %s220
    %p227 = scmp.eq.s32.totalorder %s22, 1
    %p228 = por %p226, %p227
    %p229 = scmp.ne.s32.totalorder %s220, %s221
    %p230 = scmp.eq.s32.totalorder %s22, 0
    %p231 = por %p229, %p230
    %p232 = scmp.ne.s32.totalorder %s220, %s221
    %p233 = scmp.eq.s32.totalorder %s23, 1
    %p234 = por %p232, %p233
    %p236 = scmp.ne.s32.totalorder %s221, %s235
    %p237 = scmp.eq.s32.totalorder %s23, 0
    %p238 = por %p236, %p237
    %s240 = sadd.s32 %s239, 1
    %p243 = scmp.eq.s32.totalorder %s17, 1
    %p244 = scmp.ne.s32.totalorder %s239, %s241
    %p245 = scmp.eq.s32.totalorder %s17, 0
    %p246 = por %p244, %p245
    %p247 = scmp.ne.s32.totalorder %s239, %s241
    %p248 = scmp.eq.s32.totalorder %s22, 1
    %p249 = por %p247, %p248
    %p250 = scmp.ne.s32.totalorder %s241, %s242
    %p251 = scmp.eq.s32.totalorder %s22, 0
    %p252 = por %p250, %p251
    %p253 = scmp.ne.s32.totalorder %s241, %s242
    %p254 = scmp.eq.s32.totalorder %s23, 1
    %p255 = por %p253, %p254
    %p257 = scmp.ne.s32.totalorder %s242, %s256
    %p258 = scmp.eq.s32.totalorder %s23, 0
    %p259 = por %p257, %p258
    %s261 = sadd.s32 %s260, 1
    %p264 = scmp.eq.s32.totalorder %s17, 1
    %p265 = scmp.ne.s32.totalorder %s260, %s262
    %p266 = scmp.eq.s32.totalorder %s17, 0
    %p267 = por %p265, %p266
    %p268 = scmp.ne.s32.totalorder %s260, %s262
    %p269 = scmp.eq.s32.totalorder %s22, 1
    %p270 = por %p268, %p269
    %p271 = scmp.ne.s32.totalorder %s262, %s263
    %p272 = scmp.eq.s32.totalorder %s22, 0
    %p273 = por %p271, %p272
    %p274 = scmp.ne.s32.totalorder %s262, %s263
    %p275 = scmp.eq.s32.totalorder %s23, 1
    %p276 = por %p274, %p275
    %p278 = scmp.ne.s32.totalorder %s263, %s277
    %p279 = scmp.eq.s32.totalorder %s23, 0
    %p280 = por %p278, %p279
    %s281 = ssub.s32 %s17, %s24
    %p282 = scmp.eq.s32.totalorder %s281, 0
    %s284 = sadd.s32 %s283, 1
    %s285 = scalar_select %p282, %s283, %s284
    %p288 = pneg %p282
    %p289 = scmp.eq.s32.totalorder %s17, 1
    %p290 = por %p288, %p289
    %p291 = scmp.ne.s32.totalorder %s283, %s286
    %p292 = scmp.eq.s32.totalorder %s17, 0
    %p293 = por %p291, %p292
    %p294 = scmp.ne.s32.totalorder %s283, %s286
    %p295 = scmp.eq.s32.totalorder %s22, 1
    %p296 = por %p294, %p295
    %p297 = scmp.ne.s32.totalorder %s286, %s287
    %p298 = scmp.eq.s32.totalorder %s22, 0
    %p299 = por %p297, %p298
    %p300 = scmp.ne.s32.totalorder %s286, %s287
    %p301 = scmp.eq.s32.totalorder %s23, 1
    %p302 = por %p300, %p301
    %p304 = scmp.ne.s32.totalorder %s287, %s303
    %p305 = scmp.eq.s32.totalorder %s23, 0
    %p306 = por %p304, %p305
    %p307 = scmp.le.s32.totalorder 1, %s17
    %p308 = scmp.lt.s32.totalorder %s17, 3
    %p309 = pnand %p307, %p308
    %p310 = pneg %p309
    // Predicated region
    $region9: #{point_transformer_cls.16} parent=5 // pred_check
      _
    $region10: #{point_transformer_cls.16} parent=5 // pred_check_branch
      %312 = sbr.rel (%p309) target = $region12
    $region11: #{point_transformer_cls.16} parent=5 // pred_region
      %s313 = ssub.s32 %s17, 1
      // Predicated region
      $region13: #{point_transformer_cls.16} parent=11 // pred_check
        %p314 = pneg %p168
      $region14: #{point_transformer_cls.16} parent=11 // pred_check_branch
        %316 = sbr.rel (%p314) target = $region16
      $region15: #{point_transformer_cls.16} parent=11 // pred_region
        _
      $region16: #{point_transformer_cls.16} parent=11 // pred_fallthru
        _
      // Predicated region
      $region17: #{point_transformer_cls.16} parent=11 // pred_check
        %p317 = pneg %p189
      $region18: #{point_transformer_cls.16} parent=11 // pred_check_branch
        %319 = sbr.rel (%p317) target = $region20
      $region19: #{point_transformer_cls.16} parent=11 // pred_region
        _
      $region20: #{point_transformer_cls.16} parent=11 // pred_fallthru
        _
      // Predicated region
      $region21: #{point_transformer_cls.16} parent=11 // pred_check
        %p320 = pneg %p210
      $region22: #{point_transformer_cls.16} parent=11 // pred_check_branch
        %322 = sbr.rel (%p320) target = $region24
      $region23: #{point_transformer_cls.16} parent=11 // pred_region
        _
      $region24: #{point_transformer_cls.16} parent=11 // pred_fallthru
        _
      // Predicated region
      $region25: #{point_transformer_cls.16} parent=11 // pred_check
        %p323 = pneg %p231
      $region26: #{point_transformer_cls.16} parent=11 // pred_check_branch
        %325 = sbr.rel (%p323) target = $region28
      $region27: #{point_transformer_cls.16} parent=11 // pred_region
        _
      $region28: #{point_transformer_cls.16} parent=11 // pred_fallthru
        _
      // Predicated region
      $region29: #{point_transformer_cls.16} parent=11 // pred_check
        %p326 = pneg %p252
      $region30: #{point_transformer_cls.16} parent=11 // pred_check_branch
        %328 = sbr.rel (%p326) target = $region32
      $region31: #{point_transformer_cls.16} parent=11 // pred_region
        _
      $region32: #{point_transformer_cls.16} parent=11 // pred_fallthru
        _
      // Predicated region
      $region33: #{point_transformer_cls.16} parent=11 // pred_check
        %p329 = pneg %p273
      $region34: #{point_transformer_cls.16} parent=11 // pred_check_branch
        %331 = sbr.rel (%p329) target = $region36
      $region35: #{point_transformer_cls.16} parent=11 // pred_region
        _
      $region36: #{point_transformer_cls.16} parent=11 // pred_fallthru
        _
    $region12: #{point_transformer_cls.16} parent=5 // pred_fallthru
      _
    %p332 = scmp.lt.s32.totalorder %s17, 2
    // Predicated region
    $region37: #{point_transformer_cls.16} parent=5 // pred_check
      %p333 = pneg %p332
    $region38: #{point_transformer_cls.16} parent=5 // pred_check_branch
      %335 = sbr.rel (%p333) target = $region40
    $region39: #{point_transformer_cls.16} parent=5 // pred_region
      // Predicated region
      $region41: #{point_transformer_cls.16} parent=39 // pred_check
        %p336 = pneg %p37
      $region42: #{point_transformer_cls.16} parent=39 // pred_check_branch
        %338 = sbr.rel (%p336) target = $region44
      $region43: #{point_transformer_cls.16} parent=39 // pred_region
        %s339 = smul.u32 32, %s17
        %p340 = scmp.lt.s32.totalorder %s339, 63
        %s341 = scalar_select %p340, %s339, 63
        %s342 = scalar_lea.vmem %s0, %s341
        %s343 = smul.u32 32, %s17
      $region44: #{point_transformer_cls.16} parent=39 // pred_fallthru
        _
      // Predicated region
      $region45: #{point_transformer_cls.16} parent=39 // pred_check
        %p344 = pneg %p63
      $region46: #{point_transformer_cls.16} parent=39 // pred_check_branch
        %346 = sbr.rel (%p344) target = $region48
      $region47: #{point_transformer_cls.16} parent=39 // pred_region
        %s347 = smul.u32 32, %s17
        %p348 = scmp.lt.s32.totalorder %s347, 63
        %s349 = scalar_select %p348, %s347, 63
        %s350 = smul.addr %s349, 8
        %s351 = scalar_lea.vmem %s1, %s350
        %s352 = smul.u32 32, %s17
      $region48: #{point_transformer_cls.16} parent=39 // pred_fallthru
        _
      // Predicated region
      $region49: #{point_transformer_cls.16} parent=39 // pred_check
        %p353 = pneg %p89
      $region50: #{point_transformer_cls.16} parent=39 // pred_check_branch
        %355 = sbr.rel (%p353) target = $region52
      $region51: #{point_transformer_cls.16} parent=39 // pred_region
        %s356 = smul.u32 32, %s17
        %p357 = scmp.lt.s32.totalorder %s356, 63
        %s358 = scalar_select %p357, %s356, 63
        %s359 = smul.addr %s358, 8
        %s360 = scalar_lea.vmem %s2, %s359
        %s361 = smul.u32 32, %s17
      $region52: #{point_transformer_cls.16} parent=39 // pred_fallthru
        _
      // Predicated region
      $region53: #{point_transformer_cls.16} parent=39 // pred_check
        %p362 = pneg %p115
      $region54: #{point_transformer_cls.16} parent=39 // pred_check_branch
        %364 = sbr.rel (%p362) target = $region56
      $region55: #{point_transformer_cls.16} parent=39 // pred_region
        %s365 = smul.u32 32, %s17
        %p366 = scmp.lt.s32.totalorder %s365, 63
        %s367 = scalar_select %p366, %s365, 63
        %s368 = smul.addr %s367, 8
        %s369 = scalar_lea.vmem %s3, %s368
        %s370 = smul.u32 32, %s17
      $region56: #{point_transformer_cls.16} parent=39 // pred_fallthru
        _
      // Predicated region
      $region57: #{point_transformer_cls.16} parent=39 // pred_check
        %p371 = pneg %p141
      $region58: #{point_transformer_cls.16} parent=39 // pred_check_branch
        %373 = sbr.rel (%p371) target = $region60
      $region59: #{point_transformer_cls.16} parent=39 // pred_region
        %s374 = smul.u32 4, %s17
        %p375 = scmp.lt.s32.totalorder %s374, 7
        %s376 = scalar_select %p375, %s374, 7
        %s377 = smul.addr %s376, 8
        %s378 = scalar_lea.vmem %s4, %s377
        %s379 = smul.u32 4, %s17
      $region60: #{point_transformer_cls.16} parent=39 // pred_fallthru
        _
    $region40: #{point_transformer_cls.16} parent=5 // pred_fallthru
      _
    %p380 = scmp.le.s32.totalorder 1, %s17
    %p381 = scmp.lt.s32.totalorder %s17, 3
    %p382 = pnand %p380, %p381
    %p383 = pneg %p382
    // Predicated region
    $region61: #{point_transformer_cls.16} parent=5 // pred_check
      _
    $region62: #{point_transformer_cls.16} parent=5 // pred_check_branch
      %385 = sbr.rel (%p382) target = $region64
    $region63: #{point_transformer_cls.16} parent=5 // pred_region
      %s386 = ssub.s32 %s17, 1
      %s387 = smul.u32 32, %s22
      %p388 = scmp.lt.s32.totalorder %s387, 63
      %s389 = scalar_select %p388, %s387, 63
      %s390 = scalar_lea.vmem %s0, %s389
      %p391 = pneg %p43
      %p392 = pneg %p40
      %s393 = smul.u32 32, %s22
      %p394 = scmp.lt.s32.totalorder %s393, 63
      %s395 = scalar_select %p394, %s393, 63
      %s396 = smul.addr %s395, 8
      %s397 = scalar_lea.vmem %s1, %s396
      %p398 = pneg %p69
      %p399 = pneg %p66
      %s400 = smul.u32 32, %s22
      %p401 = scmp.lt.s32.totalorder %s400, 63
      %s402 = scalar_select %p401, %s400, 63
      %s403 = smul.addr %s402, 8
      %s404 = scalar_lea.vmem %s2, %s403
      %p405 = pneg %p95
      %p406 = pneg %p92
      %s407 = smul.u32 32, %s22
      %p408 = scmp.lt.s32.totalorder %s407, 63
      %s409 = scalar_select %p408, %s407, 63
      %s410 = smul.addr %s409, 8
      %s411 = scalar_lea.vmem %s3, %s410
      %p412 = pneg %p121
      %p413 = pneg %p118
      %s414 = smul.u32 4, %s22
      %p415 = scmp.lt.s32.totalorder %s414, 7
      %s416 = scalar_select %p415, %s414, 7
      %s417 = smul.addr %s416, 8
      %s418 = scalar_lea.vmem %s4, %s417
      %p419 = pneg %p147
      %p420 = pneg %p144
      %p421 = pneg %p168
      %p422 = pneg %p165
      %p423 = pneg %p189
      %p424 = pneg %p186
      %p425 = pneg %p210
      %p426 = pneg %p207
      %p427 = pneg %p231
      %p428 = pneg %p228
      %p429 = pneg %p252
      %p430 = pneg %p249
      %p431 = pneg %p273
      %p432 = pneg %p270
      %p433 = pneg %p299
      %p434 = pneg %p296
      %s435 = smul.u32 4, %s22
      %p436 = scmp.lt.s32.totalorder %s435, 7
      %s437 = scalar_select %p436, %s435, 7
      %s438 = smul.addr %s437, 8
      %s439 = scalar_lea.vmem %s11, %s438
      %s440 = smul.u32 32, %s22
      %p441 = scmp.lt.s32.totalorder %s440, 63
      %s442 = scalar_select %p441, %s440, 63
      %s443 = scalar_lea.vmem %s0, %s442
      %s444 = smul.u32 32, %s22
      %s445 = smul.u32 32, %s22
      %p446 = scmp.lt.s32.totalorder %s445, 63
      %s447 = scalar_select %p446, %s445, 63
      %s448 = smul.addr %s447, 8
      %s449 = scalar_lea.vmem %s1, %s448
      %s450 = smul.u32 32, %s22
      %s451 = smul.u32 32, %s22
      %p452 = scmp.lt.s32.totalorder %s451, 63
      %s453 = scalar_select %p452, %s451, 63
      %s454 = smul.addr %s453, 8
      %s455 = scalar_lea.vmem %s2, %s454
      %s456 = smul.u32 32, %s22
      %s457 = smul.u32 32, %s22
      %p458 = scmp.lt.s32.totalorder %s457, 63
      %s459 = scalar_select %p458, %s457, 63
      %s460 = smul.addr %s459, 8
      %s461 = scalar_lea.vmem %s3, %s460
      %s462 = smul.u32 32, %s22
      %s463 = smul.u32 4, %s22
      %p464 = scmp.lt.s32.totalorder %s463, 7
      %s465 = scalar_select %p464, %s463, 7
      %s466 = smul.addr %s465, 8
      %s467 = scalar_lea.vmem %s4, %s466
      %s468 = smul.u32 4, %s22
      %s469 = smul.u32 4, %s22
      %p470 = scmp.lt.s32.totalorder %s469, 7
      %s471 = scalar_select %p470, %s469, 7
      %s472 = smul.addr %s471, 8
      %s473 = scalar_lea.vmem %s11, %s472
      %s474 = smul.u32 4, %s22
      %v475 = vld [vmem:[%s455] sm:$0xff]
      %v476 = vld [vmem:[%s455 + $0x8] sm:$0xff]
      %v477 = vld [vmem:[%s455 + $0x10] sm:$0xff]
      %v478 = vld [vmem:[%s455 + $0x18] sm:$0xff]
      %v479 = vld [vmem:[%s455 + $0x20] sm:$0xff]
      %v480 = vld [vmem:[%s455 + $0x28] sm:$0xff]
      %v481 = vld [vmem:[%s455 + $0x30] sm:$0xff]
      %v482 = vld [vmem:[%s455 + $0x38] sm:$0xff]
      %v483 = vld [vmem:[%s455 + $0x40] sm:$0xff]
      %v484 = vld [vmem:[%s455 + $0x48] sm:$0xff]
      %v485 = vld [vmem:[%s455 + $0x50] sm:$0xff]
      %v486 = vld [vmem:[%s455 + $0x58] sm:$0xff]
      %v487 = vld [vmem:[%s455 + $0x60] sm:$0xff]
      %v488 = vld [vmem:[%s455 + $0x68] sm:$0xff]
      %v489 = vld [vmem:[%s455 + $0x70] sm:$0xff]
      %v490 = vld [vmem:[%s455 + $0x78] sm:$0xff]
      %v491 = vld [vmem:[%s455 + $0x80] sm:$0xff]
      %v492 = vld [vmem:[%s455 + $0x88] sm:$0xff]
      %v493 = vld [vmem:[%s455 + $0x90] sm:$0xff]
      %v494 = vld [vmem:[%s455 + $0x98] sm:$0xff]
      %v495 = vld [vmem:[%s455 + $0xa0] sm:$0xff]
      %v496 = vld [vmem:[%s455 + $0xa8] sm:$0xff]
      %v497 = vld [vmem:[%s455 + $0xb0] sm:$0xff]
      %v498 = vld [vmem:[%s455 + $0xb8] sm:$0xff]
      %v499 = vld [vmem:[%s455 + $0xc0] sm:$0xff]
      %v500 = vld [vmem:[%s455 + $0xc8] sm:$0xff]
      %v501 = vld [vmem:[%s455 + $0xd0] sm:$0xff]
      %v502 = vld [vmem:[%s455 + $0xd8] sm:$0xff]
      %v503 = vld [vmem:[%s455 + $0xe0] sm:$0xff]
      %v504 = vld [vmem:[%s455 + $0xe8] sm:$0xff]
      %v505 = vld [vmem:[%s455 + $0xf0] sm:$0xff]
      %v506 = vld [vmem:[%s455 + $0xf8] sm:$0xff]
      %v507 = vld [vmem:[%s449] sm:$0xff]
      %v508 = vld [vmem:[%s449 + $0x8] sm:$0xff]
      %v509 = vld [vmem:[%s449 + $0x10] sm:$0xff]
      %v510 = vld [vmem:[%s449 + $0x18] sm:$0xff]
      %v511 = vld [vmem:[%s449 + $0x20] sm:$0xff]
      %v512 = vld [vmem:[%s449 + $0x28] sm:$0xff]
      %v513 = vld [vmem:[%s449 + $0x30] sm:$0xff]
      %v514 = vld [vmem:[%s449 + $0x38] sm:$0xff]
      %v515 = vld [vmem:[%s449 + $0x40] sm:$0xff]
      %v516 = vld [vmem:[%s449 + $0x48] sm:$0xff]
      %v517 = vld [vmem:[%s449 + $0x50] sm:$0xff]
      %v518 = vld [vmem:[%s449 + $0x58] sm:$0xff]
      %v519 = vld [vmem:[%s449 + $0x60] sm:$0xff]
      %v520 = vld [vmem:[%s449 + $0x68] sm:$0xff]
      %v521 = vld [vmem:[%s449 + $0x70] sm:$0xff]
      %v522 = vld [vmem:[%s449 + $0x78] sm:$0xff]
      %v523 = vld [vmem:[%s449 + $0x80] sm:$0xff]
      %v524 = vld [vmem:[%s449 + $0x88] sm:$0xff]
      %v525 = vld [vmem:[%s449 + $0x90] sm:$0xff]
      %v526 = vld [vmem:[%s449 + $0x98] sm:$0xff]
      %v527 = vld [vmem:[%s449 + $0xa0] sm:$0xff]
      %v528 = vld [vmem:[%s449 + $0xa8] sm:$0xff]
      %v529 = vld [vmem:[%s449 + $0xb0] sm:$0xff]
      %v530 = vld [vmem:[%s449 + $0xb8] sm:$0xff]
      %v531 = vld [vmem:[%s449 + $0xc0] sm:$0xff]
      %v532 = vld [vmem:[%s449 + $0xc8] sm:$0xff]
      %v533 = vld [vmem:[%s449 + $0xd0] sm:$0xff]
      %v534 = vld [vmem:[%s449 + $0xd8] sm:$0xff]
      %v535 = vld [vmem:[%s449 + $0xe0] sm:$0xff]
      %v536 = vld [vmem:[%s449 + $0xe8] sm:$0xff]
      %v537 = vld [vmem:[%s449 + $0xf0] sm:$0xff]
      %v538 = vld [vmem:[%s449 + $0xf8] sm:$0xff]
      %v539 = vld [vmem:[%s443] sm:$0x1]
      %v540 = vld [vmem:[%s443 + $0x1] sm:$0x1]
      %v541 = vld [vmem:[%s443 + $0x2] sm:$0x1]
      %v542 = vld [vmem:[%s443 + $0x3] sm:$0x1]
      %v543 = vld [vmem:[%s443 + $0x4] sm:$0x1]
      %v544 = vld [vmem:[%s443 + $0x5] sm:$0x1]
      %v545 = vld [vmem:[%s443 + $0x6] sm:$0x1]
      %v546 = vld [vmem:[%s443 + $0x7] sm:$0x1]
      %v547 = vld [vmem:[%s443 + $0x8] sm:$0x1]
      %v548 = vld [vmem:[%s443 + $0x9] sm:$0x1]
      %v549 = vld [vmem:[%s443 + $0xa] sm:$0x1]
      %v550 = vld [vmem:[%s443 + $0xb] sm:$0x1]
      %v551 = vld [vmem:[%s443 + $0xc] sm:$0x1]
      %v552 = vld [vmem:[%s443 + $0xd] sm:$0x1]
      %v553 = vld [vmem:[%s443 + $0xe] sm:$0x1]
      %v554 = vld [vmem:[%s443 + $0xf] sm:$0x1]
      %v555 = vld [vmem:[%s443 + $0x10] sm:$0x1]
      %v556 = vld [vmem:[%s443 + $0x11] sm:$0x1]
      %v557 = vld [vmem:[%s443 + $0x12] sm:$0x1]
      %v558 = vld [vmem:[%s443 + $0x13] sm:$0x1]
      %v559 = vld [vmem:[%s443 + $0x14] sm:$0x1]
      %v560 = vld [vmem:[%s443 + $0x15] sm:$0x1]
      %v561 = vld [vmem:[%s443 + $0x16] sm:$0x1]
      %v562 = vld [vmem:[%s443 + $0x17] sm:$0x1]
      %v563 = vld [vmem:[%s443 + $0x18] sm:$0x1]
      %v564 = vld [vmem:[%s443 + $0x19] sm:$0x1]
      %v565 = vld [vmem:[%s443 + $0x1a] sm:$0x1]
      %v566 = vld [vmem:[%s443 + $0x1b] sm:$0x1]
      %v567 = vld [vmem:[%s443 + $0x1c] sm:$0x1]
      %v568 = vld [vmem:[%s443 + $0x1d] sm:$0x1]
      %v569 = vld [vmem:[%s443 + $0x1e] sm:$0x1]
      %v570 = vld [vmem:[%s443 + $0x1f] sm:$0x1]
      %v603 = vlaneseq
      %v604 = vshrl.u32 %v603, 7
      %v605 = vsub.s32 0, %v604
      %v606 = vrot.slane %v539, %v605
      %v607 = vlaneseq
      %v608 = vshrl.u32 %v607, 7
      %v609 = vsub.s32 0, %v608
      %v610 = vrot.slane %v540, %v609
      %v611 = vlaneseq
      %v612 = vshrl.u32 %v611, 7
      %v613 = vsub.s32 0, %v612
      %v614 = vrot.slane %v541, %v613
      %v615 = vlaneseq
      %v616 = vshrl.u32 %v615, 7
      %v617 = vsub.s32 0, %v616
      %v618 = vrot.slane %v542, %v617
      %v619 = vlaneseq
      %v620 = vshrl.u32 %v619, 7
      %v621 = vsub.s32 0, %v620
      %v622 = vrot.slane %v543, %v621
      %v623 = vlaneseq
      %v624 = vshrl.u32 %v623, 7
      %v625 = vsub.s32 0, %v624
      %v626 = vrot.slane %v544, %v625
      %v627 = vlaneseq
      %v628 = vshrl.u32 %v627, 7
      %v629 = vsub.s32 0, %v628
      %v630 = vrot.slane %v545, %v629
      %v631 = vlaneseq
      %v632 = vshrl.u32 %v631, 7
      %v633 = vsub.s32 0, %v632
      %v634 = vrot.slane %v546, %v633
      %v635 = vlaneseq
      %v636 = vshrl.u32 %v635, 7
      %v637 = vsub.s32 0, %v636
      %v638 = vrot.slane %v547, %v637
      %v639 = vlaneseq
      %v640 = vshrl.u32 %v639, 7
      %v641 = vsub.s32 0, %v640
      %v642 = vrot.slane %v548, %v641
      %v643 = vlaneseq
      %v644 = vshrl.u32 %v643, 7
      %v645 = vsub.s32 0, %v644
      %v646 = vrot.slane %v549, %v645
      %v647 = vlaneseq
      %v648 = vshrl.u32 %v647, 7
      %v649 = vsub.s32 0, %v648
      %v650 = vrot.slane %v550, %v649
      %v651 = vlaneseq
      %v652 = vshrl.u32 %v651, 7
      %v653 = vsub.s32 0, %v652
      %v654 = vrot.slane %v551, %v653
      %v655 = vlaneseq
      %v656 = vshrl.u32 %v655, 7
      %v657 = vsub.s32 0, %v656
      %v658 = vrot.slane %v552, %v657
      %v659 = vlaneseq
      %v660 = vshrl.u32 %v659, 7
      %v661 = vsub.s32 0, %v660
      %v662 = vrot.slane %v553, %v661
      %v663 = vlaneseq
      %v664 = vshrl.u32 %v663, 7
      %v665 = vsub.s32 0, %v664
      %v666 = vrot.slane %v554, %v665
      %v667 = vlaneseq
      %v668 = vshrl.u32 %v667, 7
      %v669 = vsub.s32 0, %v668
      %v670 = vrot.slane %v555, %v669
      %v671 = vlaneseq
      %v672 = vshrl.u32 %v671, 7
      %v673 = vsub.s32 0, %v672
      %v674 = vrot.slane %v556, %v673
      %v675 = vlaneseq
      %v676 = vshrl.u32 %v675, 7
      %v677 = vsub.s32 0, %v676
      %v678 = vrot.slane %v557, %v677
      %v679 = vlaneseq
      %v680 = vshrl.u32 %v679, 7
      %v681 = vsub.s32 0, %v680
      %v682 = vrot.slane %v558, %v681
      %v683 = vlaneseq
      %v684 = vshrl.u32 %v683, 7
      %v685 = vsub.s32 0, %v684
      %v686 = vrot.slane %v559, %v685
      %v687 = vlaneseq
      %v688 = vshrl.u32 %v687, 7
      %v689 = vsub.s32 0, %v688
      %v690 = vrot.slane %v560, %v689
      %v691 = vlaneseq
      %v692 = vshrl.u32 %v691, 7
      %v693 = vsub.s32 0, %v692
      %v694 = vrot.slane %v561, %v693
      %v695 = vlaneseq
      %v696 = vshrl.u32 %v695, 7
      %v697 = vsub.s32 0, %v696
      %v698 = vrot.slane %v562, %v697
      %v699 = vlaneseq
      %v700 = vshrl.u32 %v699, 7
      %v701 = vsub.s32 0, %v700
      %v702 = vrot.slane %v563, %v701
      %v703 = vlaneseq
      %v704 = vshrl.u32 %v703, 7
      %v705 = vsub.s32 0, %v704
      %v706 = vrot.slane %v564, %v705
      %v707 = vlaneseq
      %v708 = vshrl.u32 %v707, 7
      %v709 = vsub.s32 0, %v708
      %v710 = vrot.slane %v565, %v709
      %v711 = vlaneseq
      %v712 = vshrl.u32 %v711, 7
      %v713 = vsub.s32 0, %v712
      %v714 = vrot.slane %v566, %v713
      %v715 = vlaneseq
      %v716 = vshrl.u32 %v715, 7
      %v717 = vsub.s32 0, %v716
      %v718 = vrot.slane %v567, %v717
      %v719 = vlaneseq
      %v720 = vshrl.u32 %v719, 7
      %v721 = vsub.s32 0, %v720
      %v722 = vrot.slane %v568, %v721
      %v723 = vlaneseq
      %v724 = vshrl.u32 %v723, 7
      %v725 = vsub.s32 0, %v724
      %v726 = vrot.slane %v569, %v725
      %v727 = vlaneseq
      %v728 = vshrl.u32 %v727, 7
      %v729 = vsub.s32 0, %v728
      %v730 = vrot.slane %v570, %v729
      %v763 = vsub.f32 %v606, %v507
      %v764 = vsub.f32 %v610, %v508
      %v765 = vsub.f32 %v614, %v509
      %v766 = vsub.f32 %v618, %v510
      %v767 = vsub.f32 %v622, %v511
      %v768 = vsub.f32 %v626, %v512
      %v769 = vsub.f32 %v630, %v513
      %v770 = vsub.f32 %v634, %v514
      %v771 = vsub.f32 %v638, %v515
      %v772 = vsub.f32 %v642, %v516
      %v773 = vsub.f32 %v646, %v517
      %v774 = vsub.f32 %v650, %v518
      %v775 = vsub.f32 %v654, %v519
      %v776 = vsub.f32 %v658, %v520
      %v777 = vsub.f32 %v662, %v521
      %v778 = vsub.f32 %v666, %v522
      %v779 = vsub.f32 %v670, %v523
      %v780 = vsub.f32 %v674, %v524
      %v781 = vsub.f32 %v678, %v525
      %v782 = vsub.f32 %v682, %v526
      %v783 = vsub.f32 %v686, %v527
      %v784 = vsub.f32 %v690, %v528
      %v785 = vsub.f32 %v694, %v529
      %v786 = vsub.f32 %v698, %v530
      %v787 = vsub.f32 %v702, %v531
      %v788 = vsub.f32 %v706, %v532
      %v789 = vsub.f32 %v710, %v533
      %v790 = vsub.f32 %v714, %v534
      %v791 = vsub.f32 %v718, %v535
      %v792 = vsub.f32 %v722, %v536
      %v793 = vsub.f32 %v726, %v537
      %v794 = vsub.f32 %v730, %v538
      %v795 = vadd.f32 %v763, %v475
      %v796 = vadd.f32 %v764, %v476
      %v797 = vadd.f32 %v765, %v477
      %v798 = vadd.f32 %v766, %v478
      %v799 = vadd.f32 %v767, %v479
      %v800 = vadd.f32 %v768, %v480
      %v801 = vadd.f32 %v769, %v481
      %v802 = vadd.f32 %v770, %v482
      %v803 = vadd.f32 %v771, %v483
      %v804 = vadd.f32 %v772, %v484
      %v805 = vadd.f32 %v773, %v485
      %v806 = vadd.f32 %v774, %v486
      %v807 = vadd.f32 %v775, %v487
      %v808 = vadd.f32 %v776, %v488
      %v809 = vadd.f32 %v777, %v489
      %v810 = vadd.f32 %v778, %v490
      %v811 = vadd.f32 %v779, %v491
      %v812 = vadd.f32 %v780, %v492
      %v813 = vadd.f32 %v781, %v493
      %v814 = vadd.f32 %v782, %v494
      %v815 = vadd.f32 %v783, %v495
      %v816 = vadd.f32 %v784, %v496
      %v817 = vadd.f32 %v785, %v497
      %v818 = vadd.f32 %v786, %v498
      %v819 = vadd.f32 %v787, %v499
      %v820 = vadd.f32 %v788, %v500
      %v821 = vadd.f32 %v789, %v501
      %v822 = vadd.f32 %v790, %v502
      %v823 = vadd.f32 %v791, %v503
      %v824 = vadd.f32 %v792, %v504
      %v825 = vadd.f32 %v793, %v505
      %v826 = vadd.f32 %v794, %v506
      %v827 = vld [vmem:[%s5] sm:$0xff]
      %v828 = vld [vmem:[%s5 + $0x8] sm:$0xff]
      %v829 = vld [vmem:[%s5 + $0x10] sm:$0xff]
      %v830 = vld [vmem:[%s5 + $0x18] sm:$0xff]
      %v831 = vld [vmem:[%s6] sm:$0x1]
      %v833 = vlaneseq
      %v834 = vshrl.u32 %v833, 7
      %v835 = vsub.s32 0, %v834
      %v836 = vrot.slane %v831, %v835
      %vm838 = vcmask 261120
      %v840 = vsel %vm838, %v795, 0
      %v843 = vsel %vm838, %v796, 0
      %v846 = vsel %vm838, %v797, 0
      %v849 = vsel %vm838, %v798, 0
      %v852 = vsel %vm838, %v799, 0
      %v855 = vsel %vm838, %v800, 0
      %v858 = vsel %vm838, %v801, 0
      %v861 = vsel %vm838, %v802, 0
      %v864 = vsel %vm838, %v803, 0
      %v867 = vsel %vm838, %v804, 0
      %v870 = vsel %vm838, %v805, 0
      %v873 = vsel %vm838, %v806, 0
      %v876 = vsel %vm838, %v807, 0
      %v879 = vsel %vm838, %v808, 0
      %v882 = vsel %vm838, %v809, 0
      %v885 = vsel %vm838, %v810, 0
      %v888 = vsel %vm838, %v811, 0
      %v891 = vsel %vm838, %v812, 0
      %v894 = vsel %vm838, %v813, 0
      %v897 = vsel %vm838, %v814, 0
      %v900 = vsel %vm838, %v815, 0
      %v903 = vsel %vm838, %v816, 0
      %v906 = vsel %vm838, %v817, 0
      %v909 = vsel %vm838, %v818, 0
      %v912 = vsel %vm838, %v819, 0
      %v915 = vsel %vm838, %v820, 0
      %v918 = vsel %vm838, %v821, 0
      %v921 = vsel %vm838, %v822, 0
      %v924 = vsel %vm838, %v823, 0
      %v927 = vsel %vm838, %v824, 0
      %v930 = vsel %vm838, %v825, 0
      %v933 = vsel %vm838, %v826, 0
      %935 = vmatprep.subr.mxu0 0.0
      %936 = vmatpush1.msra.mxu0 %v827
      %937 = vmatprep.subr.mxu0 0.0
      %938 = vmatpush1.msra.mxu0 %v828
      %939 = vmatprep.subr.mxu0 0.0
      %940 = vmatpush1.msra.mxu0 %v829
      %941 = vmatprep.subr.mxu0 0.0
      %942 = vmatpush1.msra.mxu0 %v830
      %943 = vmatprep.subr.mxu0 0.0
      %944 = vmatpush1.msra.mxu0 0.0
      %945 = vmatprep.subr.mxu0 0.0
      %946 = vmatpush1.msra.mxu0 0.0
      %947 = vmatprep.subr.mxu0 0.0
      %948 = vmatpush1.msra.mxu0 0.0
      %949 = vmatprep.subr.mxu0 0.0
      %950 = vmatpush1.msra.mxu0 0.0
      %951 = vmatprep.subr.mxu0 0.0
      %952 = vmatpush1.msra.mxu0 0.0
      %953 = vmatprep.subr.mxu0 0.0
      %954 = vmatpush1.msra.mxu0 0.0
      %955 = vmatprep.subr.mxu0 0.0
      %956 = vmatpush1.msra.mxu0 0.0
      %957 = vmatprep.subr.mxu0 0.0
      %958 = vmatpush1.msra.mxu0 0.0
      %959 = vmatprep.subr.mxu0 0.0
      %960 = vmatpush1.msra.mxu0 0.0
      %961 = vmatprep.subr.mxu0 0.0
      %962 = vmatpush1.msra.mxu0 0.0
      %963 = vmatprep.subr.mxu0 0.0
      %964 = vmatpush1.msra.mxu0 0.0
      %965 = vmatprep.subr.mxu0 0.0
      %966 = vmatpush1.msra.mxu0 0.0
      %967 = vmatprep.subr.mxu0 0.0
      %968 = vmatpush1.msra.mxu0 0.0
      %969 = vmatprep.subr.mxu0 0.0
      %970 = vmatpush1.msra.mxu0 0.0
      %971 = vmatprep.subr.mxu0 0.0
      %972 = vmatpush1.msra.mxu0 0.0
      %973 = vmatprep.subr.mxu0 0.0
      %974 = vmatpush1.msra.mxu0 0.0
      %975 = vmatprep.subr.mxu0 0.0
      %976 = vmatpush1.msra.mxu0 0.0
      %977 = vmatprep.subr.mxu0 0.0
      %978 = vmatpush1.msra.mxu0 0.0
      %979 = vmatprep.subr.mxu0 0.0
      %980 = vmatpush1.msra.mxu0 0.0
      %981 = vmatprep.subr.mxu0 0.0
      %982 = vmatpush1.msra.mxu0 0.0
      %983 = vmatprep.subr.mxu0 0.0
      %984 = vmatpush1.msra.mxu0 0.0
      %985 = vmatprep.subr.mxu0 0.0
      %986 = vmatpush1.msra.mxu0 0.0
      %987 = vmatprep.subr.mxu0 0.0
      %988 = vmatpush1.msra.mxu0 0.0
      %989 = vmatprep.subr.mxu0 0.0
      %990 = vmatpush1.msra.mxu0 0.0
      %991 = vmatprep.subr.mxu0 0.0
      %992 = vmatpush1.msra.mxu0 0.0
      %993 = vmatprep.subr.mxu0 0.0
      %994 = vmatpush1.msra.mxu0 0.0
      %995 = vmatprep.subr.mxu0 0.0
      %996 = vmatpush1.msra.mxu0 0.0
      %997 = vmatprep.subr.mxu0 0.0
      %998 = vmatpush1.msra.mxu0 0.0
      %999 = vmatprep.mubr.f32.mxu0 0.0
      %1000 = vmatmul.mubr.f32.gmra.mrb[0].mxu0 %v840
      %v1001 = vpop.f32.mrb[0].mxu0
      %v1002 = vadd.f32 %v836, %v1001
      %v1003 = vpop.f32.mrb[0].mxu0
      %1004 = vmatprep.mubr.f32.mxu0 0.0
      %1005 = vmatmul.mubr.f32.gmra.mrb[0].mxu0 %v843
      %v1006 = vpop.f32.mrb[0].mxu0
      %v1007 = vadd.f32 %v836, %v1006
      %v1008 = vpop.f32.mrb[0].mxu0
      %1009 = vmatprep.mubr.f32.mxu0 0.0
      %1010 = vmatmul.mubr.f32.gmra.mrb[0].mxu0 %v846
      %v1011 = vpop.f32.mrb[0].mxu0
      %v1012 = vadd.f32 %v836, %v1011
      %v1013 = vpop.f32.mrb[0].mxu0
      %1014 = vmatprep.mubr.f32.mxu0 0.0
      %1015 = vmatmul.mubr.f32.gmra.mrb[0].mxu0 %v849
      %v1016 = vpop.f32.mrb[0].mxu0
      %v1017 = vadd.f32 %v836, %v1016
      %v1018 = vpop.f32.mrb[0].mxu0
      %1019 = vmatprep.mubr.f32.mxu0 0.0
      %1020 = vmatmul.mubr.f32.gmra.mrb[0].mxu0 %v852
      %v1021 = vpop.f32.mrb[0].mxu0
      %v1022 = vadd.f32 %v836, %v1021
      %v1023 = vpop.f32.mrb[0].mxu0
      %1024 = vmatprep.mubr.f32.mxu0 0.0
      %1025 = vmatmul.mubr.f32.gmra.mrb[0].mxu0 %v855
      %v1026 = vpop.f32.mrb[0].mxu0
      %v1027 = vadd.f32 %v836, %v1026
      %v1028 = vpop.f32.mrb[0].mxu0
      %1029 = vmatprep.mubr.f32.mxu0 0.0
      %1030 = vmatmul.mubr.f32.gmra.mrb[0].mxu0 %v858
      %v1031 = vpop.f32.mrb[0].mxu0
      %v1032 = vadd.f32 %v836, %v1031
      %v1033 = vpop.f32.mrb[0].mxu0
      %1034 = vmatprep.mubr.f32.mxu0 0.0
      %1035 = vmatmul.mubr.f32.gmra.mrb[0].mxu0 %v861
      %v1036 = vpop.f32.mrb[0].mxu0
      %v1037 = vadd.f32 %v836, %v1036
      %v1038 = vpop.f32.mrb[0].mxu0
      %1039 = vmatprep.mubr.f32.mxu0 0.0
      %1040 = vmatmul.mubr.f32.gmra.mrb[0].mxu0 %v864
      %v1041 = vpop.f32.mrb[0].mxu0
      %v1042 = vadd.f32 %v836, %v1041
      %v1043 = vpop.f32.mrb[0].mxu0
      %1044 = vmatprep.mubr.f32.mxu0 0.0
      %1045 = vmatmul.mubr.f32.gmra.mrb[0].mxu0 %v867
      %v1046 = vpop.f32.mrb[0].mxu0
      %v1047 = vadd.f32 %v836, %v1046
      %v1048 = vpop.f32.mrb[0].mxu0
      %1049 = vmatprep.mubr.f32.mxu0 0.0
      %1050 = vmatmul.mubr.f32.gmra.mrb[0].mxu0 %v870
      %v1051 = vpop.f32.mrb[0].mxu0
      %v1052 = vadd.f32 %v836, %v1051
      %v1053 = vpop.f32.mrb[0].mxu0
      %1054 = vmatprep.mubr.f32.mxu0 0.0
      %1055 = vmatmul.mubr.f32.gmra.mrb[0].mxu0 %v873
      %v1056 = vpop.f32.mrb[0].mxu0
      %v1057 = vadd.f32 %v836, %v1056
      %v1058 = vpop.f32.mrb[0].mxu0
      %1059 = vmatprep.mubr.f32.mxu0 0.0
      %1060 = vmatmul.mubr.f32.gmra.mrb[0].mxu0 %v876
      %v1061 = vpop.f32.mrb[0].mxu0
      %v1062 = vadd.f32 %v836, %v1061
      %v1063 = vpop.f32.mrb[0].mxu0
      %1064 = vmatprep.mubr.f32.mxu0 0.0
      %1065 = vmatmul.mubr.f32.gmra.mrb[0].mxu0 %v879
      %v1066 = vpop.f32.mrb[0].mxu0
      %v1067 = vadd.f32 %v836, %v1066
      %v1068 = vpop.f32.mrb[0].mxu0
      %1069 = vmatprep.mubr.f32.mxu0 0.0
      %1070 = vmatmul.mubr.f32.gmra.mrb[0].mxu0 %v882
      %v1071 = vpop.f32.mrb[0].mxu0
      %v1072 = vadd.f32 %v836, %v1071
      %v1073 = vpop.f32.mrb[0].mxu0
      %1074 = vmatprep.mubr.f32.mxu0 0.0
      %1075 = vmatmul.mubr.f32.gmra.mrb[0].mxu0 %v885
      %v1076 = vpop.f32.mrb[0].mxu0
      %v1077 = vadd.f32 %v836, %v1076
      %v1078 = vpop.f32.mrb[0].mxu0
      %1079 = vmatprep.mubr.f32.mxu0 0.0
      %1080 = vmatmul.mubr.f32.gmra.mrb[0].mxu0 %v888
      %v1081 = vpop.f32.mrb[0].mxu0
      %v1082 = vadd.f32 %v836, %v1081
      %v1083 = vpop.f32.mrb[0].mxu0
      %1084 = vmatprep.mubr.f32.mxu0 0.0
      %1085 = vmatmul.mubr.f32.gmra.mrb[0].mxu0 %v891
      %v1086 = vpop.f32.mrb[0].mxu0
      %v1087 = vadd.f32 %v836, %v1086
      %v1088 = vpop.f32.mrb[0].mxu0
      %1089 = vmatprep.mubr.f32.mxu0 0.0
      %1090 = vmatmul.mubr.f32.gmra.mrb[0].mxu0 %v894
      %v1091 = vpop.f32.mrb[0].mxu0
      %v1092 = vadd.f32 %v836, %v1091
      %v1093 = vpop.f32.mrb[0].mxu0
      %1094 = vmatprep.mubr.f32.mxu0 0.0
      %1095 = vmatmul.mubr.f32.gmra.mrb[0].mxu0 %v897
      %v1096 = vpop.f32.mrb[0].mxu0
      %v1097 = vadd.f32 %v836, %v1096
      %v1098 = vpop.f32.mrb[0].mxu0
      %1099 = vmatprep.mubr.f32.mxu0 0.0
      %1100 = vmatmul.mubr.f32.gmra.mrb[0].mxu0 %v900
      %v1101 = vpop.f32.mrb[0].mxu0
      %v1102 = vadd.f32 %v836, %v1101
      %v1103 = vpop.f32.mrb[0].mxu0
      %1104 = vmatprep.mubr.f32.mxu0 0.0
      %1105 = vmatmul.mubr.f32.gmra.mrb[0].mxu0 %v903
      %v1106 = vpop.f32.mrb[0].mxu0
      %v1107 = vadd.f32 %v836, %v1106
      %v1108 = vpop.f32.mrb[0].mxu0
      %1109 = vmatprep.mubr.f32.mxu0 0.0
      %1110 = vmatmul.mubr.f32.gmra.mrb[0].mxu0 %v906
      %v1111 = vpop.f32.mrb[0].mxu0
      %v1112 = vadd.f32 %v836, %v1111
      %v1113 = vpop.f32.mrb[0].mxu0
      %1114 = vmatprep.mubr.f32.mxu0 0.0
      %1115 = vmatmul.mubr.f32.gmra.mrb[0].mxu0 %v909
      %v1116 = vpop.f32.mrb[0].mxu0
      %v1117 = vadd.f32 %v836, %v1116
      %v1118 = vpop.f32.mrb[0].mxu0
      %1119 = vmatprep.mubr.f32.mxu0 0.0
      %1120 = vmatmul.mubr.f32.gmra.mrb[0].mxu0 %v912
      %v1121 = vpop.f32.mrb[0].mxu0
      %v1122 = vadd.f32 %v836, %v1121
      %v1123 = vpop.f32.mrb[0].mxu0
      %1124 = vmatprep.mubr.f32.mxu0 0.0
      %1125 = vmatmul.mubr.f32.gmra.mrb[0].mxu0 %v915
      %v1126 = vpop.f32.mrb[0].mxu0
      %v1127 = vadd.f32 %v836, %v1126
      %v1128 = vpop.f32.mrb[0].mxu0
      %1129 = vmatprep.mubr.f32.mxu0 0.0
      %1130 = vmatmul.mubr.f32.gmra.mrb[0].mxu0 %v918
      %v1131 = vpop.f32.mrb[0].mxu0
      %v1132 = vadd.f32 %v836, %v1131
      %v1133 = vpop.f32.mrb[0].mxu0
      %1134 = vmatprep.mubr.f32.mxu0 0.0
      %1135 = vmatmul.mubr.f32.gmra.mrb[0].mxu0 %v921
      %v1136 = vpop.f32.mrb[0].mxu0
      %v1137 = vadd.f32 %v836, %v1136
      %v1138 = vpop.f32.mrb[0].mxu0
      %1139 = vmatprep.mubr.f32.mxu0 0.0
      %1140 = vmatmul.mubr.f32.gmra.mrb[0].mxu0 %v924
      %v1141 = vpop.f32.mrb[0].mxu0
      %v1142 = vadd.f32 %v836, %v1141
      %v1143 = vpop.f32.mrb[0].mxu0
      %1144 = vmatprep.mubr.f32.mxu0 0.0
      %1145 = vmatmul.mubr.f32.gmra.mrb[0].mxu0 %v927
      %v1146 = vpop.f32.mrb[0].mxu0
      %v1147 = vadd.f32 %v836, %v1146
      %v1148 = vpop.f32.mrb[0].mxu0
      %1149 = vmatprep.mubr.f32.mxu0 0.0
      %1150 = vmatmul.mubr.f32.gmra.mrb[0].mxu0 %v930
      %v1151 = vpop.f32.mrb[0].mxu0
      %v1152 = vadd.f32 %v836, %v1151
      %v1153 = vpop.f32.mrb[0].mxu0
      %1154 = vmatprep.mubr.f32.mxu0 0.0
      %1155 = vmatmul.mubr.f32.gmra.mrb[0].mxu0 %v933
      %v1156 = vpop.f32.mrb[0].mxu0
      %v1157 = vadd.f32 %v836, %v1156
      %v1158 = vpop.f32.mrb[0].mxu0
      %1159 = vdwg.mxu0
      %v1160 = vmax.f32 %v1002, 0.0
      %v1161 = vmax.f32 %v1007, 0.0
      %v1162 = vmax.f32 %v1012, 0.0
      %v1163 = vmax.f32 %v1017, 0.0
      %v1164 = vmax.f32 %v1022, 0.0
      %v1165 = vmax.f32 %v1027, 0.0
      %v1166 = vmax.f32 %v1032, 0.0
      %v1167 = vmax.f32 %v1037, 0.0
      %v1168 = vmax.f32 %v1042, 0.0
      %v1169 = vmax.f32 %v1047, 0.0
      %v1170 = vmax.f32 %v1052, 0.0
      %v1171 = vmax.f32 %v1057, 0.0
      %v1172 = vmax.f32 %v1062, 0.0
      %v1173 = vmax.f32 %v1067, 0.0
      %v1174 = vmax.f32 %v1072, 0.0
      %v1175 = vmax.f32 %v1077, 0.0
      %v1176 = vmax.f32 %v1082, 0.0
      %v1177 = vmax.f32 %v1087, 0.0
      %v1178 = vmax.f32 %v1092, 0.0
      %v1179 = vmax.f32 %v1097, 0.0
      %v1180 = vmax.f32 %v1102, 0.0
      %v1181 = vmax.f32 %v1107, 0.0
      %v1182 = vmax.f32 %v1112, 0.0
      %v1183 = vmax.f32 %v1117, 0.0
      %v1184 = vmax.f32 %v1122, 0.0
      %v1185 = vmax.f32 %v1127, 0.0
      %v1186 = vmax.f32 %v1132, 0.0
      %v1187 = vmax.f32 %v1137, 0.0
      %v1188 = vmax.f32 %v1142, 0.0
      %v1189 = vmax.f32 %v1147, 0.0
      %v1190 = vmax.f32 %v1152, 0.0
      %v1191 = vmax.f32 %v1157, 0.0
      %v1192 = vld [vmem:[%s7] sm:$0xff]
      %v1193 = vld [vmem:[%s7 + $0x8] sm:$0xff]
      %v1194 = vld [vmem:[%s7 + $0x10] sm:$0xff]
      %v1195 = vld [vmem:[%s7 + $0x18] sm:$0xff]
      %v1196 = vld [vmem:[%s8] sm:$0x1]
      %v1198 = vlaneseq
      %v1199 = vshrl.u32 %v1198, 7
      %v1200 = vsub.s32 0, %v1199
      %v1201 = vrot.slane %v1196, %v1200
      %v1204 = vsel %vm838, %v1160, 0
      %v1207 = vsel %vm838, %v1161, 0
      %v1210 = vsel %vm838, %v1162, 0
      %v1213 = vsel %vm838, %v1163, 0
      %v1216 = vsel %vm838, %v1164, 0
      %v1219 = vsel %vm838, %v1165, 0
      %v1222 = vsel %vm838, %v1166, 0
      %v1225 = vsel %vm838, %v1167, 0
      %v1228 = vsel %vm838, %v1168, 0
      %v1231 = vsel %vm838, %v1169, 0
      %v1234 = vsel %vm838, %v1170, 0
      %v1237 = vsel %vm838, %v1171, 0
      %v1240 = vsel %vm838, %v1172, 0
      %v1243 = vsel %vm838, %v1173, 0
      %v1246 = vsel %vm838, %v1174, 0
      %v1249 = vsel %vm838, %v1175, 0
      %v1252 = vsel %vm838, %v1176, 0
      %v1255 = vsel %vm838, %v1177, 0
      %v1258 = vsel %vm838, %v1178, 0
      %v1261 = vsel %vm838, %v1179, 0
      %v1264 = vsel %vm838, %v1180, 0
      %v1267 = vsel %vm838, %v1181, 0
      %v1270 = vsel %vm838, %v1182, 0
      %v1273 = vsel %vm838, %v1183, 0
      %v1276 = vsel %vm838, %v1184, 0
      %v1279 = vsel %vm838, %v1185, 0
      %v1282 = vsel %vm838, %v1186, 0
      %v1285 = vsel %vm838, %v1187, 0
      %v1288 = vsel %vm838, %v1188, 0
      %v1291 = vsel %vm838, %v1189, 0
      %v1294 = vsel %vm838, %v1190, 0
      %v1297 = vsel %vm838, %v1191, 0
      %1299 = vmatprep.subr.mxu0 0.0
      %1300 = vmatpush1.msra.mxu0 %v1192
      %1301 = vmatprep.subr.mxu0 0.0
      %1302 = vmatpush1.msra.mxu0 %v1193
      %1303 = vmatprep.subr.mxu0 0.0
      %1304 = vmatpush1.msra.mxu0 %v1194
      %1305 = vmatprep.subr.mxu0 0.0
      %1306 = vmatpush1.msra.mxu0 %v1195
      %1307 = vmatprep.subr.mxu0 0.0
      %1308 = vmatpush1.msra.mxu0 0.0
      %1309 = vmatprep.subr.mxu0 0.0
      %1310 = vmatpush1.msra.mxu0 0.0
      %1311 = vmatprep.subr.mxu0 0.0
      %1312 = vmatpush1.msra.mxu0 0.0
      %1313 = vmatprep.subr.mxu0 0.0
      %1314 = vmatpush1.msra.mxu0 0.0
      %1315 = vmatprep.subr.mxu0 0.0
      %1316 = vmatpush1.msra.mxu0 0.0
      %1317 = vmatprep.subr.mxu0 0.0
      %1318 = vmatpush1.msra.mxu0 0.0
      %1319 = vmatprep.subr.mxu0 0.0
      %1320 = vmatpush1.msra.mxu0 0.0
      %1321 = vmatprep.subr.mxu0 0.0
      %1322 = vmatpush1.msra.mxu0 0.0
      %1323 = vmatprep.subr.mxu0 0.0
      %1324 = vmatpush1.msra.mxu0 0.0
      %1325 = vmatprep.subr.mxu0 0.0
      %1326 = vmatpush1.msra.mxu0 0.0
      %1327 = vmatprep.subr.mxu0 0.0
      %1328 = vmatpush1.msra.mxu0 0.0
      %1329 = vmatprep.subr.mxu0 0.0
      %1330 = vmatpush1.msra.mxu0 0.0
      %1331 = vmatprep.subr.mxu0 0.0
      %1332 = vmatpush1.msra.mxu0 0.0
      %1333 = vmatprep.subr.mxu0 0.0
      %1334 = vmatpush1.msra.mxu0 0.0
      %1335 = vmatprep.subr.mxu0 0.0
      %1336 = vmatpush1.msra.mxu0 0.0
      %1337 = vmatprep.subr.mxu0 0.0
      %1338 = vmatpush1.msra.mxu0 0.0
      %1339 = vmatprep.subr.mxu0 0.0
      %1340 = vmatpush1.msra.mxu0 0.0
      %1341 = vmatprep.subr.mxu0 0.0
      %1342 = vmatpush1.msra.mxu0 0.0
      %1343 = vmatprep.subr.mxu0 0.0
      %1344 = vmatpush1.msra.mxu0 0.0
      %1345 = vmatprep.subr.mxu0 0.0
      %1346 = vmatpush1.msra.mxu0 0.0
      %1347 = vmatprep.subr.mxu0 0.0
      %1348 = vmatpush1.msra.mxu0 0.0
      %1349 = vmatprep.subr.mxu0 0.0
      %1350 = vmatpush1.msra.mxu0 0.0
      %1351 = vmatprep.subr.mxu0 0.0
      %1352 = vmatpush1.msra.mxu0 0.0
      %1353 = vmatprep.subr.mxu0 0.0
      %1354 = vmatpush1.msra.mxu0 0.0
      %1355 = vmatprep.subr.mxu0 0.0
      %1356 = vmatpush1.msra.mxu0 0.0
      %1357 = vmatprep.subr.mxu0 0.0
      %1358 = vmatpush1.msra.mxu0 0.0
      %1359 = vmatprep.subr.mxu0 0.0
      %1360 = vmatpush1.msra.mxu0 0.0
      %1361 = vmatprep.subr.mxu0 0.0
      %1362 = vmatpush1.msra.mxu0 0.0
      %1363 = vmatprep.mubr.f32.mxu0 0.0
      %1364 = vmatmul.mubr.f32.gmra.mrb[0].mxu0 %v1204
      %v1365 = vpop.f32.mrb[0].mxu0
      %v1366 = vadd.f32 %v1201, %v1365
      %v1367 = vpop.f32.mrb[0].mxu0
      %1368 = vmatprep.mubr.f32.mxu0 0.0
      %1369 = vmatmul.mubr.f32.gmra.mrb[0].mxu0 %v1207
      %v1370 = vpop.f32.mrb[0].mxu0
      %v1371 = vadd.f32 %v1201, %v1370
      %v1372 = vpop.f32.mrb[0].mxu0
      %1373 = vmatprep.mubr.f32.mxu0 0.0
      %1374 = vmatmul.mubr.f32.gmra.mrb[0].mxu0 %v1210
      %v1375 = vpop.f32.mrb[0].mxu0
      %v1376 = vadd.f32 %v1201, %v1375
      %v1377 = vpop.f32.mrb[0].mxu0
      %1378 = vmatprep.mubr.f32.mxu0 0.0
      %1379 = vmatmul.mubr.f32.gmra.mrb[0].mxu0 %v1213
      %v1380 = vpop.f32.mrb[0].mxu0
      %v1381 = vadd.f32 %v1201, %v1380
      %v1382 = vpop.f32.mrb[0].mxu0
      %1383 = vmatprep.mubr.f32.mxu0 0.0
      %1384 = vmatmul.mubr.f32.gmra.mrb[0].mxu0 %v1216
      %v1385 = vpop.f32.mrb[0].mxu0
      %v1386 = vadd.f32 %v1201, %v1385
      %v1387 = vpop.f32.mrb[0].mxu0
      %1388 = vmatprep.mubr.f32.mxu0 0.0
      %1389 = vmatmul.mubr.f32.gmra.mrb[0].mxu0 %v1219
      %v1390 = vpop.f32.mrb[0].mxu0
      %v1391 = vadd.f32 %v1201, %v1390
      %v1392 = vpop.f32.mrb[0].mxu0
      %1393 = vmatprep.mubr.f32.mxu0 0.0
      %1394 = vmatmul.mubr.f32.gmra.mrb[0].mxu0 %v1222
      %v1395 = vpop.f32.mrb[0].mxu0
      %v1396 = vadd.f32 %v1201, %v1395
      %v1397 = vpop.f32.mrb[0].mxu0
      %1398 = vmatprep.mubr.f32.mxu0 0.0
      %1399 = vmatmul.mubr.f32.gmra.mrb[0].mxu0 %v1225
      %v1400 = vpop.f32.mrb[0].mxu0
      %v1401 = vadd.f32 %v1201, %v1400
      %v1402 = vpop.f32.mrb[0].mxu0
      %1403 = vmatprep.mubr.f32.mxu0 0.0
      %1404 = vmatmul.mubr.f32.gmra.mrb[0].mxu0 %v1228
      %v1405 = vpop.f32.mrb[0].mxu0
      %v1406 = vadd.f32 %v1201, %v1405
      %v1407 = vpop.f32.mrb[0].mxu0
      %1408 = vmatprep.mubr.f32.mxu0 0.0
      %1409 = vmatmul.mubr.f32.gmra.mrb[0].mxu0 %v1231
      %v1410 = vpop.f32.mrb[0].mxu0
      %v1411 = vadd.f32 %v1201, %v1410
      %v1412 = vpop.f32.mrb[0].mxu0
      %1413 = vmatprep.mubr.f32.mxu0 0.0
      %1414 = vmatmul.mubr.f32.gmra.mrb[0].mxu0 %v1234
      %v1415 = vpop.f32.mrb[0].mxu0
      %v1416 = vadd.f32 %v1201, %v1415
      %v1417 = vpop.f32.mrb[0].mxu0
      %1418 = vmatprep.mubr.f32.mxu0 0.0
      %1419 = vmatmul.mubr.f32.gmra.mrb[0].mxu0 %v1237
      %v1420 = vpop.f32.mrb[0].mxu0
      %v1421 = vadd.f32 %v1201, %v1420
      %v1422 = vpop.f32.mrb[0].mxu0
      %1423 = vmatprep.mubr.f32.mxu0 0.0
      %1424 = vmatmul.mubr.f32.gmra.mrb[0].mxu0 %v1240
      %v1425 = vpop.f32.mrb[0].mxu0
      %v1426 = vadd.f32 %v1201, %v1425
      %v1427 = vpop.f32.mrb[0].mxu0
      %1428 = vmatprep.mubr.f32.mxu0 0.0
      %1429 = vmatmul.mubr.f32.gmra.mrb[0].mxu0 %v1243
      %v1430 = vpop.f32.mrb[0].mxu0
      %v1431 = vadd.f32 %v1201, %v1430
      %v1432 = vpop.f32.mrb[0].mxu0
      %1433 = vmatprep.mubr.f32.mxu0 0.0
      %1434 = vmatmul.mubr.f32.gmra.mrb[0].mxu0 %v1246
      %v1435 = vpop.f32.mrb[0].mxu0
      %v1436 = vadd.f32 %v1201, %v1435
      %v1437 = vpop.f32.mrb[0].mxu0
      %1438 = vmatprep.mubr.f32.mxu0 0.0
      %1439 = vmatmul.mubr.f32.gmra.mrb[0].mxu0 %v1249
      %v1440 = vpop.f32.mrb[0].mxu0
      %v1441 = vadd.f32 %v1201, %v1440
      %v1442 = vpop.f32.mrb[0].mxu0
      %1443 = vmatprep.mubr.f32.mxu0 0.0
      %1444 = vmatmul.mubr.f32.gmra.mrb[0].mxu0 %v1252
      %v1445 = vpop.f32.mrb[0].mxu0
      %v1446 = vadd.f32 %v1201, %v1445
      %v1447 = vpop.f32.mrb[0].mxu0
      %1448 = vmatprep.mubr.f32.mxu0 0.0
      %1449 = vmatmul.mubr.f32.gmra.mrb[0].mxu0 %v1255
      %v1450 = vpop.f32.mrb[0].mxu0
      %v1451 = vadd.f32 %v1201, %v1450
      %v1452 = vpop.f32.mrb[0].mxu0
      %1453 = vmatprep.mubr.f32.mxu0 0.0
      %1454 = vmatmul.mubr.f32.gmra.mrb[0].mxu0 %v1258
      %v1455 = vpop.f32.mrb[0].mxu0
      %v1456 = vadd.f32 %v1201, %v1455
      %v1457 = vpop.f32.mrb[0].mxu0
      %1458 = vmatprep.mubr.f32.mxu0 0.0
      %1459 = vmatmul.mubr.f32.gmra.mrb[0].mxu0 %v1261
      %v1460 = vpop.f32.mrb[0].mxu0
      %v1461 = vadd.f32 %v1201, %v1460
      %v1462 = vpop.f32.mrb[0].mxu0
      %1463 = vmatprep.mubr.f32.mxu0 0.0
      %1464 = vmatmul.mubr.f32.gmra.mrb[0].mxu0 %v1264
      %v1465 = vpop.f32.mrb[0].mxu0
      %v1466 = vadd.f32 %v1201, %v1465
      %v1467 = vpop.f32.mrb[0].mxu0
      %1468 = vmatprep.mubr.f32.mxu0 0.0
      %1469 = vmatmul.mubr.f32.gmra.mrb[0].mxu0 %v1267
      %v1470 = vpop.f32.mrb[0].mxu0
      %v1471 = vadd.f32 %v1201, %v1470
      %v1472 = vpop.f32.mrb[0].mxu0
      %1473 = vmatprep.mubr.f32.mxu0 0.0
      %1474 = vmatmul.mubr.f32.gmra.mrb[0].mxu0 %v1270
      %v1475 = vpop.f32.mrb[0].mxu0
      %v1476 = vadd.f32 %v1201, %v1475
      %v1477 = vpop.f32.mrb[0].mxu0
      %1478 = vmatprep.mubr.f32.mxu0 0.0
      %1479 = vmatmul.mubr.f32.gmra.mrb[0].mxu0 %v1273
      %v1480 = vpop.f32.mrb[0].mxu0
      %v1481 = vadd.f32 %v1201, %v1480
      %v1482 = vpop.f32.mrb[0].mxu0
      %1483 = vmatprep.mubr.f32.mxu0 0.0
      %1484 = vmatmul.mubr.f32.gmra.mrb[0].mxu0 %v1276
      %v1485 = vpop.f32.mrb[0].mxu0
      %v1486 = vadd.f32 %v1201, %v1485
      %v1487 = vpop.f32.mrb[0].mxu0
      %1488 = vmatprep.mubr.f32.mxu0 0.0
      %1489 = vmatmul.mubr.f32.gmra.mrb[0].mxu0 %v1279
      %v1490 = vpop.f32.mrb[0].mxu0
      %v1491 = vadd.f32 %v1201, %v1490
      %v1492 = vpop.f32.mrb[0].mxu0
      %1493 = vmatprep.mubr.f32.mxu0 0.0
      %1494 = vmatmul.mubr.f32.gmra.mrb[0].mxu0 %v1282
      %v1495 = vpop.f32.mrb[0].mxu0
      %v1496 = vadd.f32 %v1201, %v1495
      %v1497 = vpop.f32.mrb[0].mxu0
      %1498 = vmatprep.mubr.f32.mxu0 0.0
      %1499 = vmatmul.mubr.f32.gmra.mrb[0].mxu0 %v1285
      %v1500 = vpop.f32.mrb[0].mxu0
      %v1501 = vadd.f32 %v1201, %v1500
      %v1502 = vpop.f32.mrb[0].mxu0
      %1503 = vmatprep.mubr.f32.mxu0 0.0
      %1504 = vmatmul.mubr.f32.gmra.mrb[0].mxu0 %v1288
      %v1505 = vpop.f32.mrb[0].mxu0
      %v1506 = vadd.f32 %v1201, %v1505
      %v1507 = vpop.f32.mrb[0].mxu0
      %1508 = vmatprep.mubr.f32.mxu0 0.0
      %1509 = vmatmul.mubr.f32.gmra.mrb[0].mxu0 %v1291
      %v1510 = vpop.f32.mrb[0].mxu0
      %v1511 = vadd.f32 %v1201, %v1510
      %v1512 = vpop.f32.mrb[0].mxu0
      %1513 = vmatprep.mubr.f32.mxu0 0.0
      %1514 = vmatmul.mubr.f32.gmra.mrb[0].mxu0 %v1294
      %v1515 = vpop.f32.mrb[0].mxu0
      %v1516 = vadd.f32 %v1201, %v1515
      %v1517 = vpop.f32.mrb[0].mxu0
      %1518 = vmatprep.mubr.f32.mxu0 0.0
      %1519 = vmatmul.mubr.f32.gmra.mrb[0].mxu0 %v1297
      %v1520 = vpop.f32.mrb[0].mxu0
      %v1521 = vadd.f32 %v1201, %v1520
      %v1522 = vpop.f32.mrb[0].mxu0
      %1523 = vdwg.mxu0
      %v1524 = vmul.f32 %v1366, 0.17677669
      %v1525 = vmul.f32 %v1371, 0.17677669
      %v1526 = vmul.f32 %v1376, 0.17677669
      %v1527 = vmul.f32 %v1381, 0.17677669
      %v1528 = vmul.f32 %v1386, 0.17677669
      %v1529 = vmul.f32 %v1391, 0.17677669
      %v1530 = vmul.f32 %v1396, 0.17677669
      %v1531 = vmul.f32 %v1401, 0.17677669
      %v1532 = vmul.f32 %v1406, 0.17677669
      %v1533 = vmul.f32 %v1411, 0.17677669
      %v1534 = vmul.f32 %v1416, 0.17677669
      %v1535 = vmul.f32 %v1421, 0.17677669
      %v1536 = vmul.f32 %v1426, 0.17677669
      %v1537 = vmul.f32 %v1431, 0.17677669
      %v1538 = vmul.f32 %v1436, 0.17677669
      %v1539 = vmul.f32 %v1441, 0.17677669
      %v1540 = vmul.f32 %v1446, 0.17677669
      %v1541 = vmul.f32 %v1451, 0.17677669
      %v1542 = vmul.f32 %v1456, 0.17677669
      %v1543 = vmul.f32 %v1461, 0.17677669
      %v1544 = vmul.f32 %v1466, 0.17677669
      %v1545 = vmul.f32 %v1471, 0.17677669
      %v1546 = vmul.f32 %v1476, 0.17677669
      %v1547 = vmul.f32 %v1481, 0.17677669
      %v1548 = vmul.f32 %v1486, 0.17677669
      %v1549 = vmul.f32 %v1491, 0.17677669
      %v1550 = vmul.f32 %v1496, 0.17677669
      %v1551 = vmul.f32 %v1501, 0.17677669
      %v1552 = vmul.f32 %v1506, 0.17677669
      %v1553 = vmul.f32 %v1511, 0.17677669
      %v1554 = vmul.f32 %v1516, 0.17677669
      %v1555 = vmul.f32 %v1521, 0.17677669
      %v1556 = vsel %vm838, %v1524, -inf
      %v1557 = vrot.slane %v1556, 4
      %v1558 = vmax.f32 %v1556, %v1557
      %v1559 = vrot.slane %v1558, 2
      %v1560 = vmax.f32 %v1558, %v1559
      %v1561 = vrot.slane %v1560, 1
      %v1562 = vmax.f32 %v1560, %v1561
      %v1563 = vsel %vm838, %v1525, -inf
      %v1564 = vrot.slane %v1563, 4
      %v1565 = vmax.f32 %v1563, %v1564
      %v1566 = vrot.slane %v1565, 2
      %v1567 = vmax.f32 %v1565, %v1566
      %v1568 = vrot.slane %v1567, 1
      %v1569 = vmax.f32 %v1567, %v1568
      %v1570 = vsel %vm838, %v1526, -inf
      %v1571 = vrot.slane %v1570, 4
      %v1572 = vmax.f32 %v1570, %v1571
      %v1573 = vrot.slane %v1572, 2
      %v1574 = vmax.f32 %v1572, %v1573
      %v1575 = vrot.slane %v1574, 1
      %v1576 = vmax.f32 %v1574, %v1575
      %v1577 = vsel %vm838, %v1527, -inf
      %v1578 = vrot.slane %v1577, 4
      %v1579 = vmax.f32 %v1577, %v1578
      %v1580 = vrot.slane %v1579, 2
      %v1581 = vmax.f32 %v1579, %v1580
      %v1582 = vrot.slane %v1581, 1
      %v1583 = vmax.f32 %v1581, %v1582
      %v1584 = vsel %vm838, %v1528, -inf
      %v1585 = vrot.slane %v1584, 4
      %v1586 = vmax.f32 %v1584, %v1585
      %v1587 = vrot.slane %v1586, 2
      %v1588 = vmax.f32 %v1586, %v1587
      %v1589 = vrot.slane %v1588, 1
      %v1590 = vmax.f32 %v1588, %v1589
      %v1591 = vsel %vm838, %v1529, -inf
      %v1592 = vrot.slane %v1591, 4
      %v1593 = vmax.f32 %v1591, %v1592
      %v1594 = vrot.slane %v1593, 2
      %v1595 = vmax.f32 %v1593, %v1594
      %v1596 = vrot.slane %v1595, 1
      %v1597 = vmax.f32 %v1595, %v1596
      %v1598 = vsel %vm838, %v1530, -inf
      %v1599 = vrot.slane %v1598, 4
      %v1600 = vmax.f32 %v1598, %v1599
      %v1601 = vrot.slane %v1600, 2
      %v1602 = vmax.f32 %v1600, %v1601
      %v1603 = vrot.slane %v1602, 1
      %v1604 = vmax.f32 %v1602, %v1603
      %v1605 = vsel %vm838, %v1531, -inf
      %v1606 = vrot.slane %v1605, 4
      %v1607 = vmax.f32 %v1605, %v1606
      %v1608 = vrot.slane %v1607, 2
      %v1609 = vmax.f32 %v1607, %v1608
      %v1610 = vrot.slane %v1609, 1
      %v1611 = vmax.f32 %v1609, %v1610
      %v1612 = vsel %vm838, %v1532, -inf
      %v1613 = vrot.slane %v1612, 4
      %v1614 = vmax.f32 %v1612, %v1613
      %v1615 = vrot.slane %v1614, 2
      %v1616 = vmax.f32 %v1614, %v1615
      %v1617 = vrot.slane %v1616, 1
      %v1618 = vmax.f32 %v1616, %v1617
      %v1619 = vsel %vm838, %v1533, -inf
      %v1620 = vrot.slane %v1619, 4
      %v1621 = vmax.f32 %v1619, %v1620
      %v1622 = vrot.slane %v1621, 2
      %v1623 = vmax.f32 %v1621, %v1622
      %v1624 = vrot.slane %v1623, 1
      %v1625 = vmax.f32 %v1623, %v1624
      %v1626 = vsel %vm838, %v1534, -inf
      %v1627 = vrot.slane %v1626, 4
      %v1628 = vmax.f32 %v1626, %v1627
      %v1629 = vrot.slane %v1628, 2
      %v1630 = vmax.f32 %v1628, %v1629
      %v1631 = vrot.slane %v1630, 1
      %v1632 = vmax.f32 %v1630, %v1631
      %v1633 = vsel %vm838, %v1535, -inf
      %v1634 = vrot.slane %v1633, 4
      %v1635 = vmax.f32 %v1633, %v1634
      %v1636 = vrot.slane %v1635, 2
      %v1637 = vmax.f32 %v1635, %v1636
      %v1638 = vrot.slane %v1637, 1
      %v1639 = vmax.f32 %v1637, %v1638
      %v1640 = vsel %vm838, %v1536, -inf
      %v1641 = vrot.slane %v1640, 4
      %v1642 = vmax.f32 %v1640, %v1641
      %v1643 = vrot.slane %v1642, 2
      %v1644 = vmax.f32 %v1642, %v1643
      %v1645 = vrot.slane %v1644, 1
      %v1646 = vmax.f32 %v1644, %v1645
      %v1647 = vsel %vm838, %v1537, -inf
      %v1648 = vrot.slane %v1647, 4
      %v1649 = vmax.f32 %v1647, %v1648
      %v1650 = vrot.slane %v1649, 2
      %v1651 = vmax.f32 %v1649, %v1650
      %v1652 = vrot.slane %v1651, 1
      %v1653 = vmax.f32 %v1651, %v1652
      %v1654 = vsel %vm838, %v1538, -inf
      %v1655 = vrot.slane %v1654, 4
      %v1656 = vmax.f32 %v1654, %v1655
      %v1657 = vrot.slane %v1656, 2
      %v1658 = vmax.f32 %v1656, %v1657
      %v1659 = vrot.slane %v1658, 1
      %v1660 = vmax.f32 %v1658, %v1659
      %v1661 = vsel %vm838, %v1539, -inf
      %v1662 = vrot.slane %v1661, 4
      %v1663 = vmax.f32 %v1661, %v1662
      %v1664 = vrot.slane %v1663, 2
      %v1665 = vmax.f32 %v1663, %v1664
      %v1666 = vrot.slane %v1665, 1
      %v1667 = vmax.f32 %v1665, %v1666
      %v1668 = vsel %vm838, %v1540, -inf
      %v1669 = vrot.slane %v1668, 4
      %v1670 = vmax.f32 %v1668, %v1669
      %v1671 = vrot.slane %v1670, 2
      %v1672 = vmax.f32 %v1670, %v1671
      %v1673 = vrot.slane %v1672, 1
      %v1674 = vmax.f32 %v1672, %v1673
      %v1675 = vsel %vm838, %v1541, -inf
      %v1676 = vrot.slane %v1675, 4
      %v1677 = vmax.f32 %v1675, %v1676
      %v1678 = vrot.slane %v1677, 2
      %v1679 = vmax.f32 %v1677, %v1678
      %v1680 = vrot.slane %v1679, 1
      %v1681 = vmax.f32 %v1679, %v1680
      %v1682 = vsel %vm838, %v1542, -inf
      %v1683 = vrot.slane %v1682, 4
      %v1684 = vmax.f32 %v1682, %v1683
      %v1685 = vrot.slane %v1684, 2
      %v1686 = vmax.f32 %v1684, %v1685
      %v1687 = vrot.slane %v1686, 1
      %v1688 = vmax.f32 %v1686, %v1687
      %v1689 = vsel %vm838, %v1543, -inf
      %v1690 = vrot.slane %v1689, 4
      %v1691 = vmax.f32 %v1689, %v1690
      %v1692 = vrot.slane %v1691, 2
      %v1693 = vmax.f32 %v1691, %v1692
      %v1694 = vrot.slane %v1693, 1
      %v1695 = vmax.f32 %v1693, %v1694
      %v1696 = vsel %vm838, %v1544, -inf
      %v1697 = vrot.slane %v1696, 4
      %v1698 = vmax.f32 %v1696, %v1697
      %v1699 = vrot.slane %v1698, 2
      %v1700 = vmax.f32 %v1698, %v1699
      %v1701 = vrot.slane %v1700, 1
      %v1702 = vmax.f32 %v1700, %v1701
      %v1703 = vsel %vm838, %v1545, -inf
      %v1704 = vrot.slane %v1703, 4
      %v1705 = vmax.f32 %v1703, %v1704
      %v1706 = vrot.slane %v1705, 2
      %v1707 = vmax.f32 %v1705, %v1706
      %v1708 = vrot.slane %v1707, 1
      %v1709 = vmax.f32 %v1707, %v1708
      %v1710 = vsel %vm838, %v1546, -inf
      %v1711 = vrot.slane %v1710, 4
      %v1712 = vmax.f32 %v1710, %v1711
      %v1713 = vrot.slane %v1712, 2
      %v1714 = vmax.f32 %v1712, %v1713
      %v1715 = vrot.slane %v1714, 1
      %v1716 = vmax.f32 %v1714, %v1715
      %v1717 = vsel %vm838, %v1547, -inf
      %v1718 = vrot.slane %v1717, 4
      %v1719 = vmax.f32 %v1717, %v1718
      %v1720 = vrot.slane %v1719, 2
      %v1721 = vmax.f32 %v1719, %v1720
      %v1722 = vrot.slane %v1721, 1
      %v1723 = vmax.f32 %v1721, %v1722
      %v1724 = vsel %vm838, %v1548, -inf
      %v1725 = vrot.slane %v1724, 4
      %v1726 = vmax.f32 %v1724, %v1725
      %v1727 = vrot.slane %v1726, 2
      %v1728 = vmax.f32 %v1726, %v1727
      %v1729 = vrot.slane %v1728, 1
      %v1730 = vmax.f32 %v1728, %v1729
      %v1731 = vsel %vm838, %v1549, -inf
      %v1732 = vrot.slane %v1731, 4
      %v1733 = vmax.f32 %v1731, %v1732
      %v1734 = vrot.slane %v1733, 2
      %v1735 = vmax.f32 %v1733, %v1734
      %v1736 = vrot.slane %v1735, 1
      %v1737 = vmax.f32 %v1735, %v1736
      %v1738 = vsel %vm838, %v1550, -inf
      %v1739 = vrot.slane %v1738, 4
      %v1740 = vmax.f32 %v1738, %v1739
      %v1741 = vrot.slane %v1740, 2
      %v1742 = vmax.f32 %v1740, %v1741
      %v1743 = vrot.slane %v1742, 1
      %v1744 = vmax.f32 %v1742, %v1743
      %v1745 = vsel %vm838, %v1551, -inf
      %v1746 = vrot.slane %v1745, 4
      %v1747 = vmax.f32 %v1745, %v1746
      %v1748 = vrot.slane %v1747, 2
      %v1749 = vmax.f32 %v1747, %v1748
      %v1750 = vrot.slane %v1749, 1
      %v1751 = vmax.f32 %v1749, %v1750
      %v1752 = vsel %vm838, %v1552, -inf
      %v1753 = vrot.slane %v1752, 4
      %v1754 = vmax.f32 %v1752, %v1753
      %v1755 = vrot.slane %v1754, 2
      %v1756 = vmax.f32 %v1754, %v1755
      %v1757 = vrot.slane %v1756, 1
      %v1758 = vmax.f32 %v1756, %v1757
      %v1759 = vsel %vm838, %v1553, -inf
      %v1760 = vrot.slane %v1759, 4
      %v1761 = vmax.f32 %v1759, %v1760
      %v1762 = vrot.slane %v1761, 2
      %v1763 = vmax.f32 %v1761, %v1762
      %v1764 = vrot.slane %v1763, 1
      %v1765 = vmax.f32 %v1763, %v1764
      %v1766 = vsel %vm838, %v1554, -inf
      %v1767 = vrot.slane %v1766, 4
      %v1768 = vmax.f32 %v1766, %v1767
      %v1769 = vrot.slane %v1768, 2
      %v1770 = vmax.f32 %v1768, %v1769
      %v1771 = vrot.slane %v1770, 1
      %v1772 = vmax.f32 %v1770, %v1771
      %v1773 = vsel %vm838, %v1555, -inf
      %v1774 = vrot.slane %v1773, 4
      %v1775 = vmax.f32 %v1773, %v1774
      %v1776 = vrot.slane %v1775, 2
      %v1777 = vmax.f32 %v1775, %v1776
      %v1778 = vrot.slane %v1777, 1
      %v1779 = vmax.f32 %v1777, %v1778
      %v1780 = vsub.f32 %v1524, %v1562
      %v1781 = vsub.f32 %v1525, %v1569
      %v1782 = vsub.f32 %v1526, %v1576
      %v1783 = vsub.f32 %v1527, %v1583
      %v1784 = vsub.f32 %v1528, %v1590
      %v1785 = vsub.f32 %v1529, %v1597
      %v1786 = vsub.f32 %v1530, %v1604
      %v1787 = vsub.f32 %v1531, %v1611
      %v1788 = vsub.f32 %v1532, %v1618
      %v1789 = vsub.f32 %v1533, %v1625
      %v1790 = vsub.f32 %v1534, %v1632
      %v1791 = vsub.f32 %v1535, %v1639
      %v1792 = vsub.f32 %v1536, %v1646
      %v1793 = vsub.f32 %v1537, %v1653
      %v1794 = vsub.f32 %v1538, %v1660
      %v1795 = vsub.f32 %v1539, %v1667
      %v1796 = vsub.f32 %v1540, %v1674
      %v1797 = vsub.f32 %v1541, %v1681
      %v1798 = vsub.f32 %v1542, %v1688
      %v1799 = vsub.f32 %v1543, %v1695
      %v1800 = vsub.f32 %v1544, %v1702
      %v1801 = vsub.f32 %v1545, %v1709
      %v1802 = vsub.f32 %v1546, %v1716
      %v1803 = vsub.f32 %v1547, %v1723
      %v1804 = vsub.f32 %v1548, %v1730
      %v1805 = vsub.f32 %v1549, %v1737
      %v1806 = vsub.f32 %v1550, %v1744
      %v1807 = vsub.f32 %v1551, %v1751
      %v1808 = vsub.f32 %v1552, %v1758
      %v1809 = vsub.f32 %v1553, %v1765
      %v1810 = vsub.f32 %v1554, %v1772
      %v1811 = vsub.f32 %v1555, %v1779
      %v1812 = vmul.f32 %v1780, 1.442695
      %v1813 = vpow.pop %v1812
      %v1814 = vmul.f32 %v1781, 1.442695
      %v1815 = vpow.pop %v1814
      %v1816 = vmul.f32 %v1782, 1.442695
      %v1817 = vpow.pop %v1816
      %v1818 = vmul.f32 %v1783, 1.442695
      %v1819 = vpow.pop %v1818
      %v1820 = vmul.f32 %v1784, 1.442695
      %v1821 = vpow.pop %v1820
      %v1822 = vmul.f32 %v1785, 1.442695
      %v1823 = vpow.pop %v1822
      %v1824 = vmul.f32 %v1786, 1.442695
      %v1825 = vpow.pop %v1824
      %v1826 = vmul.f32 %v1787, 1.442695
      %v1827 = vpow.pop %v1826
      %v1828 = vmul.f32 %v1788, 1.442695
      %v1829 = vpow.pop %v1828
      %v1830 = vmul.f32 %v1789, 1.442695
      %v1831 = vpow.pop %v1830
      %v1832 = vmul.f32 %v1790, 1.442695
      %v1833 = vpow.pop %v1832
      %v1834 = vmul.f32 %v1791, 1.442695
      %v1835 = vpow.pop %v1834
      %v1836 = vmul.f32 %v1792, 1.442695
      %v1837 = vpow.pop %v1836
      %v1838 = vmul.f32 %v1793, 1.442695
      %v1839 = vpow.pop %v1838
      %v1840 = vmul.f32 %v1794, 1.442695
      %v1841 = vpow.pop %v1840
      %v1842 = vmul.f32 %v1795, 1.442695
      %v1843 = vpow.pop %v1842
      %v1844 = vmul.f32 %v1796, 1.442695
      %v1845 = vpow.pop %v1844
      %v1846 = vmul.f32 %v1797, 1.442695
      %v1847 = vpow.pop %v1846
      %v1848 = vmul.f32 %v1798, 1.442695
      %v1849 = vpow.pop %v1848
      %v1850 = vmul.f32 %v1799, 1.442695
      %v1851 = vpow.pop %v1850
      %v1852 = vmul.f32 %v1800, 1.442695
      %v1853 = vpow.pop %v1852
      %v1854 = vmul.f32 %v1801, 1.442695
      %v1855 = vpow.pop %v1854
      %v1856 = vmul.f32 %v1802, 1.442695
      %v1857 = vpow.pop %v1856
      %v1858 = vmul.f32 %v1803, 1.442695
      %v1859 = vpow.pop %v1858
      %v1860 = vmul.f32 %v1804, 1.442695
      %v1861 = vpow.pop %v1860
      %v1862 = vmul.f32 %v1805, 1.442695
      %v1863 = vpow.pop %v1862
      %v1864 = vmul.f32 %v1806, 1.442695
      %v1865 = vpow.pop %v1864
      %v1866 = vmul.f32 %v1807, 1.442695
      %v1867 = vpow.pop %v1866
      %v1868 = vmul.f32 %v1808, 1.442695
      %v1869 = vpow.pop %v1868
      %v1870 = vmul.f32 %v1809, 1.442695
      %v1871 = vpow.pop %v1870
      %v1872 = vmul.f32 %v1810, 1.442695
      %v1873 = vpow.pop %v1872
      %v1874 = vmul.f32 %v1811, 1.442695
      %v1875 = vpow.pop %v1874
      %v1876 = vsel %vm838, %v1813, 0.0
      %v1877 = vrot.slane %v1876, 4
      %v1878 = vadd.f32 %v1876, %v1877
      %v1879 = vrot.slane %v1878, 2
      %v1880 = vadd.f32 %v1878, %v1879
      %v1881 = vrot.slane %v1880, 1
      %v1882 = vadd.f32 %v1880, %v1881
      %v1883 = vsel %vm838, %v1815, 0.0
      %v1884 = vrot.slane %v1883, 4
      %v1885 = vadd.f32 %v1883, %v1884
      %v1886 = vrot.slane %v1885, 2
      %v1887 = vadd.f32 %v1885, %v1886
      %v1888 = vrot.slane %v1887, 1
      %v1889 = vadd.f32 %v1887, %v1888
      %v1890 = vsel %vm838, %v1817, 0.0
      %v1891 = vrot.slane %v1890, 4
      %v1892 = vadd.f32 %v1890, %v1891
      %v1893 = vrot.slane %v1892, 2
      %v1894 = vadd.f32 %v1892, %v1893
      %v1895 = vrot.slane %v1894, 1
      %v1896 = vadd.f32 %v1894, %v1895
      %v1897 = vsel %vm838, %v1819, 0.0
      %v1898 = vrot.slane %v1897, 4
      %v1899 = vadd.f32 %v1897, %v1898
      %v1900 = vrot.slane %v1899, 2
      %v1901 = vadd.f32 %v1899, %v1900
      %v1902 = vrot.slane %v1901, 1
      %v1903 = vadd.f32 %v1901, %v1902
      %v1904 = vsel %vm838, %v1821, 0.0
      %v1905 = vrot.slane %v1904, 4
      %v1906 = vadd.f32 %v1904, %v1905
      %v1907 = vrot.slane %v1906, 2
      %v1908 = vadd.f32 %v1906, %v1907
      %v1909 = vrot.slane %v1908, 1
      %v1910 = vadd.f32 %v1908, %v1909
      %v1911 = vsel %vm838, %v1823, 0.0
      %v1912 = vrot.slane %v1911, 4
      %v1913 = vadd.f32 %v1911, %v1912
      %v1914 = vrot.slane %v1913, 2
      %v1915 = vadd.f32 %v1913, %v1914
      %v1916 = vrot.slane %v1915, 1
      %v1917 = vadd.f32 %v1915, %v1916
      %v1918 = vsel %vm838, %v1825, 0.0
      %v1919 = vrot.slane %v1918, 4
      %v1920 = vadd.f32 %v1918, %v1919
      %v1921 = vrot.slane %v1920, 2
      %v1922 = vadd.f32 %v1920, %v1921
      %v1923 = vrot.slane %v1922, 1
      %v1924 = vadd.f32 %v1922, %v1923
      %v1925 = vsel %vm838, %v1827, 0.0
      %v1926 = vrot.slane %v1925, 4
      %v1927 = vadd.f32 %v1925, %v1926
      %v1928 = vrot.slane %v1927, 2
      %v1929 = vadd.f32 %v1927, %v1928
      %v1930 = vrot.slane %v1929, 1
      %v1931 = vadd.f32 %v1929, %v1930
      %v1932 = vsel %vm838, %v1829, 0.0
      %v1933 = vrot.slane %v1932, 4
      %v1934 = vadd.f32 %v1932, %v1933
      %v1935 = vrot.slane %v1934, 2
      %v1936 = vadd.f32 %v1934, %v1935
      %v1937 = vrot.slane %v1936, 1
      %v1938 = vadd.f32 %v1936, %v1937
      %v1939 = vsel %vm838, %v1831, 0.0
      %v1940 = vrot.slane %v1939, 4
      %v1941 = vadd.f32 %v1939, %v1940
      %v1942 = vrot.slane %v1941, 2
      %v1943 = vadd.f32 %v1941, %v1942
      %v1944 = vrot.slane %v1943, 1
      %v1945 = vadd.f32 %v1943, %v1944
      %v1946 = vsel %vm838, %v1833, 0.0
      %v1947 = vrot.slane %v1946, 4
      %v1948 = vadd.f32 %v1946, %v1947
      %v1949 = vrot.slane %v1948, 2
      %v1950 = vadd.f32 %v1948, %v1949
      %v1951 = vrot.slane %v1950, 1
      %v1952 = vadd.f32 %v1950, %v1951
      %v1953 = vsel %vm838, %v1835, 0.0
      %v1954 = vrot.slane %v1953, 4
      %v1955 = vadd.f32 %v1953, %v1954
      %v1956 = vrot.slane %v1955, 2
      %v1957 = vadd.f32 %v1955, %v1956
      %v1958 = vrot.slane %v1957, 1
      %v1959 = vadd.f32 %v1957, %v1958
      %v1960 = vsel %vm838, %v1837, 0.0
      %v1961 = vrot.slane %v1960, 4
      %v1962 = vadd.f32 %v1960, %v1961
      %v1963 = vrot.slane %v1962, 2
      %v1964 = vadd.f32 %v1962, %v1963
      %v1965 = vrot.slane %v1964, 1
      %v1966 = vadd.f32 %v1964, %v1965
      %v1967 = vsel %vm838, %v1839, 0.0
      %v1968 = vrot.slane %v1967, 4
      %v1969 = vadd.f32 %v1967, %v1968
      %v1970 = vrot.slane %v1969, 2
      %v1971 = vadd.f32 %v1969, %v1970
      %v1972 = vrot.slane %v1971, 1
      %v1973 = vadd.f32 %v1971, %v1972
      %v1974 = vsel %vm838, %v1841, 0.0
      %v1975 = vrot.slane %v1974, 4
      %v1976 = vadd.f32 %v1974, %v1975
      %v1977 = vrot.slane %v1976, 2
      %v1978 = vadd.f32 %v1976, %v1977
      %v1979 = vrot.slane %v1978, 1
      %v1980 = vadd.f32 %v1978, %v1979
      %v1981 = vsel %vm838, %v1843, 0.0
      %v1982 = vrot.slane %v1981, 4
      %v1983 = vadd.f32 %v1981, %v1982
      %v1984 = vrot.slane %v1983, 2
      %v1985 = vadd.f32 %v1983, %v1984
      %v1986 = vrot.slane %v1985, 1
      %v1987 = vadd.f32 %v1985, %v1986
      %v1988 = vsel %vm838, %v1845, 0.0
      %v1989 = vrot.slane %v1988, 4
      %v1990 = vadd.f32 %v1988, %v1989
      %v1991 = vrot.slane %v1990, 2
      %v1992 = vadd.f32 %v1990, %v1991
      %v1993 = vrot.slane %v1992, 1
      %v1994 = vadd.f32 %v1992, %v1993
      %v1995 = vsel %vm838, %v1847, 0.0
      %v1996 = vrot.slane %v1995, 4
      %v1997 = vadd.f32 %v1995, %v1996
      %v1998 = vrot.slane %v1997, 2
      %v1999 = vadd.f32 %v1997, %v1998
      %v2000 = vrot.slane %v1999, 1
      %v2001 = vadd.f32 %v1999, %v2000
      %v2002 = vsel %vm838, %v1849, 0.0
      %v2003 = vrot.slane %v2002, 4
      %v2004 = vadd.f32 %v2002, %v2003
      %v2005 = vrot.slane %v2004, 2
      %v2006 = vadd.f32 %v2004, %v2005
      %v2007 = vrot.slane %v2006, 1
      %v2008 = vadd.f32 %v2006, %v2007
      %v2009 = vsel %vm838, %v1851, 0.0
      %v2010 = vrot.slane %v2009, 4
      %v2011 = vadd.f32 %v2009, %v2010
      %v2012 = vrot.slane %v2011, 2
      %v2013 = vadd.f32 %v2011, %v2012
      %v2014 = vrot.slane %v2013, 1
      %v2015 = vadd.f32 %v2013, %v2014
      %v2016 = vsel %vm838, %v1853, 0.0
      %v2017 = vrot.slane %v2016, 4
      %v2018 = vadd.f32 %v2016, %v2017
      %v2019 = vrot.slane %v2018, 2
      %v2020 = vadd.f32 %v2018, %v2019
      %v2021 = vrot.slane %v2020, 1
      %v2022 = vadd.f32 %v2020, %v2021
      %v2023 = vsel %vm838, %v1855, 0.0
      %v2024 = vrot.slane %v2023, 4
      %v2025 = vadd.f32 %v2023, %v2024
      %v2026 = vrot.slane %v2025, 2
      %v2027 = vadd.f32 %v2025, %v2026
      %v2028 = vrot.slane %v2027, 1
      %v2029 = vadd.f32 %v2027, %v2028
      %v2030 = vsel %vm838, %v1857, 0.0
      %v2031 = vrot.slane %v2030, 4
      %v2032 = vadd.f32 %v2030, %v2031
      %v2033 = vrot.slane %v2032, 2
      %v2034 = vadd.f32 %v2032, %v2033
      %v2035 = vrot.slane %v2034, 1
      %v2036 = vadd.f32 %v2034, %v2035
      %v2037 = vsel %vm838, %v1859, 0.0
      %v2038 = vrot.slane %v2037, 4
      %v2039 = vadd.f32 %v2037, %v2038
      %v2040 = vrot.slane %v2039, 2
      %v2041 = vadd.f32 %v2039, %v2040
      %v2042 = vrot.slane %v2041, 1
      %v2043 = vadd.f32 %v2041, %v2042
      %v2044 = vsel %vm838, %v1861, 0.0
      %v2045 = vrot.slane %v2044, 4
      %v2046 = vadd.f32 %v2044, %v2045
      %v2047 = vrot.slane %v2046, 2
      %v2048 = vadd.f32 %v2046, %v2047
      %v2049 = vrot.slane %v2048, 1
      %v2050 = vadd.f32 %v2048, %v2049
      %v2051 = vsel %vm838, %v1863, 0.0
      %v2052 = vrot.slane %v2051, 4
      %v2053 = vadd.f32 %v2051, %v2052
      %v2054 = vrot.slane %v2053, 2
      %v2055 = vadd.f32 %v2053, %v2054
      %v2056 = vrot.slane %v2055, 1
      %v2057 = vadd.f32 %v2055, %v2056
      %v2058 = vsel %vm838, %v1865, 0.0
      %v2059 = vrot.slane %v2058, 4
      %v2060 = vadd.f32 %v2058, %v2059
      %v2061 = vrot.slane %v2060, 2
      %v2062 = vadd.f32 %v2060, %v2061
      %v2063 = vrot.slane %v2062, 1
      %v2064 = vadd.f32 %v2062, %v2063
      %v2065 = vsel %vm838, %v1867, 0.0
      %v2066 = vrot.slane %v2065, 4
      %v2067 = vadd.f32 %v2065, %v2066
      %v2068 = vrot.slane %v2067, 2
      %v2069 = vadd.f32 %v2067, %v2068
      %v2070 = vrot.slane %v2069, 1
      %v2071 = vadd.f32 %v2069, %v2070
      %v2072 = vsel %vm838, %v1869, 0.0
      %v2073 = vrot.slane %v2072, 4
      %v2074 = vadd.f32 %v2072, %v2073
      %v2075 = vrot.slane %v2074, 2
      %v2076 = vadd.f32 %v2074, %v2075
      %v2077 = vrot.slane %v2076, 1
      %v2078 = vadd.f32 %v2076, %v2077
      %v2079 = vsel %vm838, %v1871, 0.0
      %v2080 = vrot.slane %v2079, 4
      %v2081 = vadd.f32 %v2079, %v2080
      %v2082 = vrot.slane %v2081, 2
      %v2083 = vadd.f32 %v2081, %v2082
      %v2084 = vrot.slane %v2083, 1
      %v2085 = vadd.f32 %v2083, %v2084
      %v2086 = vsel %vm838, %v1873, 0.0
      %v2087 = vrot.slane %v2086, 4
      %v2088 = vadd.f32 %v2086, %v2087
      %v2089 = vrot.slane %v2088, 2
      %v2090 = vadd.f32 %v2088, %v2089
      %v2091 = vrot.slane %v2090, 1
      %v2092 = vadd.f32 %v2090, %v2091
      %v2093 = vsel %vm838, %v1875, 0.0
      %v2094 = vrot.slane %v2093, 4
      %v2095 = vadd.f32 %v2093, %v2094
      %v2096 = vrot.slane %v2095, 2
      %v2097 = vadd.f32 %v2095, %v2096
      %v2098 = vrot.slane %v2097, 1
      %v2099 = vadd.f32 %v2097, %v2098
      %v2100 = vrcp.pop %v1882
      %v2101 = vmul.f32 %v1813, %v2100
      %v2102 = vrcp.pop %v1889
      %v2103 = vmul.f32 %v1815, %v2102
      %v2104 = vrcp.pop %v1896
      %v2105 = vmul.f32 %v1817, %v2104
      %v2106 = vrcp.pop %v1903
      %v2107 = vmul.f32 %v1819, %v2106
      %v2108 = vrcp.pop %v1910
      %v2109 = vmul.f32 %v1821, %v2108
      %v2110 = vrcp.pop %v1917
      %v2111 = vmul.f32 %v1823, %v2110
      %v2112 = vrcp.pop %v1924
      %v2113 = vmul.f32 %v1825, %v2112
      %v2114 = vrcp.pop %v1931
      %v2115 = vmul.f32 %v1827, %v2114
      %v2116 = vrcp.pop %v1938
      %v2117 = vmul.f32 %v1829, %v2116
      %v2118 = vrcp.pop %v1945
      %v2119 = vmul.f32 %v1831, %v2118
      %v2120 = vrcp.pop %v1952
      %v2121 = vmul.f32 %v1833, %v2120
      %v2122 = vrcp.pop %v1959
      %v2123 = vmul.f32 %v1835, %v2122
      %v2124 = vrcp.pop %v1966
      %v2125 = vmul.f32 %v1837, %v2124
      %v2126 = vrcp.pop %v1973
      %v2127 = vmul.f32 %v1839, %v2126
      %v2128 = vrcp.pop %v1980
      %v2129 = vmul.f32 %v1841, %v2128
      %v2130 = vrcp.pop %v1987
      %v2131 = vmul.f32 %v1843, %v2130
      %v2132 = vrcp.pop %v1994
      %v2133 = vmul.f32 %v1845, %v2132
      %v2134 = vrcp.pop %v2001
      %v2135 = vmul.f32 %v1847, %v2134
      %v2136 = vrcp.pop %v2008
      %v2137 = vmul.f32 %v1849, %v2136
      %v2138 = vrcp.pop %v2015
      %v2139 = vmul.f32 %v1851, %v2138
      %v2140 = vrcp.pop %v2022
      %v2141 = vmul.f32 %v1853, %v2140
      %v2142 = vrcp.pop %v2029
      %v2143 = vmul.f32 %v1855, %v2142
      %v2144 = vrcp.pop %v2036
      %v2145 = vmul.f32 %v1857, %v2144
      %v2146 = vrcp.pop %v2043
      %v2147 = vmul.f32 %v1859, %v2146
      %v2148 = vrcp.pop %v2050
      %v2149 = vmul.f32 %v1861, %v2148
      %v2150 = vrcp.pop %v2057
      %v2151 = vmul.f32 %v1863, %v2150
      %v2152 = vrcp.pop %v2064
      %v2153 = vmul.f32 %v1865, %v2152
      %v2154 = vrcp.pop %v2071
      %v2155 = vmul.f32 %v1867, %v2154
      %v2156 = vrcp.pop %v2078
      %v2157 = vmul.f32 %v1869, %v2156
      %v2158 = vrcp.pop %v2085
      %v2159 = vmul.f32 %v1871, %v2158
      %v2160 = vrcp.pop %v2092
      %v2161 = vmul.f32 %v1873, %v2160
      %v2162 = vrcp.pop %v2099
      %v2163 = vmul.f32 %v1875, %v2162
      %v2164 = vld [vmem:[%s461] sm:$0xff]
      %v2165 = vld [vmem:[%s461 + $0x8] sm:$0xff]
      %v2166 = vld [vmem:[%s461 + $0x10] sm:$0xff]
      %v2167 = vld [vmem:[%s461 + $0x18] sm:$0xff]
      %v2168 = vld [vmem:[%s461 + $0x20] sm:$0xff]
      %v2169 = vld [vmem:[%s461 + $0x28] sm:$0xff]
      %v2170 = vld [vmem:[%s461 + $0x30] sm:$0xff]
      %v2171 = vld [vmem:[%s461 + $0x38] sm:$0xff]
      %v2172 = vld [vmem:[%s461 + $0x40] sm:$0xff]
      %v2173 = vld [vmem:[%s461 + $0x48] sm:$0xff]
      %v2174 = vld [vmem:[%s461 + $0x50] sm:$0xff]
      %v2175 = vld [vmem:[%s461 + $0x58] sm:$0xff]
      %v2176 = vld [vmem:[%s461 + $0x60] sm:$0xff]
      %v2177 = vld [vmem:[%s461 + $0x68] sm:$0xff]
      %v2178 = vld [vmem:[%s461 + $0x70] sm:$0xff]
      %v2179 = vld [vmem:[%s461 + $0x78] sm:$0xff]
      %v2180 = vld [vmem:[%s461 + $0x80] sm:$0xff]
      %v2181 = vld [vmem:[%s461 + $0x88] sm:$0xff]
      %v2182 = vld [vmem:[%s461 + $0x90] sm:$0xff]
      %v2183 = vld [vmem:[%s461 + $0x98] sm:$0xff]
      %v2184 = vld [vmem:[%s461 + $0xa0] sm:$0xff]
      %v2185 = vld [vmem:[%s461 + $0xa8] sm:$0xff]
      %v2186 = vld [vmem:[%s461 + $0xb0] sm:$0xff]
      %v2187 = vld [vmem:[%s461 + $0xb8] sm:$0xff]
      %v2188 = vld [vmem:[%s461 + $0xc0] sm:$0xff]
      %v2189 = vld [vmem:[%s461 + $0xc8] sm:$0xff]
      %v2190 = vld [vmem:[%s461 + $0xd0] sm:$0xff]
      %v2191 = vld [vmem:[%s461 + $0xd8] sm:$0xff]
      %v2192 = vld [vmem:[%s461 + $0xe0] sm:$0xff]
      %v2193 = vld [vmem:[%s461 + $0xe8] sm:$0xff]
      %v2194 = vld [vmem:[%s461 + $0xf0] sm:$0xff]
      %v2195 = vld [vmem:[%s461 + $0xf8] sm:$0xff]
      %v2196 = vadd.f32 %v2164, %v475
      %v2197 = vadd.f32 %v2165, %v476
      %v2198 = vadd.f32 %v2166, %v477
      %v2199 = vadd.f32 %v2167, %v478
      %v2200 = vadd.f32 %v2168, %v479
      %v2201 = vadd.f32 %v2169, %v480
      %v2202 = vadd.f32 %v2170, %v481
      %v2203 = vadd.f32 %v2171, %v482
      %v2204 = vadd.f32 %v2172, %v483
      %v2205 = vadd.f32 %v2173, %v484
      %v2206 = vadd.f32 %v2174, %v485
      %v2207 = vadd.f32 %v2175, %v486
      %v2208 = vadd.f32 %v2176, %v487
      %v2209 = vadd.f32 %v2177, %v488
      %v2210 = vadd.f32 %v2178, %v489
      %v2211 = vadd.f32 %v2179, %v490
      %v2212 = vadd.f32 %v2180, %v491
      %v2213 = vadd.f32 %v2181, %v492
      %v2214 = vadd.f32 %v2182, %v493
      %v2215 = vadd.f32 %v2183, %v494
      %v2216 = vadd.f32 %v2184, %v495
      %v2217 = vadd.f32 %v2185, %v496
      %v2218 = vadd.f32 %v2186, %v497
      %v2219 = vadd.f32 %v2187, %v498
      %v2220 = vadd.f32 %v2188, %v499
      %v2221 = vadd.f32 %v2189, %v500
      %v2222 = vadd.f32 %v2190, %v501
      %v2223 = vadd.f32 %v2191, %v502
      %v2224 = vadd.f32 %v2192, %v503
      %v2225 = vadd.f32 %v2193, %v504
      %v2226 = vadd.f32 %v2194, %v505
      %v2227 = vadd.f32 %v2195, %v506
      %v2228 = vmul.f32 %v2101, %v2196
      %v2229 = vmul.f32 %v2103, %v2197
      %v2230 = vmul.f32 %v2105, %v2198
      %v2231 = vmul.f32 %v2107, %v2199
      %v2232 = vmul.f32 %v2109, %v2200
      %v2233 = vmul.f32 %v2111, %v2201
      %v2234 = vmul.f32 %v2113, %v2202
      %v2235 = vmul.f32 %v2115, %v2203
      %v2236 = vmul.f32 %v2117, %v2204
      %v2237 = vmul.f32 %v2119, %v2205
      %v2238 = vmul.f32 %v2121, %v2206
      %v2239 = vmul.f32 %v2123, %v2207
      %v2240 = vmul.f32 %v2125, %v2208
      %v2241 = vmul.f32 %v2127, %v2209
      %v2242 = vmul.f32 %v2129, %v2210
      %v2243 = vmul.f32 %v2131, %v2211
      %v2244 = vmul.f32 %v2133, %v2212
      %v2245 = vmul.f32 %v2135, %v2213
      %v2246 = vmul.f32 %v2137, %v2214
      %v2247 = vmul.f32 %v2139, %v2215
      %v2248 = vmul.f32 %v2141, %v2216
      %v2249 = vmul.f32 %v2143, %v2217
      %v2250 = vmul.f32 %v2145, %v2218
      %v2251 = vmul.f32 %v2147, %v2219
      %v2252 = vmul.f32 %v2149, %v2220
      %v2253 = vmul.f32 %v2151, %v2221
      %v2254 = vmul.f32 %v2153, %v2222
      %v2255 = vmul.f32 %v2155, %v2223
      %v2256 = vmul.f32 %v2157, %v2224
      %v2257 = vmul.f32 %v2159, %v2225
      %v2258 = vmul.f32 %v2161, %v2226
      %v2259 = vmul.f32 %v2163, %v2227
      %v2260 = vsel %vm838, %v2228, 0.0
      %v2261 = vrot.slane %v2260, 4
      %v2262 = vadd.f32 %v2260, %v2261
      %v2263 = vrot.slane %v2262, 2
      %v2264 = vadd.f32 %v2262, %v2263
      %v2265 = vrot.slane %v2264, 1
      %v2266 = vadd.f32 %v2264, %v2265
      %v2267 = vsel %vm838, %v2229, 0.0
      %v2268 = vrot.slane %v2267, 4
      %v2269 = vadd.f32 %v2267, %v2268
      %v2270 = vrot.slane %v2269, 2
      %v2271 = vadd.f32 %v2269, %v2270
      %v2272 = vrot.slane %v2271, 1
      %v2273 = vadd.f32 %v2271, %v2272
      %v2274 = vsel %vm838, %v2230, 0.0
      %v2275 = vrot.slane %v2274, 4
      %v2276 = vadd.f32 %v2274, %v2275
      %v2277 = vrot.slane %v2276, 2
      %v2278 = vadd.f32 %v2276, %v2277
      %v2279 = vrot.slane %v2278, 1
      %v2280 = vadd.f32 %v2278, %v2279
      %v2281 = vsel %vm838, %v2231, 0.0
      %v2282 = vrot.slane %v2281, 4
      %v2283 = vadd.f32 %v2281, %v2282
      %v2284 = vrot.slane %v2283, 2
      %v2285 = vadd.f32 %v2283, %v2284
      %v2286 = vrot.slane %v2285, 1
      %v2287 = vadd.f32 %v2285, %v2286
      %v2288 = vsel %vm838, %v2232, 0.0
      %v2289 = vrot.slane %v2288, 4
      %v2290 = vadd.f32 %v2288, %v2289
      %v2291 = vrot.slane %v2290, 2
      %v2292 = vadd.f32 %v2290, %v2291
      %v2293 = vrot.slane %v2292, 1
      %v2294 = vadd.f32 %v2292, %v2293
      %v2295 = vsel %vm838, %v2233, 0.0
      %v2296 = vrot.slane %v2295, 4
      %v2297 = vadd.f32 %v2295, %v2296
      %v2298 = vrot.slane %v2297, 2
      %v2299 = vadd.f32 %v2297, %v2298
      %v2300 = vrot.slane %v2299, 1
      %v2301 = vadd.f32 %v2299, %v2300
      %v2302 = vsel %vm838, %v2234, 0.0
      %v2303 = vrot.slane %v2302, 4
      %v2304 = vadd.f32 %v2302, %v2303
      %v2305 = vrot.slane %v2304, 2
      %v2306 = vadd.f32 %v2304, %v2305
      %v2307 = vrot.slane %v2306, 1
      %v2308 = vadd.f32 %v2306, %v2307
      %v2309 = vsel %vm838, %v2235, 0.0
      %v2310 = vrot.slane %v2309, 4
      %v2311 = vadd.f32 %v2309, %v2310
      %v2312 = vrot.slane %v2311, 2
      %v2313 = vadd.f32 %v2311, %v2312
      %v2314 = vrot.slane %v2313, 1
      %v2315 = vadd.f32 %v2313, %v2314
      %v2316 = vsel %vm838, %v2236, 0.0
      %v2317 = vrot.slane %v2316, 4
      %v2318 = vadd.f32 %v2316, %v2317
      %v2319 = vrot.slane %v2318, 2
      %v2320 = vadd.f32 %v2318, %v2319
      %v2321 = vrot.slane %v2320, 1
      %v2322 = vadd.f32 %v2320, %v2321
      %v2323 = vsel %vm838, %v2237, 0.0
      %v2324 = vrot.slane %v2323, 4
      %v2325 = vadd.f32 %v2323, %v2324
      %v2326 = vrot.slane %v2325, 2
      %v2327 = vadd.f32 %v2325, %v2326
      %v2328 = vrot.slane %v2327, 1
      %v2329 = vadd.f32 %v2327, %v2328
      %v2330 = vsel %vm838, %v2238, 0.0
      %v2331 = vrot.slane %v2330, 4
      %v2332 = vadd.f32 %v2330, %v2331
      %v2333 = vrot.slane %v2332, 2
      %v2334 = vadd.f32 %v2332, %v2333
      %v2335 = vrot.slane %v2334, 1
      %v2336 = vadd.f32 %v2334, %v2335
      %v2337 = vsel %vm838, %v2239, 0.0
      %v2338 = vrot.slane %v2337, 4
      %v2339 = vadd.f32 %v2337, %v2338
      %v2340 = vrot.slane %v2339, 2
      %v2341 = vadd.f32 %v2339, %v2340
      %v2342 = vrot.slane %v2341, 1
      %v2343 = vadd.f32 %v2341, %v2342
      %v2344 = vsel %vm838, %v2240, 0.0
      %v2345 = vrot.slane %v2344, 4
      %v2346 = vadd.f32 %v2344, %v2345
      %v2347 = vrot.slane %v2346, 2
      %v2348 = vadd.f32 %v2346, %v2347
      %v2349 = vrot.slane %v2348, 1
      %v2350 = vadd.f32 %v2348, %v2349
      %v2351 = vsel %vm838, %v2241, 0.0
      %v2352 = vrot.slane %v2351, 4
      %v2353 = vadd.f32 %v2351, %v2352
      %v2354 = vrot.slane %v2353, 2
      %v2355 = vadd.f32 %v2353, %v2354
      %v2356 = vrot.slane %v2355, 1
      %v2357 = vadd.f32 %v2355, %v2356
      %v2358 = vsel %vm838, %v2242, 0.0
      %v2359 = vrot.slane %v2358, 4
      %v2360 = vadd.f32 %v2358, %v2359
      %v2361 = vrot.slane %v2360, 2
      %v2362 = vadd.f32 %v2360, %v2361
      %v2363 = vrot.slane %v2362, 1
      %v2364 = vadd.f32 %v2362, %v2363
      %v2365 = vsel %vm838, %v2243, 0.0
      %v2366 = vrot.slane %v2365, 4
      %v2367 = vadd.f32 %v2365, %v2366
      %v2368 = vrot.slane %v2367, 2
      %v2369 = vadd.f32 %v2367, %v2368
      %v2370 = vrot.slane %v2369, 1
      %v2371 = vadd.f32 %v2369, %v2370
      %v2372 = vsel %vm838, %v2244, 0.0
      %v2373 = vrot.slane %v2372, 4
      %v2374 = vadd.f32 %v2372, %v2373
      %v2375 = vrot.slane %v2374, 2
      %v2376 = vadd.f32 %v2374, %v2375
      %v2377 = vrot.slane %v2376, 1
      %v2378 = vadd.f32 %v2376, %v2377
      %v2379 = vsel %vm838, %v2245, 0.0
      %v2380 = vrot.slane %v2379, 4
      %v2381 = vadd.f32 %v2379, %v2380
      %v2382 = vrot.slane %v2381, 2
      %v2383 = vadd.f32 %v2381, %v2382
      %v2384 = vrot.slane %v2383, 1
      %v2385 = vadd.f32 %v2383, %v2384
      %v2386 = vsel %vm838, %v2246, 0.0
      %v2387 = vrot.slane %v2386, 4
      %v2388 = vadd.f32 %v2386, %v2387
      %v2389 = vrot.slane %v2388, 2
      %v2390 = vadd.f32 %v2388, %v2389
      %v2391 = vrot.slane %v2390, 1
      %v2392 = vadd.f32 %v2390, %v2391
      %v2393 = vsel %vm838, %v2247, 0.0
      %v2394 = vrot.slane %v2393, 4
      %v2395 = vadd.f32 %v2393, %v2394
      %v2396 = vrot.slane %v2395, 2
      %v2397 = vadd.f32 %v2395, %v2396
      %v2398 = vrot.slane %v2397, 1
      %v2399 = vadd.f32 %v2397, %v2398
      %v2400 = vsel %vm838, %v2248, 0.0
      %v2401 = vrot.slane %v2400, 4
      %v2402 = vadd.f32 %v2400, %v2401
      %v2403 = vrot.slane %v2402, 2
      %v2404 = vadd.f32 %v2402, %v2403
      %v2405 = vrot.slane %v2404, 1
      %v2406 = vadd.f32 %v2404, %v2405
      %v2407 = vsel %vm838, %v2249, 0.0
      %v2408 = vrot.slane %v2407, 4
      %v2409 = vadd.f32 %v2407, %v2408
      %v2410 = vrot.slane %v2409, 2
      %v2411 = vadd.f32 %v2409, %v2410
      %v2412 = vrot.slane %v2411, 1
      %v2413 = vadd.f32 %v2411, %v2412
      %v2414 = vsel %vm838, %v2250, 0.0
      %v2415 = vrot.slane %v2414, 4
      %v2416 = vadd.f32 %v2414, %v2415
      %v2417 = vrot.slane %v2416, 2
      %v2418 = vadd.f32 %v2416, %v2417
      %v2419 = vrot.slane %v2418, 1
      %v2420 = vadd.f32 %v2418, %v2419
      %v2421 = vsel %vm838, %v2251, 0.0
      %v2422 = vrot.slane %v2421, 4
      %v2423 = vadd.f32 %v2421, %v2422
      %v2424 = vrot.slane %v2423, 2
      %v2425 = vadd.f32 %v2423, %v2424
      %v2426 = vrot.slane %v2425, 1
      %v2427 = vadd.f32 %v2425, %v2426
      %v2428 = vsel %vm838, %v2252, 0.0
      %v2429 = vrot.slane %v2428, 4
      %v2430 = vadd.f32 %v2428, %v2429
      %v2431 = vrot.slane %v2430, 2
      %v2432 = vadd.f32 %v2430, %v2431
      %v2433 = vrot.slane %v2432, 1
      %v2434 = vadd.f32 %v2432, %v2433
      %v2435 = vsel %vm838, %v2253, 0.0
      %v2436 = vrot.slane %v2435, 4
      %v2437 = vadd.f32 %v2435, %v2436
      %v2438 = vrot.slane %v2437, 2
      %v2439 = vadd.f32 %v2437, %v2438
      %v2440 = vrot.slane %v2439, 1
      %v2441 = vadd.f32 %v2439, %v2440
      %v2442 = vsel %vm838, %v2254, 0.0
      %v2443 = vrot.slane %v2442, 4
      %v2444 = vadd.f32 %v2442, %v2443
      %v2445 = vrot.slane %v2444, 2
      %v2446 = vadd.f32 %v2444, %v2445
      %v2447 = vrot.slane %v2446, 1
      %v2448 = vadd.f32 %v2446, %v2447
      %v2449 = vsel %vm838, %v2255, 0.0
      %v2450 = vrot.slane %v2449, 4
      %v2451 = vadd.f32 %v2449, %v2450
      %v2452 = vrot.slane %v2451, 2
      %v2453 = vadd.f32 %v2451, %v2452
      %v2454 = vrot.slane %v2453, 1
      %v2455 = vadd.f32 %v2453, %v2454
      %v2456 = vsel %vm838, %v2256, 0.0
      %v2457 = vrot.slane %v2456, 4
      %v2458 = vadd.f32 %v2456, %v2457
      %v2459 = vrot.slane %v2458, 2
      %v2460 = vadd.f32 %v2458, %v2459
      %v2461 = vrot.slane %v2460, 1
      %v2462 = vadd.f32 %v2460, %v2461
      %v2463 = vsel %vm838, %v2257, 0.0
      %v2464 = vrot.slane %v2463, 4
      %v2465 = vadd.f32 %v2463, %v2464
      %v2466 = vrot.slane %v2465, 2
      %v2467 = vadd.f32 %v2465, %v2466
      %v2468 = vrot.slane %v2467, 1
      %v2469 = vadd.f32 %v2467, %v2468
      %v2470 = vsel %vm838, %v2258, 0.0
      %v2471 = vrot.slane %v2470, 4
      %v2472 = vadd.f32 %v2470, %v2471
      %v2473 = vrot.slane %v2472, 2
      %v2474 = vadd.f32 %v2472, %v2473
      %v2475 = vrot.slane %v2474, 1
      %v2476 = vadd.f32 %v2474, %v2475
      %v2477 = vsel %vm838, %v2259, 0.0
      %v2478 = vrot.slane %v2477, 4
      %v2479 = vadd.f32 %v2477, %v2478
      %v2480 = vrot.slane %v2479, 2
      %v2481 = vadd.f32 %v2479, %v2480
      %v2482 = vrot.slane %v2481, 1
      %v2483 = vadd.f32 %v2481, %v2482
      %v2484 = vld [vmem:[%s9] sm:$0xff]
      %v2485 = vld [vmem:[%s9 + $0x8] sm:$0xff]
      %v2486 = vld [vmem:[%s9 + $0x10] sm:$0xff]
      %v2487 = vld [vmem:[%s9 + $0x18] sm:$0xff]
      %v2488 = vld [vmem:[%s10] sm:$0x1]
      %v2490 = vlaneseq
      %v2491 = vshrl.u32 %v2490, 7
      %v2492 = vsub.s32 0, %v2491
      %v2493 = vrot.slane %v2488, %v2492
      %vm2527 = vcmask 1041409
      %v2528 = vsel %vm2527, %v2273, %v2266
      %vm2529 = vcmask 1042434
      %v2530 = vsel %vm2529, %v2280, %v2528
      %vm2531 = vcmask 1043459
      %v2532 = vsel %vm2531, %v2287, %v2530
      %vm2533 = vcmask 1044484
      %v2534 = vsel %vm2533, %v2294, %v2532
      %vm2535 = vcmask 1045509
      %v2536 = vsel %vm2535, %v2301, %v2534
      %vm2537 = vcmask 1046534
      %v2538 = vsel %vm2537, %v2308, %v2536
      %vm2539 = vcmask 1047559
      %v2540 = vsel %vm2539, %v2315, %v2538
      %v2541 = vsel %vm2527, %v2329, %v2322
      %v2542 = vsel %vm2529, %v2336, %v2541
      %v2543 = vsel %vm2531, %v2343, %v2542
      %v2544 = vsel %vm2533, %v2350, %v2543
      %v2545 = vsel %vm2535, %v2357, %v2544
      %v2546 = vsel %vm2537, %v2364, %v2545
      %v2547 = vsel %vm2539, %v2371, %v2546
      %v2548 = vsel %vm2527, %v2385, %v2378
      %v2549 = vsel %vm2529, %v2392, %v2548
      %v2550 = vsel %vm2531, %v2399, %v2549
      %v2551 = vsel %vm2533, %v2406, %v2550
      %v2552 = vsel %vm2535, %v2413, %v2551
      %v2553 = vsel %vm2537, %v2420, %v2552
      %v2554 = vsel %vm2539, %v2427, %v2553
      %v2555 = vsel %vm2527, %v2441, %v2434
      %v2556 = vsel %vm2529, %v2448, %v2555
      %v2557 = vsel %vm2531, %v2455, %v2556
      %v2558 = vsel %vm2533, %v2462, %v2557
      %v2559 = vsel %vm2535, %v2469, %v2558
      %v2560 = vsel %vm2537, %v2476, %v2559
      %v2561 = vsel %vm2539, %v2483, %v2560
      %v2562 = vsel %vm838, %v2540, 0
      %v2564 = vsel %vm838, %v2547, 0
      %v2566 = vsel %vm838, %v2554, 0
      %v2568 = vsel %vm838, %v2561, 0
      %2570 = vmatprep.subr.mxu0 0.0
      %2571 = vmatpush1.msra.mxu0 %v2484
      %2572 = vmatprep.subr.mxu0 0.0
      %2573 = vmatpush1.msra.mxu0 %v2485
      %2574 = vmatprep.subr.mxu0 0.0
      %2575 = vmatpush1.msra.mxu0 %v2486
      %2576 = vmatprep.subr.mxu0 0.0
      %2577 = vmatpush1.msra.mxu0 %v2487
      %2578 = vmatprep.subr.mxu0 0.0
      %2579 = vmatpush1.msra.mxu0 0.0
      %2580 = vmatprep.subr.mxu0 0.0
      %2581 = vmatpush1.msra.mxu0 0.0
      %2582 = vmatprep.subr.mxu0 0.0
      %2583 = vmatpush1.msra.mxu0 0.0
      %2584 = vmatprep.subr.mxu0 0.0
      %2585 = vmatpush1.msra.mxu0 0.0
      %2586 = vmatprep.subr.mxu0 0.0
      %2587 = vmatpush1.msra.mxu0 0.0
      %2588 = vmatprep.subr.mxu0 0.0
      %2589 = vmatpush1.msra.mxu0 0.0
      %2590 = vmatprep.subr.mxu0 0.0
      %2591 = vmatpush1.msra.mxu0 0.0
      %2592 = vmatprep.subr.mxu0 0.0
      %2593 = vmatpush1.msra.mxu0 0.0
      %2594 = vmatprep.subr.mxu0 0.0
      %2595 = vmatpush1.msra.mxu0 0.0
      %2596 = vmatprep.subr.mxu0 0.0
      %2597 = vmatpush1.msra.mxu0 0.0
      %2598 = vmatprep.subr.mxu0 0.0
      %2599 = vmatpush1.msra.mxu0 0.0
      %2600 = vmatprep.subr.mxu0 0.0
      %2601 = vmatpush1.msra.mxu0 0.0
      %2602 = vmatprep.subr.mxu0 0.0
      %2603 = vmatpush1.msra.mxu0 0.0
      %2604 = vmatprep.subr.mxu0 0.0
      %2605 = vmatpush1.msra.mxu0 0.0
      %2606 = vmatprep.subr.mxu0 0.0
      %2607 = vmatpush1.msra.mxu0 0.0
      %2608 = vmatprep.subr.mxu0 0.0
      %2609 = vmatpush1.msra.mxu0 0.0
      %2610 = vmatprep.subr.mxu0 0.0
      %2611 = vmatpush1.msra.mxu0 0.0
      %2612 = vmatprep.subr.mxu0 0.0
      %2613 = vmatpush1.msra.mxu0 0.0
      %2614 = vmatprep.subr.mxu0 0.0
      %2615 = vmatpush1.msra.mxu0 0.0
      %2616 = vmatprep.subr.mxu0 0.0
      %2617 = vmatpush1.msra.mxu0 0.0
      %2618 = vmatprep.subr.mxu0 0.0
      %2619 = vmatpush1.msra.mxu0 0.0
      %2620 = vmatprep.subr.mxu0 0.0
      %2621 = vmatpush1.msra.mxu0 0.0
      %2622 = vmatprep.subr.mxu0 0.0
      %2623 = vmatpush1.msra.mxu0 0.0
      %2624 = vmatprep.subr.mxu0 0.0
      %2625 = vmatpush1.msra.mxu0 0.0
      %2626 = vmatprep.subr.mxu0 0.0
      %2627 = vmatpush1.msra.mxu0 0.0
      %2628 = vmatprep.subr.mxu0 0.0
      %2629 = vmatpush1.msra.mxu0 0.0
      %2630 = vmatprep.subr.mxu0 0.0
      %2631 = vmatpush1.msra.mxu0 0.0
      %2632 = vmatprep.subr.mxu0 0.0
      %2633 = vmatpush1.msra.mxu0 0.0
      %2634 = vmatprep.mubr.f32.mxu0 0.0
      %2635 = vmatmul.mubr.f32.gmra.mrb[0].mxu0 %v2562
      %v2636 = vpop.f32.mrb[0].mxu0
      %v2637 = vadd.f32 %v2493, %v2636
      %v2638 = vpop.f32.mrb[0].mxu0
      %2639 = vmatprep.mubr.f32.mxu0 0.0
      %2640 = vmatmul.mubr.f32.gmra.mrb[0].mxu0 %v2564
      %v2641 = vpop.f32.mrb[0].mxu0
      %v2642 = vadd.f32 %v2493, %v2641
      %v2643 = vpop.f32.mrb[0].mxu0
      %2644 = vmatprep.mubr.f32.mxu0 0.0
      %2645 = vmatmul.mubr.f32.gmra.mrb[0].mxu0 %v2566
      %v2646 = vpop.f32.mrb[0].mxu0
      %v2647 = vadd.f32 %v2493, %v2646
      %v2648 = vpop.f32.mrb[0].mxu0
      %2649 = vmatprep.mubr.f32.mxu0 0.0
      %2650 = vmatmul.mubr.f32.gmra.mrb[0].mxu0 %v2568
      %v2651 = vpop.f32.mrb[0].mxu0
      %v2652 = vadd.f32 %v2493, %v2651
      %v2653 = vpop.f32.mrb[0].mxu0
      %2654 = vdwg.mxu0
      %v2655 = vld [vmem:[%s467] sm:$0xff]
      %v2656 = vld [vmem:[%s467 + $0x8] sm:$0xff]
      %v2657 = vld [vmem:[%s467 + $0x10] sm:$0xff]
      %v2658 = vld [vmem:[%s467 + $0x18] sm:$0xff]
      %v2659 = vadd.f32 %v2637, %v2655
      %v2660 = vadd.f32 %v2642, %v2656
      %v2661 = vadd.f32 %v2647, %v2657
      %v2662 = vadd.f32 %v2652, %v2658
      %2663 = vst.msk [vmem:[%s473] sm:$0xff] %vm838, %v2659
      %2664 = vst.msk [vmem:[%s473 + $0x8] sm:$0xff] %vm838, %v2660
      %2665 = vst.msk [vmem:[%s473 + $0x10] sm:$0xff] %vm838, %v2661
      %2666 = vst.msk [vmem:[%s473 + $0x18] sm:$0xff] %vm838, %v2662
      %s2667 = smul.u32 4, %s22
      %p2668 = scmp.lt.s32.totalorder %s2667, 7
      %s2669 = scalar_select %p2668, %s2667, 7
      %s2670 = smul.addr %s2669, 8
      %s2671 = scalar_lea.vmem %s11, %s2670
      // Predicated region
      $region65: #{point_transformer_cls.16} parent=63 // pred_check
        %p2672 = pneg %p296
      $region66: #{point_transformer_cls.16} parent=63 // pred_check_branch
        %2674 = sbr.rel (%p2672) target = $region68
      $region67: #{point_transformer_cls.16} parent=63 // pred_region
        %s2675 = smul.u32 4, %s22
      $region68: #{point_transformer_cls.16} parent=63 // pred_fallthru
        _
    $region64: #{point_transformer_cls.16} parent=5 // pred_fallthru
      _
    %p2676 = scmp.le.s32.totalorder 2, %s17
    // Predicated region
    $region69: #{point_transformer_cls.16} parent=5 // pred_check
      %p2677 = pneg %p2676
    $region70: #{point_transformer_cls.16} parent=5 // pred_check_branch
      %2679 = sbr.rel (%p2677) target = $region72
    $region71: #{point_transformer_cls.16} parent=5 // pred_region
      %s2680 = ssub.s32 %s17, 2
      // Predicated region
      $region73: #{point_transformer_cls.16} parent=71 // pred_check
        %p2681 = pneg %p302
      $region74: #{point_transformer_cls.16} parent=71 // pred_check_branch
        %2683 = sbr.rel (%p2681) target = $region76
      $region75: #{point_transformer_cls.16} parent=71 // pred_region
        %s2684 = smul.u32 4, %s23
        %p2685 = scmp.lt.s32.totalorder %s2684, 7
        %s2686 = scalar_select %p2685, %s2684, 7
        %s2687 = smul.addr %s2686, 8
        %s2688 = scalar_lea.vmem %s11, %s2687
      $region76: #{point_transformer_cls.16} parent=71 // pred_fallthru
        _
    $region72: #{point_transformer_cls.16} parent=5 // pred_fallthru
      _
  $region6: #{point_transformer_cls.16} parent=0 // loop_footer
    %s21 = sadd.s32 1, %s17
  $region7: #{point_transformer_cls.16} parent=0 // loop_footer_branch
    %16 = sbr.rel target = $region3
  $region8: #{point_transformer_cls.16} parent=0 // loop_exit
    _

// kernel: point_transformer_cls.17
$region0: #{point_transformer_cls.17}
  #allocation0 [shape = 'u32[]', space=smem, size = 0x4, offset = 0x4, fixed_abs, tag = 'smem constant byte address 0x4 - core index']
  #allocation1 [shape = 'u32[144,128]{1,0:T(1,128)}', space=vmem, size = 0x12000, scoped, tag = 'internal scratch']
  %s0 = inlined_call_operand.vmem [shape: f32[16,8,35], index: 0, kind: input, shape index: {}]
  %s1 = inlined_call_operand.vmem [shape: f32[35,64], index: 1, kind: input, shape index: {}]
  %s2 = inlined_call_operand.vmem [shape: f32[1,64], index: 2, kind: input, shape index: {}]
  %s3 = inlined_call_operand.vmem [shape: f32[64,64], index: 3, kind: input, shape index: {}]
  %s4 = inlined_call_operand.vmem [shape: f32[1,64], index: 4, kind: input, shape index: {}]
  %s5 = inlined_call_operand.vmem [shape: f32[16,64], index: 5, kind: output, shape index: {}]
  %s6 = sld [smem:[#allocation0]]
  $region53: #{point_transformer_cls.17} parent=0
    _
  %s8 = ssub.s32 1, %s6
  %s9 = scalar_select 0, %s8, %s6
  loop: start=0, step=1, limit=4
  $region2: #{point_transformer_cls.17} parent=0 // loop_pre_header
    _
  $region3: #{point_transformer_cls.17} parent=0 // loop_header
    %s11 = sphi 0, %s15
    %p12 = scmp.ge.s32.totalorder %s11, 4
    %s21 = sphi 0, %s23
    %s24 = sphi 0, %s21
    %s25 = sphi 0, %s24
    %s41 = sphi 0, %s25
    %s45 = sphi 0, %s45
    %s47 = sphi 0, %s45
    %s48 = sphi 0, %s47
    %s62 = sphi 0, %s48
    %s66 = sphi 0, %s66
    %s68 = sphi 0, %s66
    %s69 = sphi 0, %s68
    %s83 = sphi 0, %s69
    %s87 = sphi 0, %s87
    %s89 = sphi 0, %s87
    %s90 = sphi 0, %s89
    %s104 = sphi 0, %s90
    %s108 = sphi 0, %s108
    %s110 = sphi 0, %s108
    %s111 = sphi 0, %s110
    %s125 = sphi 0, %s111
    %s131 = sphi 0, %s133
    %s134 = sphi 0, %s131
    %s135 = sphi 0, %s134
    %s151 = sphi 0, %s135
  $region4: #{point_transformer_cls.17} parent=0 // loop_header_branch
    %14 = sbr.rel (%p12) target = $region8
  $region5: #{point_transformer_cls.17} parent=0 // loop_body
    %s16 = ssub.s32 %s11, 1
    %s17 = ssub.s32 %s11, 2
    %s18 = sadd.s32 %s11, 1
    %s19 = ssub.s32 %s11, %s18
    %p20 = scmp.eq.s32.totalorder %s19, 0
    %s22 = sadd.s32 %s21, 1
    %s23 = scalar_select %p20, %s21, %s22
    %p26 = pneg %p20
    %p27 = scmp.eq.s32.totalorder %s11, 1
    %p28 = por %p26, %p27
    %p29 = scmp.ne.s32.totalorder %s21, %s24
    %p30 = scmp.eq.s32.totalorder %s11, 0
    %p31 = por %p29, %p30
    %p32 = scmp.ne.s32.totalorder %s21, %s24
    %p33 = scmp.eq.s32.totalorder %s16, 1
    %p34 = por %p32, %p33
    %p35 = scmp.ne.s32.totalorder %s24, %s25
    %p36 = scmp.eq.s32.totalorder %s16, 0
    %p37 = por %p35, %p36
    %p38 = scmp.ne.s32.totalorder %s24, %s25
    %p39 = scmp.eq.s32.totalorder %s17, 1
    %p40 = por %p38, %p39
    %p42 = scmp.ne.s32.totalorder %s25, %s41
    %p43 = scmp.eq.s32.totalorder %s17, 0
    %p44 = por %p42, %p43
    %s46 = sadd.s32 %s45, 1
    %p49 = scmp.eq.s32.totalorder %s11, 1
    %p50 = scmp.ne.s32.totalorder %s45, %s47
    %p51 = scmp.eq.s32.totalorder %s11, 0
    %p52 = por %p50, %p51
    %p53 = scmp.ne.s32.totalorder %s45, %s47
    %p54 = scmp.eq.s32.totalorder %s16, 1
    %p55 = por %p53, %p54
    %p56 = scmp.ne.s32.totalorder %s47, %s48
    %p57 = scmp.eq.s32.totalorder %s16, 0
    %p58 = por %p56, %p57
    %p59 = scmp.ne.s32.totalorder %s47, %s48
    %p60 = scmp.eq.s32.totalorder %s17, 1
    %p61 = por %p59, %p60
    %p63 = scmp.ne.s32.totalorder %s48, %s62
    %p64 = scmp.eq.s32.totalorder %s17, 0
    %p65 = por %p63, %p64
    %s67 = sadd.s32 %s66, 1
    %p70 = scmp.eq.s32.totalorder %s11, 1
    %p71 = scmp.ne.s32.totalorder %s66, %s68
    %p72 = scmp.eq.s32.totalorder %s11, 0
    %p73 = por %p71, %p72
    %p74 = scmp.ne.s32.totalorder %s66, %s68
    %p75 = scmp.eq.s32.totalorder %s16, 1
    %p76 = por %p74, %p75
    %p77 = scmp.ne.s32.totalorder %s68, %s69
    %p78 = scmp.eq.s32.totalorder %s16, 0
    %p79 = por %p77, %p78
    %p80 = scmp.ne.s32.totalorder %s68, %s69
    %p81 = scmp.eq.s32.totalorder %s17, 1
    %p82 = por %p80, %p81
    %p84 = scmp.ne.s32.totalorder %s69, %s83
    %p85 = scmp.eq.s32.totalorder %s17, 0
    %p86 = por %p84, %p85
    %s88 = sadd.s32 %s87, 1
    %p91 = scmp.eq.s32.totalorder %s11, 1
    %p92 = scmp.ne.s32.totalorder %s87, %s89
    %p93 = scmp.eq.s32.totalorder %s11, 0
    %p94 = por %p92, %p93
    %p95 = scmp.ne.s32.totalorder %s87, %s89
    %p96 = scmp.eq.s32.totalorder %s16, 1
    %p97 = por %p95, %p96
    %p98 = scmp.ne.s32.totalorder %s89, %s90
    %p99 = scmp.eq.s32.totalorder %s16, 0
    %p100 = por %p98, %p99
    %p101 = scmp.ne.s32.totalorder %s89, %s90
    %p102 = scmp.eq.s32.totalorder %s17, 1
    %p103 = por %p101, %p102
    %p105 = scmp.ne.s32.totalorder %s90, %s104
    %p106 = scmp.eq.s32.totalorder %s17, 0
    %p107 = por %p105, %p106
    %s109 = sadd.s32 %s108, 1
    %p112 = scmp.eq.s32.totalorder %s11, 1
    %p113 = scmp.ne.s32.totalorder %s108, %s110
    %p114 = scmp.eq.s32.totalorder %s11, 0
    %p115 = por %p113, %p114
    %p116 = scmp.ne.s32.totalorder %s108, %s110
    %p117 = scmp.eq.s32.totalorder %s16, 1
    %p118 = por %p116, %p117
    %p119 = scmp.ne.s32.totalorder %s110, %s111
    %p120 = scmp.eq.s32.totalorder %s16, 0
    %p121 = por %p119, %p120
    %p122 = scmp.ne.s32.totalorder %s110, %s111
    %p123 = scmp.eq.s32.totalorder %s17, 1
    %p124 = por %p122, %p123
    %p126 = scmp.ne.s32.totalorder %s111, %s125
    %p127 = scmp.eq.s32.totalorder %s17, 0
    %p128 = por %p126, %p127
    %s129 = ssub.s32 %s11, %s18
    %p130 = scmp.eq.s32.totalorder %s129, 0
    %s132 = sadd.s32 %s131, 1
    %s133 = scalar_select %p130, %s131, %s132
    %p136 = pneg %p130
    %p137 = scmp.eq.s32.totalorder %s11, 1
    %p138 = por %p136, %p137
    %p139 = scmp.ne.s32.totalorder %s131, %s134
    %p140 = scmp.eq.s32.totalorder %s11, 0
    %p141 = por %p139, %p140
    %p142 = scmp.ne.s32.totalorder %s131, %s134
    %p143 = scmp.eq.s32.totalorder %s16, 1
    %p144 = por %p142, %p143
    %p145 = scmp.ne.s32.totalorder %s134, %s135
    %p146 = scmp.eq.s32.totalorder %s16, 0
    %p147 = por %p145, %p146
    %p148 = scmp.ne.s32.totalorder %s134, %s135
    %p149 = scmp.eq.s32.totalorder %s17, 1
    %p150 = por %p148, %p149
    %p152 = scmp.ne.s32.totalorder %s135, %s151
    %p153 = scmp.eq.s32.totalorder %s17, 0
    %p154 = por %p152, %p153
    %p155 = scmp.le.s32.totalorder 1, %s11
    %p156 = scmp.lt.s32.totalorder %s11, 3
    %p157 = pnand %p155, %p156
    %p158 = pneg %p157
    // Predicated region
    $region9: #{point_transformer_cls.17} parent=5 // pred_check
      _
    $region10: #{point_transformer_cls.17} parent=5 // pred_check_branch
      %160 = sbr.rel (%p157) target = $region12
    $region11: #{point_transformer_cls.17} parent=5 // pred_region
      %s161 = ssub.s32 %s11, 1
      // Predicated region
      $region13: #{point_transformer_cls.17} parent=11 // pred_check
        %p162 = pneg %p58
      $region14: #{point_transformer_cls.17} parent=11 // pred_check_branch
        %164 = sbr.rel (%p162) target = $region16
      $region15: #{point_transformer_cls.17} parent=11 // pred_region
        _
      $region16: #{point_transformer_cls.17} parent=11 // pred_fallthru
        _
      // Predicated region
      $region17: #{point_transformer_cls.17} parent=11 // pred_check
        %p165 = pneg %p79
      $region18: #{point_transformer_cls.17} parent=11 // pred_check_branch
        %167 = sbr.rel (%p165) target = $region20
      $region19: #{point_transformer_cls.17} parent=11 // pred_region
        _
      $region20: #{point_transformer_cls.17} parent=11 // pred_fallthru
        _
      // Predicated region
      $region21: #{point_transformer_cls.17} parent=11 // pred_check
        %p168 = pneg %p100
      $region22: #{point_transformer_cls.17} parent=11 // pred_check_branch
        %170 = sbr.rel (%p168) target = $region24
      $region23: #{point_transformer_cls.17} parent=11 // pred_region
        _
      $region24: #{point_transformer_cls.17} parent=11 // pred_fallthru
        _
      // Predicated region
      $region25: #{point_transformer_cls.17} parent=11 // pred_check
        %p171 = pneg %p121
      $region26: #{point_transformer_cls.17} parent=11 // pred_check_branch
        %173 = sbr.rel (%p171) target = $region28
      $region27: #{point_transformer_cls.17} parent=11 // pred_region
        _
      $region28: #{point_transformer_cls.17} parent=11 // pred_fallthru
        _
    $region12: #{point_transformer_cls.17} parent=5 // pred_fallthru
      _
    %p174 = scmp.lt.s32.totalorder %s11, 2
    // Predicated region
    $region29: #{point_transformer_cls.17} parent=5 // pred_check
      %p175 = pneg %p174
    $region30: #{point_transformer_cls.17} parent=5 // pred_check_branch
      %177 = sbr.rel (%p175) target = $region32
    $region31: #{point_transformer_cls.17} parent=5 // pred_region
      // Predicated region
      $region33: #{point_transformer_cls.17} parent=31 // pred_check
        %p178 = pneg %p31
      $region34: #{point_transformer_cls.17} parent=31 // pred_check_branch
        %180 = sbr.rel (%p178) target = $region36
      $region35: #{point_transformer_cls.17} parent=31 // pred_region
        %s181 = smul.u32 8, %s11
        %p182 = scmp.lt.s32.totalorder %s181, 15
        %s183 = scalar_select %p182, %s181, 15
        %s184 = smul.addr %s183, 8
        %s185 = scalar_lea.vmem %s0, %s184
        %s186 = smul.u32 8, %s11
      $region36: #{point_transformer_cls.17} parent=31 // pred_fallthru
        _
    $region32: #{point_transformer_cls.17} parent=5 // pred_fallthru
      _
    %p187 = scmp.le.s32.totalorder 1, %s11
    %p188 = scmp.lt.s32.totalorder %s11, 3
    %p189 = pnand %p187, %p188
    %p190 = pneg %p189
    // Predicated region
    $region37: #{point_transformer_cls.17} parent=5 // pred_check
      _
    $region38: #{point_transformer_cls.17} parent=5 // pred_check_branch
      %192 = sbr.rel (%p189) target = $region40
    $region39: #{point_transformer_cls.17} parent=5 // pred_region
      %s193 = ssub.s32 %s11, 1
      %s194 = smul.u32 8, %s16
      %p195 = scmp.lt.s32.totalorder %s194, 15
      %s196 = scalar_select %p195, %s194, 15
      %s197 = smul.addr %s196, 8
      %s198 = scalar_lea.vmem %s0, %s197
      %p199 = pneg %p37
      %p200 = pneg %p34
      %p201 = pneg %p58
      %p202 = pneg %p55
      %p203 = pneg %p79
      %p204 = pneg %p76
      %p205 = pneg %p100
      %p206 = pneg %p97
      %p207 = pneg %p121
      %p208 = pneg %p118
      %p209 = pneg %p147
      %p210 = pneg %p144
      %p211 = scmp.lt.s32.totalorder %s16, 1
      %s212 = scalar_select %p211, %s16, 1
      %s213 = smul.addr %s212, 8
      %s214 = scalar_lea.vmem %s5, %s213
      %s215 = smul.u32 8, %s16
      %p216 = scmp.lt.s32.totalorder %s215, 15
      %s217 = scalar_select %p216, %s215, 15
      %s218 = smul.addr %s217, 8
      %s219 = scalar_lea.vmem %s0, %s218
      %s220 = smul.u32 8, %s16
      %p221 = scmp.lt.s32.totalorder %s16, 1
      %s222 = scalar_select %p221, %s16, 1
      %s223 = smul.addr %s222, 8
      %s224 = scalar_lea.vmem %s5, %s223
      %v225 = vld [vmem:[%s219] sm:$0xff]
      %v226 = vld [vmem:[%s219 + $0x8] sm:$0xff]
      %v227 = vld [vmem:[%s219 + $0x10] sm:$0xff]
      %v228 = vld [vmem:[%s219 + $0x18] sm:$0xff]
      %v229 = vld [vmem:[%s219 + $0x20] sm:$0xff]
      %v230 = vld [vmem:[%s219 + $0x28] sm:$0xff]
      %v231 = vld [vmem:[%s219 + $0x30] sm:$0xff]
      %v232 = vld [vmem:[%s219 + $0x38] sm:$0xff]
      %v233 = vld [vmem:[%s1] sm:$0xff]
      %v234 = vld [vmem:[%s1 + $0x8] sm:$0xff]
      %v235 = vld [vmem:[%s1 + $0x10] sm:$0xff]
      %v236 = vld [vmem:[%s1 + $0x18] sm:$0xff]
      %v237 = vld [vmem:[%s1 + $0x20] sm:$0x7]
      %v238 = vld [vmem:[%s2] sm:$0x1]
      %v240 = vlaneseq
      %v241 = vshrl.u32 %v240, 7
      %v242 = vsub.s32 0, %v241
      %v243 = vrot.slane %v238, %v242
      %vm245 = vcmask 285696
      %v247 = vsel %vm245, %v225, 0
      %v250 = vsel %vm245, %v226, 0
      %v253 = vsel %vm245, %v227, 0
      %v256 = vsel %vm245, %v228, 0
      %v259 = vsel %vm245, %v229, 0
      %v262 = vsel %vm245, %v230, 0
      %v265 = vsel %vm245, %v231, 0
      %v268 = vsel %vm245, %v232, 0
      %vm270 = vcmask 1042432
      %v272 = vsel %vm270, %v237, 0
      %274 = vmatprep.subr.mxu0 0.0
      %275 = vmatpush1.msra.mxu0 %v233
      %276 = vmatprep.subr.mxu0 0.0
      %277 = vmatpush1.msra.mxu0 %v234
      %278 = vmatprep.subr.mxu0 0.0
      %279 = vmatpush1.msra.mxu0 %v235
      %280 = vmatprep.subr.mxu0 0.0
      %281 = vmatpush1.msra.mxu0 %v236
      %282 = vmatprep.subr.mxu0 0.0
      %283 = vmatpush1.msra.mxu0 %v272
      %284 = vmatprep.subr.mxu0 0.0
      %285 = vmatpush1.msra.mxu0 0.0
      %286 = vmatprep.subr.mxu0 0.0
      %287 = vmatpush1.msra.mxu0 0.0
      %288 = vmatprep.subr.mxu0 0.0
      %289 = vmatpush1.msra.mxu0 0.0
      %290 = vmatprep.subr.mxu0 0.0
      %291 = vmatpush1.msra.mxu0 0.0
      %292 = vmatprep.subr.mxu0 0.0
      %293 = vmatpush1.msra.mxu0 0.0
      %294 = vmatprep.subr.mxu0 0.0
      %295 = vmatpush1.msra.mxu0 0.0
      %296 = vmatprep.subr.mxu0 0.0
      %297 = vmatpush1.msra.mxu0 0.0
      %298 = vmatprep.subr.mxu0 0.0
      %299 = vmatpush1.msra.mxu0 0.0
      %300 = vmatprep.subr.mxu0 0.0
      %301 = vmatpush1.msra.mxu0 0.0
      %302 = vmatprep.subr.mxu0 0.0
      %303 = vmatpush1.msra.mxu0 0.0
      %304 = vmatprep.subr.mxu0 0.0
      %305 = vmatpush1.msra.mxu0 0.0
      %306 = vmatprep.subr.mxu0 0.0
      %307 = vmatpush1.msra.mxu0 0.0
      %308 = vmatprep.subr.mxu0 0.0
      %309 = vmatpush1.msra.mxu0 0.0
      %310 = vmatprep.subr.mxu0 0.0
      %311 = vmatpush1.msra.mxu0 0.0
      %312 = vmatprep.subr.mxu0 0.0
      %313 = vmatpush1.msra.mxu0 0.0
      %314 = vmatprep.subr.mxu0 0.0
      %315 = vmatpush1.msra.mxu0 0.0
      %316 = vmatprep.subr.mxu0 0.0
      %317 = vmatpush1.msra.mxu0 0.0
      %318 = vmatprep.subr.mxu0 0.0
      %319 = vmatpush1.msra.mxu0 0.0
      %320 = vmatprep.subr.mxu0 0.0
      %321 = vmatpush1.msra.mxu0 0.0
      %322 = vmatprep.subr.mxu0 0.0
      %323 = vmatpush1.msra.mxu0 0.0
      %324 = vmatprep.subr.mxu0 0.0
      %325 = vmatpush1.msra.mxu0 0.0
      %326 = vmatprep.subr.mxu0 0.0
      %327 = vmatpush1.msra.mxu0 0.0
      %328 = vmatprep.subr.mxu0 0.0
      %329 = vmatpush1.msra.mxu0 0.0
      %330 = vmatprep.subr.mxu0 0.0
      %331 = vmatpush1.msra.mxu0 0.0
      %332 = vmatprep.subr.mxu0 0.0
      %333 = vmatpush1.msra.mxu0 0.0
      %334 = vmatprep.subr.mxu0 0.0
      %335 = vmatpush1.msra.mxu0 0.0
      %336 = vmatprep.subr.mxu0 0.0
      %337 = vmatpush1.msra.mxu0 0.0
      %338 = vmatprep.mubr.f32.mxu0 0.0
      %339 = vmatmul.mubr.f32.gmra.mrb[0].mxu0 %v247
      %v340 = vpop.f32.mrb[0].mxu0
      %v341 = vadd.f32 %v243, %v340
      %v342 = vpop.f32.mrb[0].mxu0
      %343 = vmatprep.mubr.f32.mxu0 0.0
      %344 = vmatmul.mubr.f32.gmra.mrb[0].mxu0 %v250
      %v345 = vpop.f32.mrb[0].mxu0
      %v346 = vadd.f32 %v243, %v345
      %v347 = vpop.f32.mrb[0].mxu0
      %348 = vmatprep.mubr.f32.mxu0 0.0
      %349 = vmatmul.mubr.f32.gmra.mrb[0].mxu0 %v253
      %v350 = vpop.f32.mrb[0].mxu0
      %v351 = vadd.f32 %v243, %v350
      %v352 = vpop.f32.mrb[0].mxu0
      %353 = vmatprep.mubr.f32.mxu0 0.0
      %354 = vmatmul.mubr.f32.gmra.mrb[0].mxu0 %v256
      %v355 = vpop.f32.mrb[0].mxu0
      %v356 = vadd.f32 %v243, %v355
      %v357 = vpop.f32.mrb[0].mxu0
      %358 = vmatprep.mubr.f32.mxu0 0.0
      %359 = vmatmul.mubr.f32.gmra.mrb[0].mxu0 %v259
      %v360 = vpop.f32.mrb[0].mxu0
      %v361 = vadd.f32 %v243, %v360
      %v362 = vpop.f32.mrb[0].mxu0
      %363 = vmatprep.mubr.f32.mxu0 0.0
      %364 = vmatmul.mubr.f32.gmra.mrb[0].mxu0 %v262
      %v365 = vpop.f32.mrb[0].mxu0
      %v366 = vadd.f32 %v243, %v365
      %v367 = vpop.f32.mrb[0].mxu0
      %368 = vmatprep.mubr.f32.mxu0 0.0
      %369 = vmatmul.mubr.f32.gmra.mrb[0].mxu0 %v265
      %v370 = vpop.f32.mrb[0].mxu0
      %v371 = vadd.f32 %v243, %v370
      %v372 = vpop.f32.mrb[0].mxu0
      %373 = vmatprep.mubr.f32.mxu0 0.0
      %374 = vmatmul.mubr.f32.gmra.mrb[0].mxu0 %v268
      %v375 = vpop.f32.mrb[0].mxu0
      %v376 = vadd.f32 %v243, %v375
      %v377 = vpop.f32.mrb[0].mxu0
      %378 = vdwg.mxu0
      %v379 = vmax.f32 %v341, 0.0
      %v380 = vmax.f32 %v346, 0.0
      %v381 = vmax.f32 %v351, 0.0
      %v382 = vmax.f32 %v356, 0.0
      %v383 = vmax.f32 %v361, 0.0
      %v384 = vmax.f32 %v366, 0.0
      %v385 = vmax.f32 %v371, 0.0
      %v386 = vmax.f32 %v376, 0.0
      %v387 = vld [vmem:[%s3] sm:$0xff]
      %v388 = vld [vmem:[%s3 + $0x8] sm:$0xff]
      %v389 = vld [vmem:[%s3 + $0x10] sm:$0xff]
      %v390 = vld [vmem:[%s3 + $0x18] sm:$0xff]
      %v391 = vld [vmem:[%s3 + $0x20] sm:$0xff]
      %v392 = vld [vmem:[%s3 + $0x28] sm:$0xff]
      %v393 = vld [vmem:[%s3 + $0x30] sm:$0xff]
      %v394 = vld [vmem:[%s3 + $0x38] sm:$0xff]
      %v395 = vld [vmem:[%s4] sm:$0x1]
      %v397 = vlaneseq
      %v398 = vshrl.u32 %v397, 7
      %v399 = vsub.s32 0, %v398
      %v400 = vrot.slane %v395, %v399
      %vm402 = vcmask 523264
      %v404 = vsel %vm402, %v379, 0
      %v407 = vsel %vm402, %v380, 0
      %v410 = vsel %vm402, %v381, 0
      %v413 = vsel %vm402, %v382, 0
      %v416 = vsel %vm402, %v383, 0
      %v419 = vsel %vm402, %v384, 0
      %v422 = vsel %vm402, %v385, 0
      %v425 = vsel %vm402, %v386, 0
      %427 = vmatprep.subr.mxu0 0.0
      %428 = vmatpush1.msra.mxu0 %v387
      %429 = vmatprep.subr.mxu0 0.0
      %430 = vmatpush1.msra.mxu0 %v388
      %431 = vmatprep.subr.mxu0 0.0
      %432 = vmatpush1.msra.mxu0 %v389
      %433 = vmatprep.subr.mxu0 0.0
      %434 = vmatpush1.msra.mxu0 %v390
      %435 = vmatprep.subr.mxu0 0.0
      %436 = vmatpush1.msra.mxu0 %v391
      %437 = vmatprep.subr.mxu0 0.0
      %438 = vmatpush1.msra.mxu0 %v392
      %439 = vmatprep.subr.mxu0 0.0
      %440 = vmatpush1.msra.mxu0 %v393
      %441 = vmatprep.subr.mxu0 0.0
      %442 = vmatpush1.msra.mxu0 %v394
      %443 = vmatprep.subr.mxu0 0.0
      %444 = vmatpush1.msra.mxu0 0.0
      %445 = vmatprep.subr.mxu0 0.0
      %446 = vmatpush1.msra.mxu0 0.0
      %447 = vmatprep.subr.mxu0 0.0
      %448 = vmatpush1.msra.mxu0 0.0
      %449 = vmatprep.subr.mxu0 0.0
      %450 = vmatpush1.msra.mxu0 0.0
      %451 = vmatprep.subr.mxu0 0.0
      %452 = vmatpush1.msra.mxu0 0.0
      %453 = vmatprep.subr.mxu0 0.0
      %454 = vmatpush1.msra.mxu0 0.0
      %455 = vmatprep.subr.mxu0 0.0
      %456 = vmatpush1.msra.mxu0 0.0
      %457 = vmatprep.subr.mxu0 0.0
      %458 = vmatpush1.msra.mxu0 0.0
      %459 = vmatprep.subr.mxu0 0.0
      %460 = vmatpush1.msra.mxu0 0.0
      %461 = vmatprep.subr.mxu0 0.0
      %462 = vmatpush1.msra.mxu0 0.0
      %463 = vmatprep.subr.mxu0 0.0
      %464 = vmatpush1.msra.mxu0 0.0
      %465 = vmatprep.subr.mxu0 0.0
      %466 = vmatpush1.msra.mxu0 0.0
      %467 = vmatprep.subr.mxu0 0.0
      %468 = vmatpush1.msra.mxu0 0.0
      %469 = vmatprep.subr.mxu0 0.0
      %470 = vmatpush1.msra.mxu0 0.0
      %471 = vmatprep.subr.mxu0 0.0
      %472 = vmatpush1.msra.mxu0 0.0
      %473 = vmatprep.subr.mxu0 0.0
      %474 = vmatpush1.msra.mxu0 0.0
      %475 = vmatprep.subr.mxu0 0.0
      %476 = vmatpush1.msra.mxu0 0.0
      %477 = vmatprep.subr.mxu0 0.0
      %478 = vmatpush1.msra.mxu0 0.0
      %479 = vmatprep.subr.mxu0 0.0
      %480 = vmatpush1.msra.mxu0 0.0
      %481 = vmatprep.subr.mxu0 0.0
      %482 = vmatpush1.msra.mxu0 0.0
      %483 = vmatprep.subr.mxu0 0.0
      %484 = vmatpush1.msra.mxu0 0.0
      %485 = vmatprep.subr.mxu0 0.0
      %486 = vmatpush1.msra.mxu0 0.0
      %487 = vmatprep.subr.mxu0 0.0
      %488 = vmatpush1.msra.mxu0 0.0
      %489 = vmatprep.subr.mxu0 0.0
      %490 = vmatpush1.msra.mxu0 0.0
      %491 = vmatprep.mubr.f32.mxu0 0.0
      %492 = vmatmul.mubr.f32.gmra.mrb[0].mxu0 %v404
      %v493 = vpop.f32.mrb[0].mxu0
      %v494 = vadd.f32 %v400, %v493
      %v495 = vpop.f32.mrb[0].mxu0
      %496 = vmatprep.mubr.f32.mxu0 0.0
      %497 = vmatmul.mubr.f32.gmra.mrb[0].mxu0 %v407
      %v498 = vpop.f32.mrb[0].mxu0
      %v499 = vadd.f32 %v400, %v498
      %v500 = vpop.f32.mrb[0].mxu0
      %501 = vmatprep.mubr.f32.mxu0 0.0
      %502 = vmatmul.mubr.f32.gmra.mrb[0].mxu0 %v410
      %v503 = vpop.f32.mrb[0].mxu0
      %v504 = vadd.f32 %v400, %v503
      %v505 = vpop.f32.mrb[0].mxu0
      %506 = vmatprep.mubr.f32.mxu0 0.0
      %507 = vmatmul.mubr.f32.gmra.mrb[0].mxu0 %v413
      %v508 = vpop.f32.mrb[0].mxu0
      %v509 = vadd.f32 %v400, %v508
      %v510 = vpop.f32.mrb[0].mxu0
      %511 = vmatprep.mubr.f32.mxu0 0.0
      %512 = vmatmul.mubr.f32.gmra.mrb[0].mxu0 %v416
      %v513 = vpop.f32.mrb[0].mxu0
      %v514 = vadd.f32 %v400, %v513
      %v515 = vpop.f32.mrb[0].mxu0
      %516 = vmatprep.mubr.f32.mxu0 0.0
      %517 = vmatmul.mubr.f32.gmra.mrb[0].mxu0 %v419
      %v518 = vpop.f32.mrb[0].mxu0
      %v519 = vadd.f32 %v400, %v518
      %v520 = vpop.f32.mrb[0].mxu0
      %521 = vmatprep.mubr.f32.mxu0 0.0
      %522 = vmatmul.mubr.f32.gmra.mrb[0].mxu0 %v422
      %v523 = vpop.f32.mrb[0].mxu0
      %v524 = vadd.f32 %v400, %v523
      %v525 = vpop.f32.mrb[0].mxu0
      %526 = vmatprep.mubr.f32.mxu0 0.0
      %527 = vmatmul.mubr.f32.gmra.mrb[0].mxu0 %v425
      %v528 = vpop.f32.mrb[0].mxu0
      %v529 = vadd.f32 %v400, %v528
      %v530 = vpop.f32.mrb[0].mxu0
      %531 = vdwg.mxu0
      %v532 = vmax.f32 %v494, 0.0
      %v533 = vmax.f32 %v499, 0.0
      %v534 = vmax.f32 %v504, 0.0
      %v535 = vmax.f32 %v509, 0.0
      %v536 = vmax.f32 %v514, 0.0
      %v537 = vmax.f32 %v519, 0.0
      %v538 = vmax.f32 %v524, 0.0
      %v539 = vmax.f32 %v529, 0.0
      %v540 = vsel %vm402, %v532, -inf
      %v541 = vrot.slane %v540, 4
      %v542 = vmax.f32 %v540, %v541
      %v543 = vrot.slane %v542, 2
      %v544 = vmax.f32 %v542, %v543
      %v545 = vrot.slane %v544, 1
      %v546 = vmax.f32 %v544, %v545
      %v547 = vsel %vm402, %v533, -inf
      %v548 = vrot.slane %v547, 4
      %v549 = vmax.f32 %v547, %v548
      %v550 = vrot.slane %v549, 2
      %v551 = vmax.f32 %v549, %v550
      %v552 = vrot.slane %v551, 1
      %v553 = vmax.f32 %v551, %v552
      %v554 = vsel %vm402, %v534, -inf
      %v555 = vrot.slane %v554, 4
      %v556 = vmax.f32 %v554, %v555
      %v557 = vrot.slane %v556, 2
      %v558 = vmax.f32 %v556, %v557
      %v559 = vrot.slane %v558, 1
      %v560 = vmax.f32 %v558, %v559
      %v561 = vsel %vm402, %v535, -inf
      %v562 = vrot.slane %v561, 4
      %v563 = vmax.f32 %v561, %v562
      %v564 = vrot.slane %v563, 2
      %v565 = vmax.f32 %v563, %v564
      %v566 = vrot.slane %v565, 1
      %v567 = vmax.f32 %v565, %v566
      %v568 = vsel %vm402, %v536, -inf
      %v569 = vrot.slane %v568, 4
      %v570 = vmax.f32 %v568, %v569
      %v571 = vrot.slane %v570, 2
      %v572 = vmax.f32 %v570, %v571
      %v573 = vrot.slane %v572, 1
      %v574 = vmax.f32 %v572, %v573
      %v575 = vsel %vm402, %v537, -inf
      %v576 = vrot.slane %v575, 4
      %v577 = vmax.f32 %v575, %v576
      %v578 = vrot.slane %v577, 2
      %v579 = vmax.f32 %v577, %v578
      %v580 = vrot.slane %v579, 1
      %v581 = vmax.f32 %v579, %v580
      %v582 = vsel %vm402, %v538, -inf
      %v583 = vrot.slane %v582, 4
      %v584 = vmax.f32 %v582, %v583
      %v585 = vrot.slane %v584, 2
      %v586 = vmax.f32 %v584, %v585
      %v587 = vrot.slane %v586, 1
      %v588 = vmax.f32 %v586, %v587
      %v589 = vsel %vm402, %v539, -inf
      %v590 = vrot.slane %v589, 4
      %v591 = vmax.f32 %v589, %v590
      %v592 = vrot.slane %v591, 2
      %v593 = vmax.f32 %v591, %v592
      %v594 = vrot.slane %v593, 1
      %v595 = vmax.f32 %v593, %v594
      %vm604 = vcmask 1041409
      %v605 = vsel %vm604, %v553, %v546
      %vm606 = vcmask 1042434
      %v607 = vsel %vm606, %v560, %v605
      %vm608 = vcmask 1043459
      %v609 = vsel %vm608, %v567, %v607
      %vm610 = vcmask 1044484
      %v611 = vsel %vm610, %v574, %v609
      %vm612 = vcmask 1045509
      %v613 = vsel %vm612, %v581, %v611
      %vm614 = vcmask 1046534
      %v615 = vsel %vm614, %v588, %v613
      %vm616 = vcmask 1047559
      %v617 = vsel %vm616, %v595, %v615
      %619 = vst.msk [vmem:[%s224] sm:$0xff] %vm402, %v617
      %p620 = scmp.lt.s32.totalorder %s16, 1
      %s621 = scalar_select %p620, %s16, 1
      %s622 = smul.addr %s621, 8
      %s623 = scalar_lea.vmem %s5, %s622
      // Predicated region
      $region41: #{point_transformer_cls.17} parent=39 // pred_check
        %p624 = pneg %p144
      $region42: #{point_transformer_cls.17} parent=39 // pred_check_branch
        %626 = sbr.rel (%p624) target = $region44
      $region43: #{point_transformer_cls.17} parent=39 // pred_region
        _
      $region44: #{point_transformer_cls.17} parent=39 // pred_fallthru
        _
    $region40: #{point_transformer_cls.17} parent=5 // pred_fallthru
      _
    %p627 = scmp.le.s32.totalorder 2, %s11
    // Predicated region
    $region45: #{point_transformer_cls.17} parent=5 // pred_check
      %p628 = pneg %p627
    $region46: #{point_transformer_cls.17} parent=5 // pred_check_branch
      %630 = sbr.rel (%p628) target = $region48
    $region47: #{point_transformer_cls.17} parent=5 // pred_region
      %s631 = ssub.s32 %s11, 2
      // Predicated region
      $region49: #{point_transformer_cls.17} parent=47 // pred_check
        %p632 = pneg %p150
      $region50: #{point_transformer_cls.17} parent=47 // pred_check_branch
        %634 = sbr.rel (%p632) target = $region52
      $region51: #{point_transformer_cls.17} parent=47 // pred_region
        %p635 = scmp.lt.s32.totalorder %s17, 1
        %s636 = scalar_select %p635, %s17, 1
        %s637 = smul.addr %s636, 8
        %s638 = scalar_lea.vmem %s5, %s637
      $region52: #{point_transformer_cls.17} parent=47 // pred_fallthru
        _
    $region48: #{point_transformer_cls.17} parent=5 // pred_fallthru
      _
  $region6: #{point_transformer_cls.17} parent=0 // loop_footer
    %s15 = sadd.s32 1, %s11
  $region7: #{point_transformer_cls.17} parent=0 // loop_footer_branch
    %10 = sbr.rel target = $region3
  $region8: #{point_transformer_cls.17} parent=0 // loop_exit
    _

// kernel: point_transformer_cls.18
$region0: #{point_transformer_cls.18}
  #allocation0 [shape = 'u32[]', space=smem, size = 0x4, offset = 0x4, fixed_abs, tag = 'smem constant byte address 0x4 - core index']
  #allocation1 [shape = 'u32[144,128]{1,0:T(1,128)}', space=vmem, size = 0x12000, scoped, tag = 'internal scratch']
  %s0 = inlined_call_operand.vmem [shape: f32[16,64], index: 0, kind: input, shape index: {}]
  %s1 = inlined_call_operand.vmem [shape: f32[64,32], index: 1, kind: input, shape index: {}]
  %s2 = inlined_call_operand.vmem [shape: f32[1,32], index: 2, kind: input, shape index: {}]
  %s3 = inlined_call_operand.vmem [shape: f32[32,96], index: 3, kind: input, shape index: {}]
  %s4 = inlined_call_operand.vmem [shape: f32[16,96], index: 4, kind: output, shape index: {}]
  %s5 = sld [smem:[#allocation0]]
  $region49: #{point_transformer_cls.18} parent=0
    _
  %s7 = ssub.s32 1, %s5
  %s8 = scalar_select 0, %s7, %s5
  loop: start=0, step=1, limit=4
  $region2: #{point_transformer_cls.18} parent=0 // loop_pre_header
    _
  $region3: #{point_transformer_cls.18} parent=0 // loop_header
    %s10 = sphi 0, %s14
    %p11 = scmp.ge.s32.totalorder %s10, 4
    %s20 = sphi 0, %s22
    %s23 = sphi 0, %s20
    %s24 = sphi 0, %s23
    %s40 = sphi 0, %s24
    %s44 = sphi 0, %s44
    %s46 = sphi 0, %s44
    %s47 = sphi 0, %s46
    %s61 = sphi 0, %s47
    %s65 = sphi 0, %s65
    %s67 = sphi 0, %s65
    %s68 = sphi 0, %s67
    %s82 = sphi 0, %s68
    %s86 = sphi 0, %s86
    %s88 = sphi 0, %s86
    %s89 = sphi 0, %s88
    %s103 = sphi 0, %s89
    %s109 = sphi 0, %s111
    %s112 = sphi 0, %s109
    %s113 = sphi 0, %s112
    %s129 = sphi 0, %s113
  $region4: #{point_transformer_cls.18} parent=0 // loop_header_branch
    %13 = sbr.rel (%p11) target = $region8
  $region5: #{point_transformer_cls.18} parent=0 // loop_body
    %s15 = ssub.s32 %s10, 1
    %s16 = ssub.s32 %s10, 2
    %s17 = sadd.s32 %s10, 1
    %s18 = ssub.s32 %s10, %s17
    %p19 = scmp.eq.s32.totalorder %s18, 0
    %s21 = sadd.s32 %s20, 1
    %s22 = scalar_select %p19, %s20, %s21
    %p25 = pneg %p19
    %p26 = scmp.eq.s32.totalorder %s10, 1
    %p27 = por %p25, %p26
    %p28 = scmp.ne.s32.totalorder %s20, %s23
    %p29 = scmp.eq.s32.totalorder %s10, 0
    %p30 = por %p28, %p29
    %p31 = scmp.ne.s32.totalorder %s20, %s23
    %p32 = scmp.eq.s32.totalorder %s15, 1
    %p33 = por %p31, %p32
    %p34 = scmp.ne.s32.totalorder %s23, %s24
    %p35 = scmp.eq.s32.totalorder %s15, 0
    %p36 = por %p34, %p35
    %p37 = scmp.ne.s32.totalorder %s23, %s24
    %p38 = scmp.eq.s32.totalorder %s16, 1
    %p39 = por %p37, %p38
    %p41 = scmp.ne.s32.totalorder %s24, %s40
    %p42 = scmp.eq.s32.totalorder %s16, 0
    %p43 = por %p41, %p42
    %s45 = sadd.s32 %s44, 1
    %p48 = scmp.eq.s32.totalorder %s10, 1
    %p49 = scmp.ne.s32.totalorder %s44, %s46
    %p50 = scmp.eq.s32.totalorder %s10, 0
    %p51 = por %p49, %p50
    %p52 = scmp.ne.s32.totalorder %s44, %s46
    %p53 = scmp.eq.s32.totalorder %s15, 1
    %p54 = por %p52, %p53
    %p55 = scmp.ne.s32.totalorder %s46, %s47
    %p56 = scmp.eq.s32.totalorder %s15, 0
    %p57 = por %p55, %p56
    %p58 = scmp.ne.s32.totalorder %s46, %s47
    %p59 = scmp.eq.s32.totalorder %s16, 1
    %p60 = por %p58, %p59
    %p62 = scmp.ne.s32.totalorder %s47, %s61
    %p63 = scmp.eq.s32.totalorder %s16, 0
    %p64 = por %p62, %p63
    %s66 = sadd.s32 %s65, 1
    %p69 = scmp.eq.s32.totalorder %s10, 1
    %p70 = scmp.ne.s32.totalorder %s65, %s67
    %p71 = scmp.eq.s32.totalorder %s10, 0
    %p72 = por %p70, %p71
    %p73 = scmp.ne.s32.totalorder %s65, %s67
    %p74 = scmp.eq.s32.totalorder %s15, 1
    %p75 = por %p73, %p74
    %p76 = scmp.ne.s32.totalorder %s67, %s68
    %p77 = scmp.eq.s32.totalorder %s15, 0
    %p78 = por %p76, %p77
    %p79 = scmp.ne.s32.totalorder %s67, %s68
    %p80 = scmp.eq.s32.totalorder %s16, 1
    %p81 = por %p79, %p80
    %p83 = scmp.ne.s32.totalorder %s68, %s82
    %p84 = scmp.eq.s32.totalorder %s16, 0
    %p85 = por %p83, %p84
    %s87 = sadd.s32 %s86, 1
    %p90 = scmp.eq.s32.totalorder %s10, 1
    %p91 = scmp.ne.s32.totalorder %s86, %s88
    %p92 = scmp.eq.s32.totalorder %s10, 0
    %p93 = por %p91, %p92
    %p94 = scmp.ne.s32.totalorder %s86, %s88
    %p95 = scmp.eq.s32.totalorder %s15, 1
    %p96 = por %p94, %p95
    %p97 = scmp.ne.s32.totalorder %s88, %s89
    %p98 = scmp.eq.s32.totalorder %s15, 0
    %p99 = por %p97, %p98
    %p100 = scmp.ne.s32.totalorder %s88, %s89
    %p101 = scmp.eq.s32.totalorder %s16, 1
    %p102 = por %p100, %p101
    %p104 = scmp.ne.s32.totalorder %s89, %s103
    %p105 = scmp.eq.s32.totalorder %s16, 0
    %p106 = por %p104, %p105
    %s107 = ssub.s32 %s10, %s17
    %p108 = scmp.eq.s32.totalorder %s107, 0
    %s110 = sadd.s32 %s109, 1
    %s111 = scalar_select %p108, %s109, %s110
    %p114 = pneg %p108
    %p115 = scmp.eq.s32.totalorder %s10, 1
    %p116 = por %p114, %p115
    %p117 = scmp.ne.s32.totalorder %s109, %s112
    %p118 = scmp.eq.s32.totalorder %s10, 0
    %p119 = por %p117, %p118
    %p120 = scmp.ne.s32.totalorder %s109, %s112
    %p121 = scmp.eq.s32.totalorder %s15, 1
    %p122 = por %p120, %p121
    %p123 = scmp.ne.s32.totalorder %s112, %s113
    %p124 = scmp.eq.s32.totalorder %s15, 0
    %p125 = por %p123, %p124
    %p126 = scmp.ne.s32.totalorder %s112, %s113
    %p127 = scmp.eq.s32.totalorder %s16, 1
    %p128 = por %p126, %p127
    %p130 = scmp.ne.s32.totalorder %s113, %s129
    %p131 = scmp.eq.s32.totalorder %s16, 0
    %p132 = por %p130, %p131
    %p133 = scmp.le.s32.totalorder 1, %s10
    %p134 = scmp.lt.s32.totalorder %s10, 3
    %p135 = pnand %p133, %p134
    %p136 = pneg %p135
    // Predicated region
    $region9: #{point_transformer_cls.18} parent=5 // pred_check
      _
    $region10: #{point_transformer_cls.18} parent=5 // pred_check_branch
      %138 = sbr.rel (%p135) target = $region12
    $region11: #{point_transformer_cls.18} parent=5 // pred_region
      %s139 = ssub.s32 %s10, 1
      // Predicated region
      $region13: #{point_transformer_cls.18} parent=11 // pred_check
        %p140 = pneg %p57
      $region14: #{point_transformer_cls.18} parent=11 // pred_check_branch
        %142 = sbr.rel (%p140) target = $region16
      $region15: #{point_transformer_cls.18} parent=11 // pred_region
        _
      $region16: #{point_transformer_cls.18} parent=11 // pred_fallthru
        _
      // Predicated region
      $region17: #{point_transformer_cls.18} parent=11 // pred_check
        %p143 = pneg %p78
      $region18: #{point_transformer_cls.18} parent=11 // pred_check_branch
        %145 = sbr.rel (%p143) target = $region20
      $region19: #{point_transformer_cls.18} parent=11 // pred_region
        _
      $region20: #{point_transformer_cls.18} parent=11 // pred_fallthru
        _
      // Predicated region
      $region21: #{point_transformer_cls.18} parent=11 // pred_check
        %p146 = pneg %p99
      $region22: #{point_transformer_cls.18} parent=11 // pred_check_branch
        %148 = sbr.rel (%p146) target = $region24
      $region23: #{point_transformer_cls.18} parent=11 // pred_region
        _
      $region24: #{point_transformer_cls.18} parent=11 // pred_fallthru
        _
    $region12: #{point_transformer_cls.18} parent=5 // pred_fallthru
      _
    %p149 = scmp.lt.s32.totalorder %s10, 2
    // Predicated region
    $region25: #{point_transformer_cls.18} parent=5 // pred_check
      %p150 = pneg %p149
    $region26: #{point_transformer_cls.18} parent=5 // pred_check_branch
      %152 = sbr.rel (%p150) target = $region28
    $region27: #{point_transformer_cls.18} parent=5 // pred_region
      // Predicated region
      $region29: #{point_transformer_cls.18} parent=27 // pred_check
        %p153 = pneg %p30
      $region30: #{point_transformer_cls.18} parent=27 // pred_check_branch
        %155 = sbr.rel (%p153) target = $region32
      $region31: #{point_transformer_cls.18} parent=27 // pred_region
        %p156 = scmp.lt.s32.totalorder %s10, 1
        %s157 = scalar_select %p156, %s10, 1
        %s158 = smul.addr %s157, 8
        %s159 = scalar_lea.vmem %s0, %s158
      $region32: #{point_transformer_cls.18} parent=27 // pred_fallthru
        _
    $region28: #{point_transformer_cls.18} parent=5 // pred_fallthru
      _
    %p160 = scmp.le.s32.totalorder 1, %s10
    %p161 = scmp.lt.s32.totalorder %s10, 3
    %p162 = pnand %p160, %p161
    %p163 = pneg %p162
    // Predicated region
    $region33: #{point_transformer_cls.18} parent=5 // pred_check
      _
    $region34: #{point_transformer_cls.18} parent=5 // pred_check_branch
      %165 = sbr.rel (%p162) target = $region36
    $region35: #{point_transformer_cls.18} parent=5 // pred_region
      %s166 = ssub.s32 %s10, 1
      %p167 = scmp.lt.s32.totalorder %s15, 1
      %s168 = scalar_select %p167, %s15, 1
      %s169 = smul.addr %s168, 8
      %s170 = scalar_lea.vmem %s0, %s169
      %p171 = pneg %p36
      %p172 = pneg %p33
      %p173 = pneg %p57
      %p174 = pneg %p54
      %p175 = pneg %p78
      %p176 = pneg %p75
      %p177 = pneg %p99
      %p178 = pneg %p96
      %p179 = pneg %p125
      %p180 = pneg %p122
      %p181 = scmp.lt.s32.totalorder %s15, 1
      %s182 = scalar_select %p181, %s15, 1
      %s183 = smul.addr %s182, 8
      %s184 = scalar_lea.vmem %s4, %s183
      %p185 = scmp.lt.s32.totalorder %s15, 1
      %s186 = scalar_select %p185, %s15, 1
      %s187 = smul.addr %s186, 8
      %s188 = scalar_lea.vmem %s0, %s187
      %p189 = scmp.lt.s32.totalorder %s15, 1
      %s190 = scalar_select %p189, %s15, 1
      %s191 = smul.addr %s190, 8
      %s192 = scalar_lea.vmem %s4, %s191
      %v193 = vld [vmem:[%s188] sm:$0xff]
      %v194 = vld [vmem:[%s1] sm:$0xff]
      %v195 = vld [vmem:[%s1 + $0x8] sm:$0xff]
      %v196 = vld [vmem:[%s1 + $0x10] sm:$0xff]
      %v197 = vld [vmem:[%s1 + $0x18] sm:$0xff]
      %v198 = vld [vmem:[%s1 + $0x20] sm:$0xff]
      %v199 = vld [vmem:[%s1 + $0x28] sm:$0xff]
      %v200 = vld [vmem:[%s1 + $0x30] sm:$0xff]
      %v201 = vld [vmem:[%s1 + $0x38] sm:$0xff]
      %v202 = vld [vmem:[%s2] sm:$0x1]
      %v204 = vlaneseq
      %v205 = vshrl.u32 %v204, 7
      %v206 = vsub.s32 0, %v205
      %v207 = vrot.slane %v202, %v206
      %vm209 = vcmask 523264
      %v211 = vsel %vm209, %v193, 0
      %213 = vmatprep.subr.mxu0 0.0
      %214 = vmatpush1.msra.mxu0 %v194
      %215 = vmatprep.subr.mxu0 0.0
      %216 = vmatpush1.msra.mxu0 %v195
      %217 = vmatprep.subr.mxu0 0.0
      %218 = vmatpush1.msra.mxu0 %v196
      %219 = vmatprep.subr.mxu0 0.0
      %220 = vmatpush1.msra.mxu0 %v197
      %221 = vmatprep.subr.mxu0 0.0
      %222 = vmatpush1.msra.mxu0 %v198
      %223 = vmatprep.subr.mxu0 0.0
      %224 = vmatpush1.msra.mxu0 %v199
      %225 = vmatprep.subr.mxu0 0.0
      %226 = vmatpush1.msra.mxu0 %v200
      %227 = vmatprep.subr.mxu0 0.0
      %228 = vmatpush1.msra.mxu0 %v201
      %229 = vmatprep.subr.mxu0 0.0
      %230 = vmatpush1.msra.mxu0 0.0
      %231 = vmatprep.subr.mxu0 0.0
      %232 = vmatpush1.msra.mxu0 0.0
      %233 = vmatprep.subr.mxu0 0.0
      %234 = vmatpush1.msra.mxu0 0.0
      %235 = vmatprep.subr.mxu0 0.0
      %236 = vmatpush1.msra.mxu0 0.0
      %237 = vmatprep.subr.mxu0 0.0
      %238 = vmatpush1.msra.mxu0 0.0
      %239 = vmatprep.subr.mxu0 0.0
      %240 = vmatpush1.msra.mxu0 0.0
      %241 = vmatprep.subr.mxu0 0.0
      %242 = vmatpush1.msra.mxu0 0.0
      %243 = vmatprep.subr.mxu0 0.0
      %244 = vmatpush1.msra.mxu0 0.0
      %245 = vmatprep.subr.mxu0 0.0
      %246 = vmatpush1.msra.mxu0 0.0
      %247 = vmatprep.subr.mxu0 0.0
      %248 = vmatpush1.msra.mxu0 0.0
      %249 = vmatprep.subr.mxu0 0.0
      %250 = vmatpush1.msra.mxu0 0.0
      %251 = vmatprep.subr.mxu0 0.0
      %252 = vmatpush1.msra.mxu0 0.0
      %253 = vmatprep.subr.mxu0 0.0
      %254 = vmatpush1.msra.mxu0 0.0
      %255 = vmatprep.subr.mxu0 0.0
      %256 = vmatpush1.msra.mxu0 0.0
      %257 = vmatprep.subr.mxu0 0.0
      %258 = vmatpush1.msra.mxu0 0.0
      %259 = vmatprep.subr.mxu0 0.0
      %260 = vmatpush1.msra.mxu0 0.0
      %261 = vmatprep.subr.mxu0 0.0
      %262 = vmatpush1.msra.mxu0 0.0
      %263 = vmatprep.subr.mxu0 0.0
      %264 = vmatpush1.msra.mxu0 0.0
      %265 = vmatprep.subr.mxu0 0.0
      %266 = vmatpush1.msra.mxu0 0.0
      %267 = vmatprep.subr.mxu0 0.0
      %268 = vmatpush1.msra.mxu0 0.0
      %269 = vmatprep.subr.mxu0 0.0
      %270 = vmatpush1.msra.mxu0 0.0
      %271 = vmatprep.subr.mxu0 0.0
      %272 = vmatpush1.msra.mxu0 0.0
      %273 = vmatprep.subr.mxu0 0.0
      %274 = vmatpush1.msra.mxu0 0.0
      %275 = vmatprep.subr.mxu0 0.0
      %276 = vmatpush1.msra.mxu0 0.0
      %277 = vmatprep.mubr.f32.mxu0 0.0
      %278 = vmatmul.mubr.f32.gmra.mrb[0].mxu0 %v211
      %v279 = vpop.f32.mrb[0].mxu0
      %v280 = vadd.f32 %v207, %v279
      %v281 = vpop.f32.mrb[0].mxu0
      %282 = vdwg.mxu0
      %v283 = vld [vmem:[%s3] sm:$0xff]
      %v284 = vld [vmem:[%s3 + $0x8] sm:$0xff]
      %v285 = vld [vmem:[%s3 + $0x10] sm:$0xff]
      %v286 = vld [vmem:[%s3 + $0x18] sm:$0xff]
      %vm287 = vcmask 261120
      %v289 = vsel %vm287, %v280, 0
      %291 = vmatprep.subr.mxu0 0.0
      %292 = vmatpush1.msra.mxu0 %v283
      %293 = vmatprep.subr.mxu0 0.0
      %294 = vmatpush1.msra.mxu0 %v284
      %295 = vmatprep.subr.mxu0 0.0
      %296 = vmatpush1.msra.mxu0 %v285
      %297 = vmatprep.subr.mxu0 0.0
      %298 = vmatpush1.msra.mxu0 %v286
      %299 = vmatprep.subr.mxu0 0.0
      %300 = vmatpush1.msra.mxu0 0.0
      %301 = vmatprep.subr.mxu0 0.0
      %302 = vmatpush1.msra.mxu0 0.0
      %303 = vmatprep.subr.mxu0 0.0
      %304 = vmatpush1.msra.mxu0 0.0
      %305 = vmatprep.subr.mxu0 0.0
      %306 = vmatpush1.msra.mxu0 0.0
      %307 = vmatprep.subr.mxu0 0.0
      %308 = vmatpush1.msra.mxu0 0.0
      %309 = vmatprep.subr.mxu0 0.0
      %310 = vmatpush1.msra.mxu0 0.0
      %311 = vmatprep.subr.mxu0 0.0
      %312 = vmatpush1.msra.mxu0 0.0
      %313 = vmatprep.subr.mxu0 0.0
      %314 = vmatpush1.msra.mxu0 0.0
      %315 = vmatprep.subr.mxu0 0.0
      %316 = vmatpush1.msra.mxu0 0.0
      %317 = vmatprep.subr.mxu0 0.0
      %318 = vmatpush1.msra.mxu0 0.0
      %319 = vmatprep.subr.mxu0 0.0
      %320 = vmatpush1.msra.mxu0 0.0
      %321 = vmatprep.subr.mxu0 0.0
      %322 = vmatpush1.msra.mxu0 0.0
      %323 = vmatprep.subr.mxu0 0.0
      %324 = vmatpush1.msra.mxu0 0.0
      %325 = vmatprep.subr.mxu0 0.0
      %326 = vmatpush1.msra.mxu0 0.0
      %327 = vmatprep.subr.mxu0 0.0
      %328 = vmatpush1.msra.mxu0 0.0
      %329 = vmatprep.subr.mxu0 0.0
      %330 = vmatpush1.msra.mxu0 0.0
      %331 = vmatprep.subr.mxu0 0.0
      %332 = vmatpush1.msra.mxu0 0.0
      %333 = vmatprep.subr.mxu0 0.0
      %334 = vmatpush1.msra.mxu0 0.0
      %335 = vmatprep.subr.mxu0 0.0
      %336 = vmatpush1.msra.mxu0 0.0
      %337 = vmatprep.subr.mxu0 0.0
      %338 = vmatpush1.msra.mxu0 0.0
      %339 = vmatprep.subr.mxu0 0.0
      %340 = vmatpush1.msra.mxu0 0.0
      %341 = vmatprep.subr.mxu0 0.0
      %342 = vmatpush1.msra.mxu0 0.0
      %343 = vmatprep.subr.mxu0 0.0
      %344 = vmatpush1.msra.mxu0 0.0
      %345 = vmatprep.subr.mxu0 0.0
      %346 = vmatpush1.msra.mxu0 0.0
      %347 = vmatprep.subr.mxu0 0.0
      %348 = vmatpush1.msra.mxu0 0.0
      %349 = vmatprep.subr.mxu0 0.0
      %350 = vmatpush1.msra.mxu0 0.0
      %351 = vmatprep.subr.mxu0 0.0
      %352 = vmatpush1.msra.mxu0 0.0
      %353 = vmatprep.subr.mxu0 0.0
      %354 = vmatpush1.msra.mxu0 0.0
      %355 = vmatprep.mubr.f32.mxu0 0.0
      %356 = vmatmul.mubr.f32.gmra.mrb[0].mxu0 %v289
      %v357 = vpop.f32.mrb[0].mxu0
      %v358 = vadd.f32 0.0, %v357
      %v359 = vpop.f32.mrb[0].mxu0
      %360 = vdwg.mxu0
      %vm361 = vcmask 785408
      %362 = vst.msk [vmem:[%s192] sm:$0xff] %vm361, %v358
      %p363 = scmp.lt.s32.totalorder %s15, 1
      %s364 = scalar_select %p363, %s15, 1
      %s365 = smul.addr %s364, 8
      %s366 = scalar_lea.vmem %s4, %s365
      // Predicated region
      $region37: #{point_transformer_cls.18} parent=35 // pred_check
        %p367 = pneg %p122
      $region38: #{point_transformer_cls.18} parent=35 // pred_check_branch
        %369 = sbr.rel (%p367) target = $region40
      $region39: #{point_transformer_cls.18} parent=35 // pred_region
        _
      $region40: #{point_transformer_cls.18} parent=35 // pred_fallthru
        _
    $region36: #{point_transformer_cls.18} parent=5 // pred_fallthru
      _
    %p370 = scmp.le.s32.totalorder 2, %s10
    // Predicated region
    $region41: #{point_transformer_cls.18} parent=5 // pred_check
      %p371 = pneg %p370
    $region42: #{point_transformer_cls.18} parent=5 // pred_check_branch
      %373 = sbr.rel (%p371) target = $region44
    $region43: #{point_transformer_cls.18} parent=5 // pred_region
      %s374 = ssub.s32 %s10, 2
      // Predicated region
      $region45: #{point_transformer_cls.18} parent=43 // pred_check
        %p375 = pneg %p128
      $region46: #{point_transformer_cls.18} parent=43 // pred_check_branch
        %377 = sbr.rel (%p375) target = $region48
      $region47: #{point_transformer_cls.18} parent=43 // pred_region
        %p378 = scmp.lt.s32.totalorder %s16, 1
        %s379 = scalar_select %p378, %s16, 1
        %s380 = smul.addr %s379, 8
        %s381 = scalar_lea.vmem %s4, %s380
      $region48: #{point_transformer_cls.18} parent=43 // pred_fallthru
        _
    $region44: #{point_transformer_cls.18} parent=5 // pred_fallthru
      _
  $region6: #{point_transformer_cls.18} parent=0 // loop_footer
    %s14 = sadd.s32 1, %s10
  $region7: #{point_transformer_cls.18} parent=0 // loop_footer_branch
    %9 = sbr.rel target = $region3
  $region8: #{point_transformer_cls.18} parent=0 // loop_exit
    _

// kernel: point_transformer_cls.19
$region0: #{point_transformer_cls.19}
  #allocation0 [shape = 'u32[]', space=smem, size = 0x4, offset = 0x4, fixed_abs, tag = 'smem constant byte address 0x4 - core index']
  #allocation1 [shape = 'u32[144,128]{1,0:T(1,128)}', space=vmem, size = 0x12000, scoped, tag = 'internal scratch']
  %s0 = inlined_call_operand.vmem [shape: f32[128,3], index: 0, kind: input, shape index: {}]
  %s1 = inlined_call_operand.vmem [shape: f32[3,32], index: 1, kind: input, shape index: {}]
  %s2 = inlined_call_operand.vmem [shape: f32[1,32], index: 2, kind: input, shape index: {}]
  %s3 = inlined_call_operand.vmem [shape: f32[32,32], index: 3, kind: input, shape index: {}]
  %s4 = inlined_call_operand.vmem [shape: f32[1,32], index: 4, kind: input, shape index: {}]
  %s5 = inlined_call_operand.vmem [shape: f32[128,32], index: 5, kind: output, shape index: {}]
  %s6 = sld [smem:[#allocation0]]
  $region53: #{point_transformer_cls.19} parent=0
    _
  %s8 = ssub.s32 1, %s6
  %s9 = scalar_select 0, %s8, %s6
  loop: start=0, step=1, limit=4
  $region2: #{point_transformer_cls.19} parent=0 // loop_pre_header
    _
  $region3: #{point_transformer_cls.19} parent=0 // loop_header
    %s11 = sphi 0, %s15
    %p12 = scmp.ge.s32.totalorder %s11, 4
    %s21 = sphi 0, %s23
    %s24 = sphi 0, %s21
    %s25 = sphi 0, %s24
    %s41 = sphi 0, %s25
    %s45 = sphi 0, %s45
    %s47 = sphi 0, %s45
    %s48 = sphi 0, %s47
    %s62 = sphi 0, %s48
    %s66 = sphi 0, %s66
    %s68 = sphi 0, %s66
    %s69 = sphi 0, %s68
    %s83 = sphi 0, %s69
    %s87 = sphi 0, %s87
    %s89 = sphi 0, %s87
    %s90 = sphi 0, %s89
    %s104 = sphi 0, %s90
    %s108 = sphi 0, %s108
    %s110 = sphi 0, %s108
    %s111 = sphi 0, %s110
    %s125 = sphi 0, %s111
    %s131 = sphi 0, %s133
    %s134 = sphi 0, %s131
    %s135 = sphi 0, %s134
    %s151 = sphi 0, %s135
  $region4: #{point_transformer_cls.19} parent=0 // loop_header_branch
    %14 = sbr.rel (%p12) target = $region8
  $region5: #{point_transformer_cls.19} parent=0 // loop_body
    %s16 = ssub.s32 %s11, 1
    %s17 = ssub.s32 %s11, 2
    %s18 = sadd.s32 %s11, 1
    %s19 = ssub.s32 %s11, %s18
    %p20 = scmp.eq.s32.totalorder %s19, 0
    %s22 = sadd.s32 %s21, 1
    %s23 = scalar_select %p20, %s21, %s22
    %p26 = pneg %p20
    %p27 = scmp.eq.s32.totalorder %s11, 1
    %p28 = por %p26, %p27
    %p29 = scmp.ne.s32.totalorder %s21, %s24
    %p30 = scmp.eq.s32.totalorder %s11, 0
    %p31 = por %p29, %p30
    %p32 = scmp.ne.s32.totalorder %s21, %s24
    %p33 = scmp.eq.s32.totalorder %s16, 1
    %p34 = por %p32, %p33
    %p35 = scmp.ne.s32.totalorder %s24, %s25
    %p36 = scmp.eq.s32.totalorder %s16, 0
    %p37 = por %p35, %p36
    %p38 = scmp.ne.s32.totalorder %s24, %s25
    %p39 = scmp.eq.s32.totalorder %s17, 1
    %p40 = por %p38, %p39
    %p42 = scmp.ne.s32.totalorder %s25, %s41
    %p43 = scmp.eq.s32.totalorder %s17, 0
    %p44 = por %p42, %p43
    %s46 = sadd.s32 %s45, 1
    %p49 = scmp.eq.s32.totalorder %s11, 1
    %p50 = scmp.ne.s32.totalorder %s45, %s47
    %p51 = scmp.eq.s32.totalorder %s11, 0
    %p52 = por %p50, %p51
    %p53 = scmp.ne.s32.totalorder %s45, %s47
    %p54 = scmp.eq.s32.totalorder %s16, 1
    %p55 = por %p53, %p54
    %p56 = scmp.ne.s32.totalorder %s47, %s48
    %p57 = scmp.eq.s32.totalorder %s16, 0
    %p58 = por %p56, %p57
    %p59 = scmp.ne.s32.totalorder %s47, %s48
    %p60 = scmp.eq.s32.totalorder %s17, 1
    %p61 = por %p59, %p60
    %p63 = scmp.ne.s32.totalorder %s48, %s62
    %p64 = scmp.eq.s32.totalorder %s17, 0
    %p65 = por %p63, %p64
    %s67 = sadd.s32 %s66, 1
    %p70 = scmp.eq.s32.totalorder %s11, 1
    %p71 = scmp.ne.s32.totalorder %s66, %s68
    %p72 = scmp.eq.s32.totalorder %s11, 0
    %p73 = por %p71, %p72
    %p74 = scmp.ne.s32.totalorder %s66, %s68
    %p75 = scmp.eq.s32.totalorder %s16, 1
    %p76 = por %p74, %p75
    %p77 = scmp.ne.s32.totalorder %s68, %s69
    %p78 = scmp.eq.s32.totalorder %s16, 0
    %p79 = por %p77, %p78
    %p80 = scmp.ne.s32.totalorder %s68, %s69
    %p81 = scmp.eq.s32.totalorder %s17, 1
    %p82 = por %p80, %p81
    %p84 = scmp.ne.s32.totalorder %s69, %s83
    %p85 = scmp.eq.s32.totalorder %s17, 0
    %p86 = por %p84, %p85
    %s88 = sadd.s32 %s87, 1
    %p91 = scmp.eq.s32.totalorder %s11, 1
    %p92 = scmp.ne.s32.totalorder %s87, %s89
    %p93 = scmp.eq.s32.totalorder %s11, 0
    %p94 = por %p92, %p93
    %p95 = scmp.ne.s32.totalorder %s87, %s89
    %p96 = scmp.eq.s32.totalorder %s16, 1
    %p97 = por %p95, %p96
    %p98 = scmp.ne.s32.totalorder %s89, %s90
    %p99 = scmp.eq.s32.totalorder %s16, 0
    %p100 = por %p98, %p99
    %p101 = scmp.ne.s32.totalorder %s89, %s90
    %p102 = scmp.eq.s32.totalorder %s17, 1
    %p103 = por %p101, %p102
    %p105 = scmp.ne.s32.totalorder %s90, %s104
    %p106 = scmp.eq.s32.totalorder %s17, 0
    %p107 = por %p105, %p106
    %s109 = sadd.s32 %s108, 1
    %p112 = scmp.eq.s32.totalorder %s11, 1
    %p113 = scmp.ne.s32.totalorder %s108, %s110
    %p114 = scmp.eq.s32.totalorder %s11, 0
    %p115 = por %p113, %p114
    %p116 = scmp.ne.s32.totalorder %s108, %s110
    %p117 = scmp.eq.s32.totalorder %s16, 1
    %p118 = por %p116, %p117
    %p119 = scmp.ne.s32.totalorder %s110, %s111
    %p120 = scmp.eq.s32.totalorder %s16, 0
    %p121 = por %p119, %p120
    %p122 = scmp.ne.s32.totalorder %s110, %s111
    %p123 = scmp.eq.s32.totalorder %s17, 1
    %p124 = por %p122, %p123
    %p126 = scmp.ne.s32.totalorder %s111, %s125
    %p127 = scmp.eq.s32.totalorder %s17, 0
    %p128 = por %p126, %p127
    %s129 = ssub.s32 %s11, %s18
    %p130 = scmp.eq.s32.totalorder %s129, 0
    %s132 = sadd.s32 %s131, 1
    %s133 = scalar_select %p130, %s131, %s132
    %p136 = pneg %p130
    %p137 = scmp.eq.s32.totalorder %s11, 1
    %p138 = por %p136, %p137
    %p139 = scmp.ne.s32.totalorder %s131, %s134
    %p140 = scmp.eq.s32.totalorder %s11, 0
    %p141 = por %p139, %p140
    %p142 = scmp.ne.s32.totalorder %s131, %s134
    %p143 = scmp.eq.s32.totalorder %s16, 1
    %p144 = por %p142, %p143
    %p145 = scmp.ne.s32.totalorder %s134, %s135
    %p146 = scmp.eq.s32.totalorder %s16, 0
    %p147 = por %p145, %p146
    %p148 = scmp.ne.s32.totalorder %s134, %s135
    %p149 = scmp.eq.s32.totalorder %s17, 1
    %p150 = por %p148, %p149
    %p152 = scmp.ne.s32.totalorder %s135, %s151
    %p153 = scmp.eq.s32.totalorder %s17, 0
    %p154 = por %p152, %p153
    %p155 = scmp.le.s32.totalorder 1, %s11
    %p156 = scmp.lt.s32.totalorder %s11, 3
    %p157 = pnand %p155, %p156
    %p158 = pneg %p157
    // Predicated region
    $region9: #{point_transformer_cls.19} parent=5 // pred_check
      _
    $region10: #{point_transformer_cls.19} parent=5 // pred_check_branch
      %160 = sbr.rel (%p157) target = $region12
    $region11: #{point_transformer_cls.19} parent=5 // pred_region
      %s161 = ssub.s32 %s11, 1
      // Predicated region
      $region13: #{point_transformer_cls.19} parent=11 // pred_check
        %p162 = pneg %p58
      $region14: #{point_transformer_cls.19} parent=11 // pred_check_branch
        %164 = sbr.rel (%p162) target = $region16
      $region15: #{point_transformer_cls.19} parent=11 // pred_region
        _
      $region16: #{point_transformer_cls.19} parent=11 // pred_fallthru
        _
      // Predicated region
      $region17: #{point_transformer_cls.19} parent=11 // pred_check
        %p165 = pneg %p79
      $region18: #{point_transformer_cls.19} parent=11 // pred_check_branch
        %167 = sbr.rel (%p165) target = $region20
      $region19: #{point_transformer_cls.19} parent=11 // pred_region
        _
      $region20: #{point_transformer_cls.19} parent=11 // pred_fallthru
        _
      // Predicated region
      $region21: #{point_transformer_cls.19} parent=11 // pred_check
        %p168 = pneg %p100
      $region22: #{point_transformer_cls.19} parent=11 // pred_check_branch
        %170 = sbr.rel (%p168) target = $region24
      $region23: #{point_transformer_cls.19} parent=11 // pred_region
        _
      $region24: #{point_transformer_cls.19} parent=11 // pred_fallthru
        _
      // Predicated region
      $region25: #{point_transformer_cls.19} parent=11 // pred_check
        %p171 = pneg %p121
      $region26: #{point_transformer_cls.19} parent=11 // pred_check_branch
        %173 = sbr.rel (%p171) target = $region28
      $region27: #{point_transformer_cls.19} parent=11 // pred_region
        _
      $region28: #{point_transformer_cls.19} parent=11 // pred_fallthru
        _
    $region12: #{point_transformer_cls.19} parent=5 // pred_fallthru
      _
    %p174 = scmp.lt.s32.totalorder %s11, 2
    // Predicated region
    $region29: #{point_transformer_cls.19} parent=5 // pred_check
      %p175 = pneg %p174
    $region30: #{point_transformer_cls.19} parent=5 // pred_check_branch
      %177 = sbr.rel (%p175) target = $region32
    $region31: #{point_transformer_cls.19} parent=5 // pred_region
      // Predicated region
      $region33: #{point_transformer_cls.19} parent=31 // pred_check
        %p178 = pneg %p31
      $region34: #{point_transformer_cls.19} parent=31 // pred_check_branch
        %180 = sbr.rel (%p178) target = $region36
      $region35: #{point_transformer_cls.19} parent=31 // pred_region
        %s181 = smul.u32 8, %s11
        %p182 = scmp.lt.s32.totalorder %s181, 15
        %s183 = scalar_select %p182, %s181, 15
        %s184 = smul.addr %s183, 8
        %s185 = scalar_lea.vmem %s0, %s184
        %s186 = smul.u32 8, %s11
      $region36: #{point_transformer_cls.19} parent=31 // pred_fallthru
        _
    $region32: #{point_transformer_cls.19} parent=5 // pred_fallthru
      _
    %p187 = scmp.le.s32.totalorder 1, %s11
    %p188 = scmp.lt.s32.totalorder %s11, 3
    %p189 = pnand %p187, %p188
    %p190 = pneg %p189
    // Predicated region
    $region37: #{point_transformer_cls.19} parent=5 // pred_check
      _
    $region38: #{point_transformer_cls.19} parent=5 // pred_check_branch
      %192 = sbr.rel (%p189) target = $region40
    $region39: #{point_transformer_cls.19} parent=5 // pred_region
      %s193 = ssub.s32 %s11, 1
      %s194 = smul.u32 8, %s16
      %p195 = scmp.lt.s32.totalorder %s194, 15
      %s196 = scalar_select %p195, %s194, 15
      %s197 = smul.addr %s196, 8
      %s198 = scalar_lea.vmem %s0, %s197
      %p199 = pneg %p37
      %p200 = pneg %p34
      %p201 = pneg %p58
      %p202 = pneg %p55
      %p203 = pneg %p79
      %p204 = pneg %p76
      %p205 = pneg %p100
      %p206 = pneg %p97
      %p207 = pneg %p121
      %p208 = pneg %p118
      %p209 = pneg %p147
      %p210 = pneg %p144
      %s211 = smul.u32 8, %s16
      %p212 = scmp.lt.s32.totalorder %s211, 15
      %s213 = scalar_select %p212, %s211, 15
      %s214 = smul.addr %s213, 8
      %s215 = scalar_lea.vmem %s5, %s214
      %s216 = smul.u32 8, %s16
      %p217 = scmp.lt.s32.totalorder %s216, 15
      %s218 = scalar_select %p217, %s216, 15
      %s219 = smul.addr %s218, 8
      %s220 = scalar_lea.vmem %s0, %s219
      %s221 = smul.u32 8, %s16
      %s222 = smul.u32 8, %s16
      %p223 = scmp.lt.s32.totalorder %s222, 15
      %s224 = scalar_select %p223, %s222, 15
      %s225 = smul.addr %s224, 8
      %s226 = scalar_lea.vmem %s5, %s225
      %s227 = smul.u32 8, %s16
      %v228 = vld [vmem:[%s220] sm:$0xff]
      %v229 = vld [vmem:[%s220 + $0x8] sm:$0xff]
      %v230 = vld [vmem:[%s220 + $0x10] sm:$0xff]
      %v231 = vld [vmem:[%s220 + $0x18] sm:$0xff]
      %v232 = vld [vmem:[%s220 + $0x20] sm:$0xff]
      %v233 = vld [vmem:[%s220 + $0x28] sm:$0xff]
      %v234 = vld [vmem:[%s220 + $0x30] sm:$0xff]
      %v235 = vld [vmem:[%s220 + $0x38] sm:$0xff]
      %v236 = vld [vmem:[%s1] sm:$0x7]
      %v237 = vld [vmem:[%s2] sm:$0x1]
      %v239 = vlaneseq
      %v240 = vshrl.u32 %v239, 7
      %v241 = vsub.s32 0, %v240
      %v242 = vrot.slane %v237, %v241
      %vm244 = vcmask 23552
      %v246 = vsel %vm244, %v228, 0
      %v249 = vsel %vm244, %v229, 0
      %v252 = vsel %vm244, %v230, 0
      %v255 = vsel %vm244, %v231, 0
      %v258 = vsel %vm244, %v232, 0
      %v261 = vsel %vm244, %v233, 0
      %v264 = vsel %vm244, %v234, 0
      %v267 = vsel %vm244, %v235, 0
      %vm269 = vcmask 1042432
      %v271 = vsel %vm269, %v236, 0
      %273 = vmatprep.subr.mxu0 0.0
      %274 = vmatpush1.msra.mxu0 %v271
      %275 = vmatprep.subr.mxu0 0.0
      %276 = vmatpush1.msra.mxu0 0.0
      %277 = vmatprep.subr.mxu0 0.0
      %278 = vmatpush1.msra.mxu0 0.0
      %279 = vmatprep.subr.mxu0 0.0
      %280 = vmatpush1.msra.mxu0 0.0
      %281 = vmatprep.subr.mxu0 0.0
      %282 = vmatpush1.msra.mxu0 0.0
      %283 = vmatprep.subr.mxu0 0.0
      %284 = vmatpush1.msra.mxu0 0.0
      %285 = vmatprep.subr.mxu0 0.0
      %286 = vmatpush1.msra.mxu0 0.0
      %287 = vmatprep.subr.mxu0 0.0
      %288 = vmatpush1.msra.mxu0 0.0
      %289 = vmatprep.subr.mxu0 0.0
      %290 = vmatpush1.msra.mxu0 0.0
      %291 = vmatprep.subr.mxu0 0.0
      %292 = vmatpush1.msra.mxu0 0.0
      %293 = vmatprep.subr.mxu0 0.0
      %294 = vmatpush1.msra.mxu0 0.0
      %295 = vmatprep.subr.mxu0 0.0
      %296 = vmatpush1.msra.mxu0 0.0
      %297 = vmatprep.subr.mxu0 0.0
      %298 = vmatpush1.msra.mxu0 0.0
      %299 = vmatprep.subr.mxu0 0.0
      %300 = vmatpush1.msra.mxu0 0.0
      %301 = vmatprep.subr.mxu0 0.0
      %302 = vmatpush1.msra.mxu0 0.0
      %303 = vmatprep.subr.mxu0 0.0
      %304 = vmatpush1.msra.mxu0 0.0
      %305 = vmatprep.subr.mxu0 0.0
      %306 = vmatpush1.msra.mxu0 0.0
      %307 = vmatprep.subr.mxu0 0.0
      %308 = vmatpush1.msra.mxu0 0.0
      %309 = vmatprep.subr.mxu0 0.0
      %310 = vmatpush1.msra.mxu0 0.0
      %311 = vmatprep.subr.mxu0 0.0
      %312 = vmatpush1.msra.mxu0 0.0
      %313 = vmatprep.subr.mxu0 0.0
      %314 = vmatpush1.msra.mxu0 0.0
      %315 = vmatprep.subr.mxu0 0.0
      %316 = vmatpush1.msra.mxu0 0.0
      %317 = vmatprep.subr.mxu0 0.0
      %318 = vmatpush1.msra.mxu0 0.0
      %319 = vmatprep.subr.mxu0 0.0
      %320 = vmatpush1.msra.mxu0 0.0
      %321 = vmatprep.subr.mxu0 0.0
      %322 = vmatpush1.msra.mxu0 0.0
      %323 = vmatprep.subr.mxu0 0.0
      %324 = vmatpush1.msra.mxu0 0.0
      %325 = vmatprep.subr.mxu0 0.0
      %326 = vmatpush1.msra.mxu0 0.0
      %327 = vmatprep.subr.mxu0 0.0
      %328 = vmatpush1.msra.mxu0 0.0
      %329 = vmatprep.subr.mxu0 0.0
      %330 = vmatpush1.msra.mxu0 0.0
      %331 = vmatprep.subr.mxu0 0.0
      %332 = vmatpush1.msra.mxu0 0.0
      %333 = vmatprep.subr.mxu0 0.0
      %334 = vmatpush1.msra.mxu0 0.0
      %335 = vmatprep.subr.mxu0 0.0
      %336 = vmatpush1.msra.mxu0 0.0
      %337 = vmatprep.mubr.f32.mxu0 0.0
      %338 = vmatmul.mubr.f32.gmra.mrb[0].mxu0 %v246
      %v339 = vpop.f32.mrb[0].mxu0
      %v340 = vadd.f32 %v242, %v339
      %v341 = vpop.f32.mrb[0].mxu0
      %342 = vmatprep.mubr.f32.mxu0 0.0
      %343 = vmatmul.mubr.f32.gmra.mrb[0].mxu0 %v249
      %v344 = vpop.f32.mrb[0].mxu0
      %v345 = vadd.f32 %v242, %v344
      %v346 = vpop.f32.mrb[0].mxu0
      %347 = vmatprep.mubr.f32.mxu0 0.0
      %348 = vmatmul.mubr.f32.gmra.mrb[0].mxu0 %v252
      %v349 = vpop.f32.mrb[0].mxu0
      %v350 = vadd.f32 %v242, %v349
      %v351 = vpop.f32.mrb[0].mxu0
      %352 = vmatprep.mubr.f32.mxu0 0.0
      %353 = vmatmul.mubr.f32.gmra.mrb[0].mxu0 %v255
      %v354 = vpop.f32.mrb[0].mxu0
      %v355 = vadd.f32 %v242, %v354
      %v356 = vpop.f32.mrb[0].mxu0
      %357 = vmatprep.mubr.f32.mxu0 0.0
      %358 = vmatmul.mubr.f32.gmra.mrb[0].mxu0 %v258
      %v359 = vpop.f32.mrb[0].mxu0
      %v360 = vadd.f32 %v242, %v359
      %v361 = vpop.f32.mrb[0].mxu0
      %362 = vmatprep.mubr.f32.mxu0 0.0
      %363 = vmatmul.mubr.f32.gmra.mrb[0].mxu0 %v261
      %v364 = vpop.f32.mrb[0].mxu0
      %v365 = vadd.f32 %v242, %v364
      %v366 = vpop.f32.mrb[0].mxu0
      %367 = vmatprep.mubr.f32.mxu0 0.0
      %368 = vmatmul.mubr.f32.gmra.mrb[0].mxu0 %v264
      %v369 = vpop.f32.mrb[0].mxu0
      %v370 = vadd.f32 %v242, %v369
      %v371 = vpop.f32.mrb[0].mxu0
      %372 = vmatprep.mubr.f32.mxu0 0.0
      %373 = vmatmul.mubr.f32.gmra.mrb[0].mxu0 %v267
      %v374 = vpop.f32.mrb[0].mxu0
      %v375 = vadd.f32 %v242, %v374
      %v376 = vpop.f32.mrb[0].mxu0
      %377 = vdwg.mxu0
      %v378 = vmax.f32 %v340, 0.0
      %v379 = vmax.f32 %v345, 0.0
      %v380 = vmax.f32 %v350, 0.0
      %v381 = vmax.f32 %v355, 0.0
      %v382 = vmax.f32 %v360, 0.0
      %v383 = vmax.f32 %v365, 0.0
      %v384 = vmax.f32 %v370, 0.0
      %v385 = vmax.f32 %v375, 0.0
      %v386 = vld [vmem:[%s3] sm:$0xff]
      %v387 = vld [vmem:[%s3 + $0x8] sm:$0xff]
      %v388 = vld [vmem:[%s3 + $0x10] sm:$0xff]
      %v389 = vld [vmem:[%s3 + $0x18] sm:$0xff]
      %v390 = vld [vmem:[%s4] sm:$0x1]
      %v392 = vlaneseq
      %v393 = vshrl.u32 %v392, 7
      %v394 = vsub.s32 0, %v393
      %v395 = vrot.slane %v390, %v394
      %vm397 = vcmask 261120
      %v399 = vsel %vm397, %v378, 0
      %v402 = vsel %vm397, %v379, 0
      %v405 = vsel %vm397, %v380, 0
      %v408 = vsel %vm397, %v381, 0
      %v411 = vsel %vm397, %v382, 0
      %v414 = vsel %vm397, %v383, 0
      %v417 = vsel %vm397, %v384, 0
      %v420 = vsel %vm397, %v385, 0
      %422 = vmatprep.subr.mxu0 0.0
      %423 = vmatpush1.msra.mxu0 %v386
      %424 = vmatprep.subr.mxu0 0.0
      %425 = vmatpush1.msra.mxu0 %v387
      %426 = vmatprep.subr.mxu0 0.0
      %427 = vmatpush1.msra.mxu0 %v388
      %428 = vmatprep.subr.mxu0 0.0
      %429 = vmatpush1.msra.mxu0 %v389
      %430 = vmatprep.subr.mxu0 0.0
      %431 = vmatpush1.msra.mxu0 0.0
      %432 = vmatprep.subr.mxu0 0.0
      %433 = vmatpush1.msra.mxu0 0.0
      %434 = vmatprep.subr.mxu0 0.0
      %435 = vmatpush1.msra.mxu0 0.0
      %436 = vmatprep.subr.mxu0 0.0
      %437 = vmatpush1.msra.mxu0 0.0
      %438 = vmatprep.subr.mxu0 0.0
      %439 = vmatpush1.msra.mxu0 0.0
      %440 = vmatprep.subr.mxu0 0.0
      %441 = vmatpush1.msra.mxu0 0.0
      %442 = vmatprep.subr.mxu0 0.0
      %443 = vmatpush1.msra.mxu0 0.0
      %444 = vmatprep.subr.mxu0 0.0
      %445 = vmatpush1.msra.mxu0 0.0
      %446 = vmatprep.subr.mxu0 0.0
      %447 = vmatpush1.msra.mxu0 0.0
      %448 = vmatprep.subr.mxu0 0.0
      %449 = vmatpush1.msra.mxu0 0.0
      %450 = vmatprep.subr.mxu0 0.0
      %451 = vmatpush1.msra.mxu0 0.0
      %452 = vmatprep.subr.mxu0 0.0
      %453 = vmatpush1.msra.mxu0 0.0
      %454 = vmatprep.subr.mxu0 0.0
      %455 = vmatpush1.msra.mxu0 0.0
      %456 = vmatprep.subr.mxu0 0.0
      %457 = vmatpush1.msra.mxu0 0.0
      %458 = vmatprep.subr.mxu0 0.0
      %459 = vmatpush1.msra.mxu0 0.0
      %460 = vmatprep.subr.mxu0 0.0
      %461 = vmatpush1.msra.mxu0 0.0
      %462 = vmatprep.subr.mxu0 0.0
      %463 = vmatpush1.msra.mxu0 0.0
      %464 = vmatprep.subr.mxu0 0.0
      %465 = vmatpush1.msra.mxu0 0.0
      %466 = vmatprep.subr.mxu0 0.0
      %467 = vmatpush1.msra.mxu0 0.0
      %468 = vmatprep.subr.mxu0 0.0
      %469 = vmatpush1.msra.mxu0 0.0
      %470 = vmatprep.subr.mxu0 0.0
      %471 = vmatpush1.msra.mxu0 0.0
      %472 = vmatprep.subr.mxu0 0.0
      %473 = vmatpush1.msra.mxu0 0.0
      %474 = vmatprep.subr.mxu0 0.0
      %475 = vmatpush1.msra.mxu0 0.0
      %476 = vmatprep.subr.mxu0 0.0
      %477 = vmatpush1.msra.mxu0 0.0
      %478 = vmatprep.subr.mxu0 0.0
      %479 = vmatpush1.msra.mxu0 0.0
      %480 = vmatprep.subr.mxu0 0.0
      %481 = vmatpush1.msra.mxu0 0.0
      %482 = vmatprep.subr.mxu0 0.0
      %483 = vmatpush1.msra.mxu0 0.0
      %484 = vmatprep.subr.mxu0 0.0
      %485 = vmatpush1.msra.mxu0 0.0
      %486 = vmatprep.mubr.f32.mxu0 0.0
      %487 = vmatmul.mubr.f32.gmra.mrb[0].mxu0 %v399
      %v488 = vpop.f32.mrb[0].mxu0
      %v489 = vadd.f32 %v395, %v488
      %v490 = vpop.f32.mrb[0].mxu0
      %491 = vmatprep.mubr.f32.mxu0 0.0
      %492 = vmatmul.mubr.f32.gmra.mrb[0].mxu0 %v402
      %v493 = vpop.f32.mrb[0].mxu0
      %v494 = vadd.f32 %v395, %v493
      %v495 = vpop.f32.mrb[0].mxu0
      %496 = vmatprep.mubr.f32.mxu0 0.0
      %497 = vmatmul.mubr.f32.gmra.mrb[0].mxu0 %v405
      %v498 = vpop.f32.mrb[0].mxu0
      %v499 = vadd.f32 %v395, %v498
      %v500 = vpop.f32.mrb[0].mxu0
      %501 = vmatprep.mubr.f32.mxu0 0.0
      %502 = vmatmul.mubr.f32.gmra.mrb[0].mxu0 %v408
      %v503 = vpop.f32.mrb[0].mxu0
      %v504 = vadd.f32 %v395, %v503
      %v505 = vpop.f32.mrb[0].mxu0
      %506 = vmatprep.mubr.f32.mxu0 0.0
      %507 = vmatmul.mubr.f32.gmra.mrb[0].mxu0 %v411
      %v508 = vpop.f32.mrb[0].mxu0
      %v509 = vadd.f32 %v395, %v508
      %v510 = vpop.f32.mrb[0].mxu0
      %511 = vmatprep.mubr.f32.mxu0 0.0
      %512 = vmatmul.mubr.f32.gmra.mrb[0].mxu0 %v414
      %v513 = vpop.f32.mrb[0].mxu0
      %v514 = vadd.f32 %v395, %v513
      %v515 = vpop.f32.mrb[0].mxu0
      %516 = vmatprep.mubr.f32.mxu0 0.0
      %517 = vmatmul.mubr.f32.gmra.mrb[0].mxu0 %v417
      %v518 = vpop.f32.mrb[0].mxu0
      %v519 = vadd.f32 %v395, %v518
      %v520 = vpop.f32.mrb[0].mxu0
      %521 = vmatprep.mubr.f32.mxu0 0.0
      %522 = vmatmul.mubr.f32.gmra.mrb[0].mxu0 %v420
      %v523 = vpop.f32.mrb[0].mxu0
      %v524 = vadd.f32 %v395, %v523
      %v525 = vpop.f32.mrb[0].mxu0
      %526 = vdwg.mxu0
      %527 = vst.msk [vmem:[%s226] sm:$0xff] %vm397, %v489
      %528 = vst.msk [vmem:[%s226 + $0x8] sm:$0xff] %vm397, %v494
      %529 = vst.msk [vmem:[%s226 + $0x10] sm:$0xff] %vm397, %v499
      %530 = vst.msk [vmem:[%s226 + $0x18] sm:$0xff] %vm397, %v504
      %531 = vst.msk [vmem:[%s226 + $0x20] sm:$0xff] %vm397, %v509
      %532 = vst.msk [vmem:[%s226 + $0x28] sm:$0xff] %vm397, %v514
      %533 = vst.msk [vmem:[%s226 + $0x30] sm:$0xff] %vm397, %v519
      %534 = vst.msk [vmem:[%s226 + $0x38] sm:$0xff] %vm397, %v524
      %s535 = smul.u32 8, %s16
      %p536 = scmp.lt.s32.totalorder %s535, 15
      %s537 = scalar_select %p536, %s535, 15
      %s538 = smul.addr %s537, 8
      %s539 = scalar_lea.vmem %s5, %s538
      // Predicated region
      $region41: #{point_transformer_cls.19} parent=39 // pred_check
        %p540 = pneg %p144
      $region42: #{point_transformer_cls.19} parent=39 // pred_check_branch
        %542 = sbr.rel (%p540) target = $region44
      $region43: #{point_transformer_cls.19} parent=39 // pred_region
        %s543 = smul.u32 8, %s16
      $region44: #{point_transformer_cls.19} parent=39 // pred_fallthru
        _
    $region40: #{point_transformer_cls.19} parent=5 // pred_fallthru
      _
    %p544 = scmp.le.s32.totalorder 2, %s11
    // Predicated region
    $region45: #{point_transformer_cls.19} parent=5 // pred_check
      %p545 = pneg %p544
    $region46: #{point_transformer_cls.19} parent=5 // pred_check_branch
      %547 = sbr.rel (%p545) target = $region48
    $region47: #{point_transformer_cls.19} parent=5 // pred_region
      %s548 = ssub.s32 %s11, 2
      // Predicated region
      $region49: #{point_transformer_cls.19} parent=47 // pred_check
        %p549 = pneg %p150
      $region50: #{point_transformer_cls.19} parent=47 // pred_check_branch
        %551 = sbr.rel (%p549) target = $region52
      $region51: #{point_transformer_cls.19} parent=47 // pred_region
        %s552 = smul.u32 8, %s17
        %p553 = scmp.lt.s32.totalorder %s552, 15
        %s554 = scalar_select %p553, %s552, 15
        %s555 = smul.addr %s554, 8
        %s556 = scalar_lea.vmem %s5, %s555
      $region52: #{point_transformer_cls.19} parent=47 // pred_fallthru
        _
    $region48: #{point_transformer_cls.19} parent=5 // pred_fallthru
      _
  $region6: #{point_transformer_cls.19} parent=0 // loop_footer
    %s15 = sadd.s32 1, %s11
  $region7: #{point_transformer_cls.19} parent=0 // loop_footer_branch
    %10 = sbr.rel target = $region3
  $region8: #{point_transformer_cls.19} parent=0 // loop_exit
    _

// kernel: custom-call.35
$region0: #{custom-call.35}
  %s0 = inlined_call_operand.vmem [shape: f32[2,8], index: 0, kind: output, shape index: {}]

// kernel: point_transformer_cls.20
$region0: #{point_transformer_cls.20}
  #allocation0 [shape = 'u32[]', space=smem, size = 0x4, offset = 0x4, fixed_abs, tag = 'smem constant byte address 0x4 - core index']
  #allocation1 [shape = 'u32[144,128]{1,0:T(1,128)}', space=vmem, size = 0x12000, scoped, tag = 'internal scratch']
  %s0 = inlined_call_operand.vmem [shape: f32[16,1,32], index: 0, kind: input, shape index: {}]
  %s1 = inlined_call_operand.vmem [shape: f32[16,8,32], index: 1, kind: input, shape index: {}]
  %s2 = inlined_call_operand.vmem [shape: f32[16,8,32], index: 2, kind: input, shape index: {}]
  %s3 = inlined_call_operand.vmem [shape: f32[16,8,32], index: 3, kind: input, shape index: {}]
  %s4 = inlined_call_operand.vmem [shape: f32[16,64], index: 4, kind: input, shape index: {}]
  %s5 = inlined_call_operand.vmem [shape: f32[32,32], index: 5, kind: input, shape index: {}]
  %s6 = inlined_call_operand.vmem [shape: f32[1,32], index: 6, kind: input, shape index: {}]
  %s7 = inlined_call_operand.vmem [shape: f32[32,32], index: 7, kind: input, shape index: {}]
  %s8 = inlined_call_operand.vmem [shape: f32[1,32], index: 8, kind: input, shape index: {}]
  %s9 = inlined_call_operand.vmem [shape: f32[32,64], index: 9, kind: input, shape index: {}]
  %s10 = inlined_call_operand.vmem [shape: f32[1,64], index: 10, kind: input, shape index: {}]
  %s11 = inlined_call_operand.vmem [shape: f32[16,64], index: 11, kind: output, shape index: {}]
  %s12 = sld [smem:[#allocation0]]
  $region77: #{point_transformer_cls.20} parent=0
    _
  %s14 = ssub.s32 1, %s12
  %s15 = scalar_select 0, %s14, %s12
  loop: start=0, step=1, limit=4
  $region2: #{point_transformer_cls.20} parent=0 // loop_pre_header
    _
  $region3: #{point_transformer_cls.20} parent=0 // loop_header
    %s17 = sphi 0, %s21
    %p18 = scmp.ge.s32.totalorder %s17, 4
    %s27 = sphi 0, %s29
    %s30 = sphi 0, %s27
    %s31 = sphi 0, %s30
    %s47 = sphi 0, %s31
    %s53 = sphi 0, %s55
    %s56 = sphi 0, %s53
    %s57 = sphi 0, %s56
    %s73 = sphi 0, %s57
    %s79 = sphi 0, %s81
    %s82 = sphi 0, %s79
    %s83 = sphi 0, %s82
    %s99 = sphi 0, %s83
    %s105 = sphi 0, %s107
    %s108 = sphi 0, %s105
    %s109 = sphi 0, %s108
    %s125 = sphi 0, %s109
    %s131 = sphi 0, %s133
    %s134 = sphi 0, %s131
    %s135 = sphi 0, %s134
    %s151 = sphi 0, %s135
    %s155 = sphi 0, %s155
    %s157 = sphi 0, %s155
    %s158 = sphi 0, %s157
    %s172 = sphi 0, %s158
    %s176 = sphi 0, %s176
    %s178 = sphi 0, %s176
    %s179 = sphi 0, %s178
    %s193 = sphi 0, %s179
    %s197 = sphi 0, %s197
    %s199 = sphi 0, %s197
    %s200 = sphi 0, %s199
    %s214 = sphi 0, %s200
    %s218 = sphi 0, %s218
    %s220 = sphi 0, %s218
    %s221 = sphi 0, %s220
    %s235 = sphi 0, %s221
    %s239 = sphi 0, %s239
    %s241 = sphi 0, %s239
    %s242 = sphi 0, %s241
    %s256 = sphi 0, %s242
    %s260 = sphi 0, %s260
    %s262 = sphi 0, %s260
    %s263 = sphi 0, %s262
    %s277 = sphi 0, %s263
    %s283 = sphi 0, %s285
    %s286 = sphi 0, %s283
    %s287 = sphi 0, %s286
    %s303 = sphi 0, %s287
  $region4: #{point_transformer_cls.20} parent=0 // loop_header_branch
    %20 = sbr.rel (%p18) target = $region8
  $region5: #{point_transformer_cls.20} parent=0 // loop_body
    %s22 = ssub.s32 %s17, 1
    %s23 = ssub.s32 %s17, 2
    %s24 = sadd.s32 %s17, 1
    %s25 = ssub.s32 %s17, %s24
    %p26 = scmp.eq.s32.totalorder %s25, 0
    %s28 = sadd.s32 %s27, 1
    %s29 = scalar_select %p26, %s27, %s28
    %p32 = pneg %p26
    %p33 = scmp.eq.s32.totalorder %s17, 1
    %p34 = por %p32, %p33
    %p35 = scmp.ne.s32.totalorder %s27, %s30
    %p36 = scmp.eq.s32.totalorder %s17, 0
    %p37 = por %p35, %p36
    %p38 = scmp.ne.s32.totalorder %s27, %s30
    %p39 = scmp.eq.s32.totalorder %s22, 1
    %p40 = por %p38, %p39
    %p41 = scmp.ne.s32.totalorder %s30, %s31
    %p42 = scmp.eq.s32.totalorder %s22, 0
    %p43 = por %p41, %p42
    %p44 = scmp.ne.s32.totalorder %s30, %s31
    %p45 = scmp.eq.s32.totalorder %s23, 1
    %p46 = por %p44, %p45
    %p48 = scmp.ne.s32.totalorder %s31, %s47
    %p49 = scmp.eq.s32.totalorder %s23, 0
    %p50 = por %p48, %p49
    %s51 = ssub.s32 %s17, %s24
    %p52 = scmp.eq.s32.totalorder %s51, 0
    %s54 = sadd.s32 %s53, 1
    %s55 = scalar_select %p52, %s53, %s54
    %p58 = pneg %p52
    %p59 = scmp.eq.s32.totalorder %s17, 1
    %p60 = por %p58, %p59
    %p61 = scmp.ne.s32.totalorder %s53, %s56
    %p62 = scmp.eq.s32.totalorder %s17, 0
    %p63 = por %p61, %p62
    %p64 = scmp.ne.s32.totalorder %s53, %s56
    %p65 = scmp.eq.s32.totalorder %s22, 1
    %p66 = por %p64, %p65
    %p67 = scmp.ne.s32.totalorder %s56, %s57
    %p68 = scmp.eq.s32.totalorder %s22, 0
    %p69 = por %p67, %p68
    %p70 = scmp.ne.s32.totalorder %s56, %s57
    %p71 = scmp.eq.s32.totalorder %s23, 1
    %p72 = por %p70, %p71
    %p74 = scmp.ne.s32.totalorder %s57, %s73
    %p75 = scmp.eq.s32.totalorder %s23, 0
    %p76 = por %p74, %p75
    %s77 = ssub.s32 %s17, %s24
    %p78 = scmp.eq.s32.totalorder %s77, 0
    %s80 = sadd.s32 %s79, 1
    %s81 = scalar_select %p78, %s79, %s80
    %p84 = pneg %p78
    %p85 = scmp.eq.s32.totalorder %s17, 1
    %p86 = por %p84, %p85
    %p87 = scmp.ne.s32.totalorder %s79, %s82
    %p88 = scmp.eq.s32.totalorder %s17, 0
    %p89 = por %p87, %p88
    %p90 = scmp.ne.s32.totalorder %s79, %s82
    %p91 = scmp.eq.s32.totalorder %s22, 1
    %p92 = por %p90, %p91
    %p93 = scmp.ne.s32.totalorder %s82, %s83
    %p94 = scmp.eq.s32.totalorder %s22, 0
    %p95 = por %p93, %p94
    %p96 = scmp.ne.s32.totalorder %s82, %s83
    %p97 = scmp.eq.s32.totalorder %s23, 1
    %p98 = por %p96, %p97
    %p100 = scmp.ne.s32.totalorder %s83, %s99
    %p101 = scmp.eq.s32.totalorder %s23, 0
    %p102 = por %p100, %p101
    %s103 = ssub.s32 %s17, %s24
    %p104 = scmp.eq.s32.totalorder %s103, 0
    %s106 = sadd.s32 %s105, 1
    %s107 = scalar_select %p104, %s105, %s106
    %p110 = pneg %p104
    %p111 = scmp.eq.s32.totalorder %s17, 1
    %p112 = por %p110, %p111
    %p113 = scmp.ne.s32.totalorder %s105, %s108
    %p114 = scmp.eq.s32.totalorder %s17, 0
    %p115 = por %p113, %p114
    %p116 = scmp.ne.s32.totalorder %s105, %s108
    %p117 = scmp.eq.s32.totalorder %s22, 1
    %p118 = por %p116, %p117
    %p119 = scmp.ne.s32.totalorder %s108, %s109
    %p120 = scmp.eq.s32.totalorder %s22, 0
    %p121 = por %p119, %p120
    %p122 = scmp.ne.s32.totalorder %s108, %s109
    %p123 = scmp.eq.s32.totalorder %s23, 1
    %p124 = por %p122, %p123
    %p126 = scmp.ne.s32.totalorder %s109, %s125
    %p127 = scmp.eq.s32.totalorder %s23, 0
    %p128 = por %p126, %p127
    %s129 = ssub.s32 %s17, %s24
    %p130 = scmp.eq.s32.totalorder %s129, 0
    %s132 = sadd.s32 %s131, 1
    %s133 = scalar_select %p130, %s131, %s132
    %p136 = pneg %p130
    %p137 = scmp.eq.s32.totalorder %s17, 1
    %p138 = por %p136, %p137
    %p139 = scmp.ne.s32.totalorder %s131, %s134
    %p140 = scmp.eq.s32.totalorder %s17, 0
    %p141 = por %p139, %p140
    %p142 = scmp.ne.s32.totalorder %s131, %s134
    %p143 = scmp.eq.s32.totalorder %s22, 1
    %p144 = por %p142, %p143
    %p145 = scmp.ne.s32.totalorder %s134, %s135
    %p146 = scmp.eq.s32.totalorder %s22, 0
    %p147 = por %p145, %p146
    %p148 = scmp.ne.s32.totalorder %s134, %s135
    %p149 = scmp.eq.s32.totalorder %s23, 1
    %p150 = por %p148, %p149
    %p152 = scmp.ne.s32.totalorder %s135, %s151
    %p153 = scmp.eq.s32.totalorder %s23, 0
    %p154 = por %p152, %p153
    %s156 = sadd.s32 %s155, 1
    %p159 = scmp.eq.s32.totalorder %s17, 1
    %p160 = scmp.ne.s32.totalorder %s155, %s157
    %p161 = scmp.eq.s32.totalorder %s17, 0
    %p162 = por %p160, %p161
    %p163 = scmp.ne.s32.totalorder %s155, %s157
    %p164 = scmp.eq.s32.totalorder %s22, 1
    %p165 = por %p163, %p164
    %p166 = scmp.ne.s32.totalorder %s157, %s158
    %p167 = scmp.eq.s32.totalorder %s22, 0
    %p168 = por %p166, %p167
    %p169 = scmp.ne.s32.totalorder %s157, %s158
    %p170 = scmp.eq.s32.totalorder %s23, 1
    %p171 = por %p169, %p170
    %p173 = scmp.ne.s32.totalorder %s158, %s172
    %p174 = scmp.eq.s32.totalorder %s23, 0
    %p175 = por %p173, %p174
    %s177 = sadd.s32 %s176, 1
    %p180 = scmp.eq.s32.totalorder %s17, 1
    %p181 = scmp.ne.s32.totalorder %s176, %s178
    %p182 = scmp.eq.s32.totalorder %s17, 0
    %p183 = por %p181, %p182
    %p184 = scmp.ne.s32.totalorder %s176, %s178
    %p185 = scmp.eq.s32.totalorder %s22, 1
    %p186 = por %p184, %p185
    %p187 = scmp.ne.s32.totalorder %s178, %s179
    %p188 = scmp.eq.s32.totalorder %s22, 0
    %p189 = por %p187, %p188
    %p190 = scmp.ne.s32.totalorder %s178, %s179
    %p191 = scmp.eq.s32.totalorder %s23, 1
    %p192 = por %p190, %p191
    %p194 = scmp.ne.s32.totalorder %s179, %s193
    %p195 = scmp.eq.s32.totalorder %s23, 0
    %p196 = por %p194, %p195
    %s198 = sadd.s32 %s197, 1
    %p201 = scmp.eq.s32.totalorder %s17, 1
    %p202 = scmp.ne.s32.totalorder %s197, %s199
    %p203 = scmp.eq.s32.totalorder %s17, 0
    %p204 = por %p202, %p203
    %p205 = scmp.ne.s32.totalorder %s197, %s199
    %p206 = scmp.eq.s32.totalorder %s22, 1
    %p207 = por %p205, %p206
    %p208 = scmp.ne.s32.totalorder %s199, %s200
    %p209 = scmp.eq.s32.totalorder %s22, 0
    %p210 = por %p208, %p209
    %p211 = scmp.ne.s32.totalorder %s199, %s200
    %p212 = scmp.eq.s32.totalorder %s23, 1
    %p213 = por %p211, %p212
    %p215 = scmp.ne.s32.totalorder %s200, %s214
    %p216 = scmp.eq.s32.totalorder %s23, 0
    %p217 = por %p215, %p216
    %s219 = sadd.s32 %s218, 1
    %p222 = scmp.eq.s32.totalorder %s17, 1
    %p223 = scmp.ne.s32.totalorder %s218, %s220
    %p224 = scmp.eq.s32.totalorder %s17, 0
    %p225 = por %p223, %p224
    %p226 = scmp.ne.s32.totalorder %s218, %s220
    %p227 = scmp.eq.s32.totalorder %s22, 1
    %p228 = por %p226, %p227
    %p229 = scmp.ne.s32.totalorder %s220, %s221
    %p230 = scmp.eq.s32.totalorder %s22, 0
    %p231 = por %p229, %p230
    %p232 = scmp.ne.s32.totalorder %s220, %s221
    %p233 = scmp.eq.s32.totalorder %s23, 1
    %p234 = por %p232, %p233
    %p236 = scmp.ne.s32.totalorder %s221, %s235
    %p237 = scmp.eq.s32.totalorder %s23, 0
    %p238 = por %p236, %p237
    %s240 = sadd.s32 %s239, 1
    %p243 = scmp.eq.s32.totalorder %s17, 1
    %p244 = scmp.ne.s32.totalorder %s239, %s241
    %p245 = scmp.eq.s32.totalorder %s17, 0
    %p246 = por %p244, %p245
    %p247 = scmp.ne.s32.totalorder %s239, %s241
    %p248 = scmp.eq.s32.totalorder %s22, 1
    %p249 = por %p247, %p248
    %p250 = scmp.ne.s32.totalorder %s241, %s242
    %p251 = scmp.eq.s32.totalorder %s22, 0
    %p252 = por %p250, %p251
    %p253 = scmp.ne.s32.totalorder %s241, %s242
    %p254 = scmp.eq.s32.totalorder %s23, 1
    %p255 = por %p253, %p254
    %p257 = scmp.ne.s32.totalorder %s242, %s256
    %p258 = scmp.eq.s32.totalorder %s23, 0
    %p259 = por %p257, %p258
    %s261 = sadd.s32 %s260, 1
    %p264 = scmp.eq.s32.totalorder %s17, 1
    %p265 = scmp.ne.s32.totalorder %s260, %s262
    %p266 = scmp.eq.s32.totalorder %s17, 0
    %p267 = por %p265, %p266
    %p268 = scmp.ne.s32.totalorder %s260, %s262
    %p269 = scmp.eq.s32.totalorder %s22, 1
    %p270 = por %p268, %p269
    %p271 = scmp.ne.s32.totalorder %s262, %s263
    %p272 = scmp.eq.s32.totalorder %s22, 0
    %p273 = por %p271, %p272
    %p274 = scmp.ne.s32.totalorder %s262, %s263
    %p275 = scmp.eq.s32.totalorder %s23, 1
    %p276 = por %p274, %p275
    %p278 = scmp.ne.s32.totalorder %s263, %s277
    %p279 = scmp.eq.s32.totalorder %s23, 0
    %p280 = por %p278, %p279
    %s281 = ssub.s32 %s17, %s24
    %p282 = scmp.eq.s32.totalorder %s281, 0
    %s284 = sadd.s32 %s283, 1
    %s285 = scalar_select %p282, %s283, %s284
    %p288 = pneg %p282
    %p289 = scmp.eq.s32.totalorder %s17, 1
    %p290 = por %p288, %p289
    %p291 = scmp.ne.s32.totalorder %s283, %s286
    %p292 = scmp.eq.s32.totalorder %s17, 0
    %p293 = por %p291, %p292
    %p294 = scmp.ne.s32.totalorder %s283, %s286
    %p295 = scmp.eq.s32.totalorder %s22, 1
    %p296 = por %p294, %p295
    %p297 = scmp.ne.s32.totalorder %s286, %s287
    %p298 = scmp.eq.s32.totalorder %s22, 0
    %p299 = por %p297, %p298
    %p300 = scmp.ne.s32.totalorder %s286, %s287
    %p301 = scmp.eq.s32.totalorder %s23, 1
    %p302 = por %p300, %p301
    %p304 = scmp.ne.s32.totalorder %s287, %s303
    %p305 = scmp.eq.s32.totalorder %s23, 0
    %p306 = por %p304, %p305
    %p307 = scmp.le.s32.totalorder 1, %s17
    %p308 = scmp.lt.s32.totalorder %s17, 3
    %p309 = pnand %p307, %p308
    %p310 = pneg %p309
    // Predicated region
    $region9: #{point_transformer_cls.20} parent=5 // pred_check
      _
    $region10: #{point_transformer_cls.20} parent=5 // pred_check_branch
      %312 = sbr.rel (%p309) target = $region12
    $region11: #{point_transformer_cls.20} parent=5 // pred_region
      %s313 = ssub.s32 %s17, 1
      // Predicated region
      $region13: #{point_transformer_cls.20} parent=11 // pred_check
        %p314 = pneg %p168
      $region14: #{point_transformer_cls.20} parent=11 // pred_check_branch
        %316 = sbr.rel (%p314) target = $region16
      $region15: #{point_transformer_cls.20} parent=11 // pred_region
        _
      $region16: #{point_transformer_cls.20} parent=11 // pred_fallthru
        _
      // Predicated region
      $region17: #{point_transformer_cls.20} parent=11 // pred_check
        %p317 = pneg %p189
      $region18: #{point_transformer_cls.20} parent=11 // pred_check_branch
        %319 = sbr.rel (%p317) target = $region20
      $region19: #{point_transformer_cls.20} parent=11 // pred_region
        _
      $region20: #{point_transformer_cls.20} parent=11 // pred_fallthru
        _
      // Predicated region
      $region21: #{point_transformer_cls.20} parent=11 // pred_check
        %p320 = pneg %p210
      $region22: #{point_transformer_cls.20} parent=11 // pred_check_branch
        %322 = sbr.rel (%p320) target = $region24
      $region23: #{point_transformer_cls.20} parent=11 // pred_region
        _
      $region24: #{point_transformer_cls.20} parent=11 // pred_fallthru
        _
      // Predicated region
      $region25: #{point_transformer_cls.20} parent=11 // pred_check
        %p323 = pneg %p231
      $region26: #{point_transformer_cls.20} parent=11 // pred_check_branch
        %325 = sbr.rel (%p323) target = $region28
      $region27: #{point_transformer_cls.20} parent=11 // pred_region
        _
      $region28: #{point_transformer_cls.20} parent=11 // pred_fallthru
        _
      // Predicated region
      $region29: #{point_transformer_cls.20} parent=11 // pred_check
        %p326 = pneg %p252
      $region30: #{point_transformer_cls.20} parent=11 // pred_check_branch
        %328 = sbr.rel (%p326) target = $region32
      $region31: #{point_transformer_cls.20} parent=11 // pred_region
        _
      $region32: #{point_transformer_cls.20} parent=11 // pred_fallthru
        _
      // Predicated region
      $region33: #{point_transformer_cls.20} parent=11 // pred_check
        %p329 = pneg %p273
      $region34: #{point_transformer_cls.20} parent=11 // pred_check_branch
        %331 = sbr.rel (%p329) target = $region36
      $region35: #{point_transformer_cls.20} parent=11 // pred_region
        _
      $region36: #{point_transformer_cls.20} parent=11 // pred_fallthru
        _
    $region12: #{point_transformer_cls.20} parent=5 // pred_fallthru
      _
    %p332 = scmp.lt.s32.totalorder %s17, 2
    // Predicated region
    $region37: #{point_transformer_cls.20} parent=5 // pred_check
      %p333 = pneg %p332
    $region38: #{point_transformer_cls.20} parent=5 // pred_check_branch
      %335 = sbr.rel (%p333) target = $region40
    $region39: #{point_transformer_cls.20} parent=5 // pred_region
      // Predicated region
      $region41: #{point_transformer_cls.20} parent=39 // pred_check
        %p336 = pneg %p37
      $region42: #{point_transformer_cls.20} parent=39 // pred_check_branch
        %338 = sbr.rel (%p336) target = $region44
      $region43: #{point_transformer_cls.20} parent=39 // pred_region
        %s339 = smul.u32 8, %s17
        %p340 = scmp.lt.s32.totalorder %s339, 15
        %s341 = scalar_select %p340, %s339, 15
        %s342 = scalar_lea.vmem %s0, %s341
        %s343 = smul.u32 8, %s17
      $region44: #{point_transformer_cls.20} parent=39 // pred_fallthru
        _
      // Predicated region
      $region45: #{point_transformer_cls.20} parent=39 // pred_check
        %p344 = pneg %p63
      $region46: #{point_transformer_cls.20} parent=39 // pred_check_branch
        %346 = sbr.rel (%p344) target = $region48
      $region47: #{point_transformer_cls.20} parent=39 // pred_region
        %s347 = smul.u32 8, %s17
        %p348 = scmp.lt.s32.totalorder %s347, 15
        %s349 = scalar_select %p348, %s347, 15
        %s350 = smul.addr %s349, 8
        %s351 = scalar_lea.vmem %s1, %s350
        %s352 = smul.u32 8, %s17
      $region48: #{point_transformer_cls.20} parent=39 // pred_fallthru
        _
      // Predicated region
      $region49: #{point_transformer_cls.20} parent=39 // pred_check
        %p353 = pneg %p89
      $region50: #{point_transformer_cls.20} parent=39 // pred_check_branch
        %355 = sbr.rel (%p353) target = $region52
      $region51: #{point_transformer_cls.20} parent=39 // pred_region
        %s356 = smul.u32 8, %s17
        %p357 = scmp.lt.s32.totalorder %s356, 15
        %s358 = scalar_select %p357, %s356, 15
        %s359 = smul.addr %s358, 8
        %s360 = scalar_lea.vmem %s2, %s359
        %s361 = smul.u32 8, %s17
      $region52: #{point_transformer_cls.20} parent=39 // pred_fallthru
        _
      // Predicated region
      $region53: #{point_transformer_cls.20} parent=39 // pred_check
        %p362 = pneg %p115
      $region54: #{point_transformer_cls.20} parent=39 // pred_check_branch
        %364 = sbr.rel (%p362) target = $region56
      $region55: #{point_transformer_cls.20} parent=39 // pred_region
        %s365 = smul.u32 8, %s17
        %p366 = scmp.lt.s32.totalorder %s365, 15
        %s367 = scalar_select %p366, %s365, 15
        %s368 = smul.addr %s367, 8
        %s369 = scalar_lea.vmem %s3, %s368
        %s370 = smul.u32 8, %s17
      $region56: #{point_transformer_cls.20} parent=39 // pred_fallthru
        _
      // Predicated region
      $region57: #{point_transformer_cls.20} parent=39 // pred_check
        %p371 = pneg %p141
      $region58: #{point_transformer_cls.20} parent=39 // pred_check_branch
        %373 = sbr.rel (%p371) target = $region60
      $region59: #{point_transformer_cls.20} parent=39 // pred_region
        %p374 = scmp.lt.s32.totalorder %s17, 1
        %s375 = scalar_select %p374, %s17, 1
        %s376 = smul.addr %s375, 8
        %s377 = scalar_lea.vmem %s4, %s376
      $region60: #{point_transformer_cls.20} parent=39 // pred_fallthru
        _
    $region40: #{point_transformer_cls.20} parent=5 // pred_fallthru
      _
    %p378 = scmp.le.s32.totalorder 1, %s17
    %p379 = scmp.lt.s32.totalorder %s17, 3
    %p380 = pnand %p378, %p379
    %p381 = pneg %p380
    // Predicated region
    $region61: #{point_transformer_cls.20} parent=5 // pred_check
      _
    $region62: #{point_transformer_cls.20} parent=5 // pred_check_branch
      %383 = sbr.rel (%p380) target = $region64
    $region63: #{point_transformer_cls.20} parent=5 // pred_region
      %s384 = ssub.s32 %s17, 1
      %s385 = smul.u32 8, %s22
      %p386 = scmp.lt.s32.totalorder %s385, 15
      %s387 = scalar_select %p386, %s385, 15
      %s388 = scalar_lea.vmem %s0, %s387
      %p389 = pneg %p43
      %p390 = pneg %p40
      %s391 = smul.u32 8, %s22
      %p392 = scmp.lt.s32.totalorder %s391, 15
      %s393 = scalar_select %p392, %s391, 15
      %s394 = smul.addr %s393, 8
      %s395 = scalar_lea.vmem %s1, %s394
      %p396 = pneg %p69
      %p397 = pneg %p66
      %s398 = smul.u32 8, %s22
      %p399 = scmp.lt.s32.totalorder %s398, 15
      %s400 = scalar_select %p399, %s398, 15
      %s401 = smul.addr %s400, 8
      %s402 = scalar_lea.vmem %s2, %s401
      %p403 = pneg %p95
      %p404 = pneg %p92
      %s405 = smul.u32 8, %s22
      %p406 = scmp.lt.s32.totalorder %s405, 15
      %s407 = scalar_select %p406, %s405, 15
      %s408 = smul.addr %s407, 8
      %s409 = scalar_lea.vmem %s3, %s408
      %p410 = pneg %p121
      %p411 = pneg %p118
      %p412 = scmp.lt.s32.totalorder %s22, 1
      %s413 = scalar_select %p412, %s22, 1
      %s414 = smul.addr %s413, 8
      %s415 = scalar_lea.vmem %s4, %s414
      %p416 = pneg %p147
      %p417 = pneg %p144
      %p418 = pneg %p168
      %p419 = pneg %p165
      %p420 = pneg %p189
      %p421 = pneg %p186
      %p422 = pneg %p210
      %p423 = pneg %p207
      %p424 = pneg %p231
      %p425 = pneg %p228
      %p426 = pneg %p252
      %p427 = pneg %p249
      %p428 = pneg %p273
      %p429 = pneg %p270
      %p430 = pneg %p299
      %p431 = pneg %p296
      %p432 = scmp.lt.s32.totalorder %s22, 1
      %s433 = scalar_select %p432, %s22, 1
      %s434 = smul.addr %s433, 8
      %s435 = scalar_lea.vmem %s11, %s434
      %s436 = smul.u32 8, %s22
      %p437 = scmp.lt.s32.totalorder %s436, 15
      %s438 = scalar_select %p437, %s436, 15
      %s439 = scalar_lea.vmem %s0, %s438
      %s440 = smul.u32 8, %s22
      %s441 = smul.u32 8, %s22
      %p442 = scmp.lt.s32.totalorder %s441, 15
      %s443 = scalar_select %p442, %s441, 15
      %s444 = smul.addr %s443, 8
      %s445 = scalar_lea.vmem %s1, %s444
      %s446 = smul.u32 8, %s22
      %s447 = smul.u32 8, %s22
      %p448 = scmp.lt.s32.totalorder %s447, 15
      %s449 = scalar_select %p448, %s447, 15
      %s450 = smul.addr %s449, 8
      %s451 = scalar_lea.vmem %s2, %s450
      %s452 = smul.u32 8, %s22
      %s453 = smul.u32 8, %s22
      %p454 = scmp.lt.s32.totalorder %s453, 15
      %s455 = scalar_select %p454, %s453, 15
      %s456 = smul.addr %s455, 8
      %s457 = scalar_lea.vmem %s3, %s456
      %s458 = smul.u32 8, %s22
      %p459 = scmp.lt.s32.totalorder %s22, 1
      %s460 = scalar_select %p459, %s22, 1
      %s461 = smul.addr %s460, 8
      %s462 = scalar_lea.vmem %s4, %s461
      %p463 = scmp.lt.s32.totalorder %s22, 1
      %s464 = scalar_select %p463, %s22, 1
      %s465 = smul.addr %s464, 8
      %s466 = scalar_lea.vmem %s11, %s465
      %v467 = vld [vmem:[%s451] sm:$0xff]
      %v468 = vld [vmem:[%s451 + $0x8] sm:$0xff]
      %v469 = vld [vmem:[%s451 + $0x10] sm:$0xff]
      %v470 = vld [vmem:[%s451 + $0x18] sm:$0xff]
      %v471 = vld [vmem:[%s451 + $0x20] sm:$0xff]
      %v472 = vld [vmem:[%s451 + $0x28] sm:$0xff]
      %v473 = vld [vmem:[%s451 + $0x30] sm:$0xff]
      %v474 = vld [vmem:[%s451 + $0x38] sm:$0xff]
      %v475 = vld [vmem:[%s445] sm:$0xff]
      %v476 = vld [vmem:[%s445 + $0x8] sm:$0xff]
      %v477 = vld [vmem:[%s445 + $0x10] sm:$0xff]
      %v478 = vld [vmem:[%s445 + $0x18] sm:$0xff]
      %v479 = vld [vmem:[%s445 + $0x20] sm:$0xff]
      %v480 = vld [vmem:[%s445 + $0x28] sm:$0xff]
      %v481 = vld [vmem:[%s445 + $0x30] sm:$0xff]
      %v482 = vld [vmem:[%s445 + $0x38] sm:$0xff]
      %v483 = vld [vmem:[%s439] sm:$0x1]
      %v484 = vld [vmem:[%s439 + $0x1] sm:$0x1]
      %v485 = vld [vmem:[%s439 + $0x2] sm:$0x1]
      %v486 = vld [vmem:[%s439 + $0x3] sm:$0x1]
      %v487 = vld [vmem:[%s439 + $0x4] sm:$0x1]
      %v488 = vld [vmem:[%s439 + $0x5] sm:$0x1]
      %v489 = vld [vmem:[%s439 + $0x6] sm:$0x1]
      %v490 = vld [vmem:[%s439 + $0x7] sm:$0x1]
      %v499 = vlaneseq
      %v500 = vshrl.u32 %v499, 7
      %v501 = vsub.s32 0, %v500
      %v502 = vrot.slane %v483, %v501
      %v503 = vlaneseq
      %v504 = vshrl.u32 %v503, 7
      %v505 = vsub.s32 0, %v504
      %v506 = vrot.slane %v484, %v505
      %v507 = vlaneseq
      %v508 = vshrl.u32 %v507, 7
      %v509 = vsub.s32 0, %v508
      %v510 = vrot.slane %v485, %v509
      %v511 = vlaneseq
      %v512 = vshrl.u32 %v511, 7
      %v513 = vsub.s32 0, %v512
      %v514 = vrot.slane %v486, %v513
      %v515 = vlaneseq
      %v516 = vshrl.u32 %v515, 7
      %v517 = vsub.s32 0, %v516
      %v518 = vrot.slane %v487, %v517
      %v519 = vlaneseq
      %v520 = vshrl.u32 %v519, 7
      %v521 = vsub.s32 0, %v520
      %v522 = vrot.slane %v488, %v521
      %v523 = vlaneseq
      %v524 = vshrl.u32 %v523, 7
      %v525 = vsub.s32 0, %v524
      %v526 = vrot.slane %v489, %v525
      %v527 = vlaneseq
      %v528 = vshrl.u32 %v527, 7
      %v529 = vsub.s32 0, %v528
      %v530 = vrot.slane %v490, %v529
      %v539 = vsub.f32 %v502, %v475
      %v540 = vsub.f32 %v506, %v476
      %v541 = vsub.f32 %v510, %v477
      %v542 = vsub.f32 %v514, %v478
      %v543 = vsub.f32 %v518, %v479
      %v544 = vsub.f32 %v522, %v480
      %v545 = vsub.f32 %v526, %v481
      %v546 = vsub.f32 %v530, %v482
      %v547 = vadd.f32 %v539, %v467
      %v548 = vadd.f32 %v540, %v468
      %v549 = vadd.f32 %v541, %v469
      %v550 = vadd.f32 %v542, %v470
      %v551 = vadd.f32 %v543, %v471
      %v552 = vadd.f32 %v544, %v472
      %v553 = vadd.f32 %v545, %v473
      %v554 = vadd.f32 %v546, %v474
      %v555 = vld [vmem:[%s5] sm:$0xff]
      %v556 = vld [vmem:[%s5 + $0x8] sm:$0xff]
      %v557 = vld [vmem:[%s5 + $0x10] sm:$0xff]
      %v558 = vld [vmem:[%s5 + $0x18] sm:$0xff]
      %v559 = vld [vmem:[%s6] sm:$0x1]
      %v561 = vlaneseq
      %v562 = vshrl.u32 %v561, 7
      %v563 = vsub.s32 0, %v562
      %v564 = vrot.slane %v559, %v563
      %vm566 = vcmask 261120
      %v568 = vsel %vm566, %v547, 0
      %v571 = vsel %vm566, %v548, 0
      %v574 = vsel %vm566, %v549, 0
      %v577 = vsel %vm566, %v550, 0
      %v580 = vsel %vm566, %v551, 0
      %v583 = vsel %vm566, %v552, 0
      %v586 = vsel %vm566, %v553, 0
      %v589 = vsel %vm566, %v554, 0
      %591 = vmatprep.subr.mxu0 0.0
      %592 = vmatpush1.msra.mxu0 %v555
      %593 = vmatprep.subr.mxu0 0.0
      %594 = vmatpush1.msra.mxu0 %v556
      %595 = vmatprep.subr.mxu0 0.0
      %596 = vmatpush1.msra.mxu0 %v557
      %597 = vmatprep.subr.mxu0 0.0
      %598 = vmatpush1.msra.mxu0 %v558
      %599 = vmatprep.subr.mxu0 0.0
      %600 = vmatpush1.msra.mxu0 0.0
      %601 = vmatprep.subr.mxu0 0.0
      %602 = vmatpush1.msra.mxu0 0.0
      %603 = vmatprep.subr.mxu0 0.0
      %604 = vmatpush1.msra.mxu0 0.0
      %605 = vmatprep.subr.mxu0 0.0
      %606 = vmatpush1.msra.mxu0 0.0
      %607 = vmatprep.subr.mxu0 0.0
      %608 = vmatpush1.msra.mxu0 0.0
      %609 = vmatprep.subr.mxu0 0.0
      %610 = vmatpush1.msra.mxu0 0.0
      %611 = vmatprep.subr.mxu0 0.0
      %612 = vmatpush1.msra.mxu0 0.0
      %613 = vmatprep.subr.mxu0 0.0
      %614 = vmatpush1.msra.mxu0 0.0
      %615 = vmatprep.subr.mxu0 0.0
      %616 = vmatpush1.msra.mxu0 0.0
      %617 = vmatprep.subr.mxu0 0.0
      %618 = vmatpush1.msra.mxu0 0.0
      %619 = vmatprep.subr.mxu0 0.0
      %620 = vmatpush1.msra.mxu0 0.0
      %621 = vmatprep.subr.mxu0 0.0
      %622 = vmatpush1.msra.mxu0 0.0
      %623 = vmatprep.subr.mxu0 0.0
      %624 = vmatpush1.msra.mxu0 0.0
      %625 = vmatprep.subr.mxu0 0.0
      %626 = vmatpush1.msra.mxu0 0.0
      %627 = vmatprep.subr.mxu0 0.0
      %628 = vmatpush1.msra.mxu0 0.0
      %629 = vmatprep.subr.mxu0 0.0
      %630 = vmatpush1.msra.mxu0 0.0
      %631 = vmatprep.subr.mxu0 0.0
      %632 = vmatpush1.msra.mxu0 0.0
      %633 = vmatprep.subr.mxu0 0.0
      %634 = vmatpush1.msra.mxu0 0.0
      %635 = vmatprep.subr.mxu0 0.0
      %636 = vmatpush1.msra.mxu0 0.0
      %637 = vmatprep.subr.mxu0 0.0
      %638 = vmatpush1.msra.mxu0 0.0
      %639 = vmatprep.subr.mxu0 0.0
      %640 = vmatpush1.msra.mxu0 0.0
      %641 = vmatprep.subr.mxu0 0.0
      %642 = vmatpush1.msra.mxu0 0.0
      %643 = vmatprep.subr.mxu0 0.0
      %644 = vmatpush1.msra.mxu0 0.0
      %645 = vmatprep.subr.mxu0 0.0
      %646 = vmatpush1.msra.mxu0 0.0
      %647 = vmatprep.subr.mxu0 0.0
      %648 = vmatpush1.msra.mxu0 0.0
      %649 = vmatprep.subr.mxu0 0.0
      %650 = vmatpush1.msra.mxu0 0.0
      %651 = vmatprep.subr.mxu0 0.0
      %652 = vmatpush1.msra.mxu0 0.0
      %653 = vmatprep.subr.mxu0 0.0
      %654 = vmatpush1.msra.mxu0 0.0
      %655 = vmatprep.mubr.f32.mxu0 0.0
      %656 = vmatmul.mubr.f32.gmra.mrb[0].mxu0 %v568
      %v657 = vpop.f32.mrb[0].mxu0
      %v658 = vadd.f32 %v564, %v657
      %v659 = vpop.f32.mrb[0].mxu0
      %660 = vmatprep.mubr.f32.mxu0 0.0
      %661 = vmatmul.mubr.f32.gmra.mrb[0].mxu0 %v571
      %v662 = vpop.f32.mrb[0].mxu0
      %v663 = vadd.f32 %v564, %v662
      %v664 = vpop.f32.mrb[0].mxu0
      %665 = vmatprep.mubr.f32.mxu0 0.0
      %666 = vmatmul.mubr.f32.gmra.mrb[0].mxu0 %v574
      %v667 = vpop.f32.mrb[0].mxu0
      %v668 = vadd.f32 %v564, %v667
      %v669 = vpop.f32.mrb[0].mxu0
      %670 = vmatprep.mubr.f32.mxu0 0.0
      %671 = vmatmul.mubr.f32.gmra.mrb[0].mxu0 %v577
      %v672 = vpop.f32.mrb[0].mxu0
      %v673 = vadd.f32 %v564, %v672
      %v674 = vpop.f32.mrb[0].mxu0
      %675 = vmatprep.mubr.f32.mxu0 0.0
      %676 = vmatmul.mubr.f32.gmra.mrb[0].mxu0 %v580
      %v677 = vpop.f32.mrb[0].mxu0
      %v678 = vadd.f32 %v564, %v677
      %v679 = vpop.f32.mrb[0].mxu0
      %680 = vmatprep.mubr.f32.mxu0 0.0
      %681 = vmatmul.mubr.f32.gmra.mrb[0].mxu0 %v583
      %v682 = vpop.f32.mrb[0].mxu0
      %v683 = vadd.f32 %v564, %v682
      %v684 = vpop.f32.mrb[0].mxu0
      %685 = vmatprep.mubr.f32.mxu0 0.0
      %686 = vmatmul.mubr.f32.gmra.mrb[0].mxu0 %v586
      %v687 = vpop.f32.mrb[0].mxu0
      %v688 = vadd.f32 %v564, %v687
      %v689 = vpop.f32.mrb[0].mxu0
      %690 = vmatprep.mubr.f32.mxu0 0.0
      %691 = vmatmul.mubr.f32.gmra.mrb[0].mxu0 %v589
      %v692 = vpop.f32.mrb[0].mxu0
      %v693 = vadd.f32 %v564, %v692
      %v694 = vpop.f32.mrb[0].mxu0
      %695 = vdwg.mxu0
      %v696 = vmax.f32 %v658, 0.0
      %v697 = vmax.f32 %v663, 0.0
      %v698 = vmax.f32 %v668, 0.0
      %v699 = vmax.f32 %v673, 0.0
      %v700 = vmax.f32 %v678, 0.0
      %v701 = vmax.f32 %v683, 0.0
      %v702 = vmax.f32 %v688, 0.0
      %v703 = vmax.f32 %v693, 0.0
      %v704 = vld [vmem:[%s7] sm:$0xff]
      %v705 = vld [vmem:[%s7 + $0x8] sm:$0xff]
      %v706 = vld [vmem:[%s7 + $0x10] sm:$0xff]
      %v707 = vld [vmem:[%s7 + $0x18] sm:$0xff]
      %v708 = vld [vmem:[%s8] sm:$0x1]
      %v710 = vlaneseq
      %v711 = vshrl.u32 %v710, 7
      %v712 = vsub.s32 0, %v711
      %v713 = vrot.slane %v708, %v712
      %v716 = vsel %vm566, %v696, 0
      %v719 = vsel %vm566, %v697, 0
      %v722 = vsel %vm566, %v698, 0
      %v725 = vsel %vm566, %v699, 0
      %v728 = vsel %vm566, %v700, 0
      %v731 = vsel %vm566, %v701, 0
      %v734 = vsel %vm566, %v702, 0
      %v737 = vsel %vm566, %v703, 0
      %739 = vmatprep.subr.mxu0 0.0
      %740 = vmatpush1.msra.mxu0 %v704
      %741 = vmatprep.subr.mxu0 0.0
      %742 = vmatpush1.msra.mxu0 %v705
      %743 = vmatprep.subr.mxu0 0.0
      %744 = vmatpush1.msra.mxu0 %v706
      %745 = vmatprep.subr.mxu0 0.0
      %746 = vmatpush1.msra.mxu0 %v707
      %747 = vmatprep.subr.mxu0 0.0
      %748 = vmatpush1.msra.mxu0 0.0
      %749 = vmatprep.subr.mxu0 0.0
      %750 = vmatpush1.msra.mxu0 0.0
      %751 = vmatprep.subr.mxu0 0.0
      %752 = vmatpush1.msra.mxu0 0.0
      %753 = vmatprep.subr.mxu0 0.0
      %754 = vmatpush1.msra.mxu0 0.0
      %755 = vmatprep.subr.mxu0 0.0
      %756 = vmatpush1.msra.mxu0 0.0
      %757 = vmatprep.subr.mxu0 0.0
      %758 = vmatpush1.msra.mxu0 0.0
      %759 = vmatprep.subr.mxu0 0.0
      %760 = vmatpush1.msra.mxu0 0.0
      %761 = vmatprep.subr.mxu0 0.0
      %762 = vmatpush1.msra.mxu0 0.0
      %763 = vmatprep.subr.mxu0 0.0
      %764 = vmatpush1.msra.mxu0 0.0
      %765 = vmatprep.subr.mxu0 0.0
      %766 = vmatpush1.msra.mxu0 0.0
      %767 = vmatprep.subr.mxu0 0.0
      %768 = vmatpush1.msra.mxu0 0.0
      %769 = vmatprep.subr.mxu0 0.0
      %770 = vmatpush1.msra.mxu0 0.0
      %771 = vmatprep.subr.mxu0 0.0
      %772 = vmatpush1.msra.mxu0 0.0
      %773 = vmatprep.subr.mxu0 0.0
      %774 = vmatpush1.msra.mxu0 0.0
      %775 = vmatprep.subr.mxu0 0.0
      %776 = vmatpush1.msra.mxu0 0.0
      %777 = vmatprep.subr.mxu0 0.0
      %778 = vmatpush1.msra.mxu0 0.0
      %779 = vmatprep.subr.mxu0 0.0
      %780 = vmatpush1.msra.mxu0 0.0
      %781 = vmatprep.subr.mxu0 0.0
      %782 = vmatpush1.msra.mxu0 0.0
      %783 = vmatprep.subr.mxu0 0.0
      %784 = vmatpush1.msra.mxu0 0.0
      %785 = vmatprep.subr.mxu0 0.0
      %786 = vmatpush1.msra.mxu0 0.0
      %787 = vmatprep.subr.mxu0 0.0
      %788 = vmatpush1.msra.mxu0 0.0
      %789 = vmatprep.subr.mxu0 0.0
      %790 = vmatpush1.msra.mxu0 0.0
      %791 = vmatprep.subr.mxu0 0.0
      %792 = vmatpush1.msra.mxu0 0.0
      %793 = vmatprep.subr.mxu0 0.0
      %794 = vmatpush1.msra.mxu0 0.0
      %795 = vmatprep.subr.mxu0 0.0
      %796 = vmatpush1.msra.mxu0 0.0
      %797 = vmatprep.subr.mxu0 0.0
      %798 = vmatpush1.msra.mxu0 0.0
      %799 = vmatprep.subr.mxu0 0.0
      %800 = vmatpush1.msra.mxu0 0.0
      %801 = vmatprep.subr.mxu0 0.0
      %802 = vmatpush1.msra.mxu0 0.0
      %803 = vmatprep.mubr.f32.mxu0 0.0
      %804 = vmatmul.mubr.f32.gmra.mrb[0].mxu0 %v716
      %v805 = vpop.f32.mrb[0].mxu0
      %v806 = vadd.f32 %v713, %v805
      %v807 = vpop.f32.mrb[0].mxu0
      %808 = vmatprep.mubr.f32.mxu0 0.0
      %809 = vmatmul.mubr.f32.gmra.mrb[0].mxu0 %v719
      %v810 = vpop.f32.mrb[0].mxu0
      %v811 = vadd.f32 %v713, %v810
      %v812 = vpop.f32.mrb[0].mxu0
      %813 = vmatprep.mubr.f32.mxu0 0.0
      %814 = vmatmul.mubr.f32.gmra.mrb[0].mxu0 %v722
      %v815 = vpop.f32.mrb[0].mxu0
      %v816 = vadd.f32 %v713, %v815
      %v817 = vpop.f32.mrb[0].mxu0
      %818 = vmatprep.mubr.f32.mxu0 0.0
      %819 = vmatmul.mubr.f32.gmra.mrb[0].mxu0 %v725
      %v820 = vpop.f32.mrb[0].mxu0
      %v821 = vadd.f32 %v713, %v820
      %v822 = vpop.f32.mrb[0].mxu0
      %823 = vmatprep.mubr.f32.mxu0 0.0
      %824 = vmatmul.mubr.f32.gmra.mrb[0].mxu0 %v728
      %v825 = vpop.f32.mrb[0].mxu0
      %v826 = vadd.f32 %v713, %v825
      %v827 = vpop.f32.mrb[0].mxu0
      %828 = vmatprep.mubr.f32.mxu0 0.0
      %829 = vmatmul.mubr.f32.gmra.mrb[0].mxu0 %v731
      %v830 = vpop.f32.mrb[0].mxu0
      %v831 = vadd.f32 %v713, %v830
      %v832 = vpop.f32.mrb[0].mxu0
      %833 = vmatprep.mubr.f32.mxu0 0.0
      %834 = vmatmul.mubr.f32.gmra.mrb[0].mxu0 %v734
      %v835 = vpop.f32.mrb[0].mxu0
      %v836 = vadd.f32 %v713, %v835
      %v837 = vpop.f32.mrb[0].mxu0
      %838 = vmatprep.mubr.f32.mxu0 0.0
      %839 = vmatmul.mubr.f32.gmra.mrb[0].mxu0 %v737
      %v840 = vpop.f32.mrb[0].mxu0
      %v841 = vadd.f32 %v713, %v840
      %v842 = vpop.f32.mrb[0].mxu0
      %843 = vdwg.mxu0
      %v844 = vmul.f32 %v806, 0.17677669
      %v845 = vmul.f32 %v811, 0.17677669
      %v846 = vmul.f32 %v816, 0.17677669
      %v847 = vmul.f32 %v821, 0.17677669
      %v848 = vmul.f32 %v826, 0.17677669
      %v849 = vmul.f32 %v831, 0.17677669
      %v850 = vmul.f32 %v836, 0.17677669
      %v851 = vmul.f32 %v841, 0.17677669
      %v852 = vsel %vm566, %v844, -inf
      %v853 = vrot.slane %v852, 4
      %v854 = vmax.f32 %v852, %v853
      %v855 = vrot.slane %v854, 2
      %v856 = vmax.f32 %v854, %v855
      %v857 = vrot.slane %v856, 1
      %v858 = vmax.f32 %v856, %v857
      %v859 = vsel %vm566, %v845, -inf
      %v860 = vrot.slane %v859, 4
      %v861 = vmax.f32 %v859, %v860
      %v862 = vrot.slane %v861, 2
      %v863 = vmax.f32 %v861, %v862
      %v864 = vrot.slane %v863, 1
      %v865 = vmax.f32 %v863, %v864
      %v866 = vsel %vm566, %v846, -inf
      %v867 = vrot.slane %v866, 4
      %v868 = vmax.f32 %v866, %v867
      %v869 = vrot.slane %v868, 2
      %v870 = vmax.f32 %v868, %v869
      %v871 = vrot.slane %v870, 1
      %v872 = vmax.f32 %v870, %v871
      %v873 = vsel %vm566, %v847, -inf
      %v874 = vrot.slane %v873, 4
      %v875 = vmax.f32 %v873, %v874
      %v876 = vrot.slane %v875, 2
      %v877 = vmax.f32 %v875, %v876
      %v878 = vrot.slane %v877, 1
      %v879 = vmax.f32 %v877, %v878
      %v880 = vsel %vm566, %v848, -inf
      %v881 = vrot.slane %v880, 4
      %v882 = vmax.f32 %v880, %v881
      %v883 = vrot.slane %v882, 2
      %v884 = vmax.f32 %v882, %v883
      %v885 = vrot.slane %v884, 1
      %v886 = vmax.f32 %v884, %v885
      %v887 = vsel %vm566, %v849, -inf
      %v888 = vrot.slane %v887, 4
      %v889 = vmax.f32 %v887, %v888
      %v890 = vrot.slane %v889, 2
      %v891 = vmax.f32 %v889, %v890
      %v892 = vrot.slane %v891, 1
      %v893 = vmax.f32 %v891, %v892
      %v894 = vsel %vm566, %v850, -inf
      %v895 = vrot.slane %v894, 4
      %v896 = vmax.f32 %v894, %v895
      %v897 = vrot.slane %v896, 2
      %v898 = vmax.f32 %v896, %v897
      %v899 = vrot.slane %v898, 1
      %v900 = vmax.f32 %v898, %v899
      %v901 = vsel %vm566, %v851, -inf
      %v902 = vrot.slane %v901, 4
      %v903 = vmax.f32 %v901, %v902
      %v904 = vrot.slane %v903, 2
      %v905 = vmax.f32 %v903, %v904
      %v906 = vrot.slane %v905, 1
      %v907 = vmax.f32 %v905, %v906
      %v908 = vsub.f32 %v844, %v858
      %v909 = vsub.f32 %v845, %v865
      %v910 = vsub.f32 %v846, %v872
      %v911 = vsub.f32 %v847, %v879
      %v912 = vsub.f32 %v848, %v886
      %v913 = vsub.f32 %v849, %v893
      %v914 = vsub.f32 %v850, %v900
      %v915 = vsub.f32 %v851, %v907
      %v916 = vmul.f32 %v908, 1.442695
      %v917 = vpow.pop %v916
      %v918 = vmul.f32 %v909, 1.442695
      %v919 = vpow.pop %v918
      %v920 = vmul.f32 %v910, 1.442695
      %v921 = vpow.pop %v920
      %v922 = vmul.f32 %v911, 1.442695
      %v923 = vpow.pop %v922
      %v924 = vmul.f32 %v912, 1.442695
      %v925 = vpow.pop %v924
      %v926 = vmul.f32 %v913, 1.442695
      %v927 = vpow.pop %v926
      %v928 = vmul.f32 %v914, 1.442695
      %v929 = vpow.pop %v928
      %v930 = vmul.f32 %v915, 1.442695
      %v931 = vpow.pop %v930
      %v932 = vsel %vm566, %v917, 0.0
      %v933 = vrot.slane %v932, 4
      %v934 = vadd.f32 %v932, %v933
      %v935 = vrot.slane %v934, 2
      %v936 = vadd.f32 %v934, %v935
      %v937 = vrot.slane %v936, 1
      %v938 = vadd.f32 %v936, %v937
      %v939 = vsel %vm566, %v919, 0.0
      %v940 = vrot.slane %v939, 4
      %v941 = vadd.f32 %v939, %v940
      %v942 = vrot.slane %v941, 2
      %v943 = vadd.f32 %v941, %v942
      %v944 = vrot.slane %v943, 1
      %v945 = vadd.f32 %v943, %v944
      %v946 = vsel %vm566, %v921, 0.0
      %v947 = vrot.slane %v946, 4
      %v948 = vadd.f32 %v946, %v947
      %v949 = vrot.slane %v948, 2
      %v950 = vadd.f32 %v948, %v949
      %v951 = vrot.slane %v950, 1
      %v952 = vadd.f32 %v950, %v951
      %v953 = vsel %vm566, %v923, 0.0
      %v954 = vrot.slane %v953, 4
      %v955 = vadd.f32 %v953, %v954
      %v956 = vrot.slane %v955, 2
      %v957 = vadd.f32 %v955, %v956
      %v958 = vrot.slane %v957, 1
      %v959 = vadd.f32 %v957, %v958
      %v960 = vsel %vm566, %v925, 0.0
      %v961 = vrot.slane %v960, 4
      %v962 = vadd.f32 %v960, %v961
      %v963 = vrot.slane %v962, 2
      %v964 = vadd.f32 %v962, %v963
      %v965 = vrot.slane %v964, 1
      %v966 = vadd.f32 %v964, %v965
      %v967 = vsel %vm566, %v927, 0.0
      %v968 = vrot.slane %v967, 4
      %v969 = vadd.f32 %v967, %v968
      %v970 = vrot.slane %v969, 2
      %v971 = vadd.f32 %v969, %v970
      %v972 = vrot.slane %v971, 1
      %v973 = vadd.f32 %v971, %v972
      %v974 = vsel %vm566, %v929, 0.0
      %v975 = vrot.slane %v974, 4
      %v976 = vadd.f32 %v974, %v975
      %v977 = vrot.slane %v976, 2
      %v978 = vadd.f32 %v976, %v977
      %v979 = vrot.slane %v978, 1
      %v980 = vadd.f32 %v978, %v979
      %v981 = vsel %vm566, %v931, 0.0
      %v982 = vrot.slane %v981, 4
      %v983 = vadd.f32 %v981, %v982
      %v984 = vrot.slane %v983, 2
      %v985 = vadd.f32 %v983, %v984
      %v986 = vrot.slane %v985, 1
      %v987 = vadd.f32 %v985, %v986
      %v988 = vrcp.pop %v938
      %v989 = vmul.f32 %v917, %v988
      %v990 = vrcp.pop %v945
      %v991 = vmul.f32 %v919, %v990
      %v992 = vrcp.pop %v952
      %v993 = vmul.f32 %v921, %v992
      %v994 = vrcp.pop %v959
      %v995 = vmul.f32 %v923, %v994
      %v996 = vrcp.pop %v966
      %v997 = vmul.f32 %v925, %v996
      %v998 = vrcp.pop %v973
      %v999 = vmul.f32 %v927, %v998
      %v1000 = vrcp.pop %v980
      %v1001 = vmul.f32 %v929, %v1000
      %v1002 = vrcp.pop %v987
      %v1003 = vmul.f32 %v931, %v1002
      %v1004 = vld [vmem:[%s457] sm:$0xff]
      %v1005 = vld [vmem:[%s457 + $0x8] sm:$0xff]
      %v1006 = vld [vmem:[%s457 + $0x10] sm:$0xff]
      %v1007 = vld [vmem:[%s457 + $0x18] sm:$0xff]
      %v1008 = vld [vmem:[%s457 + $0x20] sm:$0xff]
      %v1009 = vld [vmem:[%s457 + $0x28] sm:$0xff]
      %v1010 = vld [vmem:[%s457 + $0x30] sm:$0xff]
      %v1011 = vld [vmem:[%s457 + $0x38] sm:$0xff]
      %v1012 = vadd.f32 %v1004, %v467
      %v1013 = vadd.f32 %v1005, %v468
      %v1014 = vadd.f32 %v1006, %v469
      %v1015 = vadd.f32 %v1007, %v470
      %v1016 = vadd.f32 %v1008, %v471
      %v1017 = vadd.f32 %v1009, %v472
      %v1018 = vadd.f32 %v1010, %v473
      %v1019 = vadd.f32 %v1011, %v474
      %v1020 = vmul.f32 %v989, %v1012
      %v1021 = vmul.f32 %v991, %v1013
      %v1022 = vmul.f32 %v993, %v1014
      %v1023 = vmul.f32 %v995, %v1015
      %v1024 = vmul.f32 %v997, %v1016
      %v1025 = vmul.f32 %v999, %v1017
      %v1026 = vmul.f32 %v1001, %v1018
      %v1027 = vmul.f32 %v1003, %v1019
      %v1028 = vsel %vm566, %v1020, 0.0
      %v1029 = vrot.slane %v1028, 4
      %v1030 = vadd.f32 %v1028, %v1029
      %v1031 = vrot.slane %v1030, 2
      %v1032 = vadd.f32 %v1030, %v1031
      %v1033 = vrot.slane %v1032, 1
      %v1034 = vadd.f32 %v1032, %v1033
      %v1035 = vsel %vm566, %v1021, 0.0
      %v1036 = vrot.slane %v1035, 4
      %v1037 = vadd.f32 %v1035, %v1036
      %v1038 = vrot.slane %v1037, 2
      %v1039 = vadd.f32 %v1037, %v1038
      %v1040 = vrot.slane %v1039, 1
      %v1041 = vadd.f32 %v1039, %v1040
      %v1042 = vsel %vm566, %v1022, 0.0
      %v1043 = vrot.slane %v1042, 4
      %v1044 = vadd.f32 %v1042, %v1043
      %v1045 = vrot.slane %v1044, 2
      %v1046 = vadd.f32 %v1044, %v1045
      %v1047 = vrot.slane %v1046, 1
      %v1048 = vadd.f32 %v1046, %v1047
      %v1049 = vsel %vm566, %v1023, 0.0
      %v1050 = vrot.slane %v1049, 4
      %v1051 = vadd.f32 %v1049, %v1050
      %v1052 = vrot.slane %v1051, 2
      %v1053 = vadd.f32 %v1051, %v1052
      %v1054 = vrot.slane %v1053, 1
      %v1055 = vadd.f32 %v1053, %v1054
      %v1056 = vsel %vm566, %v1024, 0.0
      %v1057 = vrot.slane %v1056, 4
      %v1058 = vadd.f32 %v1056, %v1057
      %v1059 = vrot.slane %v1058, 2
      %v1060 = vadd.f32 %v1058, %v1059
      %v1061 = vrot.slane %v1060, 1
      %v1062 = vadd.f32 %v1060, %v1061
      %v1063 = vsel %vm566, %v1025, 0.0
      %v1064 = vrot.slane %v1063, 4
      %v1065 = vadd.f32 %v1063, %v1064
      %v1066 = vrot.slane %v1065, 2
      %v1067 = vadd.f32 %v1065, %v1066
      %v1068 = vrot.slane %v1067, 1
      %v1069 = vadd.f32 %v1067, %v1068
      %v1070 = vsel %vm566, %v1026, 0.0
      %v1071 = vrot.slane %v1070, 4
      %v1072 = vadd.f32 %v1070, %v1071
      %v1073 = vrot.slane %v1072, 2
      %v1074 = vadd.f32 %v1072, %v1073
      %v1075 = vrot.slane %v1074, 1
      %v1076 = vadd.f32 %v1074, %v1075
      %v1077 = vsel %vm566, %v1027, 0.0
      %v1078 = vrot.slane %v1077, 4
      %v1079 = vadd.f32 %v1077, %v1078
      %v1080 = vrot.slane %v1079, 2
      %v1081 = vadd.f32 %v1079, %v1080
      %v1082 = vrot.slane %v1081, 1
      %v1083 = vadd.f32 %v1081, %v1082
      %v1084 = vld [vmem:[%s9] sm:$0xff]
      %v1085 = vld [vmem:[%s9 + $0x8] sm:$0xff]
      %v1086 = vld [vmem:[%s9 + $0x10] sm:$0xff]
      %v1087 = vld [vmem:[%s9 + $0x18] sm:$0xff]
      %v1088 = vld [vmem:[%s10] sm:$0x1]
      %v1090 = vlaneseq
      %v1091 = vshrl.u32 %v1090, 7
      %v1092 = vsub.s32 0, %v1091
      %v1093 = vrot.slane %v1088, %v1092
      %vm1103 = vcmask 1041409
      %v1104 = vsel %vm1103, %v1041, %v1034
      %vm1105 = vcmask 1042434
      %v1106 = vsel %vm1105, %v1048, %v1104
      %vm1107 = vcmask 1043459
      %v1108 = vsel %vm1107, %v1055, %v1106
      %vm1109 = vcmask 1044484
      %v1110 = vsel %vm1109, %v1062, %v1108
      %vm1111 = vcmask 1045509
      %v1112 = vsel %vm1111, %v1069, %v1110
      %vm1113 = vcmask 1046534
      %v1114 = vsel %vm1113, %v1076, %v1112
      %vm1115 = vcmask 1047559
      %v1116 = vsel %vm1115, %v1083, %v1114
      %v1117 = vsel %vm566, %v1116, 0
      %1119 = vmatprep.subr.mxu0 0.0
      %1120 = vmatpush1.msra.mxu0 %v1084
      %1121 = vmatprep.subr.mxu0 0.0
      %1122 = vmatpush1.msra.mxu0 %v1085
      %1123 = vmatprep.subr.mxu0 0.0
      %1124 = vmatpush1.msra.mxu0 %v1086
      %1125 = vmatprep.subr.mxu0 0.0
      %1126 = vmatpush1.msra.mxu0 %v1087
      %1127 = vmatprep.subr.mxu0 0.0
      %1128 = vmatpush1.msra.mxu0 0.0
      %1129 = vmatprep.subr.mxu0 0.0
      %1130 = vmatpush1.msra.mxu0 0.0
      %1131 = vmatprep.subr.mxu0 0.0
      %1132 = vmatpush1.msra.mxu0 0.0
      %1133 = vmatprep.subr.mxu0 0.0
      %1134 = vmatpush1.msra.mxu0 0.0
      %1135 = vmatprep.subr.mxu0 0.0
      %1136 = vmatpush1.msra.mxu0 0.0
      %1137 = vmatprep.subr.mxu0 0.0
      %1138 = vmatpush1.msra.mxu0 0.0
      %1139 = vmatprep.subr.mxu0 0.0
      %1140 = vmatpush1.msra.mxu0 0.0
      %1141 = vmatprep.subr.mxu0 0.0
      %1142 = vmatpush1.msra.mxu0 0.0
      %1143 = vmatprep.subr.mxu0 0.0
      %1144 = vmatpush1.msra.mxu0 0.0
      %1145 = vmatprep.subr.mxu0 0.0
      %1146 = vmatpush1.msra.mxu0 0.0
      %1147 = vmatprep.subr.mxu0 0.0
      %1148 = vmatpush1.msra.mxu0 0.0
      %1149 = vmatprep.subr.mxu0 0.0
      %1150 = vmatpush1.msra.mxu0 0.0
      %1151 = vmatprep.subr.mxu0 0.0
      %1152 = vmatpush1.msra.mxu0 0.0
      %1153 = vmatprep.subr.mxu0 0.0
      %1154 = vmatpush1.msra.mxu0 0.0
      %1155 = vmatprep.subr.mxu0 0.0
      %1156 = vmatpush1.msra.mxu0 0.0
      %1157 = vmatprep.subr.mxu0 0.0
      %1158 = vmatpush1.msra.mxu0 0.0
      %1159 = vmatprep.subr.mxu0 0.0
      %1160 = vmatpush1.msra.mxu0 0.0
      %1161 = vmatprep.subr.mxu0 0.0
      %1162 = vmatpush1.msra.mxu0 0.0
      %1163 = vmatprep.subr.mxu0 0.0
      %1164 = vmatpush1.msra.mxu0 0.0
      %1165 = vmatprep.subr.mxu0 0.0
      %1166 = vmatpush1.msra.mxu0 0.0
      %1167 = vmatprep.subr.mxu0 0.0
      %1168 = vmatpush1.msra.mxu0 0.0
      %1169 = vmatprep.subr.mxu0 0.0
      %1170 = vmatpush1.msra.mxu0 0.0
      %1171 = vmatprep.subr.mxu0 0.0
      %1172 = vmatpush1.msra.mxu0 0.0
      %1173 = vmatprep.subr.mxu0 0.0
      %1174 = vmatpush1.msra.mxu0 0.0
      %1175 = vmatprep.subr.mxu0 0.0
      %1176 = vmatpush1.msra.mxu0 0.0
      %1177 = vmatprep.subr.mxu0 0.0
      %1178 = vmatpush1.msra.mxu0 0.0
      %1179 = vmatprep.subr.mxu0 0.0
      %1180 = vmatpush1.msra.mxu0 0.0
      %1181 = vmatprep.subr.mxu0 0.0
      %1182 = vmatpush1.msra.mxu0 0.0
      %1183 = vmatprep.mubr.f32.mxu0 0.0
      %1184 = vmatmul.mubr.f32.gmra.mrb[0].mxu0 %v1117
      %v1185 = vpop.f32.mrb[0].mxu0
      %v1186 = vadd.f32 %v1093, %v1185
      %v1187 = vpop.f32.mrb[0].mxu0
      %1188 = vdwg.mxu0
      %v1189 = vld [vmem:[%s462] sm:$0xff]
      %v1190 = vadd.f32 %v1186, %v1189
      %vm1191 = vcmask 523264
      %1192 = vst.msk [vmem:[%s466] sm:$0xff] %vm1191, %v1190
      %p1193 = scmp.lt.s32.totalorder %s22, 1
      %s1194 = scalar_select %p1193, %s22, 1
      %s1195 = smul.addr %s1194, 8
      %s1196 = scalar_lea.vmem %s11, %s1195
      // Predicated region
      $region65: #{point_transformer_cls.20} parent=63 // pred_check
        %p1197 = pneg %p296
      $region66: #{point_transformer_cls.20} parent=63 // pred_check_branch
        %1199 = sbr.rel (%p1197) target = $region68
      $region67: #{point_transformer_cls.20} parent=63 // pred_region
        _
      $region68: #{point_transformer_cls.20} parent=63 // pred_fallthru
        _
    $region64: #{point_transformer_cls.20} parent=5 // pred_fallthru
      _
    %p1200 = scmp.le.s32.totalorder 2, %s17
    // Predicated region
    $region69: #{point_transformer_cls.20} parent=5 // pred_check
      %p1201 = pneg %p1200
    $region70: #{point_transformer_cls.20} parent=5 // pred_check_branch
      %1203 = sbr.rel (%p1201) target = $region72
    $region71: #{point_transformer_cls.20} parent=5 // pred_region
      %s1204 = ssub.s32 %s17, 2
      // Predicated region
      $region73: #{point_transformer_cls.20} parent=71 // pred_check
        %p1205 = pneg %p302
      $region74: #{point_transformer_cls.20} parent=71 // pred_check_branch
        %1207 = sbr.rel (%p1205) target = $region76
      $region75: #{point_transformer_cls.20} parent=71 // pred_region
        %p1208 = scmp.lt.s32.totalorder %s23, 1
        %s1209 = scalar_select %p1208, %s23, 1
        %s1210 = smul.addr %s1209, 8
        %s1211 = scalar_lea.vmem %s11, %s1210
      $region76: #{point_transformer_cls.20} parent=71 // pred_fallthru
        _
    $region72: #{point_transformer_cls.20} parent=5 // pred_fallthru
      _
  $region6: #{point_transformer_cls.20} parent=0 // loop_footer
    %s21 = sadd.s32 1, %s17
  $region7: #{point_transformer_cls.20} parent=0 // loop_footer_branch
    %16 = sbr.rel target = $region3
  $region8: #{point_transformer_cls.20} parent=0 // loop_exit
    _

// kernel: point_transformer_cls.22
$region0: #{point_transformer_cls.22}
  #allocation0 [shape = 'u32[]', space=smem, size = 0x4, offset = 0x4, fixed_abs, tag = 'smem constant byte address 0x4 - core index']
  #allocation1 [shape = 'u32[144,128]{1,0:T(1,128)}', space=vmem, size = 0x12000, scoped, tag = 'internal scratch']
  %s0 = inlined_call_operand.vmem [shape: f32[8,128], index: 0, kind: input, shape index: {}]
  %s1 = inlined_call_operand.vmem [shape: f32[128,32], index: 1, kind: input, shape index: {}]
  %s2 = inlined_call_operand.vmem [shape: f32[1,32], index: 2, kind: input, shape index: {}]
  %s3 = inlined_call_operand.vmem [shape: f32[32,96], index: 3, kind: input, shape index: {}]
  %s4 = inlined_call_operand.vmem [shape: f32[8,96], index: 4, kind: output, shape index: {}]
  %s5 = sld [smem:[#allocation0]]
  $region26: #{point_transformer_cls.22} parent=0
    _
  %s7 = ssub.s32 1, %s5
  %s8 = scalar_select 0, %s7, %s5
  // Predicated region
  $region2: #{point_transformer_cls.22} parent=0 // pred_check
    _
  $region3: #{point_transformer_cls.22} parent=0 // pred_check_branch
    %10 = sbr.rel (0) target = $region5
  $region4: #{point_transformer_cls.22} parent=0 // pred_region
    _
  $region5: #{point_transformer_cls.22} parent=0 // pred_fallthru
    _
  // Predicated region
  $region6: #{point_transformer_cls.22} parent=0 // pred_check
    _
  $region7: #{point_transformer_cls.22} parent=0 // pred_check_branch
    %12 = sbr.rel (0) target = $region9
  $region8: #{point_transformer_cls.22} parent=0 // pred_region
    _
  $region9: #{point_transformer_cls.22} parent=0 // pred_fallthru
    _
  // Predicated region
  $region10: #{point_transformer_cls.22} parent=0 // pred_check
    _
  $region11: #{point_transformer_cls.22} parent=0 // pred_check_branch
    %14 = sbr.rel (0) target = $region13
  $region12: #{point_transformer_cls.22} parent=0 // pred_region
    _
  $region13: #{point_transformer_cls.22} parent=0 // pred_fallthru
    _
  // Predicated region
  $region14: #{point_transformer_cls.22} parent=0 // pred_check
    _
  $region15: #{point_transformer_cls.22} parent=0 // pred_check_branch
    %16 = sbr.rel (0) target = $region17
  $region16: #{point_transformer_cls.22} parent=0 // pred_region
    _
  $region17: #{point_transformer_cls.22} parent=0 // pred_fallthru
    _
  %v17 = vld [vmem:[%s0] sm:$0xff]
  %v18 = vld [vmem:[%s1] sm:$0xff]
  %v19 = vld [vmem:[%s1 + $0x8] sm:$0xff]
  %v20 = vld [vmem:[%s1 + $0x10] sm:$0xff]
  %v21 = vld [vmem:[%s1 + $0x18] sm:$0xff]
  %v22 = vld [vmem:[%s1 + $0x20] sm:$0xff]
  %v23 = vld [vmem:[%s1 + $0x28] sm:$0xff]
  %v24 = vld [vmem:[%s1 + $0x30] sm:$0xff]
  %v25 = vld [vmem:[%s1 + $0x38] sm:$0xff]
  %v26 = vld [vmem:[%s1 + $0x40] sm:$0xff]
  %v27 = vld [vmem:[%s1 + $0x48] sm:$0xff]
  %v28 = vld [vmem:[%s1 + $0x50] sm:$0xff]
  %v29 = vld [vmem:[%s1 + $0x58] sm:$0xff]
  %v30 = vld [vmem:[%s1 + $0x60] sm:$0xff]
  %v31 = vld [vmem:[%s1 + $0x68] sm:$0xff]
  %v32 = vld [vmem:[%s1 + $0x70] sm:$0xff]
  %v33 = vld [vmem:[%s1 + $0x78] sm:$0xff]
  %v34 = vld [vmem:[%s2] sm:$0x1]
  %v36 = vlaneseq
  %v37 = vshrl.u32 %v36, 7
  %v38 = vsub.s32 0, %v37
  %v39 = vrot.slane %v34, %v38
  %41 = vmatprep.subr.mxu0 0.0
  %42 = vmatpush1.msra.mxu0 %v18
  %43 = vmatprep.subr.mxu0 0.0
  %44 = vmatpush1.msra.mxu0 %v19
  %45 = vmatprep.subr.mxu0 0.0
  %46 = vmatpush1.msra.mxu0 %v20
  %47 = vmatprep.subr.mxu0 0.0
  %48 = vmatpush1.msra.mxu0 %v21
  %49 = vmatprep.subr.mxu0 0.0
  %50 = vmatpush1.msra.mxu0 %v22
  %51 = vmatprep.subr.mxu0 0.0
  %52 = vmatpush1.msra.mxu0 %v23
  %53 = vmatprep.subr.mxu0 0.0
  %54 = vmatpush1.msra.mxu0 %v24
  %55 = vmatprep.subr.mxu0 0.0
  %56 = vmatpush1.msra.mxu0 %v25
  %57 = vmatprep.subr.mxu0 0.0
  %58 = vmatpush1.msra.mxu0 %v26
  %59 = vmatprep.subr.mxu0 0.0
  %60 = vmatpush1.msra.mxu0 %v27
  %61 = vmatprep.subr.mxu0 0.0
  %62 = vmatpush1.msra.mxu0 %v28
  %63 = vmatprep.subr.mxu0 0.0
  %64 = vmatpush1.msra.mxu0 %v29
  %65 = vmatprep.subr.mxu0 0.0
  %66 = vmatpush1.msra.mxu0 %v30
  %67 = vmatprep.subr.mxu0 0.0
  %68 = vmatpush1.msra.mxu0 %v31
  %69 = vmatprep.subr.mxu0 0.0
  %70 = vmatpush1.msra.mxu0 %v32
  %71 = vmatprep.subr.mxu0 0.0
  %72 = vmatpush1.msra.mxu0 %v33
  %73 = vmatprep.subr.mxu0 0.0
  %74 = vmatpush1.msra.mxu0 0.0
  %75 = vmatprep.subr.mxu0 0.0
  %76 = vmatpush1.msra.mxu0 0.0
  %77 = vmatprep.subr.mxu0 0.0
  %78 = vmatpush1.msra.mxu0 0.0
  %79 = vmatprep.subr.mxu0 0.0
  %80 = vmatpush1.msra.mxu0 0.0
  %81 = vmatprep.subr.mxu0 0.0
  %82 = vmatpush1.msra.mxu0 0.0
  %83 = vmatprep.subr.mxu0 0.0
  %84 = vmatpush1.msra.mxu0 0.0
  %85 = vmatprep.subr.mxu0 0.0
  %86 = vmatpush1.msra.mxu0 0.0
  %87 = vmatprep.subr.mxu0 0.0
  %88 = vmatpush1.msra.mxu0 0.0
  %89 = vmatprep.subr.mxu0 0.0
  %90 = vmatpush1.msra.mxu0 0.0
  %91 = vmatprep.subr.mxu0 0.0
  %92 = vmatpush1.msra.mxu0 0.0
  %93 = vmatprep.subr.mxu0 0.0
  %94 = vmatpush1.msra.mxu0 0.0
  %95 = vmatprep.subr.mxu0 0.0
  %96 = vmatpush1.msra.mxu0 0.0
  %97 = vmatprep.subr.mxu0 0.0
  %98 = vmatpush1.msra.mxu0 0.0
  %99 = vmatprep.subr.mxu0 0.0
  %100 = vmatpush1.msra.mxu0 0.0
  %101 = vmatprep.subr.mxu0 0.0
  %102 = vmatpush1.msra.mxu0 0.0
  %103 = vmatprep.subr.mxu0 0.0
  %104 = vmatpush1.msra.mxu0 0.0
  %105 = vmatprep.mubr.f32.mxu0 0.0
  %106 = vmatmul.mubr.f32.gmra.mrb[0].mxu0 %v17
  %v107 = vpop.f32.mrb[0].mxu0
  %v108 = vadd.f32 %v39, %v107
  %v109 = vpop.f32.mrb[0].mxu0
  %110 = vdwg.mxu0
  %v111 = vld [vmem:[%s3] sm:$0xff]
  %v112 = vld [vmem:[%s3 + $0x8] sm:$0xff]
  %v113 = vld [vmem:[%s3 + $0x10] sm:$0xff]
  %v114 = vld [vmem:[%s3 + $0x18] sm:$0xff]
  %vm115 = vcmask 261120
  %v117 = vsel %vm115, %v108, 0
  %119 = vmatprep.subr.mxu0 0.0
  %120 = vmatpush1.msra.mxu0 %v111
  %121 = vmatprep.subr.mxu0 0.0
  %122 = vmatpush1.msra.mxu0 %v112
  %123 = vmatprep.subr.mxu0 0.0
  %124 = vmatpush1.msra.mxu0 %v113
  %125 = vmatprep.subr.mxu0 0.0
  %126 = vmatpush1.msra.mxu0 %v114
  %127 = vmatprep.subr.mxu0 0.0
  %128 = vmatpush1.msra.mxu0 0.0
  %129 = vmatprep.subr.mxu0 0.0
  %130 = vmatpush1.msra.mxu0 0.0
  %131 = vmatprep.subr.mxu0 0.0
  %132 = vmatpush1.msra.mxu0 0.0
  %133 = vmatprep.subr.mxu0 0.0
  %134 = vmatpush1.msra.mxu0 0.0
  %135 = vmatprep.subr.mxu0 0.0
  %136 = vmatpush1.msra.mxu0 0.0
  %137 = vmatprep.subr.mxu0 0.0
  %138 = vmatpush1.msra.mxu0 0.0
  %139 = vmatprep.subr.mxu0 0.0
  %140 = vmatpush1.msra.mxu0 0.0
  %141 = vmatprep.subr.mxu0 0.0
  %142 = vmatpush1.msra.mxu0 0.0
  %143 = vmatprep.subr.mxu0 0.0
  %144 = vmatpush1.msra.mxu0 0.0
  %145 = vmatprep.subr.mxu0 0.0
  %146 = vmatpush1.msra.mxu0 0.0
  %147 = vmatprep.subr.mxu0 0.0
  %148 = vmatpush1.msra.mxu0 0.0
  %149 = vmatprep.subr.mxu0 0.0
  %150 = vmatpush1.msra.mxu0 0.0
  %151 = vmatprep.subr.mxu0 0.0
  %152 = vmatpush1.msra.mxu0 0.0
  %153 = vmatprep.subr.mxu0 0.0
  %154 = vmatpush1.msra.mxu0 0.0
  %155 = vmatprep.subr.mxu0 0.0
  %156 = vmatpush1.msra.mxu0 0.0
  %157 = vmatprep.subr.mxu0 0.0
  %158 = vmatpush1.msra.mxu0 0.0
  %159 = vmatprep.subr.mxu0 0.0
  %160 = vmatpush1.msra.mxu0 0.0
  %161 = vmatprep.subr.mxu0 0.0
  %162 = vmatpush1.msra.mxu0 0.0
  %163 = vmatprep.subr.mxu0 0.0
  %164 = vmatpush1.msra.mxu0 0.0
  %165 = vmatprep.subr.mxu0 0.0
  %166 = vmatpush1.msra.mxu0 0.0
  %167 = vmatprep.subr.mxu0 0.0
  %168 = vmatpush1.msra.mxu0 0.0
  %169 = vmatprep.subr.mxu0 0.0
  %170 = vmatpush1.msra.mxu0 0.0
  %171 = vmatprep.subr.mxu0 0.0
  %172 = vmatpush1.msra.mxu0 0.0
  %173 = vmatprep.subr.mxu0 0.0
  %174 = vmatpush1.msra.mxu0 0.0
  %175 = vmatprep.subr.mxu0 0.0
  %176 = vmatpush1.msra.mxu0 0.0
  %177 = vmatprep.subr.mxu0 0.0
  %178 = vmatpush1.msra.mxu0 0.0
  %179 = vmatprep.subr.mxu0 0.0
  %180 = vmatpush1.msra.mxu0 0.0
  %181 = vmatprep.subr.mxu0 0.0
  %182 = vmatpush1.msra.mxu0 0.0
  %183 = vmatprep.mubr.f32.mxu0 0.0
  %184 = vmatmul.mubr.f32.gmra.mrb[0].mxu0 %v117
  %v185 = vpop.f32.mrb[0].mxu0
  %v186 = vadd.f32 0.0, %v185
  %v187 = vpop.f32.mrb[0].mxu0
  %188 = vdwg.mxu0
  %vm189 = vcmask 785408
  %190 = vst.msk [vmem:[%s4] sm:$0xff] %vm189, %v186
  // Predicated region
  $region18: #{point_transformer_cls.22} parent=0 // pred_check
    _
  $region19: #{point_transformer_cls.22} parent=0 // pred_check_branch
    %192 = sbr.rel (0) target = $region21
  $region20: #{point_transformer_cls.22} parent=0 // pred_region
    _
  $region21: #{point_transformer_cls.22} parent=0 // pred_fallthru
    _
  // Predicated region
  $region22: #{point_transformer_cls.22} parent=0 // pred_check
    _
  $region23: #{point_transformer_cls.22} parent=0 // pred_check_branch
    %194 = sbr.rel (0) target = $region25
  $region24: #{point_transformer_cls.22} parent=0 // pred_region
    _
  $region25: #{point_transformer_cls.22} parent=0 // pred_fallthru
    _

// kernel: point_transformer_cls.21
$region0: #{point_transformer_cls.21}
  #allocation0 [shape = 'u32[]', space=smem, size = 0x4, offset = 0x4, fixed_abs, tag = 'smem constant byte address 0x4 - core index']
  #allocation1 [shape = 'u32[144,128]{1,0:T(1,128)}', space=vmem, size = 0x12000, scoped, tag = 'internal scratch']
  %s0 = inlined_call_operand.vmem [shape: f32[8,8,67], index: 0, kind: input, shape index: {}]
  %s1 = inlined_call_operand.vmem [shape: f32[67,128], index: 1, kind: input, shape index: {}]
  %s2 = inlined_call_operand.vmem [shape: f32[1,128], index: 2, kind: input, shape index: {}]
  %s3 = inlined_call_operand.vmem [shape: f32[128,128], index: 3, kind: input, shape index: {}]
  %s4 = inlined_call_operand.vmem [shape: f32[1,128], index: 4, kind: input, shape index: {}]
  %s5 = inlined_call_operand.vmem [shape: f32[8,128], index: 5, kind: output, shape index: {}]
  %s6 = sld [smem:[#allocation0]]
  $region30: #{point_transformer_cls.21} parent=0
    _
  %s8 = ssub.s32 1, %s6
  %s9 = scalar_select 0, %s8, %s6
  // Predicated region
  $region2: #{point_transformer_cls.21} parent=0 // pred_check
    _
  $region3: #{point_transformer_cls.21} parent=0 // pred_check_branch
    %11 = sbr.rel (0) target = $region5
  $region4: #{point_transformer_cls.21} parent=0 // pred_region
    _
  $region5: #{point_transformer_cls.21} parent=0 // pred_fallthru
    _
  // Predicated region
  $region6: #{point_transformer_cls.21} parent=0 // pred_check
    _
  $region7: #{point_transformer_cls.21} parent=0 // pred_check_branch
    %13 = sbr.rel (0) target = $region9
  $region8: #{point_transformer_cls.21} parent=0 // pred_region
    _
  $region9: #{point_transformer_cls.21} parent=0 // pred_fallthru
    _
  // Predicated region
  $region10: #{point_transformer_cls.21} parent=0 // pred_check
    _
  $region11: #{point_transformer_cls.21} parent=0 // pred_check_branch
    %15 = sbr.rel (0) target = $region13
  $region12: #{point_transformer_cls.21} parent=0 // pred_region
    _
  $region13: #{point_transformer_cls.21} parent=0 // pred_fallthru
    _
  // Predicated region
  $region14: #{point_transformer_cls.21} parent=0 // pred_check
    _
  $region15: #{point_transformer_cls.21} parent=0 // pred_check_branch
    %17 = sbr.rel (0) target = $region17
  $region16: #{point_transformer_cls.21} parent=0 // pred_region
    _
  $region17: #{point_transformer_cls.21} parent=0 // pred_fallthru
    _
  // Predicated region
  $region18: #{point_transformer_cls.21} parent=0 // pred_check
    _
  $region19: #{point_transformer_cls.21} parent=0 // pred_check_branch
    %19 = sbr.rel (0) target = $region21
  $region20: #{point_transformer_cls.21} parent=0 // pred_region
    _
  $region21: #{point_transformer_cls.21} parent=0 // pred_fallthru
    _
  %v20 = vld [vmem:[%s0] sm:$0xff]
  %v21 = vld [vmem:[%s0 + $0x8] sm:$0xff]
  %v22 = vld [vmem:[%s0 + $0x10] sm:$0xff]
  %v23 = vld [vmem:[%s0 + $0x18] sm:$0xff]
  %v24 = vld [vmem:[%s0 + $0x20] sm:$0xff]
  %v25 = vld [vmem:[%s0 + $0x28] sm:$0xff]
  %v26 = vld [vmem:[%s0 + $0x30] sm:$0xff]
  %v27 = vld [vmem:[%s0 + $0x38] sm:$0xff]
  %v28 = vld [vmem:[%s1] sm:$0xff]
  %v29 = vld [vmem:[%s1 + $0x8] sm:$0xff]
  %v30 = vld [vmem:[%s1 + $0x10] sm:$0xff]
  %v31 = vld [vmem:[%s1 + $0x18] sm:$0xff]
  %v32 = vld [vmem:[%s1 + $0x20] sm:$0xff]
  %v33 = vld [vmem:[%s1 + $0x28] sm:$0xff]
  %v34 = vld [vmem:[%s1 + $0x30] sm:$0xff]
  %v35 = vld [vmem:[%s1 + $0x38] sm:$0xff]
  %v36 = vld [vmem:[%s1 + $0x40] sm:$0x7]
  %v37 = vld [vmem:[%s2] sm:$0x1]
  %v39 = vlaneseq
  %v40 = vshrl.u32 %v39, 7
  %v41 = vsub.s32 0, %v40
  %v42 = vrot.slane %v37, %v41
  %vm44 = vcmask 547840
  %v46 = vsel %vm44, %v20, 0
  %v49 = vsel %vm44, %v21, 0
  %v52 = vsel %vm44, %v22, 0
  %v55 = vsel %vm44, %v23, 0
  %v58 = vsel %vm44, %v24, 0
  %v61 = vsel %vm44, %v25, 0
  %v64 = vsel %vm44, %v26, 0
  %v67 = vsel %vm44, %v27, 0
  %vm69 = vcmask 1042432
  %v71 = vsel %vm69, %v36, 0
  %73 = vmatprep.subr.mxu0 0.0
  %74 = vmatpush1.msra.mxu0 %v28
  %75 = vmatprep.subr.mxu0 0.0
  %76 = vmatpush1.msra.mxu0 %v29
  %77 = vmatprep.subr.mxu0 0.0
  %78 = vmatpush1.msra.mxu0 %v30
  %79 = vmatprep.subr.mxu0 0.0
  %80 = vmatpush1.msra.mxu0 %v31
  %81 = vmatprep.subr.mxu0 0.0
  %82 = vmatpush1.msra.mxu0 %v32
  %83 = vmatprep.subr.mxu0 0.0
  %84 = vmatpush1.msra.mxu0 %v33
  %85 = vmatprep.subr.mxu0 0.0
  %86 = vmatpush1.msra.mxu0 %v34
  %87 = vmatprep.subr.mxu0 0.0
  %88 = vmatpush1.msra.mxu0 %v35
  %89 = vmatprep.subr.mxu0 0.0
  %90 = vmatpush1.msra.mxu0 %v71
  %91 = vmatprep.subr.mxu0 0.0
  %92 = vmatpush1.msra.mxu0 0.0
  %93 = vmatprep.subr.mxu0 0.0
  %94 = vmatpush1.msra.mxu0 0.0
  %95 = vmatprep.subr.mxu0 0.0
  %96 = vmatpush1.msra.mxu0 0.0
  %97 = vmatprep.subr.mxu0 0.0
  %98 = vmatpush1.msra.mxu0 0.0
  %99 = vmatprep.subr.mxu0 0.0
  %100 = vmatpush1.msra.mxu0 0.0
  %101 = vmatprep.subr.mxu0 0.0
  %102 = vmatpush1.msra.mxu0 0.0
  %103 = vmatprep.subr.mxu0 0.0
  %104 = vmatpush1.msra.mxu0 0.0
  %105 = vmatprep.subr.mxu0 0.0
  %106 = vmatpush1.msra.mxu0 0.0
  %107 = vmatprep.subr.mxu0 0.0
  %108 = vmatpush1.msra.mxu0 0.0
  %109 = vmatprep.subr.mxu0 0.0
  %110 = vmatpush1.msra.mxu0 0.0
  %111 = vmatprep.subr.mxu0 0.0
  %112 = vmatpush1.msra.mxu0 0.0
  %113 = vmatprep.subr.mxu0 0.0
  %114 = vmatpush1.msra.mxu0 0.0
  %115 = vmatprep.subr.mxu0 0.0
  %116 = vmatpush1.msra.mxu0 0.0
  %117 = vmatprep.subr.mxu0 0.0
  %118 = vmatpush1.msra.mxu0 0.0
  %119 = vmatprep.subr.mxu0 0.0
  %120 = vmatpush1.msra.mxu0 0.0
  %121 = vmatprep.subr.mxu0 0.0
  %122 = vmatpush1.msra.mxu0 0.0
  %123 = vmatprep.subr.mxu0 0.0
  %124 = vmatpush1.msra.mxu0 0.0
  %125 = vmatprep.subr.mxu0 0.0
  %126 = vmatpush1.msra.mxu0 0.0
  %127 = vmatprep.subr.mxu0 0.0
  %128 = vmatpush1.msra.mxu0 0.0
  %129 = vmatprep.subr.mxu0 0.0
  %130 = vmatpush1.msra.mxu0 0.0
  %131 = vmatprep.subr.mxu0 0.0
  %132 = vmatpush1.msra.mxu0 0.0
  %133 = vmatprep.subr.mxu0 0.0
  %134 = vmatpush1.msra.mxu0 0.0
  %135 = vmatprep.subr.mxu0 0.0
  %136 = vmatpush1.msra.mxu0 0.0
  %137 = vmatprep.mubr.f32.mxu0 0.0
  %138 = vmatmul.mubr.f32.gmra.mrb[0].mxu0 %v46
  %v139 = vpop.f32.mrb[0].mxu0
  %v140 = vadd.f32 %v42, %v139
  %v141 = vpop.f32.mrb[0].mxu0
  %142 = vmatprep.mubr.f32.mxu0 0.0
  %143 = vmatmul.mubr.f32.gmra.mrb[0].mxu0 %v49
  %v144 = vpop.f32.mrb[0].mxu0
  %v145 = vadd.f32 %v42, %v144
  %v146 = vpop.f32.mrb[0].mxu0
  %147 = vmatprep.mubr.f32.mxu0 0.0
  %148 = vmatmul.mubr.f32.gmra.mrb[0].mxu0 %v52
  %v149 = vpop.f32.mrb[0].mxu0
  %v150 = vadd.f32 %v42, %v149
  %v151 = vpop.f32.mrb[0].mxu0
  %152 = vmatprep.mubr.f32.mxu0 0.0
  %153 = vmatmul.mubr.f32.gmra.mrb[0].mxu0 %v55
  %v154 = vpop.f32.mrb[0].mxu0
  %v155 = vadd.f32 %v42, %v154
  %v156 = vpop.f32.mrb[0].mxu0
  %157 = vmatprep.mubr.f32.mxu0 0.0
  %158 = vmatmul.mubr.f32.gmra.mrb[0].mxu0 %v58
  %v159 = vpop.f32.mrb[0].mxu0
  %v160 = vadd.f32 %v42, %v159
  %v161 = vpop.f32.mrb[0].mxu0
  %162 = vmatprep.mubr.f32.mxu0 0.0
  %163 = vmatmul.mubr.f32.gmra.mrb[0].mxu0 %v61
  %v164 = vpop.f32.mrb[0].mxu0
  %v165 = vadd.f32 %v42, %v164
  %v166 = vpop.f32.mrb[0].mxu0
  %167 = vmatprep.mubr.f32.mxu0 0.0
  %168 = vmatmul.mubr.f32.gmra.mrb[0].mxu0 %v64
  %v169 = vpop.f32.mrb[0].mxu0
  %v170 = vadd.f32 %v42, %v169
  %v171 = vpop.f32.mrb[0].mxu0
  %172 = vmatprep.mubr.f32.mxu0 0.0
  %173 = vmatmul.mubr.f32.gmra.mrb[0].mxu0 %v67
  %v174 = vpop.f32.mrb[0].mxu0
  %v175 = vadd.f32 %v42, %v174
  %v176 = vpop.f32.mrb[0].mxu0
  %177 = vdwg.mxu0
  %v178 = vmax.f32 %v140, 0.0
  %v179 = vmax.f32 %v145, 0.0
  %v180 = vmax.f32 %v150, 0.0
  %v181 = vmax.f32 %v155, 0.0
  %v182 = vmax.f32 %v160, 0.0
  %v183 = vmax.f32 %v165, 0.0
  %v184 = vmax.f32 %v170, 0.0
  %v185 = vmax.f32 %v175, 0.0
  %v186 = vld [vmem:[%s3] sm:$0xff]
  %v187 = vld [vmem:[%s3 + $0x8] sm:$0xff]
  %v188 = vld [vmem:[%s3 + $0x10] sm:$0xff]
  %v189 = vld [vmem:[%s3 + $0x18] sm:$0xff]
  %v190 = vld [vmem:[%s3 + $0x20] sm:$0xff]
  %v191 = vld [vmem:[%s3 + $0x28] sm:$0xff]
  %v192 = vld [vmem:[%s3 + $0x30] sm:$0xff]
  %v193 = vld [vmem:[%s3 + $0x38] sm:$0xff]
  %v194 = vld [vmem:[%s3 + $0x40] sm:$0xff]
  %v195 = vld [vmem:[%s3 + $0x48] sm:$0xff]
  %v196 = vld [vmem:[%s3 + $0x50] sm:$0xff]
  %v197 = vld [vmem:[%s3 + $0x58] sm:$0xff]
  %v198 = vld [vmem:[%s3 + $0x60] sm:$0xff]
  %v199 = vld [vmem:[%s3 + $0x68] sm:$0xff]
  %v200 = vld [vmem:[%s3 + $0x70] sm:$0xff]
  %v201 = vld [vmem:[%s3 + $0x78] sm:$0xff]
  %v202 = vld [vmem:[%s4] sm:$0x1]
  %v204 = vlaneseq
  %v205 = vshrl.u32 %v204, 7
  %v206 = vsub.s32 0, %v205
  %v207 = vrot.slane %v202, %v206
  %209 = vmatprep.subr.mxu0 0.0
  %210 = vmatpush1.msra.mxu0 %v186
  %211 = vmatprep.subr.mxu0 0.0
  %212 = vmatpush1.msra.mxu0 %v187
  %213 = vmatprep.subr.mxu0 0.0
  %214 = vmatpush1.msra.mxu0 %v188
  %215 = vmatprep.subr.mxu0 0.0
  %216 = vmatpush1.msra.mxu0 %v189
  %217 = vmatprep.subr.mxu0 0.0
  %218 = vmatpush1.msra.mxu0 %v190
  %219 = vmatprep.subr.mxu0 0.0
  %220 = vmatpush1.msra.mxu0 %v191
  %221 = vmatprep.subr.mxu0 0.0
  %222 = vmatpush1.msra.mxu0 %v192
  %223 = vmatprep.subr.mxu0 0.0
  %224 = vmatpush1.msra.mxu0 %v193
  %225 = vmatprep.subr.mxu0 0.0
  %226 = vmatpush1.msra.mxu0 %v194
  %227 = vmatprep.subr.mxu0 0.0
  %228 = vmatpush1.msra.mxu0 %v195
  %229 = vmatprep.subr.mxu0 0.0
  %230 = vmatpush1.msra.mxu0 %v196
  %231 = vmatprep.subr.mxu0 0.0
  %232 = vmatpush1.msra.mxu0 %v197
  %233 = vmatprep.subr.mxu0 0.0
  %234 = vmatpush1.msra.mxu0 %v198
  %235 = vmatprep.subr.mxu0 0.0
  %236 = vmatpush1.msra.mxu0 %v199
  %237 = vmatprep.subr.mxu0 0.0
  %238 = vmatpush1.msra.mxu0 %v200
  %239 = vmatprep.subr.mxu0 0.0
  %240 = vmatpush1.msra.mxu0 %v201
  %241 = vmatprep.subr.mxu0 0.0
  %242 = vmatpush1.msra.mxu0 0.0
  %243 = vmatprep.subr.mxu0 0.0
  %244 = vmatpush1.msra.mxu0 0.0
  %245 = vmatprep.subr.mxu0 0.0
  %246 = vmatpush1.msra.mxu0 0.0
  %247 = vmatprep.subr.mxu0 0.0
  %248 = vmatpush1.msra.mxu0 0.0
  %249 = vmatprep.subr.mxu0 0.0
  %250 = vmatpush1.msra.mxu0 0.0
  %251 = vmatprep.subr.mxu0 0.0
  %252 = vmatpush1.msra.mxu0 0.0
  %253 = vmatprep.subr.mxu0 0.0
  %254 = vmatpush1.msra.mxu0 0.0
  %255 = vmatprep.subr.mxu0 0.0
  %256 = vmatpush1.msra.mxu0 0.0
  %257 = vmatprep.subr.mxu0 0.0
  %258 = vmatpush1.msra.mxu0 0.0
  %259 = vmatprep.subr.mxu0 0.0
  %260 = vmatpush1.msra.mxu0 0.0
  %261 = vmatprep.subr.mxu0 0.0
  %262 = vmatpush1.msra.mxu0 0.0
  %263 = vmatprep.subr.mxu0 0.0
  %264 = vmatpush1.msra.mxu0 0.0
  %265 = vmatprep.subr.mxu0 0.0
  %266 = vmatpush1.msra.mxu0 0.0
  %267 = vmatprep.subr.mxu0 0.0
  %268 = vmatpush1.msra.mxu0 0.0
  %269 = vmatprep.subr.mxu0 0.0
  %270 = vmatpush1.msra.mxu0 0.0
  %271 = vmatprep.subr.mxu0 0.0
  %272 = vmatpush1.msra.mxu0 0.0
  %273 = vmatprep.mubr.f32.mxu0 0.0
  %274 = vmatmul.mubr.f32.gmra.mrb[0].mxu0 %v178
  %v275 = vpop.f32.mrb[0].mxu0
  %v276 = vadd.f32 %v207, %v275
  %v277 = vpop.f32.mrb[0].mxu0
  %278 = vmatprep.mubr.f32.mxu0 0.0
  %279 = vmatmul.mubr.f32.gmra.mrb[0].mxu0 %v179
  %v280 = vpop.f32.mrb[0].mxu0
  %v281 = vadd.f32 %v207, %v280
  %v282 = vpop.f32.mrb[0].mxu0
  %283 = vmatprep.mubr.f32.mxu0 0.0
  %284 = vmatmul.mubr.f32.gmra.mrb[0].mxu0 %v180
  %v285 = vpop.f32.mrb[0].mxu0
  %v286 = vadd.f32 %v207, %v285
  %v287 = vpop.f32.mrb[0].mxu0
  %288 = vmatprep.mubr.f32.mxu0 0.0
  %289 = vmatmul.mubr.f32.gmra.mrb[0].mxu0 %v181
  %v290 = vpop.f32.mrb[0].mxu0
  %v291 = vadd.f32 %v207, %v290
  %v292 = vpop.f32.mrb[0].mxu0
  %293 = vmatprep.mubr.f32.mxu0 0.0
  %294 = vmatmul.mubr.f32.gmra.mrb[0].mxu0 %v182
  %v295 = vpop.f32.mrb[0].mxu0
  %v296 = vadd.f32 %v207, %v295
  %v297 = vpop.f32.mrb[0].mxu0
  %298 = vmatprep.mubr.f32.mxu0 0.0
  %299 = vmatmul.mubr.f32.gmra.mrb[0].mxu0 %v183
  %v300 = vpop.f32.mrb[0].mxu0
  %v301 = vadd.f32 %v207, %v300
  %v302 = vpop.f32.mrb[0].mxu0
  %303 = vmatprep.mubr.f32.mxu0 0.0
  %304 = vmatmul.mubr.f32.gmra.mrb[0].mxu0 %v184
  %v305 = vpop.f32.mrb[0].mxu0
  %v306 = vadd.f32 %v207, %v305
  %v307 = vpop.f32.mrb[0].mxu0
  %308 = vmatprep.mubr.f32.mxu0 0.0
  %309 = vmatmul.mubr.f32.gmra.mrb[0].mxu0 %v185
  %v310 = vpop.f32.mrb[0].mxu0
  %v311 = vadd.f32 %v207, %v310
  %v312 = vpop.f32.mrb[0].mxu0
  %313 = vdwg.mxu0
  %v314 = vmax.f32 %v276, 0.0
  %v315 = vmax.f32 %v281, 0.0
  %v316 = vmax.f32 %v286, 0.0
  %v317 = vmax.f32 %v291, 0.0
  %v318 = vmax.f32 %v296, 0.0
  %v319 = vmax.f32 %v301, 0.0
  %v320 = vmax.f32 %v306, 0.0
  %v321 = vmax.f32 %v311, 0.0
  %v322 = vrot.slane %v314, 4
  %v323 = vmax.f32 %v314, %v322
  %v324 = vrot.slane %v323, 2
  %v325 = vmax.f32 %v323, %v324
  %v326 = vrot.slane %v325, 1
  %v327 = vmax.f32 %v325, %v326
  %v328 = vrot.slane %v315, 4
  %v329 = vmax.f32 %v315, %v328
  %v330 = vrot.slane %v329, 2
  %v331 = vmax.f32 %v329, %v330
  %v332 = vrot.slane %v331, 1
  %v333 = vmax.f32 %v331, %v332
  %v334 = vrot.slane %v316, 4
  %v335 = vmax.f32 %v316, %v334
  %v336 = vrot.slane %v335, 2
  %v337 = vmax.f32 %v335, %v336
  %v338 = vrot.slane %v337, 1
  %v339 = vmax.f32 %v337, %v338
  %v340 = vrot.slane %v317, 4
  %v341 = vmax.f32 %v317, %v340
  %v342 = vrot.slane %v341, 2
  %v343 = vmax.f32 %v341, %v342
  %v344 = vrot.slane %v343, 1
  %v345 = vmax.f32 %v343, %v344
  %v346 = vrot.slane %v318, 4
  %v347 = vmax.f32 %v318, %v346
  %v348 = vrot.slane %v347, 2
  %v349 = vmax.f32 %v347, %v348
  %v350 = vrot.slane %v349, 1
  %v351 = vmax.f32 %v349, %v350
  %v352 = vrot.slane %v319, 4
  %v353 = vmax.f32 %v319, %v352
  %v354 = vrot.slane %v353, 2
  %v355 = vmax.f32 %v353, %v354
  %v356 = vrot.slane %v355, 1
  %v357 = vmax.f32 %v355, %v356
  %v358 = vrot.slane %v320, 4
  %v359 = vmax.f32 %v320, %v358
  %v360 = vrot.slane %v359, 2
  %v361 = vmax.f32 %v359, %v360
  %v362 = vrot.slane %v361, 1
  %v363 = vmax.f32 %v361, %v362
  %v364 = vrot.slane %v321, 4
  %v365 = vmax.f32 %v321, %v364
  %v366 = vrot.slane %v365, 2
  %v367 = vmax.f32 %v365, %v366
  %v368 = vrot.slane %v367, 1
  %v369 = vmax.f32 %v367, %v368
  %vm378 = vcmask 1041409
  %v379 = vsel %vm378, %v333, %v327
  %vm380 = vcmask 1042434
  %v381 = vsel %vm380, %v339, %v379
  %vm382 = vcmask 1043459
  %v383 = vsel %vm382, %v345, %v381
  %vm384 = vcmask 1044484
  %v385 = vsel %vm384, %v351, %v383
  %vm386 = vcmask 1045509
  %v387 = vsel %vm386, %v357, %v385
  %vm388 = vcmask 1046534
  %v389 = vsel %vm388, %v363, %v387
  %vm390 = vcmask 1047559
  %v391 = vsel %vm390, %v369, %v389
  %393 = vst [vmem:[%s5] sm:$0xff] %v391
  // Predicated region
  $region22: #{point_transformer_cls.21} parent=0 // pred_check
    _
  $region23: #{point_transformer_cls.21} parent=0 // pred_check_branch
    %395 = sbr.rel (0) target = $region25
  $region24: #{point_transformer_cls.21} parent=0 // pred_region
    _
  $region25: #{point_transformer_cls.21} parent=0 // pred_fallthru
    _
  // Predicated region
  $region26: #{point_transformer_cls.21} parent=0 // pred_check
    _
  $region27: #{point_transformer_cls.21} parent=0 // pred_check_branch
    %397 = sbr.rel (0) target = $region29
  $region28: #{point_transformer_cls.21} parent=0 // pred_region
    _
  $region29: #{point_transformer_cls.21} parent=0 // pred_fallthru
    _

// kernel: point_transformer_cls.23
$region0: #{point_transformer_cls.23}
  #allocation0 [shape = 'u32[]', space=smem, size = 0x4, offset = 0x4, fixed_abs, tag = 'smem constant byte address 0x4 - core index']
  #allocation1 [shape = 'u32[144,128]{1,0:T(1,128)}', space=vmem, size = 0x12000, scoped, tag = 'internal scratch']
  %s0 = inlined_call_operand.vmem [shape: f32[8,3], index: 0, kind: input, shape index: {}]
  %s1 = inlined_call_operand.vmem [shape: f32[3,32], index: 1, kind: input, shape index: {}]
  %s2 = inlined_call_operand.vmem [shape: f32[1,32], index: 2, kind: input, shape index: {}]
  %s3 = inlined_call_operand.vmem [shape: f32[32,32], index: 3, kind: input, shape index: {}]
  %s4 = inlined_call_operand.vmem [shape: f32[1,32], index: 4, kind: input, shape index: {}]
  %s5 = inlined_call_operand.vmem [shape: f32[8,32], index: 5, kind: output, shape index: {}]
  %s6 = sld [smem:[#allocation0]]
  $region30: #{point_transformer_cls.23} parent=0
    _
  %s8 = ssub.s32 1, %s6
  %s9 = scalar_select 0, %s8, %s6
  // Predicated region
  $region2: #{point_transformer_cls.23} parent=0 // pred_check
    _
  $region3: #{point_transformer_cls.23} parent=0 // pred_check_branch
    %11 = sbr.rel (0) target = $region5
  $region4: #{point_transformer_cls.23} parent=0 // pred_region
    _
  $region5: #{point_transformer_cls.23} parent=0 // pred_fallthru
    _
  // Predicated region
  $region6: #{point_transformer_cls.23} parent=0 // pred_check
    _
  $region7: #{point_transformer_cls.23} parent=0 // pred_check_branch
    %13 = sbr.rel (0) target = $region9
  $region8: #{point_transformer_cls.23} parent=0 // pred_region
    _
  $region9: #{point_transformer_cls.23} parent=0 // pred_fallthru
    _
  // Predicated region
  $region10: #{point_transformer_cls.23} parent=0 // pred_check
    _
  $region11: #{point_transformer_cls.23} parent=0 // pred_check_branch
    %15 = sbr.rel (0) target = $region13
  $region12: #{point_transformer_cls.23} parent=0 // pred_region
    _
  $region13: #{point_transformer_cls.23} parent=0 // pred_fallthru
    _
  // Predicated region
  $region14: #{point_transformer_cls.23} parent=0 // pred_check
    _
  $region15: #{point_transformer_cls.23} parent=0 // pred_check_branch
    %17 = sbr.rel (0) target = $region17
  $region16: #{point_transformer_cls.23} parent=0 // pred_region
    _
  $region17: #{point_transformer_cls.23} parent=0 // pred_fallthru
    _
  // Predicated region
  $region18: #{point_transformer_cls.23} parent=0 // pred_check
    _
  $region19: #{point_transformer_cls.23} parent=0 // pred_check_branch
    %19 = sbr.rel (0) target = $region21
  $region20: #{point_transformer_cls.23} parent=0 // pred_region
    _
  $region21: #{point_transformer_cls.23} parent=0 // pred_fallthru
    _
  %v20 = vld [vmem:[%s0] sm:$0xff]
  %v21 = vld [vmem:[%s1] sm:$0x7]
  %v22 = vld [vmem:[%s2] sm:$0x1]
  %v24 = vlaneseq
  %v25 = vshrl.u32 %v24, 7
  %v26 = vsub.s32 0, %v25
  %v27 = vrot.slane %v22, %v26
  %vm29 = vcmask 23552
  %v31 = vsel %vm29, %v20, 0
  %vm33 = vcmask 1042432
  %v35 = vsel %vm33, %v21, 0
  %37 = vmatprep.subr.mxu0 0.0
  %38 = vmatpush1.msra.mxu0 %v35
  %39 = vmatprep.subr.mxu0 0.0
  %40 = vmatpush1.msra.mxu0 0.0
  %41 = vmatprep.subr.mxu0 0.0
  %42 = vmatpush1.msra.mxu0 0.0
  %43 = vmatprep.subr.mxu0 0.0
  %44 = vmatpush1.msra.mxu0 0.0
  %45 = vmatprep.subr.mxu0 0.0
  %46 = vmatpush1.msra.mxu0 0.0
  %47 = vmatprep.subr.mxu0 0.0
  %48 = vmatpush1.msra.mxu0 0.0
  %49 = vmatprep.subr.mxu0 0.0
  %50 = vmatpush1.msra.mxu0 0.0
  %51 = vmatprep.subr.mxu0 0.0
  %52 = vmatpush1.msra.mxu0 0.0
  %53 = vmatprep.subr.mxu0 0.0
  %54 = vmatpush1.msra.mxu0 0.0
  %55 = vmatprep.subr.mxu0 0.0
  %56 = vmatpush1.msra.mxu0 0.0
  %57 = vmatprep.subr.mxu0 0.0
  %58 = vmatpush1.msra.mxu0 0.0
  %59 = vmatprep.subr.mxu0 0.0
  %60 = vmatpush1.msra.mxu0 0.0
  %61 = vmatprep.subr.mxu0 0.0
  %62 = vmatpush1.msra.mxu0 0.0
  %63 = vmatprep.subr.mxu0 0.0
  %64 = vmatpush1.msra.mxu0 0.0
  %65 = vmatprep.subr.mxu0 0.0
  %66 = vmatpush1.msra.mxu0 0.0
  %67 = vmatprep.subr.mxu0 0.0
  %68 = vmatpush1.msra.mxu0 0.0
  %69 = vmatprep.subr.mxu0 0.0
  %70 = vmatpush1.msra.mxu0 0.0
  %71 = vmatprep.subr.mxu0 0.0
  %72 = vmatpush1.msra.mxu0 0.0
  %73 = vmatprep.subr.mxu0 0.0
  %74 = vmatpush1.msra.mxu0 0.0
  %75 = vmatprep.subr.mxu0 0.0
  %76 = vmatpush1.msra.mxu0 0.0
  %77 = vmatprep.subr.mxu0 0.0
  %78 = vmatpush1.msra.mxu0 0.0
  %79 = vmatprep.subr.mxu0 0.0
  %80 = vmatpush1.msra.mxu0 0.0
  %81 = vmatprep.subr.mxu0 0.0
  %82 = vmatpush1.msra.mxu0 0.0
  %83 = vmatprep.subr.mxu0 0.0
  %84 = vmatpush1.msra.mxu0 0.0
  %85 = vmatprep.subr.mxu0 0.0
  %86 = vmatpush1.msra.mxu0 0.0
  %87 = vmatprep.subr.mxu0 0.0
  %88 = vmatpush1.msra.mxu0 0.0
  %89 = vmatprep.subr.mxu0 0.0
  %90 = vmatpush1.msra.mxu0 0.0
  %91 = vmatprep.subr.mxu0 0.0
  %92 = vmatpush1.msra.mxu0 0.0
  %93 = vmatprep.subr.mxu0 0.0
  %94 = vmatpush1.msra.mxu0 0.0
  %95 = vmatprep.subr.mxu0 0.0
  %96 = vmatpush1.msra.mxu0 0.0
  %97 = vmatprep.subr.mxu0 0.0
  %98 = vmatpush1.msra.mxu0 0.0
  %99 = vmatprep.subr.mxu0 0.0
  %100 = vmatpush1.msra.mxu0 0.0
  %101 = vmatprep.mubr.f32.mxu0 0.0
  %102 = vmatmul.mubr.f32.gmra.mrb[0].mxu0 %v31
  %v103 = vpop.f32.mrb[0].mxu0
  %v104 = vadd.f32 %v27, %v103
  %v105 = vpop.f32.mrb[0].mxu0
  %106 = vdwg.mxu0
  %v107 = vmax.f32 %v104, 0.0
  %v108 = vld [vmem:[%s3] sm:$0xff]
  %v109 = vld [vmem:[%s3 + $0x8] sm:$0xff]
  %v110 = vld [vmem:[%s3 + $0x10] sm:$0xff]
  %v111 = vld [vmem:[%s3 + $0x18] sm:$0xff]
  %v112 = vld [vmem:[%s4] sm:$0x1]
  %v114 = vlaneseq
  %v115 = vshrl.u32 %v114, 7
  %v116 = vsub.s32 0, %v115
  %v117 = vrot.slane %v112, %v116
  %vm119 = vcmask 261120
  %v121 = vsel %vm119, %v107, 0
  %123 = vmatprep.subr.mxu0 0.0
  %124 = vmatpush1.msra.mxu0 %v108
  %125 = vmatprep.subr.mxu0 0.0
  %126 = vmatpush1.msra.mxu0 %v109
  %127 = vmatprep.subr.mxu0 0.0
  %128 = vmatpush1.msra.mxu0 %v110
  %129 = vmatprep.subr.mxu0 0.0
  %130 = vmatpush1.msra.mxu0 %v111
  %131 = vmatprep.subr.mxu0 0.0
  %132 = vmatpush1.msra.mxu0 0.0
  %133 = vmatprep.subr.mxu0 0.0
  %134 = vmatpush1.msra.mxu0 0.0
  %135 = vmatprep.subr.mxu0 0.0
  %136 = vmatpush1.msra.mxu0 0.0
  %137 = vmatprep.subr.mxu0 0.0
  %138 = vmatpush1.msra.mxu0 0.0
  %139 = vmatprep.subr.mxu0 0.0
  %140 = vmatpush1.msra.mxu0 0.0
  %141 = vmatprep.subr.mxu0 0.0
  %142 = vmatpush1.msra.mxu0 0.0
  %143 = vmatprep.subr.mxu0 0.0
  %144 = vmatpush1.msra.mxu0 0.0
  %145 = vmatprep.subr.mxu0 0.0
  %146 = vmatpush1.msra.mxu0 0.0
  %147 = vmatprep.subr.mxu0 0.0
  %148 = vmatpush1.msra.mxu0 0.0
  %149 = vmatprep.subr.mxu0 0.0
  %150 = vmatpush1.msra.mxu0 0.0
  %151 = vmatprep.subr.mxu0 0.0
  %152 = vmatpush1.msra.mxu0 0.0
  %153 = vmatprep.subr.mxu0 0.0
  %154 = vmatpush1.msra.mxu0 0.0
  %155 = vmatprep.subr.mxu0 0.0
  %156 = vmatpush1.msra.mxu0 0.0
  %157 = vmatprep.subr.mxu0 0.0
  %158 = vmatpush1.msra.mxu0 0.0
  %159 = vmatprep.subr.mxu0 0.0
  %160 = vmatpush1.msra.mxu0 0.0
  %161 = vmatprep.subr.mxu0 0.0
  %162 = vmatpush1.msra.mxu0 0.0
  %163 = vmatprep.subr.mxu0 0.0
  %164 = vmatpush1.msra.mxu0 0.0
  %165 = vmatprep.subr.mxu0 0.0
  %166 = vmatpush1.msra.mxu0 0.0
  %167 = vmatprep.subr.mxu0 0.0
  %168 = vmatpush1.msra.mxu0 0.0
  %169 = vmatprep.subr.mxu0 0.0
  %170 = vmatpush1.msra.mxu0 0.0
  %171 = vmatprep.subr.mxu0 0.0
  %172 = vmatpush1.msra.mxu0 0.0
  %173 = vmatprep.subr.mxu0 0.0
  %174 = vmatpush1.msra.mxu0 0.0
  %175 = vmatprep.subr.mxu0 0.0
  %176 = vmatpush1.msra.mxu0 0.0
  %177 = vmatprep.subr.mxu0 0.0
  %178 = vmatpush1.msra.mxu0 0.0
  %179 = vmatprep.subr.mxu0 0.0
  %180 = vmatpush1.msra.mxu0 0.0
  %181 = vmatprep.subr.mxu0 0.0
  %182 = vmatpush1.msra.mxu0 0.0
  %183 = vmatprep.subr.mxu0 0.0
  %184 = vmatpush1.msra.mxu0 0.0
  %185 = vmatprep.subr.mxu0 0.0
  %186 = vmatpush1.msra.mxu0 0.0
  %187 = vmatprep.mubr.f32.mxu0 0.0
  %188 = vmatmul.mubr.f32.gmra.mrb[0].mxu0 %v121
  %v189 = vpop.f32.mrb[0].mxu0
  %v190 = vadd.f32 %v117, %v189
  %v191 = vpop.f32.mrb[0].mxu0
  %192 = vdwg.mxu0
  %193 = vst.msk [vmem:[%s5] sm:$0xff] %vm119, %v190
  // Predicated region
  $region22: #{point_transformer_cls.23} parent=0 // pred_check
    _
  $region23: #{point_transformer_cls.23} parent=0 // pred_check_branch
    %195 = sbr.rel (0) target = $region25
  $region24: #{point_transformer_cls.23} parent=0 // pred_region
    _
  $region25: #{point_transformer_cls.23} parent=0 // pred_fallthru
    _
  // Predicated region
  $region26: #{point_transformer_cls.23} parent=0 // pred_check
    _
  $region27: #{point_transformer_cls.23} parent=0 // pred_check_branch
    %197 = sbr.rel (0) target = $region29
  $region28: #{point_transformer_cls.23} parent=0 // pred_region
    _
  $region29: #{point_transformer_cls.23} parent=0 // pred_fallthru
    _

// kernel: point_transformer_cls.24
$region0: #{point_transformer_cls.24}
  #allocation0 [shape = 'u32[]', space=smem, size = 0x4, offset = 0x4, fixed_abs, tag = 'smem constant byte address 0x4 - core index']
  #allocation1 [shape = 'u32[144,128]{1,0:T(1,128)}', space=vmem, size = 0x12000, scoped, tag = 'internal scratch']
  %s0 = inlined_call_operand.vmem [shape: f32[8,1,32], index: 0, kind: input, shape index: {}]
  %s1 = inlined_call_operand.vmem [shape: f32[8,8,32], index: 1, kind: input, shape index: {}]
  %s2 = inlined_call_operand.vmem [shape: f32[8,8,32], index: 2, kind: input, shape index: {}]
  %s3 = inlined_call_operand.vmem [shape: f32[8,8,32], index: 3, kind: input, shape index: {}]
  %s4 = inlined_call_operand.vmem [shape: f32[8,128], index: 4, kind: input, shape index: {}]
  %s5 = inlined_call_operand.vmem [shape: f32[32,32], index: 5, kind: input, shape index: {}]
  %s6 = inlined_call_operand.vmem [shape: f32[1,32], index: 6, kind: input, shape index: {}]
  %s7 = inlined_call_operand.vmem [shape: f32[32,32], index: 7, kind: input, shape index: {}]
  %s8 = inlined_call_operand.vmem [shape: f32[1,32], index: 8, kind: input, shape index: {}]
  %s9 = inlined_call_operand.vmem [shape: f32[32,128], index: 9, kind: input, shape index: {}]
  %s10 = inlined_call_operand.vmem [shape: f32[1,128], index: 10, kind: input, shape index: {}]
  %s11 = inlined_call_operand.vmem [shape: f32[8,128], index: 11, kind: output, shape index: {}]
  %s12 = sld [smem:[#allocation0]]
  $region54: #{point_transformer_cls.24} parent=0
    _
  %s14 = ssub.s32 1, %s12
  %s15 = scalar_select 0, %s14, %s12
  // Predicated region
  $region2: #{point_transformer_cls.24} parent=0 // pred_check
    _
  $region3: #{point_transformer_cls.24} parent=0 // pred_check_branch
    %17 = sbr.rel (0) target = $region5
  $region4: #{point_transformer_cls.24} parent=0 // pred_region
    _
  $region5: #{point_transformer_cls.24} parent=0 // pred_fallthru
    _
  // Predicated region
  $region6: #{point_transformer_cls.24} parent=0 // pred_check
    _
  $region7: #{point_transformer_cls.24} parent=0 // pred_check_branch
    %19 = sbr.rel (0) target = $region9
  $region8: #{point_transformer_cls.24} parent=0 // pred_region
    _
  $region9: #{point_transformer_cls.24} parent=0 // pred_fallthru
    _
  // Predicated region
  $region10: #{point_transformer_cls.24} parent=0 // pred_check
    _
  $region11: #{point_transformer_cls.24} parent=0 // pred_check_branch
    %21 = sbr.rel (0) target = $region13
  $region12: #{point_transformer_cls.24} parent=0 // pred_region
    _
  $region13: #{point_transformer_cls.24} parent=0 // pred_fallthru
    _
  // Predicated region
  $region14: #{point_transformer_cls.24} parent=0 // pred_check
    _
  $region15: #{point_transformer_cls.24} parent=0 // pred_check_branch
    %23 = sbr.rel (0) target = $region17
  $region16: #{point_transformer_cls.24} parent=0 // pred_region
    _
  $region17: #{point_transformer_cls.24} parent=0 // pred_fallthru
    _
  // Predicated region
  $region18: #{point_transformer_cls.24} parent=0 // pred_check
    _
  $region19: #{point_transformer_cls.24} parent=0 // pred_check_branch
    %25 = sbr.rel (0) target = $region21
  $region20: #{point_transformer_cls.24} parent=0 // pred_region
    _
  $region21: #{point_transformer_cls.24} parent=0 // pred_fallthru
    _
  // Predicated region
  $region22: #{point_transformer_cls.24} parent=0 // pred_check
    _
  $region23: #{point_transformer_cls.24} parent=0 // pred_check_branch
    %27 = sbr.rel (0) target = $region25
  $region24: #{point_transformer_cls.24} parent=0 // pred_region
    _
  $region25: #{point_transformer_cls.24} parent=0 // pred_fallthru
    _
  // Predicated region
  $region26: #{point_transformer_cls.24} parent=0 // pred_check
    _
  $region27: #{point_transformer_cls.24} parent=0 // pred_check_branch
    %29 = sbr.rel (0) target = $region29
  $region28: #{point_transformer_cls.24} parent=0 // pred_region
    _
  $region29: #{point_transformer_cls.24} parent=0 // pred_fallthru
    _
  // Predicated region
  $region30: #{point_transformer_cls.24} parent=0 // pred_check
    _
  $region31: #{point_transformer_cls.24} parent=0 // pred_check_branch
    %31 = sbr.rel (0) target = $region33
  $region32: #{point_transformer_cls.24} parent=0 // pred_region
    _
  $region33: #{point_transformer_cls.24} parent=0 // pred_fallthru
    _
  // Predicated region
  $region34: #{point_transformer_cls.24} parent=0 // pred_check
    _
  $region35: #{point_transformer_cls.24} parent=0 // pred_check_branch
    %33 = sbr.rel (0) target = $region37
  $region36: #{point_transformer_cls.24} parent=0 // pred_region
    _
  $region37: #{point_transformer_cls.24} parent=0 // pred_fallthru
    _
  // Predicated region
  $region38: #{point_transformer_cls.24} parent=0 // pred_check
    _
  $region39: #{point_transformer_cls.24} parent=0 // pred_check_branch
    %35 = sbr.rel (0) target = $region41
  $region40: #{point_transformer_cls.24} parent=0 // pred_region
    _
  $region41: #{point_transformer_cls.24} parent=0 // pred_fallthru
    _
  // Predicated region
  $region42: #{point_transformer_cls.24} parent=0 // pred_check
    _
  $region43: #{point_transformer_cls.24} parent=0 // pred_check_branch
    %37 = sbr.rel (0) target = $region45
  $region44: #{point_transformer_cls.24} parent=0 // pred_region
    _
  $region45: #{point_transformer_cls.24} parent=0 // pred_fallthru
    _
  %v38 = vld [vmem:[%s2] sm:$0xff]
  %v39 = vld [vmem:[%s2 + $0x8] sm:$0xff]
  %v40 = vld [vmem:[%s2 + $0x10] sm:$0xff]
  %v41 = vld [vmem:[%s2 + $0x18] sm:$0xff]
  %v42 = vld [vmem:[%s2 + $0x20] sm:$0xff]
  %v43 = vld [vmem:[%s2 + $0x28] sm:$0xff]
  %v44 = vld [vmem:[%s2 + $0x30] sm:$0xff]
  %v45 = vld [vmem:[%s2 + $0x38] sm:$0xff]
  %v46 = vld [vmem:[%s1] sm:$0xff]
  %v47 = vld [vmem:[%s1 + $0x8] sm:$0xff]
  %v48 = vld [vmem:[%s1 + $0x10] sm:$0xff]
  %v49 = vld [vmem:[%s1 + $0x18] sm:$0xff]
  %v50 = vld [vmem:[%s1 + $0x20] sm:$0xff]
  %v51 = vld [vmem:[%s1 + $0x28] sm:$0xff]
  %v52 = vld [vmem:[%s1 + $0x30] sm:$0xff]
  %v53 = vld [vmem:[%s1 + $0x38] sm:$0xff]
  %v54 = vld [vmem:[%s0] sm:$0x1]
  %v55 = vld [vmem:[%s0 + $0x1] sm:$0x1]
  %v56 = vld [vmem:[%s0 + $0x2] sm:$0x1]
  %v57 = vld [vmem:[%s0 + $0x3] sm:$0x1]
  %v58 = vld [vmem:[%s0 + $0x4] sm:$0x1]
  %v59 = vld [vmem:[%s0 + $0x5] sm:$0x1]
  %v60 = vld [vmem:[%s0 + $0x6] sm:$0x1]
  %v61 = vld [vmem:[%s0 + $0x7] sm:$0x1]
  %v70 = vlaneseq
  %v71 = vshrl.u32 %v70, 7
  %v72 = vsub.s32 0, %v71
  %v73 = vrot.slane %v54, %v72
  %v74 = vlaneseq
  %v75 = vshrl.u32 %v74, 7
  %v76 = vsub.s32 0, %v75
  %v77 = vrot.slane %v55, %v76
  %v78 = vlaneseq
  %v79 = vshrl.u32 %v78, 7
  %v80 = vsub.s32 0, %v79
  %v81 = vrot.slane %v56, %v80
  %v82 = vlaneseq
  %v83 = vshrl.u32 %v82, 7
  %v84 = vsub.s32 0, %v83
  %v85 = vrot.slane %v57, %v84
  %v86 = vlaneseq
  %v87 = vshrl.u32 %v86, 7
  %v88 = vsub.s32 0, %v87
  %v89 = vrot.slane %v58, %v88
  %v90 = vlaneseq
  %v91 = vshrl.u32 %v90, 7
  %v92 = vsub.s32 0, %v91
  %v93 = vrot.slane %v59, %v92
  %v94 = vlaneseq
  %v95 = vshrl.u32 %v94, 7
  %v96 = vsub.s32 0, %v95
  %v97 = vrot.slane %v60, %v96
  %v98 = vlaneseq
  %v99 = vshrl.u32 %v98, 7
  %v100 = vsub.s32 0, %v99
  %v101 = vrot.slane %v61, %v100
  %v110 = vsub.f32 %v73, %v46
  %v111 = vsub.f32 %v77, %v47
  %v112 = vsub.f32 %v81, %v48
  %v113 = vsub.f32 %v85, %v49
  %v114 = vsub.f32 %v89, %v50
  %v115 = vsub.f32 %v93, %v51
  %v116 = vsub.f32 %v97, %v52
  %v117 = vsub.f32 %v101, %v53
  %v118 = vadd.f32 %v110, %v38
  %v119 = vadd.f32 %v111, %v39
  %v120 = vadd.f32 %v112, %v40
  %v121 = vadd.f32 %v113, %v41
  %v122 = vadd.f32 %v114, %v42
  %v123 = vadd.f32 %v115, %v43
  %v124 = vadd.f32 %v116, %v44
  %v125 = vadd.f32 %v117, %v45
  %v126 = vld [vmem:[%s5] sm:$0xff]
  %v127 = vld [vmem:[%s5 + $0x8] sm:$0xff]
  %v128 = vld [vmem:[%s5 + $0x10] sm:$0xff]
  %v129 = vld [vmem:[%s5 + $0x18] sm:$0xff]
  %v130 = vld [vmem:[%s6] sm:$0x1]
  %v132 = vlaneseq
  %v133 = vshrl.u32 %v132, 7
  %v134 = vsub.s32 0, %v133
  %v135 = vrot.slane %v130, %v134
  %vm137 = vcmask 261120
  %v139 = vsel %vm137, %v118, 0
  %v142 = vsel %vm137, %v119, 0
  %v145 = vsel %vm137, %v120, 0
  %v148 = vsel %vm137, %v121, 0
  %v151 = vsel %vm137, %v122, 0
  %v154 = vsel %vm137, %v123, 0
  %v157 = vsel %vm137, %v124, 0
  %v160 = vsel %vm137, %v125, 0
  %162 = vmatprep.subr.mxu0 0.0
  %163 = vmatpush1.msra.mxu0 %v126
  %164 = vmatprep.subr.mxu0 0.0
  %165 = vmatpush1.msra.mxu0 %v127
  %166 = vmatprep.subr.mxu0 0.0
  %167 = vmatpush1.msra.mxu0 %v128
  %168 = vmatprep.subr.mxu0 0.0
  %169 = vmatpush1.msra.mxu0 %v129
  %170 = vmatprep.subr.mxu0 0.0
  %171 = vmatpush1.msra.mxu0 0.0
  %172 = vmatprep.subr.mxu0 0.0
  %173 = vmatpush1.msra.mxu0 0.0
  %174 = vmatprep.subr.mxu0 0.0
  %175 = vmatpush1.msra.mxu0 0.0
  %176 = vmatprep.subr.mxu0 0.0
  %177 = vmatpush1.msra.mxu0 0.0
  %178 = vmatprep.subr.mxu0 0.0
  %179 = vmatpush1.msra.mxu0 0.0
  %180 = vmatprep.subr.mxu0 0.0
  %181 = vmatpush1.msra.mxu0 0.0
  %182 = vmatprep.subr.mxu0 0.0
  %183 = vmatpush1.msra.mxu0 0.0
  %184 = vmatprep.subr.mxu0 0.0
  %185 = vmatpush1.msra.mxu0 0.0
  %186 = vmatprep.subr.mxu0 0.0
  %187 = vmatpush1.msra.mxu0 0.0
  %188 = vmatprep.subr.mxu0 0.0
  %189 = vmatpush1.msra.mxu0 0.0
  %190 = vmatprep.subr.mxu0 0.0
  %191 = vmatpush1.msra.mxu0 0.0
  %192 = vmatprep.subr.mxu0 0.0
  %193 = vmatpush1.msra.mxu0 0.0
  %194 = vmatprep.subr.mxu0 0.0
  %195 = vmatpush1.msra.mxu0 0.0
  %196 = vmatprep.subr.mxu0 0.0
  %197 = vmatpush1.msra.mxu0 0.0
  %198 = vmatprep.subr.mxu0 0.0
  %199 = vmatpush1.msra.mxu0 0.0
  %200 = vmatprep.subr.mxu0 0.0
  %201 = vmatpush1.msra.mxu0 0.0
  %202 = vmatprep.subr.mxu0 0.0
  %203 = vmatpush1.msra.mxu0 0.0
  %204 = vmatprep.subr.mxu0 0.0
  %205 = vmatpush1.msra.mxu0 0.0
  %206 = vmatprep.subr.mxu0 0.0
  %207 = vmatpush1.msra.mxu0 0.0
  %208 = vmatprep.subr.mxu0 0.0
  %209 = vmatpush1.msra.mxu0 0.0
  %210 = vmatprep.subr.mxu0 0.0
  %211 = vmatpush1.msra.mxu0 0.0
  %212 = vmatprep.subr.mxu0 0.0
  %213 = vmatpush1.msra.mxu0 0.0
  %214 = vmatprep.subr.mxu0 0.0
  %215 = vmatpush1.msra.mxu0 0.0
  %216 = vmatprep.subr.mxu0 0.0
  %217 = vmatpush1.msra.mxu0 0.0
  %218 = vmatprep.subr.mxu0 0.0
  %219 = vmatpush1.msra.mxu0 0.0
  %220 = vmatprep.subr.mxu0 0.0
  %221 = vmatpush1.msra.mxu0 0.0
  %222 = vmatprep.subr.mxu0 0.0
  %223 = vmatpush1.msra.mxu0 0.0
  %224 = vmatprep.subr.mxu0 0.0
  %225 = vmatpush1.msra.mxu0 0.0
  %226 = vmatprep.mubr.f32.mxu0 0.0
  %227 = vmatmul.mubr.f32.gmra.mrb[0].mxu0 %v139
  %v228 = vpop.f32.mrb[0].mxu0
  %v229 = vadd.f32 %v135, %v228
  %v230 = vpop.f32.mrb[0].mxu0
  %231 = vmatprep.mubr.f32.mxu0 0.0
  %232 = vmatmul.mubr.f32.gmra.mrb[0].mxu0 %v142
  %v233 = vpop.f32.mrb[0].mxu0
  %v234 = vadd.f32 %v135, %v233
  %v235 = vpop.f32.mrb[0].mxu0
  %236 = vmatprep.mubr.f32.mxu0 0.0
  %237 = vmatmul.mubr.f32.gmra.mrb[0].mxu0 %v145
  %v238 = vpop.f32.mrb[0].mxu0
  %v239 = vadd.f32 %v135, %v238
  %v240 = vpop.f32.mrb[0].mxu0
  %241 = vmatprep.mubr.f32.mxu0 0.0
  %242 = vmatmul.mubr.f32.gmra.mrb[0].mxu0 %v148
  %v243 = vpop.f32.mrb[0].mxu0
  %v244 = vadd.f32 %v135, %v243
  %v245 = vpop.f32.mrb[0].mxu0
  %246 = vmatprep.mubr.f32.mxu0 0.0
  %247 = vmatmul.mubr.f32.gmra.mrb[0].mxu0 %v151
  %v248 = vpop.f32.mrb[0].mxu0
  %v249 = vadd.f32 %v135, %v248
  %v250 = vpop.f32.mrb[0].mxu0
  %251 = vmatprep.mubr.f32.mxu0 0.0
  %252 = vmatmul.mubr.f32.gmra.mrb[0].mxu0 %v154
  %v253 = vpop.f32.mrb[0].mxu0
  %v254 = vadd.f32 %v135, %v253
  %v255 = vpop.f32.mrb[0].mxu0
  %256 = vmatprep.mubr.f32.mxu0 0.0
  %257 = vmatmul.mubr.f32.gmra.mrb[0].mxu0 %v157
  %v258 = vpop.f32.mrb[0].mxu0
  %v259 = vadd.f32 %v135, %v258
  %v260 = vpop.f32.mrb[0].mxu0
  %261 = vmatprep.mubr.f32.mxu0 0.0
  %262 = vmatmul.mubr.f32.gmra.mrb[0].mxu0 %v160
  %v263 = vpop.f32.mrb[0].mxu0
  %v264 = vadd.f32 %v135, %v263
  %v265 = vpop.f32.mrb[0].mxu0
  %266 = vdwg.mxu0
  %v267 = vmax.f32 %v229, 0.0
  %v268 = vmax.f32 %v234, 0.0
  %v269 = vmax.f32 %v239, 0.0
  %v270 = vmax.f32 %v244, 0.0
  %v271 = vmax.f32 %v249, 0.0
  %v272 = vmax.f32 %v254, 0.0
  %v273 = vmax.f32 %v259, 0.0
  %v274 = vmax.f32 %v264, 0.0
  %v275 = vld [vmem:[%s7] sm:$0xff]
  %v276 = vld [vmem:[%s7 + $0x8] sm:$0xff]
  %v277 = vld [vmem:[%s7 + $0x10] sm:$0xff]
  %v278 = vld [vmem:[%s7 + $0x18] sm:$0xff]
  %v279 = vld [vmem:[%s8] sm:$0x1]
  %v281 = vlaneseq
  %v282 = vshrl.u32 %v281, 7
  %v283 = vsub.s32 0, %v282
  %v284 = vrot.slane %v279, %v283
  %v287 = vsel %vm137, %v267, 0
  %v290 = vsel %vm137, %v268, 0
  %v293 = vsel %vm137, %v269, 0
  %v296 = vsel %vm137, %v270, 0
  %v299 = vsel %vm137, %v271, 0
  %v302 = vsel %vm137, %v272, 0
  %v305 = vsel %vm137, %v273, 0
  %v308 = vsel %vm137, %v274, 0
  %310 = vmatprep.subr.mxu0 0.0
  %311 = vmatpush1.msra.mxu0 %v275
  %312 = vmatprep.subr.mxu0 0.0
  %313 = vmatpush1.msra.mxu0 %v276
  %314 = vmatprep.subr.mxu0 0.0
  %315 = vmatpush1.msra.mxu0 %v277
  %316 = vmatprep.subr.mxu0 0.0
  %317 = vmatpush1.msra.mxu0 %v278
  %318 = vmatprep.subr.mxu0 0.0
  %319 = vmatpush1.msra.mxu0 0.0
  %320 = vmatprep.subr.mxu0 0.0
  %321 = vmatpush1.msra.mxu0 0.0
  %322 = vmatprep.subr.mxu0 0.0
  %323 = vmatpush1.msra.mxu0 0.0
  %324 = vmatprep.subr.mxu0 0.0
  %325 = vmatpush1.msra.mxu0 0.0
  %326 = vmatprep.subr.mxu0 0.0
  %327 = vmatpush1.msra.mxu0 0.0
  %328 = vmatprep.subr.mxu0 0.0
  %329 = vmatpush1.msra.mxu0 0.0
  %330 = vmatprep.subr.mxu0 0.0
  %331 = vmatpush1.msra.mxu0 0.0
  %332 = vmatprep.subr.mxu0 0.0
  %333 = vmatpush1.msra.mxu0 0.0
  %334 = vmatprep.subr.mxu0 0.0
  %335 = vmatpush1.msra.mxu0 0.0
  %336 = vmatprep.subr.mxu0 0.0
  %337 = vmatpush1.msra.mxu0 0.0
  %338 = vmatprep.subr.mxu0 0.0
  %339 = vmatpush1.msra.mxu0 0.0
  %340 = vmatprep.subr.mxu0 0.0
  %341 = vmatpush1.msra.mxu0 0.0
  %342 = vmatprep.subr.mxu0 0.0
  %343 = vmatpush1.msra.mxu0 0.0
  %344 = vmatprep.subr.mxu0 0.0
  %345 = vmatpush1.msra.mxu0 0.0
  %346 = vmatprep.subr.mxu0 0.0
  %347 = vmatpush1.msra.mxu0 0.0
  %348 = vmatprep.subr.mxu0 0.0
  %349 = vmatpush1.msra.mxu0 0.0
  %350 = vmatprep.subr.mxu0 0.0
  %351 = vmatpush1.msra.mxu0 0.0
  %352 = vmatprep.subr.mxu0 0.0
  %353 = vmatpush1.msra.mxu0 0.0
  %354 = vmatprep.subr.mxu0 0.0
  %355 = vmatpush1.msra.mxu0 0.0
  %356 = vmatprep.subr.mxu0 0.0
  %357 = vmatpush1.msra.mxu0 0.0
  %358 = vmatprep.subr.mxu0 0.0
  %359 = vmatpush1.msra.mxu0 0.0
  %360 = vmatprep.subr.mxu0 0.0
  %361 = vmatpush1.msra.mxu0 0.0
  %362 = vmatprep.subr.mxu0 0.0
  %363 = vmatpush1.msra.mxu0 0.0
  %364 = vmatprep.subr.mxu0 0.0
  %365 = vmatpush1.msra.mxu0 0.0
  %366 = vmatprep.subr.mxu0 0.0
  %367 = vmatpush1.msra.mxu0 0.0
  %368 = vmatprep.subr.mxu0 0.0
  %369 = vmatpush1.msra.mxu0 0.0
  %370 = vmatprep.subr.mxu0 0.0
  %371 = vmatpush1.msra.mxu0 0.0
  %372 = vmatprep.subr.mxu0 0.0
  %373 = vmatpush1.msra.mxu0 0.0
  %374 = vmatprep.mubr.f32.mxu0 0.0
  %375 = vmatmul.mubr.f32.gmra.mrb[0].mxu0 %v287
  %v376 = vpop.f32.mrb[0].mxu0
  %v377 = vadd.f32 %v284, %v376
  %v378 = vpop.f32.mrb[0].mxu0
  %379 = vmatprep.mubr.f32.mxu0 0.0
  %380 = vmatmul.mubr.f32.gmra.mrb[0].mxu0 %v290
  %v381 = vpop.f32.mrb[0].mxu0
  %v382 = vadd.f32 %v284, %v381
  %v383 = vpop.f32.mrb[0].mxu0
  %384 = vmatprep.mubr.f32.mxu0 0.0
  %385 = vmatmul.mubr.f32.gmra.mrb[0].mxu0 %v293
  %v386 = vpop.f32.mrb[0].mxu0
  %v387 = vadd.f32 %v284, %v386
  %v388 = vpop.f32.mrb[0].mxu0
  %389 = vmatprep.mubr.f32.mxu0 0.0
  %390 = vmatmul.mubr.f32.gmra.mrb[0].mxu0 %v296
  %v391 = vpop.f32.mrb[0].mxu0
  %v392 = vadd.f32 %v284, %v391
  %v393 = vpop.f32.mrb[0].mxu0
  %394 = vmatprep.mubr.f32.mxu0 0.0
  %395 = vmatmul.mubr.f32.gmra.mrb[0].mxu0 %v299
  %v396 = vpop.f32.mrb[0].mxu0
  %v397 = vadd.f32 %v284, %v396
  %v398 = vpop.f32.mrb[0].mxu0
  %399 = vmatprep.mubr.f32.mxu0 0.0
  %400 = vmatmul.mubr.f32.gmra.mrb[0].mxu0 %v302
  %v401 = vpop.f32.mrb[0].mxu0
  %v402 = vadd.f32 %v284, %v401
  %v403 = vpop.f32.mrb[0].mxu0
  %404 = vmatprep.mubr.f32.mxu0 0.0
  %405 = vmatmul.mubr.f32.gmra.mrb[0].mxu0 %v305
  %v406 = vpop.f32.mrb[0].mxu0
  %v407 = vadd.f32 %v284, %v406
  %v408 = vpop.f32.mrb[0].mxu0
  %409 = vmatprep.mubr.f32.mxu0 0.0
  %410 = vmatmul.mubr.f32.gmra.mrb[0].mxu0 %v308
  %v411 = vpop.f32.mrb[0].mxu0
  %v412 = vadd.f32 %v284, %v411
  %v413 = vpop.f32.mrb[0].mxu0
  %414 = vdwg.mxu0
  %v415 = vmul.f32 %v377, 0.17677669
  %v416 = vmul.f32 %v382, 0.17677669
  %v417 = vmul.f32 %v387, 0.17677669
  %v418 = vmul.f32 %v392, 0.17677669
  %v419 = vmul.f32 %v397, 0.17677669
  %v420 = vmul.f32 %v402, 0.17677669
  %v421 = vmul.f32 %v407, 0.17677669
  %v422 = vmul.f32 %v412, 0.17677669
  %v423 = vlaneseq
  %v424 = vshrl.u32 %v423, 7
  %vm425 = vcmp.lt.s32.totalorder %v424, 2
  %v426 = vsel %vm425, %v415, -1e+30
  %v427 = vsel %vm425, %v416, -1e+30
  %v428 = vsel %vm425, %v417, -1e+30
  %v429 = vsel %vm425, %v418, -1e+30
  %v430 = vsel %vm425, %v419, -1e+30
  %v431 = vsel %vm425, %v420, -1e+30
  %v432 = vsel %vm425, %v421, -1e+30
  %v433 = vsel %vm425, %v422, -1e+30
  %v434 = vsel %vm137, %v426, -inf
  %v435 = vrot.slane %v434, 4
  %v436 = vmax.f32 %v434, %v435
  %v437 = vrot.slane %v436, 2
  %v438 = vmax.f32 %v436, %v437
  %v439 = vrot.slane %v438, 1
  %v440 = vmax.f32 %v438, %v439
  %v441 = vsel %vm137, %v427, -inf
  %v442 = vrot.slane %v441, 4
  %v443 = vmax.f32 %v441, %v442
  %v444 = vrot.slane %v443, 2
  %v445 = vmax.f32 %v443, %v444
  %v446 = vrot.slane %v445, 1
  %v447 = vmax.f32 %v445, %v446
  %v448 = vsel %vm137, %v428, -inf
  %v449 = vrot.slane %v448, 4
  %v450 = vmax.f32 %v448, %v449
  %v451 = vrot.slane %v450, 2
  %v452 = vmax.f32 %v450, %v451
  %v453 = vrot.slane %v452, 1
  %v454 = vmax.f32 %v452, %v453
  %v455 = vsel %vm137, %v429, -inf
  %v456 = vrot.slane %v455, 4
  %v457 = vmax.f32 %v455, %v456
  %v458 = vrot.slane %v457, 2
  %v459 = vmax.f32 %v457, %v458
  %v460 = vrot.slane %v459, 1
  %v461 = vmax.f32 %v459, %v460
  %v462 = vsel %vm137, %v430, -inf
  %v463 = vrot.slane %v462, 4
  %v464 = vmax.f32 %v462, %v463
  %v465 = vrot.slane %v464, 2
  %v466 = vmax.f32 %v464, %v465
  %v467 = vrot.slane %v466, 1
  %v468 = vmax.f32 %v466, %v467
  %v469 = vsel %vm137, %v431, -inf
  %v470 = vrot.slane %v469, 4
  %v471 = vmax.f32 %v469, %v470
  %v472 = vrot.slane %v471, 2
  %v473 = vmax.f32 %v471, %v472
  %v474 = vrot.slane %v473, 1
  %v475 = vmax.f32 %v473, %v474
  %v476 = vsel %vm137, %v432, -inf
  %v477 = vrot.slane %v476, 4
  %v478 = vmax.f32 %v476, %v477
  %v479 = vrot.slane %v478, 2
  %v480 = vmax.f32 %v478, %v479
  %v481 = vrot.slane %v480, 1
  %v482 = vmax.f32 %v480, %v481
  %v483 = vsel %vm137, %v433, -inf
  %v484 = vrot.slane %v483, 4
  %v485 = vmax.f32 %v483, %v484
  %v486 = vrot.slane %v485, 2
  %v487 = vmax.f32 %v485, %v486
  %v488 = vrot.slane %v487, 1
  %v489 = vmax.f32 %v487, %v488
  %v490 = vsub.f32 %v426, %v440
  %v491 = vsub.f32 %v427, %v447
  %v492 = vsub.f32 %v428, %v454
  %v493 = vsub.f32 %v429, %v461
  %v494 = vsub.f32 %v430, %v468
  %v495 = vsub.f32 %v431, %v475
  %v496 = vsub.f32 %v432, %v482
  %v497 = vsub.f32 %v433, %v489
  %v498 = vmul.f32 %v490, 1.442695
  %v499 = vpow.pop %v498
  %v500 = vmul.f32 %v491, 1.442695
  %v501 = vpow.pop %v500
  %v502 = vmul.f32 %v492, 1.442695
  %v503 = vpow.pop %v502
  %v504 = vmul.f32 %v493, 1.442695
  %v505 = vpow.pop %v504
  %v506 = vmul.f32 %v494, 1.442695
  %v507 = vpow.pop %v506
  %v508 = vmul.f32 %v495, 1.442695
  %v509 = vpow.pop %v508
  %v510 = vmul.f32 %v496, 1.442695
  %v511 = vpow.pop %v510
  %v512 = vmul.f32 %v497, 1.442695
  %v513 = vpow.pop %v512
  %v514 = vsel %vm137, %v499, 0.0
  %v515 = vrot.slane %v514, 4
  %v516 = vadd.f32 %v514, %v515
  %v517 = vrot.slane %v516, 2
  %v518 = vadd.f32 %v516, %v517
  %v519 = vrot.slane %v518, 1
  %v520 = vadd.f32 %v518, %v519
  %v521 = vsel %vm137, %v501, 0.0
  %v522 = vrot.slane %v521, 4
  %v523 = vadd.f32 %v521, %v522
  %v524 = vrot.slane %v523, 2
  %v525 = vadd.f32 %v523, %v524
  %v526 = vrot.slane %v525, 1
  %v527 = vadd.f32 %v525, %v526
  %v528 = vsel %vm137, %v503, 0.0
  %v529 = vrot.slane %v528, 4
  %v530 = vadd.f32 %v528, %v529
  %v531 = vrot.slane %v530, 2
  %v532 = vadd.f32 %v530, %v531
  %v533 = vrot.slane %v532, 1
  %v534 = vadd.f32 %v532, %v533
  %v535 = vsel %vm137, %v505, 0.0
  %v536 = vrot.slane %v535, 4
  %v537 = vadd.f32 %v535, %v536
  %v538 = vrot.slane %v537, 2
  %v539 = vadd.f32 %v537, %v538
  %v540 = vrot.slane %v539, 1
  %v541 = vadd.f32 %v539, %v540
  %v542 = vsel %vm137, %v507, 0.0
  %v543 = vrot.slane %v542, 4
  %v544 = vadd.f32 %v542, %v543
  %v545 = vrot.slane %v544, 2
  %v546 = vadd.f32 %v544, %v545
  %v547 = vrot.slane %v546, 1
  %v548 = vadd.f32 %v546, %v547
  %v549 = vsel %vm137, %v509, 0.0
  %v550 = vrot.slane %v549, 4
  %v551 = vadd.f32 %v549, %v550
  %v552 = vrot.slane %v551, 2
  %v553 = vadd.f32 %v551, %v552
  %v554 = vrot.slane %v553, 1
  %v555 = vadd.f32 %v553, %v554
  %v556 = vsel %vm137, %v511, 0.0
  %v557 = vrot.slane %v556, 4
  %v558 = vadd.f32 %v556, %v557
  %v559 = vrot.slane %v558, 2
  %v560 = vadd.f32 %v558, %v559
  %v561 = vrot.slane %v560, 1
  %v562 = vadd.f32 %v560, %v561
  %v563 = vsel %vm137, %v513, 0.0
  %v564 = vrot.slane %v563, 4
  %v565 = vadd.f32 %v563, %v564
  %v566 = vrot.slane %v565, 2
  %v567 = vadd.f32 %v565, %v566
  %v568 = vrot.slane %v567, 1
  %v569 = vadd.f32 %v567, %v568
  %v570 = vrcp.pop %v520
  %v571 = vmul.f32 %v499, %v570
  %v572 = vrcp.pop %v527
  %v573 = vmul.f32 %v501, %v572
  %v574 = vrcp.pop %v534
  %v575 = vmul.f32 %v503, %v574
  %v576 = vrcp.pop %v541
  %v577 = vmul.f32 %v505, %v576
  %v578 = vrcp.pop %v548
  %v579 = vmul.f32 %v507, %v578
  %v580 = vrcp.pop %v555
  %v581 = vmul.f32 %v509, %v580
  %v582 = vrcp.pop %v562
  %v583 = vmul.f32 %v511, %v582
  %v584 = vrcp.pop %v569
  %v585 = vmul.f32 %v513, %v584
  %v586 = vld [vmem:[%s3] sm:$0xff]
  %v587 = vld [vmem:[%s3 + $0x8] sm:$0xff]
  %v588 = vld [vmem:[%s3 + $0x10] sm:$0xff]
  %v589 = vld [vmem:[%s3 + $0x18] sm:$0xff]
  %v590 = vld [vmem:[%s3 + $0x20] sm:$0xff]
  %v591 = vld [vmem:[%s3 + $0x28] sm:$0xff]
  %v592 = vld [vmem:[%s3 + $0x30] sm:$0xff]
  %v593 = vld [vmem:[%s3 + $0x38] sm:$0xff]
  %v594 = vadd.f32 %v586, %v38
  %v595 = vadd.f32 %v587, %v39
  %v596 = vadd.f32 %v588, %v40
  %v597 = vadd.f32 %v589, %v41
  %v598 = vadd.f32 %v590, %v42
  %v599 = vadd.f32 %v591, %v43
  %v600 = vadd.f32 %v592, %v44
  %v601 = vadd.f32 %v593, %v45
  %v602 = vmul.f32 %v571, %v594
  %v603 = vmul.f32 %v573, %v595
  %v604 = vmul.f32 %v575, %v596
  %v605 = vmul.f32 %v577, %v597
  %v606 = vmul.f32 %v579, %v598
  %v607 = vmul.f32 %v581, %v599
  %v608 = vmul.f32 %v583, %v600
  %v609 = vmul.f32 %v585, %v601
  %v610 = vsel %vm137, %v602, 0.0
  %v611 = vrot.slane %v610, 4
  %v612 = vadd.f32 %v610, %v611
  %v613 = vrot.slane %v612, 2
  %v614 = vadd.f32 %v612, %v613
  %v615 = vrot.slane %v614, 1
  %v616 = vadd.f32 %v614, %v615
  %v617 = vsel %vm137, %v603, 0.0
  %v618 = vrot.slane %v617, 4
  %v619 = vadd.f32 %v617, %v618
  %v620 = vrot.slane %v619, 2
  %v621 = vadd.f32 %v619, %v620
  %v622 = vrot.slane %v621, 1
  %v623 = vadd.f32 %v621, %v622
  %v624 = vsel %vm137, %v604, 0.0
  %v625 = vrot.slane %v624, 4
  %v626 = vadd.f32 %v624, %v625
  %v627 = vrot.slane %v626, 2
  %v628 = vadd.f32 %v626, %v627
  %v629 = vrot.slane %v628, 1
  %v630 = vadd.f32 %v628, %v629
  %v631 = vsel %vm137, %v605, 0.0
  %v632 = vrot.slane %v631, 4
  %v633 = vadd.f32 %v631, %v632
  %v634 = vrot.slane %v633, 2
  %v635 = vadd.f32 %v633, %v634
  %v636 = vrot.slane %v635, 1
  %v637 = vadd.f32 %v635, %v636
  %v638 = vsel %vm137, %v606, 0.0
  %v639 = vrot.slane %v638, 4
  %v640 = vadd.f32 %v638, %v639
  %v641 = vrot.slane %v640, 2
  %v642 = vadd.f32 %v640, %v641
  %v643 = vrot.slane %v642, 1
  %v644 = vadd.f32 %v642, %v643
  %v645 = vsel %vm137, %v607, 0.0
  %v646 = vrot.slane %v645, 4
  %v647 = vadd.f32 %v645, %v646
  %v648 = vrot.slane %v647, 2
  %v649 = vadd.f32 %v647, %v648
  %v650 = vrot.slane %v649, 1
  %v651 = vadd.f32 %v649, %v650
  %v652 = vsel %vm137, %v608, 0.0
  %v653 = vrot.slane %v652, 4
  %v654 = vadd.f32 %v652, %v653
  %v655 = vrot.slane %v654, 2
  %v656 = vadd.f32 %v654, %v655
  %v657 = vrot.slane %v656, 1
  %v658 = vadd.f32 %v656, %v657
  %v659 = vsel %vm137, %v609, 0.0
  %v660 = vrot.slane %v659, 4
  %v661 = vadd.f32 %v659, %v660
  %v662 = vrot.slane %v661, 2
  %v663 = vadd.f32 %v661, %v662
  %v664 = vrot.slane %v663, 1
  %v665 = vadd.f32 %v663, %v664
  %v666 = vld [vmem:[%s9] sm:$0xff]
  %v667 = vld [vmem:[%s9 + $0x8] sm:$0xff]
  %v668 = vld [vmem:[%s9 + $0x10] sm:$0xff]
  %v669 = vld [vmem:[%s9 + $0x18] sm:$0xff]
  %v670 = vld [vmem:[%s10] sm:$0x1]
  %v672 = vlaneseq
  %v673 = vshrl.u32 %v672, 7
  %v674 = vsub.s32 0, %v673
  %v675 = vrot.slane %v670, %v674
  %vm685 = vcmask 1041409
  %v686 = vsel %vm685, %v623, %v616
  %vm687 = vcmask 1042434
  %v688 = vsel %vm687, %v630, %v686
  %vm689 = vcmask 1043459
  %v690 = vsel %vm689, %v637, %v688
  %vm691 = vcmask 1044484
  %v692 = vsel %vm691, %v644, %v690
  %vm693 = vcmask 1045509
  %v694 = vsel %vm693, %v651, %v692
  %vm695 = vcmask 1046534
  %v696 = vsel %vm695, %v658, %v694
  %vm697 = vcmask 1047559
  %v698 = vsel %vm697, %v665, %v696
  %v699 = vsel %vm137, %v698, 0
  %701 = vmatprep.subr.mxu0 0.0
  %702 = vmatpush1.msra.mxu0 %v666
  %703 = vmatprep.subr.mxu0 0.0
  %704 = vmatpush1.msra.mxu0 %v667
  %705 = vmatprep.subr.mxu0 0.0
  %706 = vmatpush1.msra.mxu0 %v668
  %707 = vmatprep.subr.mxu0 0.0
  %708 = vmatpush1.msra.mxu0 %v669
  %709 = vmatprep.subr.mxu0 0.0
  %710 = vmatpush1.msra.mxu0 0.0
  %711 = vmatprep.subr.mxu0 0.0
  %712 = vmatpush1.msra.mxu0 0.0
  %713 = vmatprep.subr.mxu0 0.0
  %714 = vmatpush1.msra.mxu0 0.0
  %715 = vmatprep.subr.mxu0 0.0
  %716 = vmatpush1.msra.mxu0 0.0
  %717 = vmatprep.subr.mxu0 0.0
  %718 = vmatpush1.msra.mxu0 0.0
  %719 = vmatprep.subr.mxu0 0.0
  %720 = vmatpush1.msra.mxu0 0.0
  %721 = vmatprep.subr.mxu0 0.0
  %722 = vmatpush1.msra.mxu0 0.0
  %723 = vmatprep.subr.mxu0 0.0
  %724 = vmatpush1.msra.mxu0 0.0
  %725 = vmatprep.subr.mxu0 0.0
  %726 = vmatpush1.msra.mxu0 0.0
  %727 = vmatprep.subr.mxu0 0.0
  %728 = vmatpush1.msra.mxu0 0.0
  %729 = vmatprep.subr.mxu0 0.0
  %730 = vmatpush1.msra.mxu0 0.0
  %731 = vmatprep.subr.mxu0 0.0
  %732 = vmatpush1.msra.mxu0 0.0
  %733 = vmatprep.subr.mxu0 0.0
  %734 = vmatpush1.msra.mxu0 0.0
  %735 = vmatprep.subr.mxu0 0.0
  %736 = vmatpush1.msra.mxu0 0.0
  %737 = vmatprep.subr.mxu0 0.0
  %738 = vmatpush1.msra.mxu0 0.0
  %739 = vmatprep.subr.mxu0 0.0
  %740 = vmatpush1.msra.mxu0 0.0
  %741 = vmatprep.subr.mxu0 0.0
  %742 = vmatpush1.msra.mxu0 0.0
  %743 = vmatprep.subr.mxu0 0.0
  %744 = vmatpush1.msra.mxu0 0.0
  %745 = vmatprep.subr.mxu0 0.0
  %746 = vmatpush1.msra.mxu0 0.0
  %747 = vmatprep.subr.mxu0 0.0
  %748 = vmatpush1.msra.mxu0 0.0
  %749 = vmatprep.subr.mxu0 0.0
  %750 = vmatpush1.msra.mxu0 0.0
  %751 = vmatprep.subr.mxu0 0.0
  %752 = vmatpush1.msra.mxu0 0.0
  %753 = vmatprep.subr.mxu0 0.0
  %754 = vmatpush1.msra.mxu0 0.0
  %755 = vmatprep.subr.mxu0 0.0
  %756 = vmatpush1.msra.mxu0 0.0
  %757 = vmatprep.subr.mxu0 0.0
  %758 = vmatpush1.msra.mxu0 0.0
  %759 = vmatprep.subr.mxu0 0.0
  %760 = vmatpush1.msra.mxu0 0.0
  %761 = vmatprep.subr.mxu0 0.0
  %762 = vmatpush1.msra.mxu0 0.0
  %763 = vmatprep.subr.mxu0 0.0
  %764 = vmatpush1.msra.mxu0 0.0
  %765 = vmatprep.mubr.f32.mxu0 0.0
  %766 = vmatmul.mubr.f32.gmra.mrb[0].mxu0 %v699
  %v767 = vpop.f32.mrb[0].mxu0
  %v768 = vadd.f32 %v675, %v767
  %v769 = vpop.f32.mrb[0].mxu0
  %770 = vdwg.mxu0
  %v771 = vld [vmem:[%s4] sm:$0xff]
  %v772 = vadd.f32 %v768, %v771
  %773 = vst [vmem:[%s11] sm:$0xff] %v772
  // Predicated region
  $region46: #{point_transformer_cls.24} parent=0 // pred_check
    _
  $region47: #{point_transformer_cls.24} parent=0 // pred_check_branch
    %775 = sbr.rel (0) target = $region49
  $region48: #{point_transformer_cls.24} parent=0 // pred_region
    _
  $region49: #{point_transformer_cls.24} parent=0 // pred_fallthru
    _
  // Predicated region
  $region50: #{point_transformer_cls.24} parent=0 // pred_check
    _
  $region51: #{point_transformer_cls.24} parent=0 // pred_check_branch
    %777 = sbr.rel (0) target = $region53
  $region52: #{point_transformer_cls.24} parent=0 // pred_region
    _
  $region53: #{point_transformer_cls.24} parent=0 // pred_fallthru
    _

// kernel: point_transformer_cls.25
$region0: #{point_transformer_cls.25}
  #allocation0 [shape = 'u32[]', space=smem, size = 0x4, offset = 0x4, fixed_abs, tag = 'smem constant byte address 0x4 - core index']
  #allocation1 [shape = 'u32[144,128]{1,0:T(1,128)}', space=vmem, size = 0x12000, scoped, tag = 'internal scratch']
  %s0 = inlined_call_operand.vmem [shape: f32[2,2,128], index: 0, kind: input, shape index: {}]
  %s1 = inlined_call_operand.vmem [shape: f32[128,256], index: 1, kind: input, shape index: {}]
  %s2 = inlined_call_operand.vmem [shape: f32[1,256], index: 2, kind: input, shape index: {}]
  %s3 = inlined_call_operand.vmem [shape: f32[256,64], index: 3, kind: input, shape index: {}]
  %s4 = inlined_call_operand.vmem [shape: f32[1,64], index: 4, kind: input, shape index: {}]
  %s5 = inlined_call_operand.vmem [shape: f32[64,5], index: 5, kind: input, shape index: {}]
  %s6 = inlined_call_operand.vmem [shape: f32[1,5], index: 6, kind: input, shape index: {}]
  %s7 = inlined_call_operand.hbm [shape: f32[2,5], index: 7, kind: output, shape index: {}]
  %s8 = sld [smem:[#allocation0]]
  $region38: #{point_transformer_cls.25} parent=0
    _
  %s10 = ssub.s32 1, %s8
  %s11 = scalar_select 0, %s10, %s8
  $region1: #{point_transformer_cls.25} parent=0
    #allocation2 [shape = 'u8[1024]{0}', space=vmem, size = 0x400, scoped, tag = 'output window, operand 0, single buffered']
    #allocation3 [shape = 's32[1]{0}', space=sflag, size = 0x4, scoped, tag = 'scoped memory for point_transformer_cls.25']
    %12 = vsyncpa [#allocation3], 0
    // Predicated region
    $region2: #{point_transformer_cls.25} parent=1 // pred_check
      _
    $region3: #{point_transformer_cls.25} parent=1 // pred_check_branch
      %14 = sbr.rel (0) target = $region5
    $region4: #{point_transformer_cls.25} parent=1 // pred_region
      _
    $region5: #{point_transformer_cls.25} parent=1 // pred_fallthru
      _
    // Predicated region
    $region6: #{point_transformer_cls.25} parent=1 // pred_check
      _
    $region7: #{point_transformer_cls.25} parent=1 // pred_check_branch
      %16 = sbr.rel (0) target = $region9
    $region8: #{point_transformer_cls.25} parent=1 // pred_region
      _
    $region9: #{point_transformer_cls.25} parent=1 // pred_fallthru
      _
    // Predicated region
    $region10: #{point_transformer_cls.25} parent=1 // pred_check
      _
    $region11: #{point_transformer_cls.25} parent=1 // pred_check_branch
      %18 = sbr.rel (0) target = $region13
    $region12: #{point_transformer_cls.25} parent=1 // pred_region
      _
    $region13: #{point_transformer_cls.25} parent=1 // pred_fallthru
      _
    // Predicated region
    $region14: #{point_transformer_cls.25} parent=1 // pred_check
      _
    $region15: #{point_transformer_cls.25} parent=1 // pred_check_branch
      %20 = sbr.rel (0) target = $region17
    $region16: #{point_transformer_cls.25} parent=1 // pred_region
      _
    $region17: #{point_transformer_cls.25} parent=1 // pred_fallthru
      _
    // Predicated region
    $region18: #{point_transformer_cls.25} parent=1 // pred_check
      _
    $region19: #{point_transformer_cls.25} parent=1 // pred_check_branch
      %22 = sbr.rel (0) target = $region21
    $region20: #{point_transformer_cls.25} parent=1 // pred_region
      _
    $region21: #{point_transformer_cls.25} parent=1 // pred_fallthru
      _
    // Predicated region
    $region22: #{point_transformer_cls.25} parent=1 // pred_check
      _
    $region23: #{point_transformer_cls.25} parent=1 // pred_check_branch
      %24 = sbr.rel (0) target = $region25
    $region24: #{point_transformer_cls.25} parent=1 // pred_region
      _
    $region25: #{point_transformer_cls.25} parent=1 // pred_fallthru
      _
    // Predicated region
    $region26: #{point_transformer_cls.25} parent=1 // pred_check
      _
    $region27: #{point_transformer_cls.25} parent=1 // pred_check_branch
      %26 = sbr.rel (0) target = $region29
    $region28: #{point_transformer_cls.25} parent=1 // pred_region
      _
    $region29: #{point_transformer_cls.25} parent=1 // pred_fallthru
      _
    %v27 = vld [vmem:[%s0] sm:$0x3]
    %v28 = vld [vmem:[%s0 + $0x2] sm:$0x3]
    %vm29 = vcmask 1041408
    %v30 = vsel %vm29, %v27, 0.0
    %v31 = vrot.slane %v30, 4
    %v32 = vadd.f32 %v30, %v31
    %v33 = vrot.slane %v32, 2
    %v34 = vadd.f32 %v32, %v33
    %v35 = vrot.slane %v34, 1
    %v36 = vadd.f32 %v34, %v35
    %v37 = vsel %vm29, %v28, 0.0
    %v38 = vrot.slane %v37, 4
    %v39 = vadd.f32 %v37, %v38
    %v40 = vrot.slane %v39, 2
    %v41 = vadd.f32 %v39, %v40
    %v42 = vrot.slane %v41, 1
    %v43 = vadd.f32 %v41, %v42
    %v44 = vrcp.pop 2.0
    %v45 = vmul.f32 %v36, %v44
    %v46 = vmul.f32 %v43, %v44
    %v47 = vld [vmem:[%s1] sm:$0xff]
    %v48 = vld [vmem:[%s1 + $0x8] sm:$0xff]
    %v49 = vld [vmem:[%s1 + $0x10] sm:$0xff]
    %v50 = vld [vmem:[%s1 + $0x18] sm:$0xff]
    %v51 = vld [vmem:[%s1 + $0x20] sm:$0xff]
    %v52 = vld [vmem:[%s1 + $0x28] sm:$0xff]
    %v53 = vld [vmem:[%s1 + $0x30] sm:$0xff]
    %v54 = vld [vmem:[%s1 + $0x38] sm:$0xff]
    %v55 = vld [vmem:[%s1 + $0x40] sm:$0xff]
    %v56 = vld [vmem:[%s1 + $0x48] sm:$0xff]
    %v57 = vld [vmem:[%s1 + $0x50] sm:$0xff]
    %v58 = vld [vmem:[%s1 + $0x58] sm:$0xff]
    %v59 = vld [vmem:[%s1 + $0x60] sm:$0xff]
    %v60 = vld [vmem:[%s1 + $0x68] sm:$0xff]
    %v61 = vld [vmem:[%s1 + $0x70] sm:$0xff]
    %v62 = vld [vmem:[%s1 + $0x78] sm:$0xff]
    %v63 = vld [vmem:[%s1 + $0x80] sm:$0xff]
    %v64 = vld [vmem:[%s1 + $0x88] sm:$0xff]
    %v65 = vld [vmem:[%s1 + $0x90] sm:$0xff]
    %v66 = vld [vmem:[%s1 + $0x98] sm:$0xff]
    %v67 = vld [vmem:[%s1 + $0xa0] sm:$0xff]
    %v68 = vld [vmem:[%s1 + $0xa8] sm:$0xff]
    %v69 = vld [vmem:[%s1 + $0xb0] sm:$0xff]
    %v70 = vld [vmem:[%s1 + $0xb8] sm:$0xff]
    %v71 = vld [vmem:[%s1 + $0xc0] sm:$0xff]
    %v72 = vld [vmem:[%s1 + $0xc8] sm:$0xff]
    %v73 = vld [vmem:[%s1 + $0xd0] sm:$0xff]
    %v74 = vld [vmem:[%s1 + $0xd8] sm:$0xff]
    %v75 = vld [vmem:[%s1 + $0xe0] sm:$0xff]
    %v76 = vld [vmem:[%s1 + $0xe8] sm:$0xff]
    %v77 = vld [vmem:[%s1 + $0xf0] sm:$0xff]
    %v78 = vld [vmem:[%s1 + $0xf8] sm:$0xff]
    %v79 = vld [vmem:[%s2] sm:$0x3]
    %v81 = vlaneseq
    %v82 = vshrl.u32 %v81, 7
    %v83 = vsub.s32 0, %v82
    %v84 = vrot.slane %v79, %v83
    %v85 = vlaneseq
    %v86 = vshrl.u32 %v85, 7
    %v87 = vsub.s32 1, %v86
    %v88 = vrot.slane %v79, %v87
    %vm93 = vcmask 1041409
    %v94 = vsel %vm93, %v46, %v45
    %96 = vmatprep.subr.mxu0 %v48
    %97 = vmatpush1.msra.mxu0 %v47
    %98 = vmatprep.subr.mxu0 %v50
    %99 = vmatpush1.msra.mxu0 %v49
    %100 = vmatprep.subr.mxu0 %v52
    %101 = vmatpush1.msra.mxu0 %v51
    %102 = vmatprep.subr.mxu0 %v54
    %103 = vmatpush1.msra.mxu0 %v53
    %104 = vmatprep.subr.mxu0 %v56
    %105 = vmatpush1.msra.mxu0 %v55
    %106 = vmatprep.subr.mxu0 %v58
    %107 = vmatpush1.msra.mxu0 %v57
    %108 = vmatprep.subr.mxu0 %v60
    %109 = vmatpush1.msra.mxu0 %v59
    %110 = vmatprep.subr.mxu0 %v62
    %111 = vmatpush1.msra.mxu0 %v61
    %112 = vmatprep.subr.mxu0 %v64
    %113 = vmatpush1.msra.mxu0 %v63
    %114 = vmatprep.subr.mxu0 %v66
    %115 = vmatpush1.msra.mxu0 %v65
    %116 = vmatprep.subr.mxu0 %v68
    %117 = vmatpush1.msra.mxu0 %v67
    %118 = vmatprep.subr.mxu0 %v70
    %119 = vmatpush1.msra.mxu0 %v69
    %120 = vmatprep.subr.mxu0 %v72
    %121 = vmatpush1.msra.mxu0 %v71
    %122 = vmatprep.subr.mxu0 %v74
    %123 = vmatpush1.msra.mxu0 %v73
    %124 = vmatprep.subr.mxu0 %v76
    %125 = vmatpush1.msra.mxu0 %v75
    %126 = vmatprep.subr.mxu0 %v78
    %127 = vmatpush1.msra.mxu0 %v77
    %128 = vmatprep.subr.mxu0 0.0
    %129 = vmatpush1.msra.mxu0 0.0
    %130 = vmatprep.subr.mxu0 0.0
    %131 = vmatpush1.msra.mxu0 0.0
    %132 = vmatprep.subr.mxu0 0.0
    %133 = vmatpush1.msra.mxu0 0.0
    %134 = vmatprep.subr.mxu0 0.0
    %135 = vmatpush1.msra.mxu0 0.0
    %136 = vmatprep.subr.mxu0 0.0
    %137 = vmatpush1.msra.mxu0 0.0
    %138 = vmatprep.subr.mxu0 0.0
    %139 = vmatpush1.msra.mxu0 0.0
    %140 = vmatprep.subr.mxu0 0.0
    %141 = vmatpush1.msra.mxu0 0.0
    %142 = vmatprep.subr.mxu0 0.0
    %143 = vmatpush1.msra.mxu0 0.0
    %144 = vmatprep.subr.mxu0 0.0
    %145 = vmatpush1.msra.mxu0 0.0
    %146 = vmatprep.subr.mxu0 0.0
    %147 = vmatpush1.msra.mxu0 0.0
    %148 = vmatprep.subr.mxu0 0.0
    %149 = vmatpush1.msra.mxu0 0.0
    %150 = vmatprep.subr.mxu0 0.0
    %151 = vmatpush1.msra.mxu0 0.0
    %152 = vmatprep.subr.mxu0 0.0
    %153 = vmatpush1.msra.mxu0 0.0
    %154 = vmatprep.subr.mxu0 0.0
    %155 = vmatpush1.msra.mxu0 0.0
    %156 = vmatprep.subr.mxu0 0.0
    %157 = vmatpush1.msra.mxu0 0.0
    %158 = vmatprep.subr.mxu0 0.0
    %159 = vmatpush1.msra.mxu0 0.0
    %160 = vmatprep.mubr.f32.mxu0 0.0
    %161 = vmatmul.mubr.f32.gmra.mrb[0].mxu0 %v94
    %v162 = vpop.f32.mrb[0].mxu0
    %v163 = vadd.f32 %v84, %v162
    %v164 = vpop.f32.mrb[0].mxu0
    %v165 = vadd.f32 %v88, %v164
    %166 = vdwg.mxu0
    %v167 = vmax.f32 %v163, 0.0
    %v168 = vmax.f32 %v165, 0.0
    %v169 = vld [vmem:[%s3] sm:$0xff]
    %v170 = vld [vmem:[%s3 + $0x8] sm:$0xff]
    %v171 = vld [vmem:[%s3 + $0x10] sm:$0xff]
    %v172 = vld [vmem:[%s3 + $0x18] sm:$0xff]
    %v173 = vld [vmem:[%s3 + $0x20] sm:$0xff]
    %v174 = vld [vmem:[%s3 + $0x28] sm:$0xff]
    %v175 = vld [vmem:[%s3 + $0x30] sm:$0xff]
    %v176 = vld [vmem:[%s3 + $0x38] sm:$0xff]
    %v177 = vld [vmem:[%s3 + $0x40] sm:$0xff]
    %v178 = vld [vmem:[%s3 + $0x48] sm:$0xff]
    %v179 = vld [vmem:[%s3 + $0x50] sm:$0xff]
    %v180 = vld [vmem:[%s3 + $0x58] sm:$0xff]
    %v181 = vld [vmem:[%s3 + $0x60] sm:$0xff]
    %v182 = vld [vmem:[%s3 + $0x68] sm:$0xff]
    %v183 = vld [vmem:[%s3 + $0x70] sm:$0xff]
    %v184 = vld [vmem:[%s3 + $0x78] sm:$0xff]
    %v185 = vld [vmem:[%s3 + $0x80] sm:$0xff]
    %v186 = vld [vmem:[%s3 + $0x88] sm:$0xff]
    %v187 = vld [vmem:[%s3 + $0x90] sm:$0xff]
    %v188 = vld [vmem:[%s3 + $0x98] sm:$0xff]
    %v189 = vld [vmem:[%s3 + $0xa0] sm:$0xff]
    %v190 = vld [vmem:[%s3 + $0xa8] sm:$0xff]
    %v191 = vld [vmem:[%s3 + $0xb0] sm:$0xff]
    %v192 = vld [vmem:[%s3 + $0xb8] sm:$0xff]
    %v193 = vld [vmem:[%s3 + $0xc0] sm:$0xff]
    %v194 = vld [vmem:[%s3 + $0xc8] sm:$0xff]
    %v195 = vld [vmem:[%s3 + $0xd0] sm:$0xff]
    %v196 = vld [vmem:[%s3 + $0xd8] sm:$0xff]
    %v197 = vld [vmem:[%s3 + $0xe0] sm:$0xff]
    %v198 = vld [vmem:[%s3 + $0xe8] sm:$0xff]
    %v199 = vld [vmem:[%s3 + $0xf0] sm:$0xff]
    %v200 = vld [vmem:[%s3 + $0xf8] sm:$0xff]
    %v201 = vld [vmem:[%s4] sm:$0x1]
    %v203 = vlaneseq
    %v204 = vshrl.u32 %v203, 7
    %v205 = vsub.s32 0, %v204
    %v206 = vrot.slane %v201, %v205
    %208 = vmatprep.subr.mxu0 0.0
    %209 = vmatpush1.msra.mxu0 %v169
    %210 = vmatprep.subr.mxu0 0.0
    %211 = vmatpush1.msra.mxu0 %v170
    %212 = vmatprep.subr.mxu0 0.0
    %213 = vmatpush1.msra.mxu0 %v171
    %214 = vmatprep.subr.mxu0 0.0
    %215 = vmatpush1.msra.mxu0 %v172
    %216 = vmatprep.subr.mxu0 0.0
    %217 = vmatpush1.msra.mxu0 %v173
    %218 = vmatprep.subr.mxu0 0.0
    %219 = vmatpush1.msra.mxu0 %v174
    %220 = vmatprep.subr.mxu0 0.0
    %221 = vmatpush1.msra.mxu0 %v175
    %222 = vmatprep.subr.mxu0 0.0
    %223 = vmatpush1.msra.mxu0 %v176
    %224 = vmatprep.subr.mxu0 0.0
    %225 = vmatpush1.msra.mxu0 %v177
    %226 = vmatprep.subr.mxu0 0.0
    %227 = vmatpush1.msra.mxu0 %v178
    %228 = vmatprep.subr.mxu0 0.0
    %229 = vmatpush1.msra.mxu0 %v179
    %230 = vmatprep.subr.mxu0 0.0
    %231 = vmatpush1.msra.mxu0 %v180
    %232 = vmatprep.subr.mxu0 0.0
    %233 = vmatpush1.msra.mxu0 %v181
    %234 = vmatprep.subr.mxu0 0.0
    %235 = vmatpush1.msra.mxu0 %v182
    %236 = vmatprep.subr.mxu0 0.0
    %237 = vmatpush1.msra.mxu0 %v183
    %238 = vmatprep.subr.mxu0 0.0
    %239 = vmatpush1.msra.mxu0 %v184
    %240 = vmatprep.subr.mxu0 0.0
    %241 = vmatpush1.msra.mxu0 %v185
    %242 = vmatprep.subr.mxu0 0.0
    %243 = vmatpush1.msra.mxu0 %v186
    %244 = vmatprep.subr.mxu0 0.0
    %245 = vmatpush1.msra.mxu0 %v187
    %246 = vmatprep.subr.mxu0 0.0
    %247 = vmatpush1.msra.mxu0 %v188
    %248 = vmatprep.subr.mxu0 0.0
    %249 = vmatpush1.msra.mxu0 %v189
    %250 = vmatprep.subr.mxu0 0.0
    %251 = vmatpush1.msra.mxu0 %v190
    %252 = vmatprep.subr.mxu0 0.0
    %253 = vmatpush1.msra.mxu0 %v191
    %254 = vmatprep.subr.mxu0 0.0
    %255 = vmatpush1.msra.mxu0 %v192
    %256 = vmatprep.subr.mxu0 0.0
    %257 = vmatpush1.msra.mxu0 %v193
    %258 = vmatprep.subr.mxu0 0.0
    %259 = vmatpush1.msra.mxu0 %v194
    %260 = vmatprep.subr.mxu0 0.0
    %261 = vmatpush1.msra.mxu0 %v195
    %262 = vmatprep.subr.mxu0 0.0
    %263 = vmatpush1.msra.mxu0 %v196
    %264 = vmatprep.subr.mxu0 0.0
    %265 = vmatpush1.msra.mxu0 %v197
    %266 = vmatprep.subr.mxu0 0.0
    %267 = vmatpush1.msra.mxu0 %v198
    %268 = vmatprep.subr.mxu0 0.0
    %269 = vmatpush1.msra.mxu0 %v199
    %270 = vmatprep.subr.mxu0 0.0
    %271 = vmatpush1.msra.mxu0 %v200
    %272 = vmatprep.mubr.f32.mxu0 %v168
    %273 = vmatmul.mubr.f32.gmra.mrb[0].mxu0 %v167
    %v274 = vpop.f32.mrb[0].mxu0
    %v275 = vadd.f32 %v206, %v274
    %v276 = vpop.f32.mrb[0].mxu0
    %277 = vdwg.mxu0
    %v278 = vmax.f32 %v275, 0.0
    %v279 = vld [vmem:[%s5] sm:$0xff]
    %v280 = vld [vmem:[%s5 + $0x8] sm:$0xff]
    %v281 = vld [vmem:[%s5 + $0x10] sm:$0xff]
    %v282 = vld [vmem:[%s5 + $0x18] sm:$0xff]
    %v283 = vld [vmem:[%s5 + $0x20] sm:$0xff]
    %v284 = vld [vmem:[%s5 + $0x28] sm:$0xff]
    %v285 = vld [vmem:[%s5 + $0x30] sm:$0xff]
    %v286 = vld [vmem:[%s5 + $0x38] sm:$0xff]
    %v287 = vld [vmem:[%s6] sm:$0x1]
    %v289 = vlaneseq
    %v290 = vshrl.u32 %v289, 7
    %v291 = vsub.s32 0, %v290
    %v292 = vrot.slane %v287, %v291
    %vm294 = vcmask 523264
    %v296 = vsel %vm294, %v278, 0
    %298 = vmatprep.subr.mxu0 0.0
    %299 = vmatpush1.msra.mxu0 %v279
    %300 = vmatprep.subr.mxu0 0.0
    %301 = vmatpush1.msra.mxu0 %v280
    %302 = vmatprep.subr.mxu0 0.0
    %303 = vmatpush1.msra.mxu0 %v281
    %304 = vmatprep.subr.mxu0 0.0
    %305 = vmatpush1.msra.mxu0 %v282
    %306 = vmatprep.subr.mxu0 0.0
    %307 = vmatpush1.msra.mxu0 %v283
    %308 = vmatprep.subr.mxu0 0.0
    %309 = vmatpush1.msra.mxu0 %v284
    %310 = vmatprep.subr.mxu0 0.0
    %311 = vmatpush1.msra.mxu0 %v285
    %312 = vmatprep.subr.mxu0 0.0
    %313 = vmatpush1.msra.mxu0 %v286
    %314 = vmatprep.subr.mxu0 0.0
    %315 = vmatpush1.msra.mxu0 0.0
    %316 = vmatprep.subr.mxu0 0.0
    %317 = vmatpush1.msra.mxu0 0.0
    %318 = vmatprep.subr.mxu0 0.0
    %319 = vmatpush1.msra.mxu0 0.0
    %320 = vmatprep.subr.mxu0 0.0
    %321 = vmatpush1.msra.mxu0 0.0
    %322 = vmatprep.subr.mxu0 0.0
    %323 = vmatpush1.msra.mxu0 0.0
    %324 = vmatprep.subr.mxu0 0.0
    %325 = vmatpush1.msra.mxu0 0.0
    %326 = vmatprep.subr.mxu0 0.0
    %327 = vmatpush1.msra.mxu0 0.0
    %328 = vmatprep.subr.mxu0 0.0
    %329 = vmatpush1.msra.mxu0 0.0
    %330 = vmatprep.subr.mxu0 0.0
    %331 = vmatpush1.msra.mxu0 0.0
    %332 = vmatprep.subr.mxu0 0.0
    %333 = vmatpush1.msra.mxu0 0.0
    %334 = vmatprep.subr.mxu0 0.0
    %335 = vmatpush1.msra.mxu0 0.0
    %336 = vmatprep.subr.mxu0 0.0
    %337 = vmatpush1.msra.mxu0 0.0
    %338 = vmatprep.subr.mxu0 0.0
    %339 = vmatpush1.msra.mxu0 0.0
    %340 = vmatprep.subr.mxu0 0.0
    %341 = vmatpush1.msra.mxu0 0.0
    %342 = vmatprep.subr.mxu0 0.0
    %343 = vmatpush1.msra.mxu0 0.0
    %344 = vmatprep.subr.mxu0 0.0
    %345 = vmatpush1.msra.mxu0 0.0
    %346 = vmatprep.subr.mxu0 0.0
    %347 = vmatpush1.msra.mxu0 0.0
    %348 = vmatprep.subr.mxu0 0.0
    %349 = vmatpush1.msra.mxu0 0.0
    %350 = vmatprep.subr.mxu0 0.0
    %351 = vmatpush1.msra.mxu0 0.0
    %352 = vmatprep.subr.mxu0 0.0
    %353 = vmatpush1.msra.mxu0 0.0
    %354 = vmatprep.subr.mxu0 0.0
    %355 = vmatpush1.msra.mxu0 0.0
    %356 = vmatprep.subr.mxu0 0.0
    %357 = vmatpush1.msra.mxu0 0.0
    %358 = vmatprep.subr.mxu0 0.0
    %359 = vmatpush1.msra.mxu0 0.0
    %360 = vmatprep.subr.mxu0 0.0
    %361 = vmatpush1.msra.mxu0 0.0
    %362 = vmatprep.mubr.f32.mxu0 0.0
    %363 = vmatmul.mubr.f32.gmra.mrb[0].mxu0 %v296
    %v364 = vpop.f32.mrb[0].mxu0
    %v365 = vadd.f32 %v292, %v364
    %v366 = vpop.f32.mrb[0].mxu0
    %367 = vdwg.mxu0
    %vm368 = vcmask 33792
    %369 = vst.msk [vmem:[#allocation2] sm:$0x3] %vm368, %v365
    // Predicated region
    $region30: #{point_transformer_cls.25} parent=1 // pred_check
      _
    $region31: #{point_transformer_cls.25} parent=1 // pred_check_branch
      %371 = sbr.rel (0) target = $region33
    $region32: #{point_transformer_cls.25} parent=1 // pred_region
      %s373 = ssub.s32 32, 32
      %374 = vsyncadd [#allocation3], %s373
      %s376 = sshll.u32 [#allocation2], 4
      %s377 = int_to_ptr.vmem [resolvable:$true] %s376
      %379 = dma.vmem_to_hbm [thread:$0]  %s377, 32, %s7, [#allocation3]
    $region33: #{point_transformer_cls.25} parent=1 // pred_fallthru
      _
    // Predicated region
    $region34: #{point_transformer_cls.25} parent=1 // pred_check
      _
    $region35: #{point_transformer_cls.25} parent=1 // pred_check_branch
      %381 = sbr.rel (0) target = $region37
    $region36: #{point_transformer_cls.25} parent=1 // pred_region
      %382 = dma.done [#allocation3], 32
    $region37: #{point_transformer_cls.25} parent=1 // pred_fallthru
      _
    %383 = vsyncpa [#allocation3], 1

</llo_original>
